<compile_context>
chip_gen: v6e
topology: v6e:2x2x1
jax: 0.10.0
libtpu: 0.0.40
codegen_flags: <defaults>
</compile_context>

<pallas_src>
import functools

import jax
import jax.numpy as jnp
from jax.experimental import pallas as pl
from jax.experimental.pallas import tpu as pltpu


# --------------------------------------------------------------------------
# small helpers
# --------------------------------------------------------------------------
def _round_up(n, m=8):
    return ((n + m - 1) // m) * m


def _pad_rows(a, mult=8):
    pad = (-a.shape[0]) % mult
    if pad:
        a = jnp.pad(a, ((0, pad), (0, 0)))
    return a


def _layernorm(x, g, b, eps=1e-5):
    mu = jnp.mean(x, axis=-1, keepdims=True)
    var = jnp.mean((x - mu) ** 2, axis=-1, keepdims=True)
    return (x - mu) * jax.lax.rsqrt(var + eps) * g + b


def _softmax(x):
    m = jnp.max(x, axis=-1, keepdims=True)
    e = jnp.exp(x - m)
    s = jnp.sum(e, axis=-1, keepdims=True)
    return e * pl.reciprocal(s, approx=True)


def _tensorcores_per_chip():
    """2 on dual-TensorCore chips (v7x), else 1.  Robust fallback: 1."""
    try:
        kind = jax.devices()[0].device_kind.lower()
    except Exception:
        return 1
    return 2 if "v7" in kind else 1


# --------------------------------------------------------------------------
# kernel
# --------------------------------------------------------------------------
def transformer_pre_kernel(
    x_ref,        # (1, BB*SP, In)   input block (rows S..SP-1 of each sample are zero pad)
    a_ref,        # slab A  (cols = H): lin_w | (pos+lin_b, padded, tiled) | a1_ow | fc2_w | misc
    q1_ref,       # fused attn1 QKV  (H rows weight, bias row at q1_b)        cols = 3H
    q2_ref,       # fused attn2 QKV  (SP rows weight, bias row at q2_b)       cols = 3*NH*DHP
    o2_ref,       # attn2 out proj   (NH*DHP rows, head blocks of 16; bias)   cols = SP
    f1_ref,       # fc1              (H rows weight, bias row at f1_b)        cols = F
    h1_ref,       # heads layer 1    (H rows weight, then b/gamma/beta rows)  cols = 2M
    h2_ref,       # heads layer 2    (2M rows block-diag weight, bias row)    cols = 128
    out_ref,      # (1, BB, 128) -> lane0 = y, lanes1..2 = class probs
    *, BB, S, SP, In, H, F, M, NH, DHP, lay):

    dot = functools.partial(jnp.dot, preferred_element_type=jnp.float32)

    def nt(a, b):  # contract last dims:  a @ b.T  without materializing b.T
        return jax.lax.dot_general(a, b, (((1,), (1,)), ((), ())),
                                   preferred_element_type=jnp.float32)

    BBS = BB * SP
    x2 = x_ref[0]                                          # (BBS, In)

    # ---- unpack parameter slabs (static, 8-row-aligned slices) ----
    lin_w = a_ref[lay['lin_w']:lay['lin_w'] + In, :]       # (In, H)
    posb  = a_ref[lay['posb']:lay['posb'] + BBS, :]        # (BBS, H)  pos + lin_b, padded+tiled
    a1_ow = a_ref[lay['a1_ow']:lay['a1_ow'] + H, :]        # (H, H)
    fc2_w = a_ref[lay['fc2_w']:lay['fc2_w'] + F, :]        # (F, H)
    m0 = lay['misc']
    a1_ob = a_ref[m0 + 0:m0 + 1, :]
    fc2_b = a_ref[m0 + 1:m0 + 2, :]
    n1_g  = a_ref[m0 + 2:m0 + 3, :]
    n1_b  = a_ref[m0 + 3:m0 + 4, :]
    n2_g  = a_ref[m0 + 4:m0 + 5, :]
    n2_b  = a_ref[m0 + 5:m0 + 6, :]

    wq1 = q1_ref[0:H, :]                                   # (H, 3H)  Q columns pre-scaled
    bq1 = q1_ref[lay['q1_b']:lay['q1_b'] + 1, :]           # (1, 3H)
    wq2 = q2_ref[0:SP, :]                                  # (SP, 3*NH*DHP) Q pre-scaled, pad rows 0
    bq2 = q2_ref[lay['q2_b']:lay['q2_b'] + 1, :]           # (1, 3*NH*DHP)
    a2_ow = o2_ref[0:NH * DHP, :]                          # (NH*DHP, SP)  16-row head blocks
    a2_ob = o2_ref[lay['o2_b']:lay['o2_b'] + 1, :]         # (1, SP)
    fc1_w = f1_ref[0:H, :]                                 # (H, F)
    fc1_b = f1_ref[lay['f1_b']:lay['f1_b'] + 1, :]         # (1, F)
    hw1 = h1_ref[0:H, :]                                   # (H, 2M)
    hb1 = h1_ref[lay['h1_b'] + 0:lay['h1_b'] + 1, :]       # (1, 2M)
    hg  = h1_ref[lay['h1_b'] + 1:lay['h1_b'] + 2, :]       # (1, 2M)
    hbt = h1_ref[lay['h1_b'] + 2:lay['h1_b'] + 3, :]       # (1, 2M)
    hw2 = h2_ref[0:2 * M, :]                               # (2M, 128) block-diagonal, padded lanes
    hb2 = h2_ref[lay['h2_b']:lay['h2_b'] + 1, :]           # (1, 128)

    # attn1 key-padding mask (keys S..SP-1 are zero-padding rows)
    lane = jax.lax.broadcasted_iota(jnp.int32, (1, SP), 1)
    kmask = jnp.where(lane < S, 0.0, -1e30).astype(jnp.float32)   # (1, SP)

    # ---- input projection + positional embedding (lin_b folded into posb) ----
    X = dot(x2, lin_w) + posb                              # (BBS, H); pad rows stay exactly 0

    # ---- attn1 fused QKV over all tokens of all samples in this block ----
    qkv1 = dot(X, wq1) + bq1                               # (BBS, 3H), Q pre-scaled
    q1 = qkv1[:, 0:H]
    k1 = qkv1[:, H:2 * H]
    v1 = qkv1[:, 2 * H:3 * H]

    koff = NH * DHP
    voff = 2 * NH * DHP

    y2_rows = []
    for b in range(BB):                                    # static loop, 8-aligned slices
        lo = b * SP
        qb = q1[lo:lo + SP]
        kb = k1[lo:lo + SP]
        vb = v1[lo:lo + SP]
        p1 = _softmax(nt(qb, kb) + kmask)                  # (SP, SP); pad keys get 0 weight
        att1 = dot(p1, vb)                                 # (SP, H)
        Y1b = dot(att1, a1_ow) + a1_ob                     # (SP, H)  (out-proj inside the loop)

        # attn2: sequence axis (padded to SP) becomes the embedding axis,
        # H "tokens", NH heads padded to DHP lanes each.
        Z = Y1b.T                                          # (H, SP); pad rows of wq2 are zero
        qkv2 = dot(Z, wq2) + bq2                           # (H, 3*NH*DHP), Q pre-scaled
        acc = jnp.zeros((H, SP), jnp.float32)
        for h in range(NH):                                # static 5-head loop, running accumulator
            c = h * DHP
            qh = qkv2[:, c:c + DHP]
            kh = qkv2[:, koff + c:koff + c + DHP]
            vh = qkv2[:, voff + c:voff + c + DHP]
            ph = _softmax(nt(qh, kh))                      # (H, H); padded lanes contribute 0
            oh = dot(ph, vh)                               # (H, DHP)
            acc = acc + dot(oh, a2_ow[c:c + DHP, :])       # (H, SP)
        y2_rows.append((acc + a2_ob).T)                    # (SP, H); pad rows are exactly 0

    Y2 = y2_rows[0] if BB == 1 else jnp.concatenate(y2_rows, axis=0)   # (BBS, H), 48-aligned

    # ---- residual + norm1 (dropout = identity, eval mode) ----
    X = _layernorm(X + Y2, n1_g, n1_b)

    # ---- feed-forward ----
    Fh = jnp.maximum(dot(X, fc1_w) + fc1_b, 0.0)
    Fh = dot(Fh, fc2_w) + fc2_b
    X = _layernorm(X + Fh, n2_g, n2_b)

    # ---- heads on the last REAL sequence position of each sample ----
    last_rows = [X[b * SP + S - 1:b * SP + S, :] for b in range(BB)]
    xl = last_rows[0] if BB == 1 else jnp.concatenate(last_rows, axis=0)  # (BB, H)

    h1 = jnp.maximum(dot(xl, hw1) + hb1, 0.0)              # (BB, 2M) = [reg | class]
    ho = _layernorm(h1[:, 0:M], hg[:, 0:M], hbt[:, 0:M])             # regression branch
    hc = _layernorm(h1[:, M:2 * M], hg[:, M:2 * M], hbt[:, M:2 * M])  # class branch
    hcat = jnp.concatenate([ho, hc], axis=-1)              # (BB, 2M)

    out3 = dot(hcat, hw2) + hb2                            # (BB, 128); lanes 3.. are exactly 0
    y = out3[:, 0:1]                                       # MLP head: no final ReLU
    classy = _softmax(jnp.maximum(out3[:, 1:3], 0.0))      # CLASSMLP: ReLU then Softmax
    tail = jnp.zeros((BB, 128 - 3), jnp.float32)
    out_ref[0] = jnp.concatenate([y, classy, tail], axis=-1)   # single lane-dense store


# --------------------------------------------------------------------------
# parameters (synthetic, already transposed to (in, out)) and packing
# --------------------------------------------------------------------------
def make_params(key, input_size, num_hidden, seq_len, ffn_hidden, mlp_size):
    H, S, F, M, In = num_hidden, seq_len, ffn_hidden, mlp_size, input_size
    ks = iter(jax.random.split(key, 64))

    def nrm(shape, scale=0.05):
        return scale * jax.random.normal(next(ks), shape, dtype=jnp.float32)

    ones = lambda s: jnp.ones(s, jnp.float32)
    zeros = lambda s: jnp.zeros(s, jnp.float32)

    return dict(
        lin_w=nrm((In, H)), lin_b=nrm((1, H)), pos=nrm((S, H)),
        a1_qw=nrm((H, H)), a1_kw=nrm((H, H)), a1_vw=nrm((H, H)),
        a1_qb=nrm((1, H)), a1_kb=nrm((1, H)), a1_vb=nrm((1, H)),
        a1_ow=nrm((H, H)), a1_ob=nrm((1, H)),
        a2_qw=nrm((S, S)), a2_kw=nrm((S, S)), a2_vw=nrm((S, S)),
        a2_qb=nrm((1, S)), a2_kb=nrm((1, S)), a2_vb=nrm((1, S)),
        a2_ow=nrm((S, S)), a2_ob=nrm((1, S)),
        n1_g=ones((1, H)), n1_b=zeros((1, H)),
        fc1_w=nrm((H, F)), fc1_b=nrm((1, F)),
        fc2_w=nrm((F, H)), fc2_b=nrm((1, H)),
        n2_g=ones((1, H)), n2_b=zeros((1, H)),
        o_w1=nrm((H, M)), o_b1=nrm((1, M)), o_lg=ones((1, M)), o_lb=zeros((1, M)),
        o_w2=nrm((M, 1)), o_b2=nrm((1, 1)),
        c_w1=nrm((H, M)), c_b1=nrm((1, M)), c_lg=ones((1, M)), c_lb=zeros((1, M)),
        c_w2=nrm((M, 2)), c_b2=nrm((1, 2)),
    )


def pack_params(p, *, bb, num_heads2, seq_pad):
    """Pack all parameters into 7 slabs (built ONCE at init time)."""
    In, H = p['lin_w'].shape
    S = p['pos'].shape[0]
    SP = seq_pad
    F = p['fc1_w'].shape[1]
    M = p['o_w1'].shape[1]
    NH = num_heads2
    DH = S // NH
    DHP = 16                                     # per-head lanes, padded

    lay = {}

    # --- slab A: everything whose column width is H ------------------------
    pos_b = jnp.pad(p['pos'] + p['lin_b'], ((0, SP - S), (0, 0)))     # (SP, H), pad rows 0
    posb = jnp.concatenate([pos_b] * bb, axis=0)                      # (bb*SP, H)
    misc = jnp.concatenate(
        [p['a1_ob'], p['fc2_b'], p['n1_g'], p['n1_b'], p['n2_g'], p['n2_b']],
        axis=0)                                                       # (6, H)
    rows, padded = 0, []
    for name, seg in (('lin_w', p['lin_w']), ('posb', posb),
                      ('a1_ow', p['a1_ow']), ('fc2_w', p['fc2_w']),
                      ('misc', misc)):
        lay[name] = rows
        seg = _pad_rows(seg)
        padded.append(seg)
        rows += seg.shape[0]
    slab_a = jnp.concatenate(padded, axis=0)

    # --- fused attn1 QKV (softmax scale folded into Q columns) -------------
    s1 = 1.0 / float(H) ** 0.5                   # 1 head of dim H
    wq1 = jnp.concatenate([p['a1_qw'] * s1, p['a1_kw'], p['a1_vw']], axis=1)
    bq1 = jnp.concatenate([p['a1_qb'] * s1, p['a1_kb'], p['a1_vb']], axis=1)
    lay['q1_b'] = _round_up(H)
    slab_q1 = jnp.concatenate([_pad_rows(wq1), _pad_rows(bq1)], axis=0)

    # --- fused attn2 QKV: heads padded to DHP lanes, seq rows padded to SP --
    s2 = 1.0 / float(DH) ** 0.5                  # NH heads of dim DH

    def pad_heads_cols(w):                       # (rows, S) -> (rows, NH*DHP)
        blocks = []
        for h in range(NH):
            blk = w[:, h * DH:(h + 1) * DH]
            blocks.append(jnp.pad(blk, ((0, 0), (0, DHP - DH))))
        return jnp.concatenate(blocks, axis=1)

    wq2 = jnp.concatenate([pad_heads_cols(p['a2_qw'] * s2),
                           pad_heads_cols(p['a2_kw']),
                           pad_heads_cols(p['a2_vw'])], axis=1)       # (S, 3*NH*DHP)
    wq2 = jnp.pad(wq2, ((0, SP - S), (0, 0)))                          # zero pad rows
    bq2 = jnp.concatenate([pad_heads_cols(p['a2_qb'] * s2),
                           pad_heads_cols(p['a2_kb']),
                           pad_heads_cols(p['a2_vb'])], axis=1)       # (1, 3*NH*DHP)
    lay['q2_b'] = _round_up(SP)
    slab_q2 = jnp.concatenate([_pad_rows(wq2), _pad_rows(bq2)], axis=0)

    # --- attn2 output projection, pre-split into 16-row head blocks --------
    ow_blocks = []
    for h in range(NH):
        blk = p['a2_ow'][h * DH:(h + 1) * DH, :]                       # (DH, S)
        ow_blocks.append(jnp.pad(blk, ((0, DHP - DH), (0, SP - S))))   # (DHP, SP)
    a2_ow_p = jnp.concatenate(ow_blocks, axis=0)                       # (NH*DHP, SP)
    a2_ob_p = jnp.pad(p['a2_ob'], ((0, 0), (0, SP - S)))               # (1, SP)
    lay['o2_b'] = NH * DHP
    slab_o2 = jnp.concatenate([a2_ow_p, _pad_rows(a2_ob_p)], axis=0)

    # --- fc1 -----------------------------------------------------------------
    lay['f1_b'] = _round_up(H)
    slab_f1 = jnp.concatenate([_pad_rows(p['fc1_w']), _pad_rows(p['fc1_b'])], axis=0)

    # --- heads, first linear + per-branch layernorm (fused along columns) ---
    hw1 = jnp.concatenate([p['o_w1'], p['c_w1']], axis=1)             # (H, 2M)
    hrows = jnp.concatenate(
        [jnp.concatenate([p['o_b1'], p['c_b1']], axis=1),
         jnp.concatenate([p['o_lg'], p['c_lg']], axis=1),
         jnp.concatenate([p['o_lb'], p['c_lb']], axis=1)], axis=0)    # (3, 2M)
    lay['h1_b'] = _round_up(H)
    slab_h1 = jnp.concatenate([_pad_rows(hw1), _pad_rows(hrows)], axis=0)

    # --- heads, second linear: block-diagonal, padded to 128 output lanes ---
    w2 = jnp.zeros((2 * M, 128), jnp.float32)
    w2 = w2.at[:M, 0:1].set(p['o_w2'])
    w2 = w2.at[M:, 1:3].set(p['c_w2'])
    b2 = jnp.zeros((1, 128), jnp.float32)
    b2 = b2.at[:, 0:1].set(p['o_b2'])
    b2 = b2.at[:, 1:3].set(p['c_b2'])
    lay['h2_b'] = _round_up(2 * M)
    slab_h2 = jnp.concatenate([_pad_rows(w2), _pad_rows(b2)], axis=0)

    slabs = (slab_a, slab_q1, slab_q2, slab_o2, slab_f1, slab_h1, slab_h2)
    return slabs, lay


# --------------------------------------------------------------------------
# wrapper (packing is NOT done here; slabs are passed in, built at init)
# --------------------------------------------------------------------------
def transformer_pre_forward(x, slabs, *, lay, dims):
    G, BB, S, SP = dims['G'], dims['BB'], dims['S'], dims['SP']
    In, H, F, M = dims['In'], dims['H'], dims['F'], dims['M']
    NH, DHP = dims['NH'], dims['DHP']

    # pad seq 45 -> 48 so all per-sample row boundaries are 8-aligned
    xp = jnp.pad(x, ((0, 0), (0, SP - S), (0, 0)))
    xg = xp.reshape(G, BB * SP, In)

    kernel = functools.partial(
        transformer_pre_kernel,
        BB=BB, S=S, SP=SP, In=In, H=H, F=F, M=M, NH=NH, DHP=DHP, lay=lay)

    in_specs = [pl.BlockSpec((1, BB * SP, In), lambda g: (g, 0, 0))]
    in_specs += [pl.BlockSpec(s.shape, lambda g: (0, 0)) for s in slabs]

    out = pl.pallas_call(
        kernel,
        out_shape=jax.ShapeDtypeStruct((G, BB, 128), jnp.float32),
        grid=(G,),
        in_specs=in_specs,
        out_specs=pl.BlockSpec((1, BB, 128), lambda g: (g, 0, 0)),
        compiler_params=pltpu.CompilerParams(
            dimension_semantics=("parallel",)),
    )(xg, *slabs)

    out = out.reshape(G * BB, 128)
    return out[:, 0:1], out[:, 1:3]


# --------------------------------------------------------------------------
# pure-JAX reference (for a sanity check of the fused/packed kernel)
# --------------------------------------------------------------------------
def transformer_pre_reference(x, p, *, num_heads2=5):
    B, S, In = x.shape
    H = p['lin_w'].shape[1]
    DH = S // num_heads2

    def ln(v, g, b, eps=1e-5):
        mu = v.mean(-1, keepdims=True)
        var = ((v - mu) ** 2).mean(-1, keepdims=True)
        return (v - mu) / jnp.sqrt(var + eps) * g + b

    X = jnp.einsum('bsi,ih->bsh', x, p['lin_w']) + p['lin_b'] + p['pos'][None]
    # attn1 (1 head over the sequence axis)
    q = jnp.einsum('bsh,hk->bsk', X, p['a1_qw']) + p['a1_qb']
    k = jnp.einsum('bsh,hk->bsk', X, p['a1_kw']) + p['a1_kb']
    v = jnp.einsum('bsh,hk->bsk', X, p['a1_vw']) + p['a1_vb']
    att = jax.nn.softmax(jnp.einsum('bqh,bkh->bqk', q, k) / float(H) ** 0.5, axis=-1)
    Y1 = jnp.einsum('bqk,bkh->bqh', att, v) @ p['a1_ow'] + p['a1_ob']
    # attn2 (seq axis as embedding; 5 heads of dim 9)
    Z = jnp.swapaxes(Y1, 1, 2)                               # (B, H, S)
    q2 = (Z @ p['a2_qw'] + p['a2_qb']).reshape(B, H, num_heads2, DH)
    k2 = (Z @ p['a2_kw'] + p['a2_kb']).reshape(B, H, num_heads2, DH)
    v2 = (Z @ p['a2_vw'] + p['a2_vb']).reshape(B, H, num_heads2, DH)
    sc = jnp.einsum('bqnd,bknd->bnqk', q2, k2) / float(DH) ** 0.5
    pr = jax.nn.softmax(sc, axis=-1)
    o2 = jnp.einsum('bnqk,bknd->bqnd', pr, v2).reshape(B, H, S)
    Y2 = jnp.swapaxes(o2 @ p['a2_ow'] + p['a2_ob'], 1, 2)    # (B, S, H)
    X = ln(X + Y2, p['n1_g'], p['n1_b'])
    Fh = jnp.maximum(X @ p['fc1_w'] + p['fc1_b'], 0.0) @ p['fc2_w'] + p['fc2_b']
    X = ln(X + Fh, p['n2_g'], p['n2_b'])
    xl = X[:, -1, :]
    ho = ln(jnp.maximum(xl @ p['o_w1'] + p['o_b1'], 0.0), p['o_lg'], p['o_lb'])
    y = ho @ p['o_w2'] + p['o_b2']
    hc = ln(jnp.maximum(xl @ p['c_w1'] + p['c_b1'], 0.0), p['c_lg'], p['c_lb'])
    cy = jax.nn.softmax(jnp.maximum(hc @ p['c_w2'] + p['c_b2'], 0.0), axis=-1)
    return y, cy


if __name__ == "__main__":
    # seq_len is forced to 45 by attn2 (embed_dim=45, 5 heads) in EncoderLayer.
    B, INPUT_SIZE, NUM_HIDDEN, SEQ_LEN, FFN_HIDDEN, MLP_SIZE = 4, 16, 32, 45, 64, 16
    NH = 5

    key = jax.random.PRNGKey(0)
    kx, kp = jax.random.split(key)

    x = jax.random.normal(kx, (B, SEQ_LEN, INPUT_SIZE), dtype=jnp.float32)
    params = make_params(kp, INPUT_SIZE, NUM_HIDDEN, SEQ_LEN, FFN_HIDDEN, MLP_SIZE)

    # ----- init time: grid selection + one-shot parameter packing -----
    G = 2 if (_tensorcores_per_chip() >= 2 and B % 2 == 0) else 1
    BB = B // G
    SP = _round_up(SEQ_LEN, 8)                    # 45 -> 48
    slabs, lay = pack_params(params, bb=BB, num_heads2=NH, seq_pad=SP)
    slabs = tuple(jax.device_put(s) for s in slabs)

    dims = dict(G=G, BB=BB, S=SEQ_LEN, SP=SP, In=INPUT_SIZE, H=NUM_HIDDEN,
                F=FFN_HIDDEN, M=MLP_SIZE, NH=NH, DHP=16)
    fwd = jax.jit(functools.partial(transformer_pre_forward, lay=lay, dims=dims))

    # ----- forward -----
    y, classy = fwd(x, slabs)
    jax.block_until_ready((y, classy))
    assert y.shape == (B, 1) and classy.shape == (B, 2)

    # sanity check against a pure-JAX reference (loose tol: TPU matmul precision)
    y_ref, c_ref = transformer_pre_reference(x, params)
    assert float(jnp.max(jnp.abs(y - y_ref))) < 2e-2
    assert float(jnp.max(jnp.abs(classy - c_ref))) < 2e-2

    print("KERNEL_OK")
</pallas_src>

<mosaic_0001>
module attributes {stable_mosaic.version = 11 : i64} {
  func.func @transformer_pre_kernel(%arg0: i32, %arg1: memref<1x192x16xf32, #tpu.memory_space<vmem>>, %arg2: memref<312x32xf32, #tpu.memory_space<vmem>>, %arg3: memref<40x96xf32, #tpu.memory_space<vmem>>, %arg4: memref<56x240xf32, #tpu.memory_space<vmem>>, %arg5: memref<88x48xf32, #tpu.memory_space<vmem>>, %arg6: memref<40x64xf32, #tpu.memory_space<vmem>>, %arg7: memref<40x32xf32, #tpu.memory_space<vmem>>, %arg8: memref<40x128xf32, #tpu.memory_space<vmem>>, %arg9: memref<1x4x128xf32, #tpu.memory_space<vmem>>) attributes {dimension_semantics = [#tpu.dimension_semantics<parallel>], iteration_bounds = array<i64: 1>, scalar_prefetch = 0 : i64, scratch_operands = 0 : i64, tpu.core_type = #tpu.core_type<tc>, window_params = [{transform_indices = @transform_0, window_bounds = array<i64: 1, 192, 16>}, {pipeline_mode = #tpu.pipeline_mode<synchronous>, transform_indices = @transform_1, window_bounds = array<i64: 312, 32>}, {pipeline_mode = #tpu.pipeline_mode<synchronous>, transform_indices = @transform_2, window_bounds = array<i64: 40, 96>}, {pipeline_mode = #tpu.pipeline_mode<synchronous>, transform_indices = @transform_3, window_bounds = array<i64: 56, 240>}, {pipeline_mode = #tpu.pipeline_mode<synchronous>, transform_indices = @transform_4, window_bounds = array<i64: 88, 48>}, {pipeline_mode = #tpu.pipeline_mode<synchronous>, transform_indices = @transform_5, window_bounds = array<i64: 40, 64>}, {pipeline_mode = #tpu.pipeline_mode<synchronous>, transform_indices = @transform_6, window_bounds = array<i64: 40, 32>}, {pipeline_mode = #tpu.pipeline_mode<synchronous>, transform_indices = @transform_7, window_bounds = array<i64: 40, 128>}, {transform_indices = @transform_8, window_bounds = array<i64: 1, 4, 128>}]} {
    %c0 = arith.constant 0 : index
    %c0_0 = arith.constant 0 : index
    %c0_1 = arith.constant 0 : index
    %0 = vector.load %arg1[%c0, %c0_0, %c0_1] : memref<1x192x16xf32, #tpu.memory_space<vmem>>, vector<1x192x16xf32>
    %1 = vector.shape_cast %0 : vector<1x192x16xf32> to vector<192x16xf32>
    %c0_2 = arith.constant 0 : index
    %c0_3 = arith.constant 0 : index
    %2 = vector.load %arg2[%c0_2, %c0_3] : memref<312x32xf32, #tpu.memory_space<vmem>>, vector<16x32xf32>
    %c16 = arith.constant 16 : index
    %c0_4 = arith.constant 0 : index
    %3 = vector.load %arg2[%c16, %c0_4] : memref<312x32xf32, #tpu.memory_space<vmem>>, vector<192x32xf32>
    %c208 = arith.constant 208 : index
    %c0_5 = arith.constant 0 : index
    %4 = vector.load %arg2[%c208, %c0_5] : memref<312x32xf32, #tpu.memory_space<vmem>>, vector<32x32xf32>
    %c240 = arith.constant 240 : index
    %c0_6 = arith.constant 0 : index
    %5 = vector.load %arg2[%c240, %c0_6] : memref<312x32xf32, #tpu.memory_space<vmem>>, vector<64x32xf32>
    %c304 = arith.constant 304 : index
    %c0_7 = arith.constant 0 : index
    %6 = vector.load %arg2[%c304, %c0_7] : memref<312x32xf32, #tpu.memory_space<vmem>>, vector<1x32xf32>
    %c305 = arith.constant 305 : index
    %c0_8 = arith.constant 0 : index
    %7 = vector.load %arg2[%c305, %c0_8] : memref<312x32xf32, #tpu.memory_space<vmem>>, vector<1x32xf32>
    %c306 = arith.constant 306 : index
    %c0_9 = arith.constant 0 : index
    %8 = vector.load %arg2[%c306, %c0_9] : memref<312x32xf32, #tpu.memory_space<vmem>>, vector<1x32xf32>
    %c307 = arith.constant 307 : index
    %c0_10 = arith.constant 0 : index
    %9 = vector.load %arg2[%c307, %c0_10] : memref<312x32xf32, #tpu.memory_space<vmem>>, vector<1x32xf32>
    %c308 = arith.constant 308 : index
    %c0_11 = arith.constant 0 : index
    %10 = vector.load %arg2[%c308, %c0_11] : memref<312x32xf32, #tpu.memory_space<vmem>>, vector<1x32xf32>
    %c309 = arith.constant 309 : index
    %c0_12 = arith.constant 0 : index
    %11 = vector.load %arg2[%c309, %c0_12] : memref<312x32xf32, #tpu.memory_space<vmem>>, vector<1x32xf32>
    %c0_13 = arith.constant 0 : index
    %c0_14 = arith.constant 0 : index
    %12 = vector.load %arg3[%c0_13, %c0_14] : memref<40x96xf32, #tpu.memory_space<vmem>>, vector<32x96xf32>
    %c32 = arith.constant 32 : index
    %c0_15 = arith.constant 0 : index
    %13 = vector.load %arg3[%c32, %c0_15] : memref<40x96xf32, #tpu.memory_space<vmem>>, vector<1x96xf32>
    %c0_16 = arith.constant 0 : index
    %c0_17 = arith.constant 0 : index
    %14 = vector.load %arg4[%c0_16, %c0_17] : memref<56x240xf32, #tpu.memory_space<vmem>>, vector<48x240xf32>
    %c48 = arith.constant 48 : index
    %c0_18 = arith.constant 0 : index
    %15 = vector.load %arg4[%c48, %c0_18] : memref<56x240xf32, #tpu.memory_space<vmem>>, vector<1x240xf32>
    %c0_19 = arith.constant 0 : index
    %c0_20 = arith.constant 0 : index
    %16 = vector.load %arg5[%c0_19, %c0_20] : memref<88x48xf32, #tpu.memory_space<vmem>>, vector<80x48xf32>
    %c80 = arith.constant 80 : index
    %c0_21 = arith.constant 0 : index
    %17 = vector.load %arg5[%c80, %c0_21] : memref<88x48xf32, #tpu.memory_space<vmem>>, vector<1x48xf32>
    %c0_22 = arith.constant 0 : index
    %c0_23 = arith.constant 0 : index
    %18 = vector.load %arg6[%c0_22, %c0_23] : memref<40x64xf32, #tpu.memory_space<vmem>>, vector<32x64xf32>
    %c32_24 = arith.constant 32 : index
    %c0_25 = arith.constant 0 : index
    %19 = vector.load %arg6[%c32_24, %c0_25] : memref<40x64xf32, #tpu.memory_space<vmem>>, vector<1x64xf32>
    %c0_26 = arith.constant 0 : index
    %c0_27 = arith.constant 0 : index
    %20 = vector.load %arg7[%c0_26, %c0_27] : memref<40x32xf32, #tpu.memory_space<vmem>>, vector<32x32xf32>
    %c32_28 = arith.constant 32 : index
    %c0_29 = arith.constant 0 : index
    %21 = vector.load %arg7[%c32_28, %c0_29] : memref<40x32xf32, #tpu.memory_space<vmem>>, vector<1x32xf32>
    %c33 = arith.constant 33 : index
    %c0_30 = arith.constant 0 : index
    %22 = vector.load %arg7[%c33, %c0_30] : memref<40x32xf32, #tpu.memory_space<vmem>>, vector<1x32xf32>
    %c34 = arith.constant 34 : index
    %c0_31 = arith.constant 0 : index
    %23 = vector.load %arg7[%c34, %c0_31] : memref<40x32xf32, #tpu.memory_space<vmem>>, vector<1x32xf32>
    %c0_32 = arith.constant 0 : index
    %c0_33 = arith.constant 0 : index
    %24 = vector.load %arg8[%c0_32, %c0_33] : memref<40x128xf32, #tpu.memory_space<vmem>>, vector<32x128xf32>
    %c32_34 = arith.constant 32 : index
    %c0_35 = arith.constant 0 : index
    %25 = vector.load %arg8[%c32_34, %c0_35] : memref<40x128xf32, #tpu.memory_space<vmem>>, vector<1x128xf32>
    %26 = tpu.iota {dimensions = array<i32: 1>} : vector<1x48xi32>
    %c45_i32 = arith.constant 45 : i32
    %27 = vector.broadcast %c45_i32 : i32 to vector<1x48xi32>
    %28 = arith.cmpi slt, %26, %27 : vector<1x48xi32>
    %cst = arith.constant 0.000000e+00 : f32
    %cst_36 = arith.constant -1.000000e+30 : f32
    %29 = vector.broadcast %cst : f32 to vector<1x48xf32>
    %30 = vector.broadcast %cst_36 : f32 to vector<1x48xf32>
    %31 = arith.select %28, %29, %30 : vector<1x48xi1>, vector<1x48xf32>
    %cst_37 = arith.constant dense<0.000000e+00> : vector<192x32xf32>
    %32 = tpu.matmul %1, %2, %cst_37 {dimension_numbers = #tpu.dot_dimension_numbers<[1], [0], [0], [1], [0, 0, 1, 1], [], []>} : vector<192x16xf32>, vector<16x32xf32>, vector<192x32xf32> -> vector<192x32xf32>
    %33 = arith.addf %32, %3 : vector<192x32xf32>
    %cst_38 = arith.constant dense<0.000000e+00> : vector<192x96xf32>
    %34 = tpu.matmul %33, %12, %cst_38 {dimension_numbers = #tpu.dot_dimension_numbers<[1], [0], [0], [1], [0, 0, 1, 1], [], []>} : vector<192x32xf32>, vector<32x96xf32>, vector<192x96xf32> -> vector<192x96xf32>
    %35 = vector.broadcast %13 : vector<1x96xf32> to vector<192x96xf32>
    %36 = arith.addf %34, %35 : vector<192x96xf32>
    %37 = vector.extract_strided_slice %36 {offsets = [0, 0], sizes = [192, 32], strides = [1, 1]} : vector<192x96xf32> to vector<192x32xf32>
    %38 = vector.extract_strided_slice %36 {offsets = [0, 32], sizes = [192, 32], strides = [1, 1]} : vector<192x96xf32> to vector<192x32xf32>
    %39 = vector.extract_strided_slice %36 {offsets = [0, 64], sizes = [192, 32], strides = [1, 1]} : vector<192x96xf32> to vector<192x32xf32>
    %40 = vector.extract_strided_slice %37 {offsets = [0, 0], sizes = [48, 32], strides = [1, 1]} : vector<192x32xf32> to vector<48x32xf32>
    %41 = vector.extract_strided_slice %38 {offsets = [0, 0], sizes = [48, 32], strides = [1, 1]} : vector<192x32xf32> to vector<48x32xf32>
    %42 = vector.extract_strided_slice %39 {offsets = [0, 0], sizes = [48, 32], strides = [1, 1]} : vector<192x32xf32> to vector<48x32xf32>
    %cst_39 = arith.constant dense<0.000000e+00> : vector<48x48xf32>
    %43 = tpu.matmul %40, %41, %cst_39 {dimension_numbers = #tpu.dot_dimension_numbers<[1], [1], [0], [0], [0, 0, 1, 0], [], []>} : vector<48x32xf32>, vector<48x32xf32>, vector<48x48xf32> -> vector<48x48xf32>
    %44 = vector.broadcast %31 : vector<1x48xf32> to vector<48x48xf32>
    %45 = arith.addf %43, %44 : vector<48x48xf32>
    %cst_40 = arith.constant dense<0xFF800000> : vector<48xf32>
    %46 = vector.multi_reduction <maximumf>, %45, %cst_40 [1] : vector<48x48xf32> to vector<48xf32>
    %47 = vector.shape_cast %46 : vector<48xf32> to vector<48x1xf32>
    %48 = vector.broadcast %47 : vector<48x1xf32> to vector<48x48xf32>
    %49 = arith.subf %45, %48 : vector<48x48xf32>
    %50 = math.exp %49 : vector<48x48xf32>
    %cst_41 = arith.constant dense<0.000000e+00> : vector<48xf32>
    %51 = vector.multi_reduction <add>, %50, %cst_41 [1] : vector<48x48xf32> to vector<48xf32>
    %52 = vector.shape_cast %51 : vector<48xf32> to vector<48x1xf32>
    %53 = tpu.reciprocal %52 {approx = true} : vector<48x1xf32> -> vector<48x1xf32>
    %54 = vector.broadcast %53 : vector<48x1xf32> to vector<48x48xf32>
    %55 = arith.mulf %50, %54 : vector<48x48xf32>
    %cst_42 = arith.constant dense<0.000000e+00> : vector<48x32xf32>
    %56 = tpu.matmul %55, %42, %cst_42 {dimension_numbers = #tpu.dot_dimension_numbers<[1], [0], [0], [1], [0, 0, 1, 1], [], []>} : vector<48x48xf32>, vector<48x32xf32>, vector<48x32xf32> -> vector<48x32xf32>
    %cst_43 = arith.constant dense<0.000000e+00> : vector<48x32xf32>
    %57 = tpu.matmul %56, %4, %cst_43 {dimension_numbers = #tpu.dot_dimension_numbers<[1], [0], [0], [1], [0, 0, 1, 1], [], []>} : vector<48x32xf32>, vector<32x32xf32>, vector<48x32xf32> -> vector<48x32xf32>
    %58 = vector.broadcast %6 : vector<1x32xf32> to vector<48x32xf32>
    %59 = arith.addf %57, %58 : vector<48x32xf32>
    %60 = tpu.transpose %59, [1, 0] : vector<48x32xf32> -> vector<32x48xf32>
    %cst_44 = arith.constant dense<0.000000e+00> : vector<32x240xf32>
    %61 = tpu.matmul %60, %14, %cst_44 {dimension_numbers = #tpu.dot_dimension_numbers<[1], [0], [0], [1], [0, 0, 1, 1], [], []>} : vector<32x48xf32>, vector<48x240xf32>, vector<32x240xf32> -> vector<32x240xf32>
    %62 = vector.broadcast %15 : vector<1x240xf32> to vector<32x240xf32>
    %63 = arith.addf %61, %62 : vector<32x240xf32>
    %cst_45 = arith.constant 0.000000e+00 : f32
    %64 = vector.broadcast %cst_45 : f32 to vector<32x48xf32>
    %65 = vector.extract_strided_slice %63 {offsets = [0, 0], sizes = [32, 16], strides = [1, 1]} : vector<32x240xf32> to vector<32x16xf32>
    %66 = vector.extract_strided_slice %63 {offsets = [0, 80], sizes = [32, 16], strides = [1, 1]} : vector<32x240xf32> to vector<32x16xf32>
    %67 = vector.extract_strided_slice %63 {offsets = [0, 160], sizes = [32, 16], strides = [1, 1]} : vector<32x240xf32> to vector<32x16xf32>
    %cst_46 = arith.constant dense<0.000000e+00> : vector<32x32xf32>
    %68 = tpu.matmul %65, %66, %cst_46 {dimension_numbers = #tpu.dot_dimension_numbers<[1], [1], [0], [0], [0, 0, 1, 0], [], []>} : vector<32x16xf32>, vector<32x16xf32>, vector<32x32xf32> -> vector<32x32xf32>
    %cst_47 = arith.constant dense<0xFF800000> : vector<32xf32>
    %69 = vector.multi_reduction <maximumf>, %68, %cst_47 [1] : vector<32x32xf32> to vector<32xf32>
    %70 = vector.shape_cast %69 : vector<32xf32> to vector<32x1xf32>
    %71 = vector.broadcast %70 : vector<32x1xf32> to vector<32x32xf32>
    %72 = arith.subf %68, %71 : vector<32x32xf32>
    %73 = math.exp %72 : vector<32x32xf32>
    %cst_48 = arith.constant dense<0.000000e+00> : vector<32xf32>
    %74 = vector.multi_reduction <add>, %73, %cst_48 [1] : vector<32x32xf32> to vector<32xf32>
    %75 = vector.shape_cast %74 : vector<32xf32> to vector<32x1xf32>
    %76 = tpu.reciprocal %75 {approx = true} : vector<32x1xf32> -> vector<32x1xf32>
    %77 = vector.broadcast %76 : vector<32x1xf32> to vector<32x32xf32>
    %78 = arith.mulf %73, %77 : vector<32x32xf32>
    %cst_49 = arith.constant dense<0.000000e+00> : vector<32x16xf32>
    %79 = tpu.matmul %78, %67, %cst_49 {dimension_numbers = #tpu.dot_dimension_numbers<[1], [0], [0], [1], [0, 0, 1, 1], [], []>} : vector<32x32xf32>, vector<32x16xf32>, vector<32x16xf32> -> vector<32x16xf32>
    %80 = vector.extract_strided_slice %16 {offsets = [0, 0], sizes = [16, 48], strides = [1, 1]} : vector<80x48xf32> to vector<16x48xf32>
    %cst_50 = arith.constant dense<0.000000e+00> : vector<32x48xf32>
    %81 = tpu.matmul %79, %80, %cst_50 {dimension_numbers = #tpu.dot_dimension_numbers<[1], [0], [0], [1], [0, 0, 1, 1], [], []>} : vector<32x16xf32>, vector<16x48xf32>, vector<32x48xf32> -> vector<32x48xf32>
    %82 = arith.addf %64, %81 : vector<32x48xf32>
    %83 = vector.extract_strided_slice %63 {offsets = [0, 16], sizes = [32, 16], strides = [1, 1]} : vector<32x240xf32> to vector<32x16xf32>
    %84 = vector.extract_strided_slice %63 {offsets = [0, 96], sizes = [32, 16], strides = [1, 1]} : vector<32x240xf32> to vector<32x16xf32>
    %85 = vector.extract_strided_slice %63 {offsets = [0, 176], sizes = [32, 16], strides = [1, 1]} : vector<32x240xf32> to vector<32x16xf32>
    %cst_51 = arith.constant dense<0.000000e+00> : vector<32x32xf32>
    %86 = tpu.matmul %83, %84, %cst_51 {dimension_numbers = #tpu.dot_dimension_numbers<[1], [1], [0], [0], [0, 0, 1, 0], [], []>} : vector<32x16xf32>, vector<32x16xf32>, vector<32x32xf32> -> vector<32x32xf32>
    %cst_52 = arith.constant dense<0xFF800000> : vector<32xf32>
    %87 = vector.multi_reduction <maximumf>, %86, %cst_52 [1] : vector<32x32xf32> to vector<32xf32>
    %88 = vector.shape_cast %87 : vector<32xf32> to vector<32x1xf32>
    %89 = vector.broadcast %88 : vector<32x1xf32> to vector<32x32xf32>
    %90 = arith.subf %86, %89 : vector<32x32xf32>
    %91 = math.exp %90 : vector<32x32xf32>
    %cst_53 = arith.constant dense<0.000000e+00> : vector<32xf32>
    %92 = vector.multi_reduction <add>, %91, %cst_53 [1] : vector<32x32xf32> to vector<32xf32>
    %93 = vector.shape_cast %92 : vector<32xf32> to vector<32x1xf32>
    %94 = tpu.reciprocal %93 {approx = true} : vector<32x1xf32> -> vector<32x1xf32>
    %95 = vector.broadcast %94 : vector<32x1xf32> to vector<32x32xf32>
    %96 = arith.mulf %91, %95 : vector<32x32xf32>
    %cst_54 = arith.constant dense<0.000000e+00> : vector<32x16xf32>
    %97 = tpu.matmul %96, %85, %cst_54 {dimension_numbers = #tpu.dot_dimension_numbers<[1], [0], [0], [1], [0, 0, 1, 1], [], []>} : vector<32x32xf32>, vector<32x16xf32>, vector<32x16xf32> -> vector<32x16xf32>
    %98 = vector.extract_strided_slice %16 {offsets = [16, 0], sizes = [16, 48], strides = [1, 1]} : vector<80x48xf32> to vector<16x48xf32>
    %cst_55 = arith.constant dense<0.000000e+00> : vector<32x48xf32>
    %99 = tpu.matmul %97, %98, %cst_55 {dimension_numbers = #tpu.dot_dimension_numbers<[1], [0], [0], [1], [0, 0, 1, 1], [], []>} : vector<32x16xf32>, vector<16x48xf32>, vector<32x48xf32> -> vector<32x48xf32>
    %100 = arith.addf %82, %99 : vector<32x48xf32>
    %101 = vector.extract_strided_slice %63 {offsets = [0, 32], sizes = [32, 16], strides = [1, 1]} : vector<32x240xf32> to vector<32x16xf32>
    %102 = vector.extract_strided_slice %63 {offsets = [0, 112], sizes = [32, 16], strides = [1, 1]} : vector<32x240xf32> to vector<32x16xf32>
    %103 = vector.extract_strided_slice %63 {offsets = [0, 192], sizes = [32, 16], strides = [1, 1]} : vector<32x240xf32> to vector<32x16xf32>
    %cst_56 = arith.constant dense<0.000000e+00> : vector<32x32xf32>
    %104 = tpu.matmul %101, %102, %cst_56 {dimension_numbers = #tpu.dot_dimension_numbers<[1], [1], [0], [0], [0, 0, 1, 0], [], []>} : vector<32x16xf32>, vector<32x16xf32>, vector<32x32xf32> -> vector<32x32xf32>
    %cst_57 = arith.constant dense<0xFF800000> : vector<32xf32>
    %105 = vector.multi_reduction <maximumf>, %104, %cst_57 [1] : vector<32x32xf32> to vector<32xf32>
    %106 = vector.shape_cast %105 : vector<32xf32> to vector<32x1xf32>
    %107 = vector.broadcast %106 : vector<32x1xf32> to vector<32x32xf32>
    %108 = arith.subf %104, %107 : vector<32x32xf32>
    %109 = math.exp %108 : vector<32x32xf32>
    %cst_58 = arith.constant dense<0.000000e+00> : vector<32xf32>
    %110 = vector.multi_reduction <add>, %109, %cst_58 [1] : vector<32x32xf32> to vector<32xf32>
    %111 = vector.shape_cast %110 : vector<32xf32> to vector<32x1xf32>
    %112 = tpu.reciprocal %111 {approx = true} : vector<32x1xf32> -> vector<32x1xf32>
    %113 = vector.broadcast %112 : vector<32x1xf32> to vector<32x32xf32>
    %114 = arith.mulf %109, %113 : vector<32x32xf32>
    %cst_59 = arith.constant dense<0.000000e+00> : vector<32x16xf32>
    %115 = tpu.matmul %114, %103, %cst_59 {dimension_numbers = #tpu.dot_dimension_numbers<[1], [0], [0], [1], [0, 0, 1, 1], [], []>} : vector<32x32xf32>, vector<32x16xf32>, vector<32x16xf32> -> vector<32x16xf32>
    %116 = vector.extract_strided_slice %16 {offsets = [32, 0], sizes = [16, 48], strides = [1, 1]} : vector<80x48xf32> to vector<16x48xf32>
    %cst_60 = arith.constant dense<0.000000e+00> : vector<32x48xf32>
    %117 = tpu.matmul %115, %116, %cst_60 {dimension_numbers = #tpu.dot_dimension_numbers<[1], [0], [0], [1], [0, 0, 1, 1], [], []>} : vector<32x16xf32>, vector<16x48xf32>, vector<32x48xf32> -> vector<32x48xf32>
    %118 = arith.addf %100, %117 : vector<32x48xf32>
    %119 = vector.extract_strided_slice %63 {offsets = [0, 48], sizes = [32, 16], strides = [1, 1]} : vector<32x240xf32> to vector<32x16xf32>
    %120 = vector.extract_strided_slice %63 {offsets = [0, 128], sizes = [32, 16], strides = [1, 1]} : vector<32x240xf32> to vector<32x16xf32>
    %121 = vector.extract_strided_slice %63 {offsets = [0, 208], sizes = [32, 16], strides = [1, 1]} : vector<32x240xf32> to vector<32x16xf32>
    %cst_61 = arith.constant dense<0.000000e+00> : vector<32x32xf32>
    %122 = tpu.matmul %119, %120, %cst_61 {dimension_numbers = #tpu.dot_dimension_numbers<[1], [1], [0], [0], [0, 0, 1, 0], [], []>} : vector<32x16xf32>, vector<32x16xf32>, vector<32x32xf32> -> vector<32x32xf32>
    %cst_62 = arith.constant dense<0xFF800000> : vector<32xf32>
    %123 = vector.multi_reduction <maximumf>, %122, %cst_62 [1] : vector<32x32xf32> to vector<32xf32>
    %124 = vector.shape_cast %123 : vector<32xf32> to vector<32x1xf32>
    %125 = vector.broadcast %124 : vector<32x1xf32> to vector<32x32xf32>
    %126 = arith.subf %122, %125 : vector<32x32xf32>
    %127 = math.exp %126 : vector<32x32xf32>
    %cst_63 = arith.constant dense<0.000000e+00> : vector<32xf32>
    %128 = vector.multi_reduction <add>, %127, %cst_63 [1] : vector<32x32xf32> to vector<32xf32>
    %129 = vector.shape_cast %128 : vector<32xf32> to vector<32x1xf32>
    %130 = tpu.reciprocal %129 {approx = true} : vector<32x1xf32> -> vector<32x1xf32>
    %131 = vector.broadcast %130 : vector<32x1xf32> to vector<32x32xf32>
    %132 = arith.mulf %127, %131 : vector<32x32xf32>
    %cst_64 = arith.constant dense<0.000000e+00> : vector<32x16xf32>
    %133 = tpu.matmul %132, %121, %cst_64 {dimension_numbers = #tpu.dot_dimension_numbers<[1], [0], [0], [1], [0, 0, 1, 1], [], []>} : vector<32x32xf32>, vector<32x16xf32>, vector<32x16xf32> -> vector<32x16xf32>
    %134 = vector.extract_strided_slice %16 {offsets = [48, 0], sizes = [16, 48], strides = [1, 1]} : vector<80x48xf32> to vector<16x48xf32>
    %cst_65 = arith.constant dense<0.000000e+00> : vector<32x48xf32>
    %135 = tpu.matmul %133, %134, %cst_65 {dimension_numbers = #tpu.dot_dimension_numbers<[1], [0], [0], [1], [0, 0, 1, 1], [], []>} : vector<32x16xf32>, vector<16x48xf32>, vector<32x48xf32> -> vector<32x48xf32>
    %136 = arith.addf %118, %135 : vector<32x48xf32>
    %137 = vector.extract_strided_slice %63 {offsets = [0, 64], sizes = [32, 16], strides = [1, 1]} : vector<32x240xf32> to vector<32x16xf32>
    %138 = vector.extract_strided_slice %63 {offsets = [0, 144], sizes = [32, 16], strides = [1, 1]} : vector<32x240xf32> to vector<32x16xf32>
    %139 = vector.extract_strided_slice %63 {offsets = [0, 224], sizes = [32, 16], strides = [1, 1]} : vector<32x240xf32> to vector<32x16xf32>
    %cst_66 = arith.constant dense<0.000000e+00> : vector<32x32xf32>
    %140 = tpu.matmul %137, %138, %cst_66 {dimension_numbers = #tpu.dot_dimension_numbers<[1], [1], [0], [0], [0, 0, 1, 0], [], []>} : vector<32x16xf32>, vector<32x16xf32>, vector<32x32xf32> -> vector<32x32xf32>
    %cst_67 = arith.constant dense<0xFF800000> : vector<32xf32>
    %141 = vector.multi_reduction <maximumf>, %140, %cst_67 [1] : vector<32x32xf32> to vector<32xf32>
    %142 = vector.shape_cast %141 : vector<32xf32> to vector<32x1xf32>
    %143 = vector.broadcast %142 : vector<32x1xf32> to vector<32x32xf32>
    %144 = arith.subf %140, %143 : vector<32x32xf32>
    %145 = math.exp %144 : vector<32x32xf32>
    %cst_68 = arith.constant dense<0.000000e+00> : vector<32xf32>
    %146 = vector.multi_reduction <add>, %145, %cst_68 [1] : vector<32x32xf32> to vector<32xf32>
    %147 = vector.shape_cast %146 : vector<32xf32> to vector<32x1xf32>
    %148 = tpu.reciprocal %147 {approx = true} : vector<32x1xf32> -> vector<32x1xf32>
    %149 = vector.broadcast %148 : vector<32x1xf32> to vector<32x32xf32>
    %150 = arith.mulf %145, %149 : vector<32x32xf32>
    %cst_69 = arith.constant dense<0.000000e+00> : vector<32x16xf32>
    %151 = tpu.matmul %150, %139, %cst_69 {dimension_numbers = #tpu.dot_dimension_numbers<[1], [0], [0], [1], [0, 0, 1, 1], [], []>} : vector<32x32xf32>, vector<32x16xf32>, vector<32x16xf32> -> vector<32x16xf32>
    %152 = vector.extract_strided_slice %16 {offsets = [64, 0], sizes = [16, 48], strides = [1, 1]} : vector<80x48xf32> to vector<16x48xf32>
    %cst_70 = arith.constant dense<0.000000e+00> : vector<32x48xf32>
    %153 = tpu.matmul %151, %152, %cst_70 {dimension_numbers = #tpu.dot_dimension_numbers<[1], [0], [0], [1], [0, 0, 1, 1], [], []>} : vector<32x16xf32>, vector<16x48xf32>, vector<32x48xf32> -> vector<32x48xf32>
    %154 = arith.addf %136, %153 : vector<32x48xf32>
    %155 = vector.broadcast %17 : vector<1x48xf32> to vector<32x48xf32>
    %156 = arith.addf %154, %155 : vector<32x48xf32>
    %157 = tpu.transpose %156, [1, 0] : vector<32x48xf32> -> vector<48x32xf32>
    %158 = vector.extract_strided_slice %37 {offsets = [48, 0], sizes = [48, 32], strides = [1, 1]} : vector<192x32xf32> to vector<48x32xf32>
    %159 = vector.extract_strided_slice %38 {offsets = [48, 0], sizes = [48, 32], strides = [1, 1]} : vector<192x32xf32> to vector<48x32xf32>
    %160 = vector.extract_strided_slice %39 {offsets = [48, 0], sizes = [48, 32], strides = [1, 1]} : vector<192x32xf32> to vector<48x32xf32>
    %cst_71 = arith.constant dense<0.000000e+00> : vector<48x48xf32>
    %161 = tpu.matmul %158, %159, %cst_71 {dimension_numbers = #tpu.dot_dimension_numbers<[1], [1], [0], [0], [0, 0, 1, 0], [], []>} : vector<48x32xf32>, vector<48x32xf32>, vector<48x48xf32> -> vector<48x48xf32>
    %162 = vector.broadcast %31 : vector<1x48xf32> to vector<48x48xf32>
    %163 = arith.addf %161, %162 : vector<48x48xf32>
    %cst_72 = arith.constant dense<0xFF800000> : vector<48xf32>
    %164 = vector.multi_reduction <maximumf>, %163, %cst_72 [1] : vector<48x48xf32> to vector<48xf32>
    %165 = vector.shape_cast %164 : vector<48xf32> to vector<48x1xf32>
    %166 = vector.broadcast %165 : vector<48x1xf32> to vector<48x48xf32>
    %167 = arith.subf %163, %166 : vector<48x48xf32>
    %168 = math.exp %167 : vector<48x48xf32>
    %cst_73 = arith.constant dense<0.000000e+00> : vector<48xf32>
    %169 = vector.multi_reduction <add>, %168, %cst_73 [1] : vector<48x48xf32> to vector<48xf32>
    %170 = vector.shape_cast %169 : vector<48xf32> to vector<48x1xf32>
    %171 = tpu.reciprocal %170 {approx = true} : vector<48x1xf32> -> vector<48x1xf32>
    %172 = vector.broadcast %171 : vector<48x1xf32> to vector<48x48xf32>
    %173 = arith.mulf %168, %172 : vector<48x48xf32>
    %cst_74 = arith.constant dense<0.000000e+00> : vector<48x32xf32>
    %174 = tpu.matmul %173, %160, %cst_74 {dimension_numbers = #tpu.dot_dimension_numbers<[1], [0], [0], [1], [0, 0, 1, 1], [], []>} : vector<48x48xf32>, vector<48x32xf32>, vector<48x32xf32> -> vector<48x32xf32>
    %cst_75 = arith.constant dense<0.000000e+00> : vector<48x32xf32>
    %175 = tpu.matmul %174, %4, %cst_75 {dimension_numbers = #tpu.dot_dimension_numbers<[1], [0], [0], [1], [0, 0, 1, 1], [], []>} : vector<48x32xf32>, vector<32x32xf32>, vector<48x32xf32> -> vector<48x32xf32>
    %176 = vector.broadcast %6 : vector<1x32xf32> to vector<48x32xf32>
    %177 = arith.addf %175, %176 : vector<48x32xf32>
    %178 = tpu.transpose %177, [1, 0] : vector<48x32xf32> -> vector<32x48xf32>
    %cst_76 = arith.constant dense<0.000000e+00> : vector<32x240xf32>
    %179 = tpu.matmul %178, %14, %cst_76 {dimension_numbers = #tpu.dot_dimension_numbers<[1], [0], [0], [1], [0, 0, 1, 1], [], []>} : vector<32x48xf32>, vector<48x240xf32>, vector<32x240xf32> -> vector<32x240xf32>
    %180 = vector.broadcast %15 : vector<1x240xf32> to vector<32x240xf32>
    %181 = arith.addf %179, %180 : vector<32x240xf32>
    %cst_77 = arith.constant 0.000000e+00 : f32
    %182 = vector.broadcast %cst_77 : f32 to vector<32x48xf32>
    %183 = vector.extract_strided_slice %181 {offsets = [0, 0], sizes = [32, 16], strides = [1, 1]} : vector<32x240xf32> to vector<32x16xf32>
    %184 = vector.extract_strided_slice %181 {offsets = [0, 80], sizes = [32, 16], strides = [1, 1]} : vector<32x240xf32> to vector<32x16xf32>
    %185 = vector.extract_strided_slice %181 {offsets = [0, 160], sizes = [32, 16], strides = [1, 1]} : vector<32x240xf32> to vector<32x16xf32>
    %cst_78 = arith.constant dense<0.000000e+00> : vector<32x32xf32>
    %186 = tpu.matmul %183, %184, %cst_78 {dimension_numbers = #tpu.dot_dimension_numbers<[1], [1], [0], [0], [0, 0, 1, 0], [], []>} : vector<32x16xf32>, vector<32x16xf32>, vector<32x32xf32> -> vector<32x32xf32>
    %cst_79 = arith.constant dense<0xFF800000> : vector<32xf32>
    %187 = vector.multi_reduction <maximumf>, %186, %cst_79 [1] : vector<32x32xf32> to vector<32xf32>
    %188 = vector.shape_cast %187 : vector<32xf32> to vector<32x1xf32>
    %189 = vector.broadcast %188 : vector<32x1xf32> to vector<32x32xf32>
    %190 = arith.subf %186, %189 : vector<32x32xf32>
    %191 = math.exp %190 : vector<32x32xf32>
    %cst_80 = arith.constant dense<0.000000e+00> : vector<32xf32>
    %192 = vector.multi_reduction <add>, %191, %cst_80 [1] : vector<32x32xf32> to vector<32xf32>
    %193 = vector.shape_cast %192 : vector<32xf32> to vector<32x1xf32>
    %194 = tpu.reciprocal %193 {approx = true} : vector<32x1xf32> -> vector<32x1xf32>
    %195 = vector.broadcast %194 : vector<32x1xf32> to vector<32x32xf32>
    %196 = arith.mulf %191, %195 : vector<32x32xf32>
    %cst_81 = arith.constant dense<0.000000e+00> : vector<32x16xf32>
    %197 = tpu.matmul %196, %185, %cst_81 {dimension_numbers = #tpu.dot_dimension_numbers<[1], [0], [0], [1], [0, 0, 1, 1], [], []>} : vector<32x32xf32>, vector<32x16xf32>, vector<32x16xf32> -> vector<32x16xf32>
    %198 = vector.extract_strided_slice %16 {offsets = [0, 0], sizes = [16, 48], strides = [1, 1]} : vector<80x48xf32> to vector<16x48xf32>
    %cst_82 = arith.constant dense<0.000000e+00> : vector<32x48xf32>
    %199 = tpu.matmul %197, %198, %cst_82 {dimension_numbers = #tpu.dot_dimension_numbers<[1], [0], [0], [1], [0, 0, 1, 1], [], []>} : vector<32x16xf32>, vector<16x48xf32>, vector<32x48xf32> -> vector<32x48xf32>
    %200 = arith.addf %182, %199 : vector<32x48xf32>
    %201 = vector.extract_strided_slice %181 {offsets = [0, 16], sizes = [32, 16], strides = [1, 1]} : vector<32x240xf32> to vector<32x16xf32>
    %202 = vector.extract_strided_slice %181 {offsets = [0, 96], sizes = [32, 16], strides = [1, 1]} : vector<32x240xf32> to vector<32x16xf32>
    %203 = vector.extract_strided_slice %181 {offsets = [0, 176], sizes = [32, 16], strides = [1, 1]} : vector<32x240xf32> to vector<32x16xf32>
    %cst_83 = arith.constant dense<0.000000e+00> : vector<32x32xf32>
    %204 = tpu.matmul %201, %202, %cst_83 {dimension_numbers = #tpu.dot_dimension_numbers<[1], [1], [0], [0], [0, 0, 1, 0], [], []>} : vector<32x16xf32>, vector<32x16xf32>, vector<32x32xf32> -> vector<32x32xf32>
    %cst_84 = arith.constant dense<0xFF800000> : vector<32xf32>
    %205 = vector.multi_reduction <maximumf>, %204, %cst_84 [1] : vector<32x32xf32> to vector<32xf32>
    %206 = vector.shape_cast %205 : vector<32xf32> to vector<32x1xf32>
    %207 = vector.broadcast %206 : vector<32x1xf32> to vector<32x32xf32>
    %208 = arith.subf %204, %207 : vector<32x32xf32>
    %209 = math.exp %208 : vector<32x32xf32>
    %cst_85 = arith.constant dense<0.000000e+00> : vector<32xf32>
    %210 = vector.multi_reduction <add>, %209, %cst_85 [1] : vector<32x32xf32> to vector<32xf32>
    %211 = vector.shape_cast %210 : vector<32xf32> to vector<32x1xf32>
    %212 = tpu.reciprocal %211 {approx = true} : vector<32x1xf32> -> vector<32x1xf32>
    %213 = vector.broadcast %212 : vector<32x1xf32> to vector<32x32xf32>
    %214 = arith.mulf %209, %213 : vector<32x32xf32>
    %cst_86 = arith.constant dense<0.000000e+00> : vector<32x16xf32>
    %215 = tpu.matmul %214, %203, %cst_86 {dimension_numbers = #tpu.dot_dimension_numbers<[1], [0], [0], [1], [0, 0, 1, 1], [], []>} : vector<32x32xf32>, vector<32x16xf32>, vector<32x16xf32> -> vector<32x16xf32>
    %216 = vector.extract_strided_slice %16 {offsets = [16, 0], sizes = [16, 48], strides = [1, 1]} : vector<80x48xf32> to vector<16x48xf32>
    %cst_87 = arith.constant dense<0.000000e+00> : vector<32x48xf32>
    %217 = tpu.matmul %215, %216, %cst_87 {dimension_numbers = #tpu.dot_dimension_numbers<[1], [0], [0], [1], [0, 0, 1, 1], [], []>} : vector<32x16xf32>, vector<16x48xf32>, vector<32x48xf32> -> vector<32x48xf32>
    %218 = arith.addf %200, %217 : vector<32x48xf32>
    %219 = vector.extract_strided_slice %181 {offsets = [0, 32], sizes = [32, 16], strides = [1, 1]} : vector<32x240xf32> to vector<32x16xf32>
    %220 = vector.extract_strided_slice %181 {offsets = [0, 112], sizes = [32, 16], strides = [1, 1]} : vector<32x240xf32> to vector<32x16xf32>
    %221 = vector.extract_strided_slice %181 {offsets = [0, 192], sizes = [32, 16], strides = [1, 1]} : vector<32x240xf32> to vector<32x16xf32>
    %cst_88 = arith.constant dense<0.000000e+00> : vector<32x32xf32>
    %222 = tpu.matmul %219, %220, %cst_88 {dimension_numbers = #tpu.dot_dimension_numbers<[1], [1], [0], [0], [0, 0, 1, 0], [], []>} : vector<32x16xf32>, vector<32x16xf32>, vector<32x32xf32> -> vector<32x32xf32>
    %cst_89 = arith.constant dense<0xFF800000> : vector<32xf32>
    %223 = vector.multi_reduction <maximumf>, %222, %cst_89 [1] : vector<32x32xf32> to vector<32xf32>
    %224 = vector.shape_cast %223 : vector<32xf32> to vector<32x1xf32>
    %225 = vector.broadcast %224 : vector<32x1xf32> to vector<32x32xf32>
    %226 = arith.subf %222, %225 : vector<32x32xf32>
    %227 = math.exp %226 : vector<32x32xf32>
    %cst_90 = arith.constant dense<0.000000e+00> : vector<32xf32>
    %228 = vector.multi_reduction <add>, %227, %cst_90 [1] : vector<32x32xf32> to vector<32xf32>
    %229 = vector.shape_cast %228 : vector<32xf32> to vector<32x1xf32>
    %230 = tpu.reciprocal %229 {approx = true} : vector<32x1xf32> -> vector<32x1xf32>
    %231 = vector.broadcast %230 : vector<32x1xf32> to vector<32x32xf32>
    %232 = arith.mulf %227, %231 : vector<32x32xf32>
    %cst_91 = arith.constant dense<0.000000e+00> : vector<32x16xf32>
    %233 = tpu.matmul %232, %221, %cst_91 {dimension_numbers = #tpu.dot_dimension_numbers<[1], [0], [0], [1], [0, 0, 1, 1], [], []>} : vector<32x32xf32>, vector<32x16xf32>, vector<32x16xf32> -> vector<32x16xf32>
    %234 = vector.extract_strided_slice %16 {offsets = [32, 0], sizes = [16, 48], strides = [1, 1]} : vector<80x48xf32> to vector<16x48xf32>
    %cst_92 = arith.constant dense<0.000000e+00> : vector<32x48xf32>
    %235 = tpu.matmul %233, %234, %cst_92 {dimension_numbers = #tpu.dot_dimension_numbers<[1], [0], [0], [1], [0, 0, 1, 1], [], []>} : vector<32x16xf32>, vector<16x48xf32>, vector<32x48xf32> -> vector<32x48xf32>
    %236 = arith.addf %218, %235 : vector<32x48xf32>
    %237 = vector.extract_strided_slice %181 {offsets = [0, 48], sizes = [32, 16], strides = [1, 1]} : vector<32x240xf32> to vector<32x16xf32>
    %238 = vector.extract_strided_slice %181 {offsets = [0, 128], sizes = [32, 16], strides = [1, 1]} : vector<32x240xf32> to vector<32x16xf32>
    %239 = vector.extract_strided_slice %181 {offsets = [0, 208], sizes = [32, 16], strides = [1, 1]} : vector<32x240xf32> to vector<32x16xf32>
    %cst_93 = arith.constant dense<0.000000e+00> : vector<32x32xf32>
    %240 = tpu.matmul %237, %238, %cst_93 {dimension_numbers = #tpu.dot_dimension_numbers<[1], [1], [0], [0], [0, 0, 1, 0], [], []>} : vector<32x16xf32>, vector<32x16xf32>, vector<32x32xf32> -> vector<32x32xf32>
    %cst_94 = arith.constant dense<0xFF800000> : vector<32xf32>
    %241 = vector.multi_reduction <maximumf>, %240, %cst_94 [1] : vector<32x32xf32> to vector<32xf32>
    %242 = vector.shape_cast %241 : vector<32xf32> to vector<32x1xf32>
    %243 = vector.broadcast %242 : vector<32x1xf32> to vector<32x32xf32>
    %244 = arith.subf %240, %243 : vector<32x32xf32>
    %245 = math.exp %244 : vector<32x32xf32>
    %cst_95 = arith.constant dense<0.000000e+00> : vector<32xf32>
    %246 = vector.multi_reduction <add>, %245, %cst_95 [1] : vector<32x32xf32> to vector<32xf32>
    %247 = vector.shape_cast %246 : vector<32xf32> to vector<32x1xf32>
    %248 = tpu.reciprocal %247 {approx = true} : vector<32x1xf32> -> vector<32x1xf32>
    %249 = vector.broadcast %248 : vector<32x1xf32> to vector<32x32xf32>
    %250 = arith.mulf %245, %249 : vector<32x32xf32>
    %cst_96 = arith.constant dense<0.000000e+00> : vector<32x16xf32>
    %251 = tpu.matmul %250, %239, %cst_96 {dimension_numbers = #tpu.dot_dimension_numbers<[1], [0], [0], [1], [0, 0, 1, 1], [], []>} : vector<32x32xf32>, vector<32x16xf32>, vector<32x16xf32> -> vector<32x16xf32>
    %252 = vector.extract_strided_slice %16 {offsets = [48, 0], sizes = [16, 48], strides = [1, 1]} : vector<80x48xf32> to vector<16x48xf32>
    %cst_97 = arith.constant dense<0.000000e+00> : vector<32x48xf32>
    %253 = tpu.matmul %251, %252, %cst_97 {dimension_numbers = #tpu.dot_dimension_numbers<[1], [0], [0], [1], [0, 0, 1, 1], [], []>} : vector<32x16xf32>, vector<16x48xf32>, vector<32x48xf32> -> vector<32x48xf32>
    %254 = arith.addf %236, %253 : vector<32x48xf32>
    %255 = vector.extract_strided_slice %181 {offsets = [0, 64], sizes = [32, 16], strides = [1, 1]} : vector<32x240xf32> to vector<32x16xf32>
    %256 = vector.extract_strided_slice %181 {offsets = [0, 144], sizes = [32, 16], strides = [1, 1]} : vector<32x240xf32> to vector<32x16xf32>
    %257 = vector.extract_strided_slice %181 {offsets = [0, 224], sizes = [32, 16], strides = [1, 1]} : vector<32x240xf32> to vector<32x16xf32>
    %cst_98 = arith.constant dense<0.000000e+00> : vector<32x32xf32>
    %258 = tpu.matmul %255, %256, %cst_98 {dimension_numbers = #tpu.dot_dimension_numbers<[1], [1], [0], [0], [0, 0, 1, 0], [], []>} : vector<32x16xf32>, vector<32x16xf32>, vector<32x32xf32> -> vector<32x32xf32>
    %cst_99 = arith.constant dense<0xFF800000> : vector<32xf32>
    %259 = vector.multi_reduction <maximumf>, %258, %cst_99 [1] : vector<32x32xf32> to vector<32xf32>
    %260 = vector.shape_cast %259 : vector<32xf32> to vector<32x1xf32>
    %261 = vector.broadcast %260 : vector<32x1xf32> to vector<32x32xf32>
    %262 = arith.subf %258, %261 : vector<32x32xf32>
    %263 = math.exp %262 : vector<32x32xf32>
    %cst_100 = arith.constant dense<0.000000e+00> : vector<32xf32>
    %264 = vector.multi_reduction <add>, %263, %cst_100 [1] : vector<32x32xf32> to vector<32xf32>
    %265 = vector.shape_cast %264 : vector<32xf32> to vector<32x1xf32>
    %266 = tpu.reciprocal %265 {approx = true} : vector<32x1xf32> -> vector<32x1xf32>
    %267 = vector.broadcast %266 : vector<32x1xf32> to vector<32x32xf32>
    %268 = arith.mulf %263, %267 : vector<32x32xf32>
    %cst_101 = arith.constant dense<0.000000e+00> : vector<32x16xf32>
    %269 = tpu.matmul %268, %257, %cst_101 {dimension_numbers = #tpu.dot_dimension_numbers<[1], [0], [0], [1], [0, 0, 1, 1], [], []>} : vector<32x32xf32>, vector<32x16xf32>, vector<32x16xf32> -> vector<32x16xf32>
    %270 = vector.extract_strided_slice %16 {offsets = [64, 0], sizes = [16, 48], strides = [1, 1]} : vector<80x48xf32> to vector<16x48xf32>
    %cst_102 = arith.constant dense<0.000000e+00> : vector<32x48xf32>
    %271 = tpu.matmul %269, %270, %cst_102 {dimension_numbers = #tpu.dot_dimension_numbers<[1], [0], [0], [1], [0, 0, 1, 1], [], []>} : vector<32x16xf32>, vector<16x48xf32>, vector<32x48xf32> -> vector<32x48xf32>
    %272 = arith.addf %254, %271 : vector<32x48xf32>
    %273 = vector.broadcast %17 : vector<1x48xf32> to vector<32x48xf32>
    %274 = arith.addf %272, %273 : vector<32x48xf32>
    %275 = tpu.transpose %274, [1, 0] : vector<32x48xf32> -> vector<48x32xf32>
    %276 = vector.extract_strided_slice %37 {offsets = [96, 0], sizes = [48, 32], strides = [1, 1]} : vector<192x32xf32> to vector<48x32xf32>
    %277 = vector.extract_strided_slice %38 {offsets = [96, 0], sizes = [48, 32], strides = [1, 1]} : vector<192x32xf32> to vector<48x32xf32>
    %278 = vector.extract_strided_slice %39 {offsets = [96, 0], sizes = [48, 32], strides = [1, 1]} : vector<192x32xf32> to vector<48x32xf32>
    %cst_103 = arith.constant dense<0.000000e+00> : vector<48x48xf32>
    %279 = tpu.matmul %276, %277, %cst_103 {dimension_numbers = #tpu.dot_dimension_numbers<[1], [1], [0], [0], [0, 0, 1, 0], [], []>} : vector<48x32xf32>, vector<48x32xf32>, vector<48x48xf32> -> vector<48x48xf32>
    %280 = vector.broadcast %31 : vector<1x48xf32> to vector<48x48xf32>
    %281 = arith.addf %279, %280 : vector<48x48xf32>
    %cst_104 = arith.constant dense<0xFF800000> : vector<48xf32>
    %282 = vector.multi_reduction <maximumf>, %281, %cst_104 [1] : vector<48x48xf32> to vector<48xf32>
    %283 = vector.shape_cast %282 : vector<48xf32> to vector<48x1xf32>
    %284 = vector.broadcast %283 : vector<48x1xf32> to vector<48x48xf32>
    %285 = arith.subf %281, %284 : vector<48x48xf32>
    %286 = math.exp %285 : vector<48x48xf32>
    %cst_105 = arith.constant dense<0.000000e+00> : vector<48xf32>
    %287 = vector.multi_reduction <add>, %286, %cst_105 [1] : vector<48x48xf32> to vector<48xf32>
    %288 = vector.shape_cast %287 : vector<48xf32> to vector<48x1xf32>
    %289 = tpu.reciprocal %288 {approx = true} : vector<48x1xf32> -> vector<48x1xf32>
    %290 = vector.broadcast %289 : vector<48x1xf32> to vector<48x48xf32>
    %291 = arith.mulf %286, %290 : vector<48x48xf32>
    %cst_106 = arith.constant dense<0.000000e+00> : vector<48x32xf32>
    %292 = tpu.matmul %291, %278, %cst_106 {dimension_numbers = #tpu.dot_dimension_numbers<[1], [0], [0], [1], [0, 0, 1, 1], [], []>} : vector<48x48xf32>, vector<48x32xf32>, vector<48x32xf32> -> vector<48x32xf32>
    %cst_107 = arith.constant dense<0.000000e+00> : vector<48x32xf32>
    %293 = tpu.matmul %292, %4, %cst_107 {dimension_numbers = #tpu.dot_dimension_numbers<[1], [0], [0], [1], [0, 0, 1, 1], [], []>} : vector<48x32xf32>, vector<32x32xf32>, vector<48x32xf32> -> vector<48x32xf32>
    %294 = vector.broadcast %6 : vector<1x32xf32> to vector<48x32xf32>
    %295 = arith.addf %293, %294 : vector<48x32xf32>
    %296 = tpu.transpose %295, [1, 0] : vector<48x32xf32> -> vector<32x48xf32>
    %cst_108 = arith.constant dense<0.000000e+00> : vector<32x240xf32>
    %297 = tpu.matmul %296, %14, %cst_108 {dimension_numbers = #tpu.dot_dimension_numbers<[1], [0], [0], [1], [0, 0, 1, 1], [], []>} : vector<32x48xf32>, vector<48x240xf32>, vector<32x240xf32> -> vector<32x240xf32>
    %298 = vector.broadcast %15 : vector<1x240xf32> to vector<32x240xf32>
    %299 = arith.addf %297, %298 : vector<32x240xf32>
    %cst_109 = arith.constant 0.000000e+00 : f32
    %300 = vector.broadcast %cst_109 : f32 to vector<32x48xf32>
    %301 = vector.extract_strided_slice %299 {offsets = [0, 0], sizes = [32, 16], strides = [1, 1]} : vector<32x240xf32> to vector<32x16xf32>
    %302 = vector.extract_strided_slice %299 {offsets = [0, 80], sizes = [32, 16], strides = [1, 1]} : vector<32x240xf32> to vector<32x16xf32>
    %303 = vector.extract_strided_slice %299 {offsets = [0, 160], sizes = [32, 16], strides = [1, 1]} : vector<32x240xf32> to vector<32x16xf32>
    %cst_110 = arith.constant dense<0.000000e+00> : vector<32x32xf32>
    %304 = tpu.matmul %301, %302, %cst_110 {dimension_numbers = #tpu.dot_dimension_numbers<[1], [1], [0], [0], [0, 0, 1, 0], [], []>} : vector<32x16xf32>, vector<32x16xf32>, vector<32x32xf32> -> vector<32x32xf32>
    %cst_111 = arith.constant dense<0xFF800000> : vector<32xf32>
    %305 = vector.multi_reduction <maximumf>, %304, %cst_111 [1] : vector<32x32xf32> to vector<32xf32>
    %306 = vector.shape_cast %305 : vector<32xf32> to vector<32x1xf32>
    %307 = vector.broadcast %306 : vector<32x1xf32> to vector<32x32xf32>
    %308 = arith.subf %304, %307 : vector<32x32xf32>
    %309 = math.exp %308 : vector<32x32xf32>
    %cst_112 = arith.constant dense<0.000000e+00> : vector<32xf32>
    %310 = vector.multi_reduction <add>, %309, %cst_112 [1] : vector<32x32xf32> to vector<32xf32>
    %311 = vector.shape_cast %310 : vector<32xf32> to vector<32x1xf32>
    %312 = tpu.reciprocal %311 {approx = true} : vector<32x1xf32> -> vector<32x1xf32>
    %313 = vector.broadcast %312 : vector<32x1xf32> to vector<32x32xf32>
    %314 = arith.mulf %309, %313 : vector<32x32xf32>
    %cst_113 = arith.constant dense<0.000000e+00> : vector<32x16xf32>
    %315 = tpu.matmul %314, %303, %cst_113 {dimension_numbers = #tpu.dot_dimension_numbers<[1], [0], [0], [1], [0, 0, 1, 1], [], []>} : vector<32x32xf32>, vector<32x16xf32>, vector<32x16xf32> -> vector<32x16xf32>
    %316 = vector.extract_strided_slice %16 {offsets = [0, 0], sizes = [16, 48], strides = [1, 1]} : vector<80x48xf32> to vector<16x48xf32>
    %cst_114 = arith.constant dense<0.000000e+00> : vector<32x48xf32>
    %317 = tpu.matmul %315, %316, %cst_114 {dimension_numbers = #tpu.dot_dimension_numbers<[1], [0], [0], [1], [0, 0, 1, 1], [], []>} : vector<32x16xf32>, vector<16x48xf32>, vector<32x48xf32> -> vector<32x48xf32>
    %318 = arith.addf %300, %317 : vector<32x48xf32>
    %319 = vector.extract_strided_slice %299 {offsets = [0, 16], sizes = [32, 16], strides = [1, 1]} : vector<32x240xf32> to vector<32x16xf32>
    %320 = vector.extract_strided_slice %299 {offsets = [0, 96], sizes = [32, 16], strides = [1, 1]} : vector<32x240xf32> to vector<32x16xf32>
    %321 = vector.extract_strided_slice %299 {offsets = [0, 176], sizes = [32, 16], strides = [1, 1]} : vector<32x240xf32> to vector<32x16xf32>
    %cst_115 = arith.constant dense<0.000000e+00> : vector<32x32xf32>
    %322 = tpu.matmul %319, %320, %cst_115 {dimension_numbers = #tpu.dot_dimension_numbers<[1], [1], [0], [0], [0, 0, 1, 0], [], []>} : vector<32x16xf32>, vector<32x16xf32>, vector<32x32xf32> -> vector<32x32xf32>
    %cst_116 = arith.constant dense<0xFF800000> : vector<32xf32>
    %323 = vector.multi_reduction <maximumf>, %322, %cst_116 [1] : vector<32x32xf32> to vector<32xf32>
    %324 = vector.shape_cast %323 : vector<32xf32> to vector<32x1xf32>
    %325 = vector.broadcast %324 : vector<32x1xf32> to vector<32x32xf32>
    %326 = arith.subf %322, %325 : vector<32x32xf32>
    %327 = math.exp %326 : vector<32x32xf32>
    %cst_117 = arith.constant dense<0.000000e+00> : vector<32xf32>
    %328 = vector.multi_reduction <add>, %327, %cst_117 [1] : vector<32x32xf32> to vector<32xf32>
    %329 = vector.shape_cast %328 : vector<32xf32> to vector<32x1xf32>
    %330 = tpu.reciprocal %329 {approx = true} : vector<32x1xf32> -> vector<32x1xf32>
    %331 = vector.broadcast %330 : vector<32x1xf32> to vector<32x32xf32>
    %332 = arith.mulf %327, %331 : vector<32x32xf32>
    %cst_118 = arith.constant dense<0.000000e+00> : vector<32x16xf32>
    %333 = tpu.matmul %332, %321, %cst_118 {dimension_numbers = #tpu.dot_dimension_numbers<[1], [0], [0], [1], [0, 0, 1, 1], [], []>} : vector<32x32xf32>, vector<32x16xf32>, vector<32x16xf32> -> vector<32x16xf32>
    %334 = vector.extract_strided_slice %16 {offsets = [16, 0], sizes = [16, 48], strides = [1, 1]} : vector<80x48xf32> to vector<16x48xf32>
    %cst_119 = arith.constant dense<0.000000e+00> : vector<32x48xf32>
    %335 = tpu.matmul %333, %334, %cst_119 {dimension_numbers = #tpu.dot_dimension_numbers<[1], [0], [0], [1], [0, 0, 1, 1], [], []>} : vector<32x16xf32>, vector<16x48xf32>, vector<32x48xf32> -> vector<32x48xf32>
    %336 = arith.addf %318, %335 : vector<32x48xf32>
    %337 = vector.extract_strided_slice %299 {offsets = [0, 32], sizes = [32, 16], strides = [1, 1]} : vector<32x240xf32> to vector<32x16xf32>
    %338 = vector.extract_strided_slice %299 {offsets = [0, 112], sizes = [32, 16], strides = [1, 1]} : vector<32x240xf32> to vector<32x16xf32>
    %339 = vector.extract_strided_slice %299 {offsets = [0, 192], sizes = [32, 16], strides = [1, 1]} : vector<32x240xf32> to vector<32x16xf32>
    %cst_120 = arith.constant dense<0.000000e+00> : vector<32x32xf32>
    %340 = tpu.matmul %337, %338, %cst_120 {dimension_numbers = #tpu.dot_dimension_numbers<[1], [1], [0], [0], [0, 0, 1, 0], [], []>} : vector<32x16xf32>, vector<32x16xf32>, vector<32x32xf32> -> vector<32x32xf32>
    %cst_121 = arith.constant dense<0xFF800000> : vector<32xf32>
    %341 = vector.multi_reduction <maximumf>, %340, %cst_121 [1] : vector<32x32xf32> to vector<32xf32>
    %342 = vector.shape_cast %341 : vector<32xf32> to vector<32x1xf32>
    %343 = vector.broadcast %342 : vector<32x1xf32> to vector<32x32xf32>
    %344 = arith.subf %340, %343 : vector<32x32xf32>
    %345 = math.exp %344 : vector<32x32xf32>
    %cst_122 = arith.constant dense<0.000000e+00> : vector<32xf32>
    %346 = vector.multi_reduction <add>, %345, %cst_122 [1] : vector<32x32xf32> to vector<32xf32>
    %347 = vector.shape_cast %346 : vector<32xf32> to vector<32x1xf32>
    %348 = tpu.reciprocal %347 {approx = true} : vector<32x1xf32> -> vector<32x1xf32>
    %349 = vector.broadcast %348 : vector<32x1xf32> to vector<32x32xf32>
    %350 = arith.mulf %345, %349 : vector<32x32xf32>
    %cst_123 = arith.constant dense<0.000000e+00> : vector<32x16xf32>
    %351 = tpu.matmul %350, %339, %cst_123 {dimension_numbers = #tpu.dot_dimension_numbers<[1], [0], [0], [1], [0, 0, 1, 1], [], []>} : vector<32x32xf32>, vector<32x16xf32>, vector<32x16xf32> -> vector<32x16xf32>
    %352 = vector.extract_strided_slice %16 {offsets = [32, 0], sizes = [16, 48], strides = [1, 1]} : vector<80x48xf32> to vector<16x48xf32>
    %cst_124 = arith.constant dense<0.000000e+00> : vector<32x48xf32>
    %353 = tpu.matmul %351, %352, %cst_124 {dimension_numbers = #tpu.dot_dimension_numbers<[1], [0], [0], [1], [0, 0, 1, 1], [], []>} : vector<32x16xf32>, vector<16x48xf32>, vector<32x48xf32> -> vector<32x48xf32>
    %354 = arith.addf %336, %353 : vector<32x48xf32>
    %355 = vector.extract_strided_slice %299 {offsets = [0, 48], sizes = [32, 16], strides = [1, 1]} : vector<32x240xf32> to vector<32x16xf32>
    %356 = vector.extract_strided_slice %299 {offsets = [0, 128], sizes = [32, 16], strides = [1, 1]} : vector<32x240xf32> to vector<32x16xf32>
    %357 = vector.extract_strided_slice %299 {offsets = [0, 208], sizes = [32, 16], strides = [1, 1]} : vector<32x240xf32> to vector<32x16xf32>
    %cst_125 = arith.constant dense<0.000000e+00> : vector<32x32xf32>
    %358 = tpu.matmul %355, %356, %cst_125 {dimension_numbers = #tpu.dot_dimension_numbers<[1], [1], [0], [0], [0, 0, 1, 0], [], []>} : vector<32x16xf32>, vector<32x16xf32>, vector<32x32xf32> -> vector<32x32xf32>
    %cst_126 = arith.constant dense<0xFF800000> : vector<32xf32>
    %359 = vector.multi_reduction <maximumf>, %358, %cst_126 [1] : vector<32x32xf32> to vector<32xf32>
    %360 = vector.shape_cast %359 : vector<32xf32> to vector<32x1xf32>
    %361 = vector.broadcast %360 : vector<32x1xf32> to vector<32x32xf32>
    %362 = arith.subf %358, %361 : vector<32x32xf32>
    %363 = math.exp %362 : vector<32x32xf32>
    %cst_127 = arith.constant dense<0.000000e+00> : vector<32xf32>
    %364 = vector.multi_reduction <add>, %363, %cst_127 [1] : vector<32x32xf32> to vector<32xf32>
    %365 = vector.shape_cast %364 : vector<32xf32> to vector<32x1xf32>
    %366 = tpu.reciprocal %365 {approx = true} : vector<32x1xf32> -> vector<32x1xf32>
    %367 = vector.broadcast %366 : vector<32x1xf32> to vector<32x32xf32>
    %368 = arith.mulf %363, %367 : vector<32x32xf32>
    %cst_128 = arith.constant dense<0.000000e+00> : vector<32x16xf32>
    %369 = tpu.matmul %368, %357, %cst_128 {dimension_numbers = #tpu.dot_dimension_numbers<[1], [0], [0], [1], [0, 0, 1, 1], [], []>} : vector<32x32xf32>, vector<32x16xf32>, vector<32x16xf32> -> vector<32x16xf32>
    %370 = vector.extract_strided_slice %16 {offsets = [48, 0], sizes = [16, 48], strides = [1, 1]} : vector<80x48xf32> to vector<16x48xf32>
    %cst_129 = arith.constant dense<0.000000e+00> : vector<32x48xf32>
    %371 = tpu.matmul %369, %370, %cst_129 {dimension_numbers = #tpu.dot_dimension_numbers<[1], [0], [0], [1], [0, 0, 1, 1], [], []>} : vector<32x16xf32>, vector<16x48xf32>, vector<32x48xf32> -> vector<32x48xf32>
    %372 = arith.addf %354, %371 : vector<32x48xf32>
    %373 = vector.extract_strided_slice %299 {offsets = [0, 64], sizes = [32, 16], strides = [1, 1]} : vector<32x240xf32> to vector<32x16xf32>
    %374 = vector.extract_strided_slice %299 {offsets = [0, 144], sizes = [32, 16], strides = [1, 1]} : vector<32x240xf32> to vector<32x16xf32>
    %375 = vector.extract_strided_slice %299 {offsets = [0, 224], sizes = [32, 16], strides = [1, 1]} : vector<32x240xf32> to vector<32x16xf32>
    %cst_130 = arith.constant dense<0.000000e+00> : vector<32x32xf32>
    %376 = tpu.matmul %373, %374, %cst_130 {dimension_numbers = #tpu.dot_dimension_numbers<[1], [1], [0], [0], [0, 0, 1, 0], [], []>} : vector<32x16xf32>, vector<32x16xf32>, vector<32x32xf32> -> vector<32x32xf32>
    %cst_131 = arith.constant dense<0xFF800000> : vector<32xf32>
    %377 = vector.multi_reduction <maximumf>, %376, %cst_131 [1] : vector<32x32xf32> to vector<32xf32>
    %378 = vector.shape_cast %377 : vector<32xf32> to vector<32x1xf32>
    %379 = vector.broadcast %378 : vector<32x1xf32> to vector<32x32xf32>
    %380 = arith.subf %376, %379 : vector<32x32xf32>
    %381 = math.exp %380 : vector<32x32xf32>
    %cst_132 = arith.constant dense<0.000000e+00> : vector<32xf32>
    %382 = vector.multi_reduction <add>, %381, %cst_132 [1] : vector<32x32xf32> to vector<32xf32>
    %383 = vector.shape_cast %382 : vector<32xf32> to vector<32x1xf32>
    %384 = tpu.reciprocal %383 {approx = true} : vector<32x1xf32> -> vector<32x1xf32>
    %385 = vector.broadcast %384 : vector<32x1xf32> to vector<32x32xf32>
    %386 = arith.mulf %381, %385 : vector<32x32xf32>
    %cst_133 = arith.constant dense<0.000000e+00> : vector<32x16xf32>
    %387 = tpu.matmul %386, %375, %cst_133 {dimension_numbers = #tpu.dot_dimension_numbers<[1], [0], [0], [1], [0, 0, 1, 1], [], []>} : vector<32x32xf32>, vector<32x16xf32>, vector<32x16xf32> -> vector<32x16xf32>
    %388 = vector.extract_strided_slice %16 {offsets = [64, 0], sizes = [16, 48], strides = [1, 1]} : vector<80x48xf32> to vector<16x48xf32>
    %cst_134 = arith.constant dense<0.000000e+00> : vector<32x48xf32>
    %389 = tpu.matmul %387, %388, %cst_134 {dimension_numbers = #tpu.dot_dimension_numbers<[1], [0], [0], [1], [0, 0, 1, 1], [], []>} : vector<32x16xf32>, vector<16x48xf32>, vector<32x48xf32> -> vector<32x48xf32>
    %390 = arith.addf %372, %389 : vector<32x48xf32>
    %391 = vector.broadcast %17 : vector<1x48xf32> to vector<32x48xf32>
    %392 = arith.addf %390, %391 : vector<32x48xf32>
    %393 = tpu.transpose %392, [1, 0] : vector<32x48xf32> -> vector<48x32xf32>
    %394 = vector.extract_strided_slice %37 {offsets = [144, 0], sizes = [48, 32], strides = [1, 1]} : vector<192x32xf32> to vector<48x32xf32>
    %395 = vector.extract_strided_slice %38 {offsets = [144, 0], sizes = [48, 32], strides = [1, 1]} : vector<192x32xf32> to vector<48x32xf32>
    %396 = vector.extract_strided_slice %39 {offsets = [144, 0], sizes = [48, 32], strides = [1, 1]} : vector<192x32xf32> to vector<48x32xf32>
    %cst_135 = arith.constant dense<0.000000e+00> : vector<48x48xf32>
    %397 = tpu.matmul %394, %395, %cst_135 {dimension_numbers = #tpu.dot_dimension_numbers<[1], [1], [0], [0], [0, 0, 1, 0], [], []>} : vector<48x32xf32>, vector<48x32xf32>, vector<48x48xf32> -> vector<48x48xf32>
    %398 = vector.broadcast %31 : vector<1x48xf32> to vector<48x48xf32>
    %399 = arith.addf %397, %398 : vector<48x48xf32>
    %cst_136 = arith.constant dense<0xFF800000> : vector<48xf32>
    %400 = vector.multi_reduction <maximumf>, %399, %cst_136 [1] : vector<48x48xf32> to vector<48xf32>
    %401 = vector.shape_cast %400 : vector<48xf32> to vector<48x1xf32>
    %402 = vector.broadcast %401 : vector<48x1xf32> to vector<48x48xf32>
    %403 = arith.subf %399, %402 : vector<48x48xf32>
    %404 = math.exp %403 : vector<48x48xf32>
    %cst_137 = arith.constant dense<0.000000e+00> : vector<48xf32>
    %405 = vector.multi_reduction <add>, %404, %cst_137 [1] : vector<48x48xf32> to vector<48xf32>
    %406 = vector.shape_cast %405 : vector<48xf32> to vector<48x1xf32>
    %407 = tpu.reciprocal %406 {approx = true} : vector<48x1xf32> -> vector<48x1xf32>
    %408 = vector.broadcast %407 : vector<48x1xf32> to vector<48x48xf32>
    %409 = arith.mulf %404, %408 : vector<48x48xf32>
    %cst_138 = arith.constant dense<0.000000e+00> : vector<48x32xf32>
    %410 = tpu.matmul %409, %396, %cst_138 {dimension_numbers = #tpu.dot_dimension_numbers<[1], [0], [0], [1], [0, 0, 1, 1], [], []>} : vector<48x48xf32>, vector<48x32xf32>, vector<48x32xf32> -> vector<48x32xf32>
    %cst_139 = arith.constant dense<0.000000e+00> : vector<48x32xf32>
    %411 = tpu.matmul %410, %4, %cst_139 {dimension_numbers = #tpu.dot_dimension_numbers<[1], [0], [0], [1], [0, 0, 1, 1], [], []>} : vector<48x32xf32>, vector<32x32xf32>, vector<48x32xf32> -> vector<48x32xf32>
    %412 = vector.broadcast %6 : vector<1x32xf32> to vector<48x32xf32>
    %413 = arith.addf %411, %412 : vector<48x32xf32>
    %414 = tpu.transpose %413, [1, 0] : vector<48x32xf32> -> vector<32x48xf32>
    %cst_140 = arith.constant dense<0.000000e+00> : vector<32x240xf32>
    %415 = tpu.matmul %414, %14, %cst_140 {dimension_numbers = #tpu.dot_dimension_numbers<[1], [0], [0], [1], [0, 0, 1, 1], [], []>} : vector<32x48xf32>, vector<48x240xf32>, vector<32x240xf32> -> vector<32x240xf32>
    %416 = vector.broadcast %15 : vector<1x240xf32> to vector<32x240xf32>
    %417 = arith.addf %415, %416 : vector<32x240xf32>
    %cst_141 = arith.constant 0.000000e+00 : f32
    %418 = vector.broadcast %cst_141 : f32 to vector<32x48xf32>
    %419 = vector.extract_strided_slice %417 {offsets = [0, 0], sizes = [32, 16], strides = [1, 1]} : vector<32x240xf32> to vector<32x16xf32>
    %420 = vector.extract_strided_slice %417 {offsets = [0, 80], sizes = [32, 16], strides = [1, 1]} : vector<32x240xf32> to vector<32x16xf32>
    %421 = vector.extract_strided_slice %417 {offsets = [0, 160], sizes = [32, 16], strides = [1, 1]} : vector<32x240xf32> to vector<32x16xf32>
    %cst_142 = arith.constant dense<0.000000e+00> : vector<32x32xf32>
    %422 = tpu.matmul %419, %420, %cst_142 {dimension_numbers = #tpu.dot_dimension_numbers<[1], [1], [0], [0], [0, 0, 1, 0], [], []>} : vector<32x16xf32>, vector<32x16xf32>, vector<32x32xf32> -> vector<32x32xf32>
    %cst_143 = arith.constant dense<0xFF800000> : vector<32xf32>
    %423 = vector.multi_reduction <maximumf>, %422, %cst_143 [1] : vector<32x32xf32> to vector<32xf32>
    %424 = vector.shape_cast %423 : vector<32xf32> to vector<32x1xf32>
    %425 = vector.broadcast %424 : vector<32x1xf32> to vector<32x32xf32>
    %426 = arith.subf %422, %425 : vector<32x32xf32>
    %427 = math.exp %426 : vector<32x32xf32>
    %cst_144 = arith.constant dense<0.000000e+00> : vector<32xf32>
    %428 = vector.multi_reduction <add>, %427, %cst_144 [1] : vector<32x32xf32> to vector<32xf32>
    %429 = vector.shape_cast %428 : vector<32xf32> to vector<32x1xf32>
    %430 = tpu.reciprocal %429 {approx = true} : vector<32x1xf32> -> vector<32x1xf32>
    %431 = vector.broadcast %430 : vector<32x1xf32> to vector<32x32xf32>
    %432 = arith.mulf %427, %431 : vector<32x32xf32>
    %cst_145 = arith.constant dense<0.000000e+00> : vector<32x16xf32>
    %433 = tpu.matmul %432, %421, %cst_145 {dimension_numbers = #tpu.dot_dimension_numbers<[1], [0], [0], [1], [0, 0, 1, 1], [], []>} : vector<32x32xf32>, vector<32x16xf32>, vector<32x16xf32> -> vector<32x16xf32>
    %434 = vector.extract_strided_slice %16 {offsets = [0, 0], sizes = [16, 48], strides = [1, 1]} : vector<80x48xf32> to vector<16x48xf32>
    %cst_146 = arith.constant dense<0.000000e+00> : vector<32x48xf32>
    %435 = tpu.matmul %433, %434, %cst_146 {dimension_numbers = #tpu.dot_dimension_numbers<[1], [0], [0], [1], [0, 0, 1, 1], [], []>} : vector<32x16xf32>, vector<16x48xf32>, vector<32x48xf32> -> vector<32x48xf32>
    %436 = arith.addf %418, %435 : vector<32x48xf32>
    %437 = vector.extract_strided_slice %417 {offsets = [0, 16], sizes = [32, 16], strides = [1, 1]} : vector<32x240xf32> to vector<32x16xf32>
    %438 = vector.extract_strided_slice %417 {offsets = [0, 96], sizes = [32, 16], strides = [1, 1]} : vector<32x240xf32> to vector<32x16xf32>
    %439 = vector.extract_strided_slice %417 {offsets = [0, 176], sizes = [32, 16], strides = [1, 1]} : vector<32x240xf32> to vector<32x16xf32>
    %cst_147 = arith.constant dense<0.000000e+00> : vector<32x32xf32>
    %440 = tpu.matmul %437, %438, %cst_147 {dimension_numbers = #tpu.dot_dimension_numbers<[1], [1], [0], [0], [0, 0, 1, 0], [], []>} : vector<32x16xf32>, vector<32x16xf32>, vector<32x32xf32> -> vector<32x32xf32>
    %cst_148 = arith.constant dense<0xFF800000> : vector<32xf32>
    %441 = vector.multi_reduction <maximumf>, %440, %cst_148 [1] : vector<32x32xf32> to vector<32xf32>
    %442 = vector.shape_cast %441 : vector<32xf32> to vector<32x1xf32>
    %443 = vector.broadcast %442 : vector<32x1xf32> to vector<32x32xf32>
    %444 = arith.subf %440, %443 : vector<32x32xf32>
    %445 = math.exp %444 : vector<32x32xf32>
    %cst_149 = arith.constant dense<0.000000e+00> : vector<32xf32>
    %446 = vector.multi_reduction <add>, %445, %cst_149 [1] : vector<32x32xf32> to vector<32xf32>
    %447 = vector.shape_cast %446 : vector<32xf32> to vector<32x1xf32>
    %448 = tpu.reciprocal %447 {approx = true} : vector<32x1xf32> -> vector<32x1xf32>
    %449 = vector.broadcast %448 : vector<32x1xf32> to vector<32x32xf32>
    %450 = arith.mulf %445, %449 : vector<32x32xf32>
    %cst_150 = arith.constant dense<0.000000e+00> : vector<32x16xf32>
    %451 = tpu.matmul %450, %439, %cst_150 {dimension_numbers = #tpu.dot_dimension_numbers<[1], [0], [0], [1], [0, 0, 1, 1], [], []>} : vector<32x32xf32>, vector<32x16xf32>, vector<32x16xf32> -> vector<32x16xf32>
    %452 = vector.extract_strided_slice %16 {offsets = [16, 0], sizes = [16, 48], strides = [1, 1]} : vector<80x48xf32> to vector<16x48xf32>
    %cst_151 = arith.constant dense<0.000000e+00> : vector<32x48xf32>
    %453 = tpu.matmul %451, %452, %cst_151 {dimension_numbers = #tpu.dot_dimension_numbers<[1], [0], [0], [1], [0, 0, 1, 1], [], []>} : vector<32x16xf32>, vector<16x48xf32>, vector<32x48xf32> -> vector<32x48xf32>
    %454 = arith.addf %436, %453 : vector<32x48xf32>
    %455 = vector.extract_strided_slice %417 {offsets = [0, 32], sizes = [32, 16], strides = [1, 1]} : vector<32x240xf32> to vector<32x16xf32>
    %456 = vector.extract_strided_slice %417 {offsets = [0, 112], sizes = [32, 16], strides = [1, 1]} : vector<32x240xf32> to vector<32x16xf32>
    %457 = vector.extract_strided_slice %417 {offsets = [0, 192], sizes = [32, 16], strides = [1, 1]} : vector<32x240xf32> to vector<32x16xf32>
    %cst_152 = arith.constant dense<0.000000e+00> : vector<32x32xf32>
    %458 = tpu.matmul %455, %456, %cst_152 {dimension_numbers = #tpu.dot_dimension_numbers<[1], [1], [0], [0], [0, 0, 1, 0], [], []>} : vector<32x16xf32>, vector<32x16xf32>, vector<32x32xf32> -> vector<32x32xf32>
    %cst_153 = arith.constant dense<0xFF800000> : vector<32xf32>
    %459 = vector.multi_reduction <maximumf>, %458, %cst_153 [1] : vector<32x32xf32> to vector<32xf32>
    %460 = vector.shape_cast %459 : vector<32xf32> to vector<32x1xf32>
    %461 = vector.broadcast %460 : vector<32x1xf32> to vector<32x32xf32>
    %462 = arith.subf %458, %461 : vector<32x32xf32>
    %463 = math.exp %462 : vector<32x32xf32>
    %cst_154 = arith.constant dense<0.000000e+00> : vector<32xf32>
    %464 = vector.multi_reduction <add>, %463, %cst_154 [1] : vector<32x32xf32> to vector<32xf32>
    %465 = vector.shape_cast %464 : vector<32xf32> to vector<32x1xf32>
    %466 = tpu.reciprocal %465 {approx = true} : vector<32x1xf32> -> vector<32x1xf32>
    %467 = vector.broadcast %466 : vector<32x1xf32> to vector<32x32xf32>
    %468 = arith.mulf %463, %467 : vector<32x32xf32>
    %cst_155 = arith.constant dense<0.000000e+00> : vector<32x16xf32>
    %469 = tpu.matmul %468, %457, %cst_155 {dimension_numbers = #tpu.dot_dimension_numbers<[1], [0], [0], [1], [0, 0, 1, 1], [], []>} : vector<32x32xf32>, vector<32x16xf32>, vector<32x16xf32> -> vector<32x16xf32>
    %470 = vector.extract_strided_slice %16 {offsets = [32, 0], sizes = [16, 48], strides = [1, 1]} : vector<80x48xf32> to vector<16x48xf32>
    %cst_156 = arith.constant dense<0.000000e+00> : vector<32x48xf32>
    %471 = tpu.matmul %469, %470, %cst_156 {dimension_numbers = #tpu.dot_dimension_numbers<[1], [0], [0], [1], [0, 0, 1, 1], [], []>} : vector<32x16xf32>, vector<16x48xf32>, vector<32x48xf32> -> vector<32x48xf32>
    %472 = arith.addf %454, %471 : vector<32x48xf32>
    %473 = vector.extract_strided_slice %417 {offsets = [0, 48], sizes = [32, 16], strides = [1, 1]} : vector<32x240xf32> to vector<32x16xf32>
    %474 = vector.extract_strided_slice %417 {offsets = [0, 128], sizes = [32, 16], strides = [1, 1]} : vector<32x240xf32> to vector<32x16xf32>
    %475 = vector.extract_strided_slice %417 {offsets = [0, 208], sizes = [32, 16], strides = [1, 1]} : vector<32x240xf32> to vector<32x16xf32>
    %cst_157 = arith.constant dense<0.000000e+00> : vector<32x32xf32>
    %476 = tpu.matmul %473, %474, %cst_157 {dimension_numbers = #tpu.dot_dimension_numbers<[1], [1], [0], [0], [0, 0, 1, 0], [], []>} : vector<32x16xf32>, vector<32x16xf32>, vector<32x32xf32> -> vector<32x32xf32>
    %cst_158 = arith.constant dense<0xFF800000> : vector<32xf32>
    %477 = vector.multi_reduction <maximumf>, %476, %cst_158 [1] : vector<32x32xf32> to vector<32xf32>
    %478 = vector.shape_cast %477 : vector<32xf32> to vector<32x1xf32>
    %479 = vector.broadcast %478 : vector<32x1xf32> to vector<32x32xf32>
    %480 = arith.subf %476, %479 : vector<32x32xf32>
    %481 = math.exp %480 : vector<32x32xf32>
    %cst_159 = arith.constant dense<0.000000e+00> : vector<32xf32>
    %482 = vector.multi_reduction <add>, %481, %cst_159 [1] : vector<32x32xf32> to vector<32xf32>
    %483 = vector.shape_cast %482 : vector<32xf32> to vector<32x1xf32>
    %484 = tpu.reciprocal %483 {approx = true} : vector<32x1xf32> -> vector<32x1xf32>
    %485 = vector.broadcast %484 : vector<32x1xf32> to vector<32x32xf32>
    %486 = arith.mulf %481, %485 : vector<32x32xf32>
    %cst_160 = arith.constant dense<0.000000e+00> : vector<32x16xf32>
    %487 = tpu.matmul %486, %475, %cst_160 {dimension_numbers = #tpu.dot_dimension_numbers<[1], [0], [0], [1], [0, 0, 1, 1], [], []>} : vector<32x32xf32>, vector<32x16xf32>, vector<32x16xf32> -> vector<32x16xf32>
    %488 = vector.extract_strided_slice %16 {offsets = [48, 0], sizes = [16, 48], strides = [1, 1]} : vector<80x48xf32> to vector<16x48xf32>
    %cst_161 = arith.constant dense<0.000000e+00> : vector<32x48xf32>
    %489 = tpu.matmul %487, %488, %cst_161 {dimension_numbers = #tpu.dot_dimension_numbers<[1], [0], [0], [1], [0, 0, 1, 1], [], []>} : vector<32x16xf32>, vector<16x48xf32>, vector<32x48xf32> -> vector<32x48xf32>
    %490 = arith.addf %472, %489 : vector<32x48xf32>
    %491 = vector.extract_strided_slice %417 {offsets = [0, 64], sizes = [32, 16], strides = [1, 1]} : vector<32x240xf32> to vector<32x16xf32>
    %492 = vector.extract_strided_slice %417 {offsets = [0, 144], sizes = [32, 16], strides = [1, 1]} : vector<32x240xf32> to vector<32x16xf32>
    %493 = vector.extract_strided_slice %417 {offsets = [0, 224], sizes = [32, 16], strides = [1, 1]} : vector<32x240xf32> to vector<32x16xf32>
    %cst_162 = arith.constant dense<0.000000e+00> : vector<32x32xf32>
    %494 = tpu.matmul %491, %492, %cst_162 {dimension_numbers = #tpu.dot_dimension_numbers<[1], [1], [0], [0], [0, 0, 1, 0], [], []>} : vector<32x16xf32>, vector<32x16xf32>, vector<32x32xf32> -> vector<32x32xf32>
    %cst_163 = arith.constant dense<0xFF800000> : vector<32xf32>
    %495 = vector.multi_reduction <maximumf>, %494, %cst_163 [1] : vector<32x32xf32> to vector<32xf32>
    %496 = vector.shape_cast %495 : vector<32xf32> to vector<32x1xf32>
    %497 = vector.broadcast %496 : vector<32x1xf32> to vector<32x32xf32>
    %498 = arith.subf %494, %497 : vector<32x32xf32>
    %499 = math.exp %498 : vector<32x32xf32>
    %cst_164 = arith.constant dense<0.000000e+00> : vector<32xf32>
    %500 = vector.multi_reduction <add>, %499, %cst_164 [1] : vector<32x32xf32> to vector<32xf32>
    %501 = vector.shape_cast %500 : vector<32xf32> to vector<32x1xf32>
    %502 = tpu.reciprocal %501 {approx = true} : vector<32x1xf32> -> vector<32x1xf32>
    %503 = vector.broadcast %502 : vector<32x1xf32> to vector<32x32xf32>
    %504 = arith.mulf %499, %503 : vector<32x32xf32>
    %cst_165 = arith.constant dense<0.000000e+00> : vector<32x16xf32>
    %505 = tpu.matmul %504, %493, %cst_165 {dimension_numbers = #tpu.dot_dimension_numbers<[1], [0], [0], [1], [0, 0, 1, 1], [], []>} : vector<32x32xf32>, vector<32x16xf32>, vector<32x16xf32> -> vector<32x16xf32>
    %506 = vector.extract_strided_slice %16 {offsets = [64, 0], sizes = [16, 48], strides = [1, 1]} : vector<80x48xf32> to vector<16x48xf32>
    %cst_166 = arith.constant dense<0.000000e+00> : vector<32x48xf32>
    %507 = tpu.matmul %505, %506, %cst_166 {dimension_numbers = #tpu.dot_dimension_numbers<[1], [0], [0], [1], [0, 0, 1, 1], [], []>} : vector<32x16xf32>, vector<16x48xf32>, vector<32x48xf32> -> vector<32x48xf32>
    %508 = arith.addf %490, %507 : vector<32x48xf32>
    %509 = vector.broadcast %17 : vector<1x48xf32> to vector<32x48xf32>
    %510 = arith.addf %508, %509 : vector<32x48xf32>
    %511 = tpu.transpose %510, [1, 0] : vector<32x48xf32> -> vector<48x32xf32>
    %512 = tpu.concatenate %157, %275, %393, %511 in 0 : vector<48x32xf32>, vector<48x32xf32>, vector<48x32xf32>, vector<48x32xf32> -> vector<192x32xf32>
    %513 = arith.addf %33, %512 : vector<192x32xf32>
    %cst_167 = arith.constant dense<0.000000e+00> : vector<192xf32>
    %514 = vector.multi_reduction <add>, %513, %cst_167 [1] : vector<192x32xf32> to vector<192xf32>
    %515 = vector.shape_cast %514 : vector<192xf32> to vector<192x1xf32>
    %cst_168 = arith.constant 3.200000e+01 : f32
    %516 = vector.broadcast %cst_168 : f32 to vector<192x1xf32>
    %517 = arith.divf %515, %516 : vector<192x1xf32>
    %518 = vector.broadcast %517 : vector<192x1xf32> to vector<192x32xf32>
    %519 = arith.subf %513, %518 : vector<192x32xf32>
    %520 = arith.mulf %519, %519 : vector<192x32xf32>
    %cst_169 = arith.constant dense<0.000000e+00> : vector<192xf32>
    %521 = vector.multi_reduction <add>, %520, %cst_169 [1] : vector<192x32xf32> to vector<192xf32>
    %522 = vector.shape_cast %521 : vector<192xf32> to vector<192x1xf32>
    %cst_170 = arith.constant 3.200000e+01 : f32
    %523 = vector.broadcast %cst_170 : f32 to vector<192x1xf32>
    %524 = arith.divf %522, %523 : vector<192x1xf32>
    %525 = vector.broadcast %517 : vector<192x1xf32> to vector<192x32xf32>
    %526 = arith.subf %513, %525 : vector<192x32xf32>
    %cst_171 = arith.constant 9.99999974E-6 : f32
    %527 = vector.broadcast %cst_171 : f32 to vector<192x1xf32>
    %528 = arith.addf %524, %527 : vector<192x1xf32>
    %529 = math.rsqrt %528 : vector<192x1xf32>
    %530 = vector.broadcast %529 : vector<192x1xf32> to vector<192x32xf32>
    %531 = arith.mulf %526, %530 : vector<192x32xf32>
    %532 = vector.broadcast %8 : vector<1x32xf32> to vector<192x32xf32>
    %533 = arith.mulf %531, %532 : vector<192x32xf32>
    %534 = vector.broadcast %9 : vector<1x32xf32> to vector<192x32xf32>
    %535 = arith.addf %533, %534 : vector<192x32xf32>
    %cst_172 = arith.constant dense<0.000000e+00> : vector<192x64xf32>
    %536 = tpu.matmul %535, %18, %cst_172 {dimension_numbers = #tpu.dot_dimension_numbers<[1], [0], [0], [1], [0, 0, 1, 1], [], []>} : vector<192x32xf32>, vector<32x64xf32>, vector<192x64xf32> -> vector<192x64xf32>
    %537 = vector.broadcast %19 : vector<1x64xf32> to vector<192x64xf32>
    %538 = arith.addf %536, %537 : vector<192x64xf32>
    %cst_173 = arith.constant 0.000000e+00 : f32
    %539 = vector.broadcast %cst_173 : f32 to vector<192x64xf32>
    %540 = arith.maximumf %538, %539 : vector<192x64xf32>
    %cst_174 = arith.constant dense<0.000000e+00> : vector<192x32xf32>
    %541 = tpu.matmul %540, %5, %cst_174 {dimension_numbers = #tpu.dot_dimension_numbers<[1], [0], [0], [1], [0, 0, 1, 1], [], []>} : vector<192x64xf32>, vector<64x32xf32>, vector<192x32xf32> -> vector<192x32xf32>
    %542 = vector.broadcast %7 : vector<1x32xf32> to vector<192x32xf32>
    %543 = arith.addf %541, %542 : vector<192x32xf32>
    %544 = arith.addf %535, %543 : vector<192x32xf32>
    %cst_175 = arith.constant dense<0.000000e+00> : vector<192xf32>
    %545 = vector.multi_reduction <add>, %544, %cst_175 [1] : vector<192x32xf32> to vector<192xf32>
    %546 = vector.shape_cast %545 : vector<192xf32> to vector<192x1xf32>
    %cst_176 = arith.constant 3.200000e+01 : f32
    %547 = vector.broadcast %cst_176 : f32 to vector<192x1xf32>
    %548 = arith.divf %546, %547 : vector<192x1xf32>
    %549 = vector.broadcast %548 : vector<192x1xf32> to vector<192x32xf32>
    %550 = arith.subf %544, %549 : vector<192x32xf32>
    %551 = arith.mulf %550, %550 : vector<192x32xf32>
    %cst_177 = arith.constant dense<0.000000e+00> : vector<192xf32>
    %552 = vector.multi_reduction <add>, %551, %cst_177 [1] : vector<192x32xf32> to vector<192xf32>
    %553 = vector.shape_cast %552 : vector<192xf32> to vector<192x1xf32>
    %cst_178 = arith.constant 3.200000e+01 : f32
    %554 = vector.broadcast %cst_178 : f32 to vector<192x1xf32>
    %555 = arith.divf %553, %554 : vector<192x1xf32>
    %556 = vector.broadcast %548 : vector<192x1xf32> to vector<192x32xf32>
    %557 = arith.subf %544, %556 : vector<192x32xf32>
    %cst_179 = arith.constant 9.99999974E-6 : f32
    %558 = vector.broadcast %cst_179 : f32 to vector<192x1xf32>
    %559 = arith.addf %555, %558 : vector<192x1xf32>
    %560 = math.rsqrt %559 : vector<192x1xf32>
    %561 = vector.broadcast %560 : vector<192x1xf32> to vector<192x32xf32>
    %562 = arith.mulf %557, %561 : vector<192x32xf32>
    %563 = vector.broadcast %10 : vector<1x32xf32> to vector<192x32xf32>
    %564 = arith.mulf %562, %563 : vector<192x32xf32>
    %565 = vector.broadcast %11 : vector<1x32xf32> to vector<192x32xf32>
    %566 = arith.addf %564, %565 : vector<192x32xf32>
    %567 = vector.extract_strided_slice %566 {offsets = [44, 0], sizes = [1, 32], strides = [1, 1]} : vector<192x32xf32> to vector<1x32xf32>
    %568 = vector.extract_strided_slice %566 {offsets = [92, 0], sizes = [1, 32], strides = [1, 1]} : vector<192x32xf32> to vector<1x32xf32>
    %569 = vector.extract_strided_slice %566 {offsets = [140, 0], sizes = [1, 32], strides = [1, 1]} : vector<192x32xf32> to vector<1x32xf32>
    %570 = vector.extract_strided_slice %566 {offsets = [188, 0], sizes = [1, 32], strides = [1, 1]} : vector<192x32xf32> to vector<1x32xf32>
    %571 = tpu.concatenate %567, %568, %569, %570 in 0 : vector<1x32xf32>, vector<1x32xf32>, vector<1x32xf32>, vector<1x32xf32> -> vector<4x32xf32>
    %cst_180 = arith.constant dense<0.000000e+00> : vector<4x32xf32>
    %572 = tpu.matmul %571, %20, %cst_180 {dimension_numbers = #tpu.dot_dimension_numbers<[1], [0], [0], [1], [0, 0, 1, 1], [], []>} : vector<4x32xf32>, vector<32x32xf32>, vector<4x32xf32> -> vector<4x32xf32>
    %573 = vector.broadcast %21 : vector<1x32xf32> to vector<4x32xf32>
    %574 = arith.addf %572, %573 : vector<4x32xf32>
    %cst_181 = arith.constant 0.000000e+00 : f32
    %575 = vector.broadcast %cst_181 : f32 to vector<4x32xf32>
    %576 = arith.maximumf %574, %575 : vector<4x32xf32>
    %577 = vector.extract_strided_slice %576 {offsets = [0, 0], sizes = [4, 16], strides = [1, 1]} : vector<4x32xf32> to vector<4x16xf32>
    %578 = vector.extract_strided_slice %22 {offsets = [0, 0], sizes = [1, 16], strides = [1, 1]} : vector<1x32xf32> to vector<1x16xf32>
    %579 = vector.extract_strided_slice %23 {offsets = [0, 0], sizes = [1, 16], strides = [1, 1]} : vector<1x32xf32> to vector<1x16xf32>
    %cst_182 = arith.constant dense<0.000000e+00> : vector<4xf32>
    %580 = vector.multi_reduction <add>, %577, %cst_182 [1] : vector<4x16xf32> to vector<4xf32>
    %581 = vector.shape_cast %580 : vector<4xf32> to vector<4x1xf32>
    %cst_183 = arith.constant 1.600000e+01 : f32
    %582 = vector.broadcast %cst_183 : f32 to vector<4x1xf32>
    %583 = arith.divf %581, %582 : vector<4x1xf32>
    %584 = vector.broadcast %583 : vector<4x1xf32> to vector<4x16xf32>
    %585 = arith.subf %577, %584 : vector<4x16xf32>
    %586 = arith.mulf %585, %585 : vector<4x16xf32>
    %cst_184 = arith.constant dense<0.000000e+00> : vector<4xf32>
    %587 = vector.multi_reduction <add>, %586, %cst_184 [1] : vector<4x16xf32> to vector<4xf32>
    %588 = vector.shape_cast %587 : vector<4xf32> to vector<4x1xf32>
    %cst_185 = arith.constant 1.600000e+01 : f32
    %589 = vector.broadcast %cst_185 : f32 to vector<4x1xf32>
    %590 = arith.divf %588, %589 : vector<4x1xf32>
    %591 = vector.broadcast %583 : vector<4x1xf32> to vector<4x16xf32>
    %592 = arith.subf %577, %591 : vector<4x16xf32>
    %cst_186 = arith.constant 9.99999974E-6 : f32
    %593 = vector.broadcast %cst_186 : f32 to vector<4x1xf32>
    %594 = arith.addf %590, %593 : vector<4x1xf32>
    %595 = math.rsqrt %594 : vector<4x1xf32>
    %596 = vector.broadcast %595 : vector<4x1xf32> to vector<4x16xf32>
    %597 = arith.mulf %592, %596 : vector<4x16xf32>
    %598 = vector.broadcast %578 : vector<1x16xf32> to vector<4x16xf32>
    %599 = arith.mulf %597, %598 : vector<4x16xf32>
    %600 = vector.broadcast %579 : vector<1x16xf32> to vector<4x16xf32>
    %601 = arith.addf %599, %600 : vector<4x16xf32>
    %602 = vector.extract_strided_slice %576 {offsets = [0, 16], sizes = [4, 16], strides = [1, 1]} : vector<4x32xf32> to vector<4x16xf32>
    %603 = vector.extract_strided_slice %22 {offsets = [0, 16], sizes = [1, 16], strides = [1, 1]} : vector<1x32xf32> to vector<1x16xf32>
    %604 = vector.extract_strided_slice %23 {offsets = [0, 16], sizes = [1, 16], strides = [1, 1]} : vector<1x32xf32> to vector<1x16xf32>
    %cst_187 = arith.constant dense<0.000000e+00> : vector<4xf32>
    %605 = vector.multi_reduction <add>, %602, %cst_187 [1] : vector<4x16xf32> to vector<4xf32>
    %606 = vector.shape_cast %605 : vector<4xf32> to vector<4x1xf32>
    %cst_188 = arith.constant 1.600000e+01 : f32
    %607 = vector.broadcast %cst_188 : f32 to vector<4x1xf32>
    %608 = arith.divf %606, %607 : vector<4x1xf32>
    %609 = vector.broadcast %608 : vector<4x1xf32> to vector<4x16xf32>
    %610 = arith.subf %602, %609 : vector<4x16xf32>
    %611 = arith.mulf %610, %610 : vector<4x16xf32>
    %cst_189 = arith.constant dense<0.000000e+00> : vector<4xf32>
    %612 = vector.multi_reduction <add>, %611, %cst_189 [1] : vector<4x16xf32> to vector<4xf32>
    %613 = vector.shape_cast %612 : vector<4xf32> to vector<4x1xf32>
    %cst_190 = arith.constant 1.600000e+01 : f32
    %614 = vector.broadcast %cst_190 : f32 to vector<4x1xf32>
    %615 = arith.divf %613, %614 : vector<4x1xf32>
    %616 = vector.broadcast %608 : vector<4x1xf32> to vector<4x16xf32>
    %617 = arith.subf %602, %616 : vector<4x16xf32>
    %cst_191 = arith.constant 9.99999974E-6 : f32
    %618 = vector.broadcast %cst_191 : f32 to vector<4x1xf32>
    %619 = arith.addf %615, %618 : vector<4x1xf32>
    %620 = math.rsqrt %619 : vector<4x1xf32>
    %621 = vector.broadcast %620 : vector<4x1xf32> to vector<4x16xf32>
    %622 = arith.mulf %617, %621 : vector<4x16xf32>
    %623 = vector.broadcast %603 : vector<1x16xf32> to vector<4x16xf32>
    %624 = arith.mulf %622, %623 : vector<4x16xf32>
    %625 = vector.broadcast %604 : vector<1x16xf32> to vector<4x16xf32>
    %626 = arith.addf %624, %625 : vector<4x16xf32>
    %627 = tpu.concatenate %601, %626 in 1 : vector<4x16xf32>, vector<4x16xf32> -> vector<4x32xf32>
    %cst_192 = arith.constant dense<0.000000e+00> : vector<4x128xf32>
    %628 = tpu.matmul %627, %24, %cst_192 {dimension_numbers = #tpu.dot_dimension_numbers<[1], [0], [0], [1], [0, 0, 1, 1], [], []>} : vector<4x32xf32>, vector<32x128xf32>, vector<4x128xf32> -> vector<4x128xf32>
    %629 = vector.broadcast %25 : vector<1x128xf32> to vector<4x128xf32>
    %630 = arith.addf %628, %629 : vector<4x128xf32>
    %631 = vector.extract_strided_slice %630 {offsets = [0, 0], sizes = [4, 1], strides = [1, 1]} : vector<4x128xf32> to vector<4x1xf32>
    %632 = vector.extract_strided_slice %630 {offsets = [0, 1], sizes = [4, 2], strides = [1, 1]} : vector<4x128xf32> to vector<4x2xf32>
    %cst_193 = arith.constant 0.000000e+00 : f32
    %633 = vector.broadcast %cst_193 : f32 to vector<4x2xf32>
    %634 = arith.maximumf %632, %633 : vector<4x2xf32>
    %cst_194 = arith.constant dense<0xFF800000> : vector<4xf32>
    %635 = vector.multi_reduction <maximumf>, %634, %cst_194 [1] : vector<4x2xf32> to vector<4xf32>
    %636 = vector.shape_cast %635 : vector<4xf32> to vector<4x1xf32>
    %637 = vector.broadcast %636 : vector<4x1xf32> to vector<4x2xf32>
    %638 = arith.subf %634, %637 : vector<4x2xf32>
    %639 = math.exp %638 : vector<4x2xf32>
    %cst_195 = arith.constant dense<0.000000e+00> : vector<4xf32>
    %640 = vector.multi_reduction <add>, %639, %cst_195 [1] : vector<4x2xf32> to vector<4xf32>
    %641 = vector.shape_cast %640 : vector<4xf32> to vector<4x1xf32>
    %642 = tpu.reciprocal %641 {approx = true} : vector<4x1xf32> -> vector<4x1xf32>
    %643 = vector.broadcast %642 : vector<4x1xf32> to vector<4x2xf32>
    %644 = arith.mulf %639, %643 : vector<4x2xf32>
    %cst_196 = arith.constant 0.000000e+00 : f32
    %645 = vector.broadcast %cst_196 : f32 to vector<4x125xf32>
    %646 = tpu.concatenate %631, %644, %645 in 1 : vector<4x1xf32>, vector<4x2xf32>, vector<4x125xf32> -> vector<4x128xf32>
    %c0_197 = arith.constant 0 : index
    %c0_198 = arith.constant 0 : index
    %c0_199 = arith.constant 0 : index
    %647 = vector.load %arg9[%c0_197, %c0_198, %c0_199] : memref<1x4x128xf32, #tpu.memory_space<vmem>>, vector<1x4x128xf32>
    %648 = vector.shape_cast %647 : vector<1x4x128xf32> to vector<4x128xf32>
    %649 = vector.shape_cast %646 : vector<4x128xf32> to vector<1x4x128xf32>
    tpu.vector_store %arg9[%c0_197, %c0_198, %c0_199], %649 {strides = array<i32>} : memref<1x4x128xf32, #tpu.memory_space<vmem>>, vector<1x4x128xf32>,
    return
  }
  func.func @transform_0(%arg0: i32) -> (i32, i32, i32) {
    %c0_i32 = arith.constant 0 : i32
    %c0_i32_0 = arith.constant 0 : i32
    %c0_i32_1 = arith.constant 0 : i32
    return %arg0, %c0_i32, %c0_i32_0 : i32, i32, i32
  }
  func.func @transform_1(%arg0: i32) -> (i32, i32) {
    %c0_i32 = arith.constant 0 : i32
    %c0_i32_0 = arith.constant 0 : i32
    %c0_i32_1 = arith.constant 0 : i32
    return %c0_i32, %c0_i32_0 : i32, i32
  }
  func.func @transform_2(%arg0: i32) -> (i32, i32) {
    %c0_i32 = arith.constant 0 : i32
    %c0_i32_0 = arith.constant 0 : i32
    %c0_i32_1 = arith.constant 0 : i32
    return %c0_i32, %c0_i32_0 : i32, i32
  }
  func.func @transform_3(%arg0: i32) -> (i32, i32) {
    %c0_i32 = arith.constant 0 : i32
    %c0_i32_0 = arith.constant 0 : i32
    %c0_i32_1 = arith.constant 0 : i32
    return %c0_i32, %c0_i32_0 : i32, i32
  }
  func.func @transform_4(%arg0: i32) -> (i32, i32) {
    %c0_i32 = arith.constant 0 : i32
    %c0_i32_0 = arith.constant 0 : i32
    %c0_i32_1 = arith.constant 0 : i32
    return %c0_i32, %c0_i32_0 : i32, i32
  }
  func.func @transform_5(%arg0: i32) -> (i32, i32) {
    %c0_i32 = arith.constant 0 : i32
    %c0_i32_0 = arith.constant 0 : i32
    %c0_i32_1 = arith.constant 0 : i32
    return %c0_i32, %c0_i32_0 : i32, i32
  }
  func.func @transform_6(%arg0: i32) -> (i32, i32) {
    %c0_i32 = arith.constant 0 : i32
    %c0_i32_0 = arith.constant 0 : i32
    %c0_i32_1 = arith.constant 0 : i32
    return %c0_i32, %c0_i32_0 : i32, i32
  }
  func.func @transform_7(%arg0: i32) -> (i32, i32) {
    %c0_i32 = arith.constant 0 : i32
    %c0_i32_0 = arith.constant 0 : i32
    %c0_i32_1 = arith.constant 0 : i32
    return %c0_i32, %c0_i32_0 : i32, i32
  }
  func.func @transform_8(%arg0: i32) -> (i32, i32, i32) {
    %c0_i32 = arith.constant 0 : i32
    %c0_i32_0 = arith.constant 0 : i32
    %c0_i32_1 = arith.constant 0 : i32
    return %arg0, %c0_i32, %c0_i32_0 : i32, i32, i32
  }
}

</mosaic_0001>

<llo_original>
// kernel: transformer_pre_forward.1
$region0: #{transformer_pre_forward.1}
  #allocation0 [shape = 'u32[]', space=smem, size = 0x4, offset = 0x4, fixed_abs, tag = 'smem constant byte address 0x4 - core index']
  #allocation1 [shape = 'u32[144,128]{1,0:T(1,128)}', space=vmem, size = 0x12000, scoped, tag = 'internal scratch']
  %s0 = inlined_call_operand.vmem [shape: f32[1,192,16], index: 0, kind: input, shape index: {}]
  %s1 = inlined_call_operand.vmem [shape: f32[312,32], index: 1, kind: input, shape index: {}]
  %s2 = inlined_call_operand.vmem [shape: f32[40,96], index: 2, kind: input, shape index: {}]
  %s3 = inlined_call_operand.vmem [shape: f32[56,240], index: 3, kind: input, shape index: {}]
  %s4 = inlined_call_operand.vmem [shape: f32[88,48], index: 4, kind: input, shape index: {}]
  %s5 = inlined_call_operand.vmem [shape: f32[40,64], index: 5, kind: input, shape index: {}]
  %s6 = inlined_call_operand.vmem [shape: f32[40,32], index: 6, kind: input, shape index: {}]
  %s7 = inlined_call_operand.vmem [shape: f32[40,128], index: 7, kind: input, shape index: {}]
  %s8 = inlined_call_operand.vmem [shape: f32[1,4,128], index: 8, kind: output, shape index: {}]
  %s9 = sld [smem:[#allocation0]]
  $region42: #{transformer_pre_forward.1} parent=0
    _
  %s11 = ssub.s32 1, %s9
  %s12 = scalar_select 0, %s11, %s9
  // Predicated region
  $region2: #{transformer_pre_forward.1} parent=0 // pred_check
    _
  $region3: #{transformer_pre_forward.1} parent=0 // pred_check_branch
    %14 = sbr.rel (0) target = $region5
  $region4: #{transformer_pre_forward.1} parent=0 // pred_region
    _
  $region5: #{transformer_pre_forward.1} parent=0 // pred_fallthru
    _
  // Predicated region
  $region6: #{transformer_pre_forward.1} parent=0 // pred_check
    _
  $region7: #{transformer_pre_forward.1} parent=0 // pred_check_branch
    %16 = sbr.rel (0) target = $region9
  $region8: #{transformer_pre_forward.1} parent=0 // pred_region
    _
  $region9: #{transformer_pre_forward.1} parent=0 // pred_fallthru
    _
  // Predicated region
  $region10: #{transformer_pre_forward.1} parent=0 // pred_check
    _
  $region11: #{transformer_pre_forward.1} parent=0 // pred_check_branch
    %18 = sbr.rel (0) target = $region13
  $region12: #{transformer_pre_forward.1} parent=0 // pred_region
    _
  $region13: #{transformer_pre_forward.1} parent=0 // pred_fallthru
    _
  // Predicated region
  $region14: #{transformer_pre_forward.1} parent=0 // pred_check
    _
  $region15: #{transformer_pre_forward.1} parent=0 // pred_check_branch
    %20 = sbr.rel (0) target = $region17
  $region16: #{transformer_pre_forward.1} parent=0 // pred_region
    _
  $region17: #{transformer_pre_forward.1} parent=0 // pred_fallthru
    _
  // Predicated region
  $region18: #{transformer_pre_forward.1} parent=0 // pred_check
    _
  $region19: #{transformer_pre_forward.1} parent=0 // pred_check_branch
    %22 = sbr.rel (0) target = $region21
  $region20: #{transformer_pre_forward.1} parent=0 // pred_region
    _
  $region21: #{transformer_pre_forward.1} parent=0 // pred_fallthru
    _
  // Predicated region
  $region22: #{transformer_pre_forward.1} parent=0 // pred_check
    _
  $region23: #{transformer_pre_forward.1} parent=0 // pred_check_branch
    %24 = sbr.rel (0) target = $region25
  $region24: #{transformer_pre_forward.1} parent=0 // pred_region
    _
  $region25: #{transformer_pre_forward.1} parent=0 // pred_fallthru
    _
  // Predicated region
  $region26: #{transformer_pre_forward.1} parent=0 // pred_check
    _
  $region27: #{transformer_pre_forward.1} parent=0 // pred_check_branch
    %26 = sbr.rel (0) target = $region29
  $region28: #{transformer_pre_forward.1} parent=0 // pred_region
    _
  $region29: #{transformer_pre_forward.1} parent=0 // pred_fallthru
    _
  // Predicated region
  $region30: #{transformer_pre_forward.1} parent=0 // pred_check
    _
  $region31: #{transformer_pre_forward.1} parent=0 // pred_check_branch
    %28 = sbr.rel (0) target = $region33
  $region32: #{transformer_pre_forward.1} parent=0 // pred_region
    _
  $region33: #{transformer_pre_forward.1} parent=0 // pred_fallthru
    _
  %v29 = vld [vmem:[%s0] sm:$0xff]
  %v30 = vld [vmem:[%s0 + $0x8] sm:$0xff]
  %v31 = vld [vmem:[%s0 + $0x10] sm:$0xff]
  %v32 = vld [vmem:[%s0 + $0x18] sm:$0xff]
  %v33 = vld [vmem:[%s0 + $0x20] sm:$0xff]
  %v34 = vld [vmem:[%s0 + $0x28] sm:$0xff]
  %v35 = vld [vmem:[%s0 + $0x30] sm:$0xff]
  %v36 = vld [vmem:[%s0 + $0x38] sm:$0xff]
  %v37 = vld [vmem:[%s0 + $0x40] sm:$0xff]
  %v38 = vld [vmem:[%s0 + $0x48] sm:$0xff]
  %v39 = vld [vmem:[%s0 + $0x50] sm:$0xff]
  %v40 = vld [vmem:[%s0 + $0x58] sm:$0xff]
  %v41 = vld [vmem:[%s0 + $0x60] sm:$0xff]
  %v42 = vld [vmem:[%s0 + $0x68] sm:$0xff]
  %v43 = vld [vmem:[%s0 + $0x70] sm:$0xff]
  %v44 = vld [vmem:[%s0 + $0x78] sm:$0xff]
  %v45 = vld [vmem:[%s0 + $0x80] sm:$0xff]
  %v46 = vld [vmem:[%s0 + $0x88] sm:$0xff]
  %v47 = vld [vmem:[%s0 + $0x90] sm:$0xff]
  %v48 = vld [vmem:[%s0 + $0x98] sm:$0xff]
  %v49 = vld [vmem:[%s0 + $0xa0] sm:$0xff]
  %v50 = vld [vmem:[%s0 + $0xa8] sm:$0xff]
  %v51 = vld [vmem:[%s0 + $0xb0] sm:$0xff]
  %v52 = vld [vmem:[%s0 + $0xb8] sm:$0xff]
  %v53 = vld [vmem:[%s1] sm:$0xff]
  %v54 = vld [vmem:[%s1 + $0x8] sm:$0xff]
  %v55 = vld [vmem:[%s1 + $0x10] sm:$0xff]
  %v56 = vld [vmem:[%s1 + $0x18] sm:$0xff]
  %v57 = vld [vmem:[%s1 + $0x20] sm:$0xff]
  %v58 = vld [vmem:[%s1 + $0x28] sm:$0xff]
  %v59 = vld [vmem:[%s1 + $0x30] sm:$0xff]
  %v60 = vld [vmem:[%s1 + $0x38] sm:$0xff]
  %v61 = vld [vmem:[%s1 + $0x40] sm:$0xff]
  %v62 = vld [vmem:[%s1 + $0x48] sm:$0xff]
  %v63 = vld [vmem:[%s1 + $0x50] sm:$0xff]
  %v64 = vld [vmem:[%s1 + $0x58] sm:$0xff]
  %v65 = vld [vmem:[%s1 + $0x60] sm:$0xff]
  %v66 = vld [vmem:[%s1 + $0x68] sm:$0xff]
  %v67 = vld [vmem:[%s1 + $0x70] sm:$0xff]
  %v68 = vld [vmem:[%s1 + $0x78] sm:$0xff]
  %v69 = vld [vmem:[%s1 + $0x80] sm:$0xff]
  %v70 = vld [vmem:[%s1 + $0x88] sm:$0xff]
  %v71 = vld [vmem:[%s1 + $0x90] sm:$0xff]
  %v72 = vld [vmem:[%s1 + $0x98] sm:$0xff]
  %v73 = vld [vmem:[%s1 + $0xa0] sm:$0xff]
  %v74 = vld [vmem:[%s1 + $0xa8] sm:$0xff]
  %v75 = vld [vmem:[%s1 + $0xb0] sm:$0xff]
  %v76 = vld [vmem:[%s1 + $0xb8] sm:$0xff]
  %v77 = vld [vmem:[%s1 + $0xc0] sm:$0xff]
  %v78 = vld [vmem:[%s1 + $0xc8] sm:$0xff]
  %v79 = vld [vmem:[%s1 + $0xd0] sm:$0xff]
  %v80 = vld [vmem:[%s1 + $0xd8] sm:$0xff]
  %v81 = vld [vmem:[%s1 + $0xe0] sm:$0xff]
  %v82 = vld [vmem:[%s1 + $0xe8] sm:$0xff]
  %v83 = vld [vmem:[%s1 + $0xf0] sm:$0xff]
  %v84 = vld [vmem:[%s1 + $0xf8] sm:$0xff]
  %v85 = vld [vmem:[%s1 + $0x100] sm:$0xff]
  %v86 = vld [vmem:[%s1 + $0x108] sm:$0xff]
  %v87 = vld [vmem:[%s1 + $0x110] sm:$0xff]
  %v88 = vld [vmem:[%s1 + $0x118] sm:$0xff]
  %v89 = vld [vmem:[%s1 + $0x120] sm:$0xff]
  %v90 = vld [vmem:[%s1 + $0x128] sm:$0xff]
  %v91 = vld [vmem:[%s1 + $0x130] sm:$0x1]
  %v92 = vld [vmem:[%s1 + $0x131] sm:$0x1]
  %v93 = vld [vmem:[%s1 + $0x132] sm:$0x1]
  %v94 = vld [vmem:[%s1 + $0x133] sm:$0x1]
  %v95 = vld [vmem:[%s1 + $0x134] sm:$0x1]
  %v96 = vld [vmem:[%s1 + $0x135] sm:$0x1]
  %v97 = vld [vmem:[%s2] sm:$0xff]
  %v98 = vld [vmem:[%s2 + $0x8] sm:$0xff]
  %v99 = vld [vmem:[%s2 + $0x10] sm:$0xff]
  %v100 = vld [vmem:[%s2 + $0x18] sm:$0xff]
  %v101 = vld [vmem:[%s2 + $0x20] sm:$0x1]
  %v102 = vld [vmem:[%s3] sm:$0xff]
  %v103 = vld [vmem:[%s3 + $0x8] sm:$0xff]
  %v104 = vld [vmem:[%s3 + $0x10] sm:$0xff]
  %v105 = vld [vmem:[%s3 + $0x18] sm:$0xff]
  %v106 = vld [vmem:[%s3 + $0x20] sm:$0xff]
  %v107 = vld [vmem:[%s3 + $0x28] sm:$0xff]
  %v108 = vld [vmem:[%s3 + $0x30] sm:$0xff]
  %v109 = vld [vmem:[%s3 + $0x38] sm:$0xff]
  %v110 = vld [vmem:[%s3 + $0x40] sm:$0xff]
  %v111 = vld [vmem:[%s3 + $0x48] sm:$0xff]
  %v112 = vld [vmem:[%s3 + $0x50] sm:$0xff]
  %v113 = vld [vmem:[%s3 + $0x58] sm:$0xff]
  %s114 = scalar_lea.vmem %s3, 96
  %v115 = vld [vmem:[%s114] ss:$8 sm:$0x3]
  %v116 = vld [vmem:[%s4] sm:$0xff]
  %v117 = vld [vmem:[%s4 + $0x8] sm:$0xff]
  %v118 = vld [vmem:[%s4 + $0x10] sm:$0xff]
  %v119 = vld [vmem:[%s4 + $0x18] sm:$0xff]
  %v120 = vld [vmem:[%s4 + $0x20] sm:$0xff]
  %v121 = vld [vmem:[%s4 + $0x28] sm:$0xff]
  %v122 = vld [vmem:[%s4 + $0x30] sm:$0xff]
  %v123 = vld [vmem:[%s4 + $0x38] sm:$0xff]
  %v124 = vld [vmem:[%s4 + $0x40] sm:$0xff]
  %v125 = vld [vmem:[%s4 + $0x48] sm:$0xff]
  %v126 = vld [vmem:[%s4 + $0x50] sm:$0x1]
  %v127 = vld [vmem:[%s5] sm:$0xff]
  %v128 = vld [vmem:[%s5 + $0x8] sm:$0xff]
  %v129 = vld [vmem:[%s5 + $0x10] sm:$0xff]
  %v130 = vld [vmem:[%s5 + $0x18] sm:$0xff]
  %v131 = vld [vmem:[%s5 + $0x20] sm:$0x1]
  %v132 = vld [vmem:[%s6] sm:$0xff]
  %v133 = vld [vmem:[%s6 + $0x8] sm:$0xff]
  %v134 = vld [vmem:[%s6 + $0x10] sm:$0xff]
  %v135 = vld [vmem:[%s6 + $0x18] sm:$0xff]
  %v136 = vld [vmem:[%s6 + $0x20] sm:$0x1]
  %v137 = vld [vmem:[%s6 + $0x21] sm:$0x1]
  %v138 = vld [vmem:[%s6 + $0x22] sm:$0x1]
  %v139 = vld [vmem:[%s7] sm:$0xff]
  %v140 = vld [vmem:[%s7 + $0x8] sm:$0xff]
  %v141 = vld [vmem:[%s7 + $0x10] sm:$0xff]
  %v142 = vld [vmem:[%s7 + $0x18] sm:$0xff]
  %v143 = vld [vmem:[%s7 + $0x20] sm:$0x1]
  %v144 = vlaneseq
  %v145 = vand.u32 %v144, 127
  %vm146 = vcmp.lt.s32.totalorder %v145, 45
  %v147 = vsel %vm146, 0.0, -1e+30
  %vm148 = vcmask 130048
  %v150 = vsel %vm148, %v29, 0
  %v153 = vsel %vm148, %v30, 0
  %v156 = vsel %vm148, %v31, 0
  %v159 = vsel %vm148, %v32, 0
  %v162 = vsel %vm148, %v33, 0
  %v165 = vsel %vm148, %v34, 0
  %v168 = vsel %vm148, %v35, 0
  %v171 = vsel %vm148, %v36, 0
  %v174 = vsel %vm148, %v37, 0
  %v177 = vsel %vm148, %v38, 0
  %v180 = vsel %vm148, %v39, 0
  %v183 = vsel %vm148, %v40, 0
  %v186 = vsel %vm148, %v41, 0
  %v189 = vsel %vm148, %v42, 0
  %v192 = vsel %vm148, %v43, 0
  %v195 = vsel %vm148, %v44, 0
  %v198 = vsel %vm148, %v45, 0
  %v201 = vsel %vm148, %v46, 0
  %v204 = vsel %vm148, %v47, 0
  %v207 = vsel %vm148, %v48, 0
  %v210 = vsel %vm148, %v49, 0
  %v213 = vsel %vm148, %v50, 0
  %v216 = vsel %vm148, %v51, 0
  %v219 = vsel %vm148, %v52, 0
  %221 = vmatprep.subr.mxu0 0.0
  %222 = vmatpush1.msra.mxu0 0.0
  %223 = vmatprep.subr.mxu0 0.0
  %224 = vmatpush1.msra.mxu0 0.0
  %225 = vmatprep.subr.mxu0 0.0
  %226 = vmatpush1.msra.mxu0 0.0
  %227 = vmatprep.subr.mxu0 0.0
  %228 = vmatpush1.msra.mxu0 0.0
  %229 = vmatprep.subr.mxu0 0.0
  %230 = vmatpush1.msra.mxu0 0.0
  %231 = vmatprep.subr.mxu0 0.0
  %232 = vmatpush1.msra.mxu0 0.0
  %233 = vmatprep.subr.mxu0 0.0
  %234 = vmatpush1.msra.mxu0 0.0
  %235 = vmatprep.subr.mxu0 0.0
  %236 = vmatpush1.msra.mxu0 0.0
  %237 = vmatprep.subr.mxu0 0.0
  %238 = vmatpush1.msra.mxu0 0.0
  %239 = vmatprep.subr.mxu0 0.0
  %240 = vmatpush1.msra.mxu0 0.0
  %241 = vmatprep.subr.mxu0 0.0
  %242 = vmatpush1.msra.mxu0 0.0
  %243 = vmatprep.subr.mxu0 0.0
  %244 = vmatpush1.msra.mxu0 0.0
  %245 = vmatprep.subr.mxu0 0.0
  %246 = vmatpush1.msra.mxu0 0.0
  %247 = vmatprep.subr.mxu0 0.0
  %248 = vmatpush1.msra.mxu0 0.0
  %249 = vmatprep.subr.mxu0 0.0
  %250 = vmatpush1.msra.mxu0 %v54
  %251 = vmatprep.subr.mxu0 0.0
  %252 = vmatpush1.msra.mxu0 %v53
  %253 = vmatprep.subr.mxu0 0.0
  %254 = vmatpush2.msra.mxu0 0.0
  %255 = vmatprep.subr.mxu0 0.0
  %256 = vmatpush2.msra.mxu0 0.0
  %257 = vmatprep.subr.mxu0 0.0
  %258 = vmatpush2.msra.mxu0 0.0
  %259 = vmatprep.subr.mxu0 0.0
  %260 = vmatpush2.msra.mxu0 0.0
  %261 = vmatprep.subr.mxu0 0.0
  %262 = vmatpush2.msra.mxu0 0.0
  %263 = vmatprep.subr.mxu0 0.0
  %264 = vmatpush2.msra.mxu0 0.0
  %265 = vmatprep.subr.mxu0 0.0
  %266 = vmatpush2.msra.mxu0 0.0
  %267 = vmatprep.subr.mxu0 0.0
  %268 = vmatpush2.msra.mxu0 0.0
  %269 = vmatprep.subr.mxu0 0.0
  %270 = vmatpush2.msra.mxu0 0.0
  %271 = vmatprep.subr.mxu0 0.0
  %272 = vmatpush2.msra.mxu0 0.0
  %273 = vmatprep.subr.mxu0 0.0
  %274 = vmatpush2.msra.mxu0 0.0
  %275 = vmatprep.subr.mxu0 0.0
  %276 = vmatpush2.msra.mxu0 0.0
  %277 = vmatprep.subr.mxu0 0.0
  %278 = vmatpush2.msra.mxu0 0.0
  %279 = vmatprep.subr.mxu0 0.0
  %280 = vmatpush2.msra.mxu0 0.0
  %281 = vmatprep.subr.mxu0 0.0
  %282 = vmatpush2.msra.mxu0 0.0
  %283 = vmatprep.subr.mxu0 0.0
  %284 = vmatpush2.msra.mxu0 0.0
  %285 = vmatprep.mubr.f32.mxu0 0.0
  %286 = vmatmul.mubr.f32.gmra.mxu0 %v150
  %v287 = vpop.f32.mrf.mxu0
  %v288 = vadd.f32 %v55, %v287
  %v289 = vpop.f32.mrf.mxu0
  %290 = vmatprep.mubr.f32.mxu0 0.0
  %291 = vmatmul.mubr.f32.gmra.mxu0 %v153
  %v292 = vpop.f32.mrf.mxu0
  %v293 = vadd.f32 %v56, %v292
  %v294 = vpop.f32.mrf.mxu0
  %295 = vmatprep.mubr.f32.mxu0 0.0
  %296 = vmatmul.mubr.f32.gmra.mxu0 %v156
  %v297 = vpop.f32.mrf.mxu0
  %v298 = vadd.f32 %v57, %v297
  %v299 = vpop.f32.mrf.mxu0
  %300 = vmatprep.mubr.f32.mxu0 0.0
  %301 = vmatmul.mubr.f32.gmra.mxu0 %v159
  %v302 = vpop.f32.mrf.mxu0
  %v303 = vadd.f32 %v58, %v302
  %v304 = vpop.f32.mrf.mxu0
  %305 = vmatprep.mubr.f32.mxu0 0.0
  %306 = vmatmul.mubr.f32.gmra.mxu0 %v162
  %v307 = vpop.f32.mrf.mxu0
  %v308 = vadd.f32 %v59, %v307
  %v309 = vpop.f32.mrf.mxu0
  %310 = vmatprep.mubr.f32.mxu0 0.0
  %311 = vmatmul.mubr.f32.gmra.mxu0 %v165
  %v312 = vpop.f32.mrf.mxu0
  %v313 = vadd.f32 %v60, %v312
  %v314 = vpop.f32.mrf.mxu0
  %315 = vmatprep.mubr.f32.mxu0 0.0
  %316 = vmatmul.mubr.f32.gmra.mxu0 %v168
  %v317 = vpop.f32.mrf.mxu0
  %v318 = vadd.f32 %v61, %v317
  %v319 = vpop.f32.mrf.mxu0
  %320 = vmatprep.mubr.f32.mxu0 0.0
  %321 = vmatmul.mubr.f32.gmra.mxu0 %v171
  %v322 = vpop.f32.mrf.mxu0
  %v323 = vadd.f32 %v62, %v322
  %v324 = vpop.f32.mrf.mxu0
  %325 = vmatprep.mubr.f32.mxu0 0.0
  %326 = vmatmul.mubr.f32.gmra.mxu0 %v174
  %v327 = vpop.f32.mrf.mxu0
  %v328 = vadd.f32 %v63, %v327
  %v329 = vpop.f32.mrf.mxu0
  %330 = vmatprep.mubr.f32.mxu0 0.0
  %331 = vmatmul.mubr.f32.gmra.mxu0 %v177
  %v332 = vpop.f32.mrf.mxu0
  %v333 = vadd.f32 %v64, %v332
  %v334 = vpop.f32.mrf.mxu0
  %335 = vmatprep.mubr.f32.mxu0 0.0
  %336 = vmatmul.mubr.f32.gmra.mxu0 %v180
  %v337 = vpop.f32.mrf.mxu0
  %v338 = vadd.f32 %v65, %v337
  %v339 = vpop.f32.mrf.mxu0
  %340 = vmatprep.mubr.f32.mxu0 0.0
  %341 = vmatmul.mubr.f32.gmra.mxu0 %v183
  %v342 = vpop.f32.mrf.mxu0
  %v343 = vadd.f32 %v66, %v342
  %v344 = vpop.f32.mrf.mxu0
  %345 = vmatprep.mubr.f32.mxu0 0.0
  %346 = vmatmul.mubr.f32.gmra.mxu0 %v186
  %v347 = vpop.f32.mrf.mxu0
  %v348 = vadd.f32 %v67, %v347
  %v349 = vpop.f32.mrf.mxu0
  %350 = vmatprep.mubr.f32.mxu0 0.0
  %351 = vmatmul.mubr.f32.gmra.mxu0 %v189
  %v352 = vpop.f32.mrf.mxu0
  %v353 = vadd.f32 %v68, %v352
  %v354 = vpop.f32.mrf.mxu0
  %355 = vmatprep.mubr.f32.mxu0 0.0
  %356 = vmatmul.mubr.f32.gmra.mxu0 %v192
  %v357 = vpop.f32.mrf.mxu0
  %v358 = vadd.f32 %v69, %v357
  %v359 = vpop.f32.mrf.mxu0
  %360 = vmatprep.mubr.f32.mxu0 0.0
  %361 = vmatmul.mubr.f32.gmra.mxu0 %v195
  %v362 = vpop.f32.mrf.mxu0
  %v363 = vadd.f32 %v70, %v362
  %v364 = vpop.f32.mrf.mxu0
  %365 = vmatprep.mubr.f32.mxu0 0.0
  %366 = vmatmul.mubr.f32.gmra.mxu0 %v198
  %v367 = vpop.f32.mrf.mxu0
  %v368 = vadd.f32 %v71, %v367
  %v369 = vpop.f32.mrf.mxu0
  %370 = vmatprep.mubr.f32.mxu0 0.0
  %371 = vmatmul.mubr.f32.gmra.mxu0 %v201
  %v372 = vpop.f32.mrf.mxu0
  %v373 = vadd.f32 %v72, %v372
  %v374 = vpop.f32.mrf.mxu0
  %375 = vmatprep.mubr.f32.mxu0 0.0
  %376 = vmatmul.mubr.f32.gmra.mxu0 %v204
  %v377 = vpop.f32.mrf.mxu0
  %v378 = vadd.f32 %v73, %v377
  %v379 = vpop.f32.mrf.mxu0
  %380 = vmatprep.mubr.f32.mxu0 0.0
  %381 = vmatmul.mubr.f32.gmra.mxu0 %v207
  %v382 = vpop.f32.mrf.mxu0
  %v383 = vadd.f32 %v74, %v382
  %v384 = vpop.f32.mrf.mxu0
  %385 = vmatprep.mubr.f32.mxu0 0.0
  %386 = vmatmul.mubr.f32.gmra.mxu0 %v210
  %v387 = vpop.f32.mrf.mxu0
  %v388 = vadd.f32 %v75, %v387
  %v389 = vpop.f32.mrf.mxu0
  %390 = vmatprep.mubr.f32.mxu0 0.0
  %391 = vmatmul.mubr.f32.gmra.mxu0 %v213
  %v392 = vpop.f32.mrf.mxu0
  %v393 = vadd.f32 %v76, %v392
  %v394 = vpop.f32.mrf.mxu0
  %395 = vmatprep.mubr.f32.mxu0 0.0
  %396 = vmatmul.mubr.f32.gmra.mxu0 %v216
  %v397 = vpop.f32.mrf.mxu0
  %v398 = vadd.f32 %v77, %v397
  %v399 = vpop.f32.mrf.mxu0
  %400 = vmatprep.mubr.f32.mxu0 0.0
  %401 = vmatmul.mubr.f32.gmra.mxu0 %v219
  %v402 = vpop.f32.mrf.mxu0
  %v403 = vadd.f32 %v78, %v402
  %v404 = vpop.f32.mrf.mxu0
  %405 = vdwg.mxu0
  %v406 = vlaneseq
  %v407 = vshrl.u32 %v406, 7
  %v408 = vsub.s32 0, %v407
  %v409 = vrot.slane %v101, %v408
  %vm410 = vcmask 261120
  %v412 = vsel %vm410, %v288, 0
  %v415 = vsel %vm410, %v293, 0
  %v418 = vsel %vm410, %v298, 0
  %v421 = vsel %vm410, %v303, 0
  %v424 = vsel %vm410, %v308, 0
  %v427 = vsel %vm410, %v313, 0
  %v430 = vsel %vm410, %v318, 0
  %v433 = vsel %vm410, %v323, 0
  %v436 = vsel %vm410, %v328, 0
  %v439 = vsel %vm410, %v333, 0
  %v442 = vsel %vm410, %v338, 0
  %v445 = vsel %vm410, %v343, 0
  %v448 = vsel %vm410, %v348, 0
  %v451 = vsel %vm410, %v353, 0
  %v454 = vsel %vm410, %v358, 0
  %v457 = vsel %vm410, %v363, 0
  %v460 = vsel %vm410, %v368, 0
  %v463 = vsel %vm410, %v373, 0
  %v466 = vsel %vm410, %v378, 0
  %v469 = vsel %vm410, %v383, 0
  %v472 = vsel %vm410, %v388, 0
  %v475 = vsel %vm410, %v393, 0
  %v478 = vsel %vm410, %v398, 0
  %v481 = vsel %vm410, %v403, 0
  %483 = vmatprep.subr.mxu0 0.0
  %484 = vmatpush1.msra.mxu0 0.0
  %485 = vmatprep.subr.mxu0 0.0
  %486 = vmatpush1.msra.mxu0 0.0
  %487 = vmatprep.subr.mxu0 0.0
  %488 = vmatpush1.msra.mxu0 0.0
  %489 = vmatprep.subr.mxu0 0.0
  %490 = vmatpush1.msra.mxu0 0.0
  %491 = vmatprep.subr.mxu0 0.0
  %492 = vmatpush1.msra.mxu0 0.0
  %493 = vmatprep.subr.mxu0 0.0
  %494 = vmatpush1.msra.mxu0 0.0
  %495 = vmatprep.subr.mxu0 0.0
  %496 = vmatpush1.msra.mxu0 0.0
  %497 = vmatprep.subr.mxu0 0.0
  %498 = vmatpush1.msra.mxu0 0.0
  %499 = vmatprep.subr.mxu0 0.0
  %500 = vmatpush1.msra.mxu0 0.0
  %501 = vmatprep.subr.mxu0 0.0
  %502 = vmatpush1.msra.mxu0 0.0
  %503 = vmatprep.subr.mxu0 0.0
  %504 = vmatpush1.msra.mxu0 0.0
  %505 = vmatprep.subr.mxu0 0.0
  %506 = vmatpush1.msra.mxu0 0.0
  %507 = vmatprep.subr.mxu0 0.0
  %508 = vmatpush1.msra.mxu0 %v100
  %509 = vmatprep.subr.mxu0 0.0
  %510 = vmatpush1.msra.mxu0 %v99
  %511 = vmatprep.subr.mxu0 0.0
  %512 = vmatpush1.msra.mxu0 %v98
  %513 = vmatprep.subr.mxu0 0.0
  %514 = vmatpush1.msra.mxu0 %v97
  %515 = vmatprep.subr.mxu0 0.0
  %516 = vmatpush2.msra.mxu0 0.0
  %517 = vmatprep.subr.mxu0 0.0
  %518 = vmatpush2.msra.mxu0 0.0
  %519 = vmatprep.subr.mxu0 0.0
  %520 = vmatpush2.msra.mxu0 0.0
  %521 = vmatprep.subr.mxu0 0.0
  %522 = vmatpush2.msra.mxu0 0.0
  %523 = vmatprep.subr.mxu0 0.0
  %524 = vmatpush2.msra.mxu0 0.0
  %525 = vmatprep.subr.mxu0 0.0
  %526 = vmatpush2.msra.mxu0 0.0
  %527 = vmatprep.subr.mxu0 0.0
  %528 = vmatpush2.msra.mxu0 0.0
  %529 = vmatprep.subr.mxu0 0.0
  %530 = vmatpush2.msra.mxu0 0.0
  %531 = vmatprep.subr.mxu0 0.0
  %532 = vmatpush2.msra.mxu0 0.0
  %533 = vmatprep.subr.mxu0 0.0
  %534 = vmatpush2.msra.mxu0 0.0
  %535 = vmatprep.subr.mxu0 0.0
  %536 = vmatpush2.msra.mxu0 0.0
  %537 = vmatprep.subr.mxu0 0.0
  %538 = vmatpush2.msra.mxu0 0.0
  %539 = vmatprep.subr.mxu0 0.0
  %540 = vmatpush2.msra.mxu0 0.0
  %541 = vmatprep.subr.mxu0 0.0
  %542 = vmatpush2.msra.mxu0 0.0
  %543 = vmatprep.subr.mxu0 0.0
  %544 = vmatpush2.msra.mxu0 0.0
  %545 = vmatprep.subr.mxu0 0.0
  %546 = vmatpush2.msra.mxu0 0.0
  %547 = vmatprep.mubr.f32.mxu0 0.0
  %548 = vmatmul.mubr.f32.gmra.mxu0 %v412
  %v549 = vpop.f32.mrf.mxu0
  %v550 = vadd.f32 %v409, %v549
  %v551 = vpop.f32.mrf.mxu0
  %552 = vmatprep.mubr.f32.mxu0 0.0
  %553 = vmatmul.mubr.f32.gmra.mxu0 %v415
  %v554 = vpop.f32.mrf.mxu0
  %v555 = vadd.f32 %v409, %v554
  %v556 = vpop.f32.mrf.mxu0
  %557 = vmatprep.mubr.f32.mxu0 0.0
  %558 = vmatmul.mubr.f32.gmra.mxu0 %v418
  %v559 = vpop.f32.mrf.mxu0
  %v560 = vadd.f32 %v409, %v559
  %v561 = vpop.f32.mrf.mxu0
  %562 = vmatprep.mubr.f32.mxu0 0.0
  %563 = vmatmul.mubr.f32.gmra.mxu0 %v421
  %v564 = vpop.f32.mrf.mxu0
  %v565 = vadd.f32 %v409, %v564
  %v566 = vpop.f32.mrf.mxu0
  %567 = vmatprep.mubr.f32.mxu0 0.0
  %568 = vmatmul.mubr.f32.gmra.mxu0 %v424
  %v569 = vpop.f32.mrf.mxu0
  %v570 = vadd.f32 %v409, %v569
  %v571 = vpop.f32.mrf.mxu0
  %572 = vmatprep.mubr.f32.mxu0 0.0
  %573 = vmatmul.mubr.f32.gmra.mxu0 %v427
  %v574 = vpop.f32.mrf.mxu0
  %v575 = vadd.f32 %v409, %v574
  %v576 = vpop.f32.mrf.mxu0
  %577 = vmatprep.mubr.f32.mxu0 0.0
  %578 = vmatmul.mubr.f32.gmra.mxu0 %v430
  %v579 = vpop.f32.mrf.mxu0
  %v580 = vadd.f32 %v409, %v579
  %v581 = vpop.f32.mrf.mxu0
  %582 = vmatprep.mubr.f32.mxu0 0.0
  %583 = vmatmul.mubr.f32.gmra.mxu0 %v433
  %v584 = vpop.f32.mrf.mxu0
  %v585 = vadd.f32 %v409, %v584
  %v586 = vpop.f32.mrf.mxu0
  %587 = vmatprep.mubr.f32.mxu0 0.0
  %588 = vmatmul.mubr.f32.gmra.mxu0 %v436
  %v589 = vpop.f32.mrf.mxu0
  %v590 = vadd.f32 %v409, %v589
  %v591 = vpop.f32.mrf.mxu0
  %592 = vmatprep.mubr.f32.mxu0 0.0
  %593 = vmatmul.mubr.f32.gmra.mxu0 %v439
  %v594 = vpop.f32.mrf.mxu0
  %v595 = vadd.f32 %v409, %v594
  %v596 = vpop.f32.mrf.mxu0
  %597 = vmatprep.mubr.f32.mxu0 0.0
  %598 = vmatmul.mubr.f32.gmra.mxu0 %v442
  %v599 = vpop.f32.mrf.mxu0
  %v600 = vadd.f32 %v409, %v599
  %v601 = vpop.f32.mrf.mxu0
  %602 = vmatprep.mubr.f32.mxu0 0.0
  %603 = vmatmul.mubr.f32.gmra.mxu0 %v445
  %v604 = vpop.f32.mrf.mxu0
  %v605 = vadd.f32 %v409, %v604
  %v606 = vpop.f32.mrf.mxu0
  %607 = vmatprep.mubr.f32.mxu0 0.0
  %608 = vmatmul.mubr.f32.gmra.mxu0 %v448
  %v609 = vpop.f32.mrf.mxu0
  %v610 = vadd.f32 %v409, %v609
  %v611 = vpop.f32.mrf.mxu0
  %612 = vmatprep.mubr.f32.mxu0 0.0
  %613 = vmatmul.mubr.f32.gmra.mxu0 %v451
  %v614 = vpop.f32.mrf.mxu0
  %v615 = vadd.f32 %v409, %v614
  %v616 = vpop.f32.mrf.mxu0
  %617 = vmatprep.mubr.f32.mxu0 0.0
  %618 = vmatmul.mubr.f32.gmra.mxu0 %v454
  %v619 = vpop.f32.mrf.mxu0
  %v620 = vadd.f32 %v409, %v619
  %v621 = vpop.f32.mrf.mxu0
  %622 = vmatprep.mubr.f32.mxu0 0.0
  %623 = vmatmul.mubr.f32.gmra.mxu0 %v457
  %v624 = vpop.f32.mrf.mxu0
  %v625 = vadd.f32 %v409, %v624
  %v626 = vpop.f32.mrf.mxu0
  %627 = vmatprep.mubr.f32.mxu0 0.0
  %628 = vmatmul.mubr.f32.gmra.mxu0 %v460
  %v629 = vpop.f32.mrf.mxu0
  %v630 = vadd.f32 %v409, %v629
  %v631 = vpop.f32.mrf.mxu0
  %632 = vmatprep.mubr.f32.mxu0 0.0
  %633 = vmatmul.mubr.f32.gmra.mxu0 %v463
  %v634 = vpop.f32.mrf.mxu0
  %v635 = vadd.f32 %v409, %v634
  %v636 = vpop.f32.mrf.mxu0
  %637 = vmatprep.mubr.f32.mxu0 0.0
  %638 = vmatmul.mubr.f32.gmra.mxu0 %v466
  %v639 = vpop.f32.mrf.mxu0
  %v640 = vadd.f32 %v409, %v639
  %v641 = vpop.f32.mrf.mxu0
  %642 = vmatprep.mubr.f32.mxu0 0.0
  %643 = vmatmul.mubr.f32.gmra.mxu0 %v469
  %v644 = vpop.f32.mrf.mxu0
  %v645 = vadd.f32 %v409, %v644
  %v646 = vpop.f32.mrf.mxu0
  %647 = vmatprep.mubr.f32.mxu0 0.0
  %648 = vmatmul.mubr.f32.gmra.mxu0 %v472
  %v649 = vpop.f32.mrf.mxu0
  %v650 = vadd.f32 %v409, %v649
  %v651 = vpop.f32.mrf.mxu0
  %652 = vmatprep.mubr.f32.mxu0 0.0
  %653 = vmatmul.mubr.f32.gmra.mxu0 %v475
  %v654 = vpop.f32.mrf.mxu0
  %v655 = vadd.f32 %v409, %v654
  %v656 = vpop.f32.mrf.mxu0
  %657 = vmatprep.mubr.f32.mxu0 0.0
  %658 = vmatmul.mubr.f32.gmra.mxu0 %v478
  %v659 = vpop.f32.mrf.mxu0
  %v660 = vadd.f32 %v409, %v659
  %v661 = vpop.f32.mrf.mxu0
  %662 = vmatprep.mubr.f32.mxu0 0.0
  %663 = vmatmul.mubr.f32.gmra.mxu0 %v481
  %v664 = vpop.f32.mrf.mxu0
  %v665 = vadd.f32 %v409, %v664
  %v666 = vpop.f32.mrf.mxu0
  %667 = vdwg.mxu0
  %674 = vrot.lane.b32.xlu0 %v550, 96
  %v675 = vpop.permute.xlu0 %674
  %676 = vrot.lane.b32.xlu0 %v555, 96
  %v677 = vpop.permute.xlu0 %676
  %678 = vrot.lane.b32.xlu0 %v560, 96
  %v679 = vpop.permute.xlu0 %678
  %680 = vrot.lane.b32.xlu0 %v565, 96
  %v681 = vpop.permute.xlu0 %680
  %682 = vrot.lane.b32.xlu0 %v570, 96
  %v683 = vpop.permute.xlu0 %682
  %684 = vrot.lane.b32.xlu0 %v575, 96
  %v685 = vpop.permute.xlu0 %684
  %v686 = vsel %vm410, %v550, 0
  %v688 = vsel %vm410, %v555, 0
  %v690 = vsel %vm410, %v560, 0
  %v692 = vsel %vm410, %v565, 0
  %v694 = vsel %vm410, %v570, 0
  %v696 = vsel %vm410, %v575, 0
  %v698 = vsel %vm410, %v675, 0
  %v700 = vsel %vm410, %v677, 0
  %v702 = vsel %vm410, %v679, 0
  %v704 = vsel %vm410, %v681, 0
  %v706 = vsel %vm410, %v683, 0
  %v708 = vsel %vm410, %v685, 0
  %710 = vmatprep.subr.mxu0 0.0
  %711 = vmatpush1.xpose.msra.mxu0 0.0
  %712 = vmatprep.subr.mxu0 0.0
  %713 = vmatpush1.xpose.msra.mxu0 0.0
  %714 = vmatprep.subr.mxu0 0.0
  %715 = vmatpush1.xpose.msra.mxu0 0.0
  %716 = vmatprep.subr.mxu0 0.0
  %717 = vmatpush1.xpose.msra.mxu0 0.0
  %718 = vmatprep.subr.mxu0 0.0
  %719 = vmatpush1.xpose.msra.mxu0 0.0
  %720 = vmatprep.subr.mxu0 0.0
  %721 = vmatpush1.xpose.msra.mxu0 0.0
  %722 = vmatprep.subr.mxu0 0.0
  %723 = vmatpush1.xpose.msra.mxu0 0.0
  %724 = vmatprep.subr.mxu0 0.0
  %725 = vmatpush1.xpose.msra.mxu0 0.0
  %726 = vmatprep.subr.mxu0 0.0
  %727 = vmatpush1.xpose.msra.mxu0 0.0
  %728 = vmatprep.subr.mxu0 0.0
  %729 = vmatpush1.xpose.msra.mxu0 0.0
  %730 = vmatprep.subr.mxu0 0.0
  %731 = vmatpush1.xpose.msra.mxu0 %v708
  %732 = vmatprep.subr.mxu0 0.0
  %733 = vmatpush1.xpose.msra.mxu0 %v706
  %734 = vmatprep.subr.mxu0 0.0
  %735 = vmatpush1.xpose.msra.mxu0 %v704
  %736 = vmatprep.subr.mxu0 0.0
  %737 = vmatpush1.xpose.msra.mxu0 %v702
  %738 = vmatprep.subr.mxu0 0.0
  %739 = vmatpush1.xpose.msra.mxu0 %v700
  %740 = vmatprep.subr.mxu0 0.0
  %741 = vmatpush1.xpose.msra.mxu0 %v698
  %742 = vmatprep.subr.mxu0 0.0
  %743 = vmatpush2.xpose.msra.mxu0 0.0
  %744 = vmatprep.subr.mxu0 0.0
  %745 = vmatpush2.xpose.msra.mxu0 0.0
  %746 = vmatprep.subr.mxu0 0.0
  %747 = vmatpush2.xpose.msra.mxu0 0.0
  %748 = vmatprep.subr.mxu0 0.0
  %749 = vmatpush2.xpose.msra.mxu0 0.0
  %750 = vmatprep.subr.mxu0 0.0
  %751 = vmatpush2.xpose.msra.mxu0 0.0
  %752 = vmatprep.subr.mxu0 0.0
  %753 = vmatpush2.xpose.msra.mxu0 0.0
  %754 = vmatprep.subr.mxu0 0.0
  %755 = vmatpush2.xpose.msra.mxu0 0.0
  %756 = vmatprep.subr.mxu0 0.0
  %757 = vmatpush2.xpose.msra.mxu0 0.0
  %758 = vmatprep.subr.mxu0 0.0
  %759 = vmatpush2.xpose.msra.mxu0 0.0
  %760 = vmatprep.subr.mxu0 0.0
  %761 = vmatpush2.xpose.msra.mxu0 0.0
  %762 = vmatprep.subr.mxu0 0.0
  %763 = vmatpush2.xpose.msra.mxu0 0.0
  %764 = vmatprep.subr.mxu0 0.0
  %765 = vmatpush2.xpose.msra.mxu0 0.0
  %766 = vmatprep.subr.mxu0 0.0
  %767 = vmatpush2.xpose.msra.mxu0 0.0
  %768 = vmatprep.subr.mxu0 0.0
  %769 = vmatpush2.xpose.msra.mxu0 0.0
  %770 = vmatprep.subr.mxu0 0.0
  %771 = vmatpush2.xpose.msra.mxu0 0.0
  %772 = vmatprep.subr.mxu0 0.0
  %773 = vmatpush2.xpose.msra.mxu0 0.0
  %774 = vmatprep.mubr.f32.mxu0 0.0
  %775 = vmatmul.mubr.f32.gmra.mxu0 %v686
  %v776 = vpop.f32.mrf.mxu0
  %v777 = vadd.f32 %v147, %v776
  %v778 = vpop.f32.mrf.mxu0
  %779 = vmatprep.mubr.f32.mxu0 0.0
  %780 = vmatmul.mubr.f32.gmra.mxu0 %v688
  %v781 = vpop.f32.mrf.mxu0
  %v782 = vadd.f32 %v147, %v781
  %v783 = vpop.f32.mrf.mxu0
  %784 = vmatprep.mubr.f32.mxu0 0.0
  %785 = vmatmul.mubr.f32.gmra.mxu0 %v690
  %v786 = vpop.f32.mrf.mxu0
  %v787 = vadd.f32 %v147, %v786
  %v788 = vpop.f32.mrf.mxu0
  %789 = vmatprep.mubr.f32.mxu0 0.0
  %790 = vmatmul.mubr.f32.gmra.mxu0 %v692
  %v791 = vpop.f32.mrf.mxu0
  %v792 = vadd.f32 %v147, %v791
  %v793 = vpop.f32.mrf.mxu0
  %794 = vmatprep.mubr.f32.mxu0 0.0
  %795 = vmatmul.mubr.f32.gmra.mxu0 %v694
  %v796 = vpop.f32.mrf.mxu0
  %v797 = vadd.f32 %v147, %v796
  %v798 = vpop.f32.mrf.mxu0
  %799 = vmatprep.mubr.f32.mxu0 0.0
  %800 = vmatmul.mubr.f32.gmra.mxu0 %v696
  %v801 = vpop.f32.mrf.mxu0
  %v802 = vadd.f32 %v147, %v801
  %v803 = vpop.f32.mrf.mxu0
  %804 = vdwg.mxu0
  %vm805 = vcmask 392192
  %v806 = vsel %vm805, %v777, -inf
  %807 = vmax.xlane.f32.xlu0 %v806
  %v808 = vpop.xlane.xlu0 %807
  %v809 = vsel %vm805, %v782, -inf
  %810 = vmax.xlane.f32.xlu0 %v809
  %v811 = vpop.xlane.xlu0 %810
  %v812 = vsel %vm805, %v787, -inf
  %813 = vmax.xlane.f32.xlu0 %v812
  %v814 = vpop.xlane.xlu0 %813
  %v815 = vsel %vm805, %v792, -inf
  %816 = vmax.xlane.f32.xlu0 %v815
  %v817 = vpop.xlane.xlu0 %816
  %v818 = vsel %vm805, %v797, -inf
  %819 = vmax.xlane.f32.xlu0 %v818
  %v820 = vpop.xlane.xlu0 %819
  %v821 = vsel %vm805, %v802, -inf
  %822 = vmax.xlane.f32.xlu0 %v821
  %v823 = vpop.xlane.xlu0 %822
  %v824 = vsub.f32 %v777, %v808
  %v825 = vsub.f32 %v782, %v811
  %v826 = vsub.f32 %v787, %v814
  %v827 = vsub.f32 %v792, %v817
  %v828 = vsub.f32 %v797, %v820
  %v829 = vsub.f32 %v802, %v823
  %v830 = vmul.f32 %v824, 1.442695
  %v831 = vpow.pop %v830
  %v832 = vmul.f32 %v825, 1.442695
  %v833 = vpow.pop %v832
  %v834 = vmul.f32 %v826, 1.442695
  %v835 = vpow.pop %v834
  %v836 = vmul.f32 %v827, 1.442695
  %v837 = vpow.pop %v836
  %v838 = vmul.f32 %v828, 1.442695
  %v839 = vpow.pop %v838
  %v840 = vmul.f32 %v829, 1.442695
  %v841 = vpow.pop %v840
  %v842 = vsel %vm805, %v831, 0.0
  %843 = vadd.xlane.f32.xlu0 %v842
  %v844 = vpop.xlane.xlu0 %843
  %v845 = vsel %vm805, %v833, 0.0
  %846 = vadd.xlane.f32.xlu0 %v845
  %v847 = vpop.xlane.xlu0 %846
  %v848 = vsel %vm805, %v835, 0.0
  %849 = vadd.xlane.f32.xlu0 %v848
  %v850 = vpop.xlane.xlu0 %849
  %v851 = vsel %vm805, %v837, 0.0
  %852 = vadd.xlane.f32.xlu0 %v851
  %v853 = vpop.xlane.xlu0 %852
  %v854 = vsel %vm805, %v839, 0.0
  %855 = vadd.xlane.f32.xlu0 %v854
  %v856 = vpop.xlane.xlu0 %855
  %v857 = vsel %vm805, %v841, 0.0
  %858 = vadd.xlane.f32.xlu0 %v857
  %v859 = vpop.xlane.xlu0 %858
  %v860 = vrcp.pop %v844
  %v861 = vrcp.pop %v847
  %v862 = vrcp.pop %v850
  %v863 = vrcp.pop %v853
  %v864 = vrcp.pop %v856
  %v865 = vrcp.pop %v859
  %v866 = vmul.f32 %v831, %v860
  %v867 = vmul.f32 %v833, %v861
  %v868 = vmul.f32 %v835, %v862
  %v869 = vmul.f32 %v837, %v863
  %v870 = vmul.f32 %v839, %v864
  %v871 = vmul.f32 %v841, %v865
  %872 = vrot.lane.b32.xlu0 %v550, 64
  %v873 = vpop.permute.xlu0 %872
  %874 = vrot.lane.b32.xlu0 %v555, 64
  %v875 = vpop.permute.xlu0 %874
  %876 = vrot.lane.b32.xlu0 %v560, 64
  %v877 = vpop.permute.xlu0 %876
  %878 = vrot.lane.b32.xlu0 %v565, 64
  %v879 = vpop.permute.xlu0 %878
  %880 = vrot.lane.b32.xlu0 %v570, 64
  %v881 = vpop.permute.xlu0 %880
  %882 = vrot.lane.b32.xlu0 %v575, 64
  %v883 = vpop.permute.xlu0 %882
  %v891 = vsel %vm805, %v866, 0
  %v894 = vsel %vm805, %v867, 0
  %v897 = vsel %vm805, %v868, 0
  %v900 = vsel %vm805, %v869, 0
  %v903 = vsel %vm805, %v870, 0
  %v906 = vsel %vm805, %v871, 0
  %908 = vmatprep.subr.mxu0 0.0
  %909 = vmatpush1.msra.mxu0 0.0
  %910 = vmatprep.subr.mxu0 0.0
  %911 = vmatpush1.msra.mxu0 0.0
  %912 = vmatprep.subr.mxu0 0.0
  %913 = vmatpush1.msra.mxu0 0.0
  %914 = vmatprep.subr.mxu0 0.0
  %915 = vmatpush1.msra.mxu0 0.0
  %916 = vmatprep.subr.mxu0 0.0
  %917 = vmatpush1.msra.mxu0 0.0
  %918 = vmatprep.subr.mxu0 0.0
  %919 = vmatpush1.msra.mxu0 0.0
  %920 = vmatprep.subr.mxu0 0.0
  %921 = vmatpush1.msra.mxu0 0.0
  %922 = vmatprep.subr.mxu0 0.0
  %923 = vmatpush1.msra.mxu0 0.0
  %924 = vmatprep.subr.mxu0 0.0
  %925 = vmatpush1.msra.mxu0 0.0
  %926 = vmatprep.subr.mxu0 0.0
  %927 = vmatpush1.msra.mxu0 0.0
  %928 = vmatprep.subr.mxu0 0.0
  %929 = vmatpush1.msra.mxu0 %v883
  %930 = vmatprep.subr.mxu0 0.0
  %931 = vmatpush1.msra.mxu0 %v881
  %932 = vmatprep.subr.mxu0 0.0
  %933 = vmatpush1.msra.mxu0 %v879
  %934 = vmatprep.subr.mxu0 0.0
  %935 = vmatpush1.msra.mxu0 %v877
  %936 = vmatprep.subr.mxu0 0.0
  %937 = vmatpush1.msra.mxu0 %v875
  %938 = vmatprep.subr.mxu0 0.0
  %939 = vmatpush1.msra.mxu0 %v873
  %940 = vmatprep.subr.mxu0 0.0
  %941 = vmatpush2.msra.mxu0 0.0
  %942 = vmatprep.subr.mxu0 0.0
  %943 = vmatpush2.msra.mxu0 0.0
  %944 = vmatprep.subr.mxu0 0.0
  %945 = vmatpush2.msra.mxu0 0.0
  %946 = vmatprep.subr.mxu0 0.0
  %947 = vmatpush2.msra.mxu0 0.0
  %948 = vmatprep.subr.mxu0 0.0
  %949 = vmatpush2.msra.mxu0 0.0
  %950 = vmatprep.subr.mxu0 0.0
  %951 = vmatpush2.msra.mxu0 0.0
  %952 = vmatprep.subr.mxu0 0.0
  %953 = vmatpush2.msra.mxu0 0.0
  %954 = vmatprep.subr.mxu0 0.0
  %955 = vmatpush2.msra.mxu0 0.0
  %956 = vmatprep.subr.mxu0 0.0
  %957 = vmatpush2.msra.mxu0 0.0
  %958 = vmatprep.subr.mxu0 0.0
  %959 = vmatpush2.msra.mxu0 0.0
  %960 = vmatprep.subr.mxu0 0.0
  %961 = vmatpush2.msra.mxu0 0.0
  %962 = vmatprep.subr.mxu0 0.0
  %963 = vmatpush2.msra.mxu0 0.0
  %964 = vmatprep.subr.mxu0 0.0
  %965 = vmatpush2.msra.mxu0 0.0
  %966 = vmatprep.subr.mxu0 0.0
  %967 = vmatpush2.msra.mxu0 0.0
  %968 = vmatprep.subr.mxu0 0.0
  %969 = vmatpush2.msra.mxu0 0.0
  %970 = vmatprep.subr.mxu0 0.0
  %971 = vmatpush2.msra.mxu0 0.0
  %972 = vmatprep.mubr.f32.mxu0 0.0
  %973 = vmatmul.mubr.f32.gmra.mxu0 %v891
  %v974 = vpop.f32.mrf.mxu0
  %v975 = vadd.f32 0.0, %v974
  %v976 = vpop.f32.mrf.mxu0
  %977 = vmatprep.mubr.f32.mxu0 0.0
  %978 = vmatmul.mubr.f32.gmra.mxu0 %v894
  %v979 = vpop.f32.mrf.mxu0
  %v980 = vadd.f32 0.0, %v979
  %v981 = vpop.f32.mrf.mxu0
  %982 = vmatprep.mubr.f32.mxu0 0.0
  %983 = vmatmul.mubr.f32.gmra.mxu0 %v897
  %v984 = vpop.f32.mrf.mxu0
  %v985 = vadd.f32 0.0, %v984
  %v986 = vpop.f32.mrf.mxu0
  %987 = vmatprep.mubr.f32.mxu0 0.0
  %988 = vmatmul.mubr.f32.gmra.mxu0 %v900
  %v989 = vpop.f32.mrf.mxu0
  %v990 = vadd.f32 0.0, %v989
  %v991 = vpop.f32.mrf.mxu0
  %992 = vmatprep.mubr.f32.mxu0 0.0
  %993 = vmatmul.mubr.f32.gmra.mxu0 %v903
  %v994 = vpop.f32.mrf.mxu0
  %v995 = vadd.f32 0.0, %v994
  %v996 = vpop.f32.mrf.mxu0
  %997 = vmatprep.mubr.f32.mxu0 0.0
  %998 = vmatmul.mubr.f32.gmra.mxu0 %v906
  %v999 = vpop.f32.mrf.mxu0
  %v1000 = vadd.f32 0.0, %v999
  %v1001 = vpop.f32.mrf.mxu0
  %1002 = vdwg.mxu0
  %v1003 = vlaneseq
  %v1004 = vshrl.u32 %v1003, 7
  %v1005 = vsub.s32 0, %v1004
  %v1006 = vrot.slane %v91, %v1005
  %v1008 = vsel %vm410, %v975, 0
  %v1011 = vsel %vm410, %v980, 0
  %v1014 = vsel %vm410, %v985, 0
  %v1017 = vsel %vm410, %v990, 0
  %v1020 = vsel %vm410, %v995, 0
  %v1023 = vsel %vm410, %v1000, 0
  %1025 = vmatprep.subr.mxu0 0.0
  %1026 = vmatpush1.msra.mxu0 0.0
  %1027 = vmatprep.subr.mxu0 0.0
  %1028 = vmatpush1.msra.mxu0 0.0
  %1029 = vmatprep.subr.mxu0 0.0
  %1030 = vmatpush1.msra.mxu0 0.0
  %1031 = vmatprep.subr.mxu0 0.0
  %1032 = vmatpush1.msra.mxu0 0.0
  %1033 = vmatprep.subr.mxu0 0.0
  %1034 = vmatpush1.msra.mxu0 0.0
  %1035 = vmatprep.subr.mxu0 0.0
  %1036 = vmatpush1.msra.mxu0 0.0
  %1037 = vmatprep.subr.mxu0 0.0
  %1038 = vmatpush1.msra.mxu0 0.0
  %1039 = vmatprep.subr.mxu0 0.0
  %1040 = vmatpush1.msra.mxu0 0.0
  %1041 = vmatprep.subr.mxu0 0.0
  %1042 = vmatpush1.msra.mxu0 0.0
  %1043 = vmatprep.subr.mxu0 0.0
  %1044 = vmatpush1.msra.mxu0 0.0
  %1045 = vmatprep.subr.mxu0 0.0
  %1046 = vmatpush1.msra.mxu0 0.0
  %1047 = vmatprep.subr.mxu0 0.0
  %1048 = vmatpush1.msra.mxu0 0.0
  %1049 = vmatprep.subr.mxu0 0.0
  %1050 = vmatpush1.msra.mxu0 %v82
  %1051 = vmatprep.subr.mxu0 0.0
  %1052 = vmatpush1.msra.mxu0 %v81
  %1053 = vmatprep.subr.mxu0 0.0
  %1054 = vmatpush1.msra.mxu0 %v80
  %1055 = vmatprep.subr.mxu0 0.0
  %1056 = vmatpush1.msra.mxu0 %v79
  %1057 = vmatprep.subr.mxu0 0.0
  %1058 = vmatpush2.msra.mxu0 0.0
  %1059 = vmatprep.subr.mxu0 0.0
  %1060 = vmatpush2.msra.mxu0 0.0
  %1061 = vmatprep.subr.mxu0 0.0
  %1062 = vmatpush2.msra.mxu0 0.0
  %1063 = vmatprep.subr.mxu0 0.0
  %1064 = vmatpush2.msra.mxu0 0.0
  %1065 = vmatprep.subr.mxu0 0.0
  %1066 = vmatpush2.msra.mxu0 0.0
  %1067 = vmatprep.subr.mxu0 0.0
  %1068 = vmatpush2.msra.mxu0 0.0
  %1069 = vmatprep.subr.mxu0 0.0
  %1070 = vmatpush2.msra.mxu0 0.0
  %1071 = vmatprep.subr.mxu0 0.0
  %1072 = vmatpush2.msra.mxu0 0.0
  %1073 = vmatprep.subr.mxu0 0.0
  %1074 = vmatpush2.msra.mxu0 0.0
  %1075 = vmatprep.subr.mxu0 0.0
  %1076 = vmatpush2.msra.mxu0 0.0
  %1077 = vmatprep.subr.mxu0 0.0
  %1078 = vmatpush2.msra.mxu0 0.0
  %1079 = vmatprep.subr.mxu0 0.0
  %1080 = vmatpush2.msra.mxu0 0.0
  %1081 = vmatprep.subr.mxu0 0.0
  %1082 = vmatpush2.msra.mxu0 0.0
  %1083 = vmatprep.subr.mxu0 0.0
  %1084 = vmatpush2.msra.mxu0 0.0
  %1085 = vmatprep.subr.mxu0 0.0
  %1086 = vmatpush2.msra.mxu0 0.0
  %1087 = vmatprep.subr.mxu0 0.0
  %1088 = vmatpush2.msra.mxu0 0.0
  %1089 = vmatprep.mubr.f32.mxu0 0.0
  %1090 = vmatmul.mubr.f32.gmra.mxu0 %v1008
  %v1091 = vpop.f32.mrf.mxu0
  %v1092 = vadd.f32 %v1006, %v1091
  %v1093 = vpop.f32.mrf.mxu0
  %1094 = vmatprep.mubr.f32.mxu0 0.0
  %1095 = vmatmul.mubr.f32.gmra.mxu0 %v1011
  %v1096 = vpop.f32.mrf.mxu0
  %v1097 = vadd.f32 %v1006, %v1096
  %v1098 = vpop.f32.mrf.mxu0
  %1099 = vmatprep.mubr.f32.mxu0 0.0
  %1100 = vmatmul.mubr.f32.gmra.mxu0 %v1014
  %v1101 = vpop.f32.mrf.mxu0
  %v1102 = vadd.f32 %v1006, %v1101
  %v1103 = vpop.f32.mrf.mxu0
  %1104 = vmatprep.mubr.f32.mxu0 0.0
  %1105 = vmatmul.mubr.f32.gmra.mxu0 %v1017
  %v1106 = vpop.f32.mrf.mxu0
  %v1107 = vadd.f32 %v1006, %v1106
  %v1108 = vpop.f32.mrf.mxu0
  %1109 = vmatprep.mubr.f32.mxu0 0.0
  %1110 = vmatmul.mubr.f32.gmra.mxu0 %v1020
  %v1111 = vpop.f32.mrf.mxu0
  %v1112 = vadd.f32 %v1006, %v1111
  %v1113 = vpop.f32.mrf.mxu0
  %1114 = vmatprep.mubr.f32.mxu0 0.0
  %1115 = vmatmul.mubr.f32.gmra.mxu0 %v1023
  %v1116 = vpop.f32.mrf.mxu0
  %v1117 = vadd.f32 %v1006, %v1116
  %v1118 = vpop.f32.mrf.mxu0
  %1119 = vdwg.mxu0
  %1120 = vxpose.xlu0.b32.start [1/16] %v1092, 128
  %1121 = vxpose.xlu0.b32.cont [2/16] %v1097, 128
  %1122 = vxpose.xlu0.b32.cont [3/16] %v1102, 128
  %1123 = vxpose.xlu0.b32.cont [4/16] %v1107, 128
  %1124 = vxpose.xlu0.b32.cont [5/16] %v1112, 128
  %1125 = vxpose.xlu0.b32.cont [6/16] %v1117, 128
  %1126 = vxpose.xlu0.b32.cont [7/16] 0.0, 128
  %1127 = vxpose.xlu0.b32.cont [8/16] 0.0, 128
  %1128 = vxpose.xlu0.b32.cont [9/16] 0.0, 128
  %1129 = vxpose.xlu0.b32.cont [10/16] 0.0, 128
  %1130 = vxpose.xlu0.b32.cont [11/16] 0.0, 128
  %1131 = vxpose.xlu0.b32.cont [12/16] 0.0, 128
  %1132 = vxpose.xlu0.b32.cont [13/16] 0.0, 128
  %1133 = vxpose.xlu0.b32.cont [14/16] 0.0, 128
  %1134 = vxpose.xlu0.b32.cont [15/16] 0.0, 128
  %1135 = vxpose.xlu0.b32.end [16/16] 0.0, 128
  %v1136 = vpop.trf.xlu0
  %v1137 = vpop.trf.xlu0
  %v1138 = vpop.trf.xlu0
  %v1139 = vpop.trf.xlu0
  %v1140 = vpop.trf.xlu0
  %v1141 = vpop.trf.xlu0
  %v1142 = vpop.trf.xlu0
  %v1143 = vpop.trf.xlu0
  %v1144 = vpop.trf.xlu0
  %v1145 = vpop.trf.xlu0
  %v1146 = vpop.trf.xlu0
  %v1147 = vpop.trf.xlu0
  %v1148 = vpop.trf.xlu0
  %v1149 = vpop.trf.xlu0
  %v1150 = vpop.trf.xlu0
  %v1151 = vpop.trf.xlu0
  %v1153 = vlaneseq
  %v1154 = vshrl.u32 %v1153, 7
  %v1155 = vsub.s32 0, %v1154
  %v1156 = vrot.slane %v115, %v1155
  %v1157 = vlaneseq
  %v1158 = vshrl.u32 %v1157, 7
  %v1159 = vsub.s32 1, %v1158
  %v1160 = vrot.slane %v115, %v1159
  %v1164 = vsel %vm805, %v1136, 0
  %v1167 = vsel %vm805, %v1137, 0
  %v1170 = vsel %vm805, %v1138, 0
  %v1173 = vsel %vm805, %v1139, 0
  %1175 = vmatprep.subr.mxu0 0.0
  %1176 = vmatpush1.msra.mxu0 0.0
  %1177 = vmatprep.subr.mxu0 0.0
  %1178 = vmatpush1.msra.mxu0 0.0
  %1179 = vmatprep.subr.mxu0 0.0
  %1180 = vmatpush1.msra.mxu0 0.0
  %1181 = vmatprep.subr.mxu0 0.0
  %1182 = vmatpush1.msra.mxu0 0.0
  %1183 = vmatprep.subr.mxu0 0.0
  %1184 = vmatpush1.msra.mxu0 0.0
  %1185 = vmatprep.subr.mxu0 0.0
  %1186 = vmatpush1.msra.mxu0 0.0
  %1187 = vmatprep.subr.mxu0 0.0
  %1188 = vmatpush1.msra.mxu0 0.0
  %1189 = vmatprep.subr.mxu0 0.0
  %1190 = vmatpush1.msra.mxu0 0.0
  %1191 = vmatprep.subr.mxu0 0.0
  %1192 = vmatpush1.msra.mxu0 0.0
  %1193 = vmatprep.subr.mxu0 0.0
  %1194 = vmatpush1.msra.mxu0 0.0
  %1195 = vmatprep.subr.mxu0 %v113
  %1196 = vmatpush1.msra.mxu0 %v112
  %1197 = vmatprep.subr.mxu0 %v111
  %1198 = vmatpush1.msra.mxu0 %v110
  %1199 = vmatprep.subr.mxu0 %v109
  %1200 = vmatpush1.msra.mxu0 %v108
  %1201 = vmatprep.subr.mxu0 %v107
  %1202 = vmatpush1.msra.mxu0 %v106
  %1203 = vmatprep.subr.mxu0 %v105
  %1204 = vmatpush1.msra.mxu0 %v104
  %1205 = vmatprep.subr.mxu0 %v103
  %1206 = vmatpush1.msra.mxu0 %v102
  %1207 = vmatprep.subr.mxu0 0.0
  %1208 = vmatpush2.msra.mxu0 0.0
  %1209 = vmatprep.subr.mxu0 0.0
  %1210 = vmatpush2.msra.mxu0 0.0
  %1211 = vmatprep.subr.mxu0 0.0
  %1212 = vmatpush2.msra.mxu0 0.0
  %1213 = vmatprep.subr.mxu0 0.0
  %1214 = vmatpush2.msra.mxu0 0.0
  %1215 = vmatprep.subr.mxu0 0.0
  %1216 = vmatpush2.msra.mxu0 0.0
  %1217 = vmatprep.subr.mxu0 0.0
  %1218 = vmatpush2.msra.mxu0 0.0
  %1219 = vmatprep.subr.mxu0 0.0
  %1220 = vmatpush2.msra.mxu0 0.0
  %1221 = vmatprep.subr.mxu0 0.0
  %1222 = vmatpush2.msra.mxu0 0.0
  %1223 = vmatprep.subr.mxu0 0.0
  %1224 = vmatpush2.msra.mxu0 0.0
  %1225 = vmatprep.subr.mxu0 0.0
  %1226 = vmatpush2.msra.mxu0 0.0
  %1227 = vmatprep.subr.mxu0 0.0
  %1228 = vmatpush2.msra.mxu0 0.0
  %1229 = vmatprep.subr.mxu0 0.0
  %1230 = vmatpush2.msra.mxu0 0.0
  %1231 = vmatprep.subr.mxu0 0.0
  %1232 = vmatpush2.msra.mxu0 0.0
  %1233 = vmatprep.subr.mxu0 0.0
  %1234 = vmatpush2.msra.mxu0 0.0
  %1235 = vmatprep.subr.mxu0 0.0
  %1236 = vmatpush2.msra.mxu0 0.0
  %1237 = vmatprep.subr.mxu0 0.0
  %1238 = vmatpush2.msra.mxu0 0.0
  %1239 = vmatprep.mubr.f32.mxu0 0.0
  %1240 = vmatmul.mubr.f32.gmra.mxu0 %v1164
  %v1241 = vpop.f32.mrf.mxu0
  %v1242 = vadd.f32 %v1156, %v1241
  %v1243 = vpop.f32.mrf.mxu0
  %v1244 = vadd.f32 %v1160, %v1243
  %1245 = vmatprep.mubr.f32.mxu0 0.0
  %1246 = vmatmul.mubr.f32.gmra.mxu0 %v1167
  %v1247 = vpop.f32.mrf.mxu0
  %v1248 = vadd.f32 %v1156, %v1247
  %v1249 = vpop.f32.mrf.mxu0
  %v1250 = vadd.f32 %v1160, %v1249
  %1251 = vmatprep.mubr.f32.mxu0 0.0
  %1252 = vmatmul.mubr.f32.gmra.mxu0 %v1170
  %v1253 = vpop.f32.mrf.mxu0
  %v1254 = vadd.f32 %v1156, %v1253
  %v1255 = vpop.f32.mrf.mxu0
  %v1256 = vadd.f32 %v1160, %v1255
  %1257 = vmatprep.mubr.f32.mxu0 0.0
  %1258 = vmatmul.mubr.f32.gmra.mxu0 %v1173
  %v1259 = vpop.f32.mrf.mxu0
  %v1260 = vadd.f32 %v1156, %v1259
  %v1261 = vpop.f32.mrf.mxu0
  %v1262 = vadd.f32 %v1160, %v1261
  %1263 = vdwg.mxu0
  %1268 = vrot.lane.b32.xlu0 %v1242, 48
  %v1269 = vpop.permute.xlu0 %1268
  %1270 = vrot.lane.b32.xlu0 %v1248, 48
  %v1271 = vpop.permute.xlu0 %1270
  %1272 = vrot.lane.b32.xlu0 %v1254, 48
  %v1273 = vpop.permute.xlu0 %1272
  %1274 = vrot.lane.b32.xlu0 %v1260, 48
  %v1275 = vpop.permute.xlu0 %1274
  %v1276 = vsel %vm148, %v1242, 0
  %v1278 = vsel %vm148, %v1248, 0
  %v1280 = vsel %vm148, %v1254, 0
  %v1282 = vsel %vm148, %v1260, 0
  %v1284 = vsel %vm148, %v1269, 0
  %v1286 = vsel %vm148, %v1271, 0
  %v1288 = vsel %vm148, %v1273, 0
  %v1290 = vsel %vm148, %v1275, 0
  %1292 = vmatprep.subr.mxu0 0.0
  %1293 = vmatpush1.xpose.msra.mxu0 0.0
  %1294 = vmatprep.subr.mxu0 0.0
  %1295 = vmatpush1.xpose.msra.mxu0 0.0
  %1296 = vmatprep.subr.mxu0 0.0
  %1297 = vmatpush1.xpose.msra.mxu0 0.0
  %1298 = vmatprep.subr.mxu0 0.0
  %1299 = vmatpush1.xpose.msra.mxu0 0.0
  %1300 = vmatprep.subr.mxu0 0.0
  %1301 = vmatpush1.xpose.msra.mxu0 0.0
  %1302 = vmatprep.subr.mxu0 0.0
  %1303 = vmatpush1.xpose.msra.mxu0 0.0
  %1304 = vmatprep.subr.mxu0 0.0
  %1305 = vmatpush1.xpose.msra.mxu0 0.0
  %1306 = vmatprep.subr.mxu0 0.0
  %1307 = vmatpush1.xpose.msra.mxu0 0.0
  %1308 = vmatprep.subr.mxu0 0.0
  %1309 = vmatpush1.xpose.msra.mxu0 0.0
  %1310 = vmatprep.subr.mxu0 0.0
  %1311 = vmatpush1.xpose.msra.mxu0 0.0
  %1312 = vmatprep.subr.mxu0 0.0
  %1313 = vmatpush1.xpose.msra.mxu0 0.0
  %1314 = vmatprep.subr.mxu0 0.0
  %1315 = vmatpush1.xpose.msra.mxu0 0.0
  %1316 = vmatprep.subr.mxu0 0.0
  %1317 = vmatpush1.xpose.msra.mxu0 %v1290
  %1318 = vmatprep.subr.mxu0 0.0
  %1319 = vmatpush1.xpose.msra.mxu0 %v1288
  %1320 = vmatprep.subr.mxu0 0.0
  %1321 = vmatpush1.xpose.msra.mxu0 %v1286
  %1322 = vmatprep.subr.mxu0 0.0
  %1323 = vmatpush1.xpose.msra.mxu0 %v1284
  %1324 = vmatprep.subr.mxu0 0.0
  %1325 = vmatpush2.xpose.msra.mxu0 0.0
  %1326 = vmatprep.subr.mxu0 0.0
  %1327 = vmatpush2.xpose.msra.mxu0 0.0
  %1328 = vmatprep.subr.mxu0 0.0
  %1329 = vmatpush2.xpose.msra.mxu0 0.0
  %1330 = vmatprep.subr.mxu0 0.0
  %1331 = vmatpush2.xpose.msra.mxu0 0.0
  %1332 = vmatprep.subr.mxu0 0.0
  %1333 = vmatpush2.xpose.msra.mxu0 0.0
  %1334 = vmatprep.subr.mxu0 0.0
  %1335 = vmatpush2.xpose.msra.mxu0 0.0
  %1336 = vmatprep.subr.mxu0 0.0
  %1337 = vmatpush2.xpose.msra.mxu0 0.0
  %1338 = vmatprep.subr.mxu0 0.0
  %1339 = vmatpush2.xpose.msra.mxu0 0.0
  %1340 = vmatprep.subr.mxu0 0.0
  %1341 = vmatpush2.xpose.msra.mxu0 0.0
  %1342 = vmatprep.subr.mxu0 0.0
  %1343 = vmatpush2.xpose.msra.mxu0 0.0
  %1344 = vmatprep.subr.mxu0 0.0
  %1345 = vmatpush2.xpose.msra.mxu0 0.0
  %1346 = vmatprep.subr.mxu0 0.0
  %1347 = vmatpush2.xpose.msra.mxu0 0.0
  %1348 = vmatprep.subr.mxu0 0.0
  %1349 = vmatpush2.xpose.msra.mxu0 0.0
  %1350 = vmatprep.subr.mxu0 0.0
  %1351 = vmatpush2.xpose.msra.mxu0 0.0
  %1352 = vmatprep.subr.mxu0 0.0
  %1353 = vmatpush2.xpose.msra.mxu0 0.0
  %1354 = vmatprep.subr.mxu0 0.0
  %1355 = vmatpush2.xpose.msra.mxu0 0.0
  %1356 = vmatprep.mubr.f32.mxu0 0.0
  %1357 = vmatmul.mubr.f32.gmra.mxu0 %v1276
  %v1358 = vpop.f32.mrf.mxu0
  %v1359 = vadd.f32 0.0, %v1358
  %v1360 = vpop.f32.mrf.mxu0
  %1361 = vmatprep.mubr.f32.mxu0 0.0
  %1362 = vmatmul.mubr.f32.gmra.mxu0 %v1278
  %v1363 = vpop.f32.mrf.mxu0
  %v1364 = vadd.f32 0.0, %v1363
  %v1365 = vpop.f32.mrf.mxu0
  %1366 = vmatprep.mubr.f32.mxu0 0.0
  %1367 = vmatmul.mubr.f32.gmra.mxu0 %v1280
  %v1368 = vpop.f32.mrf.mxu0
  %v1369 = vadd.f32 0.0, %v1368
  %v1370 = vpop.f32.mrf.mxu0
  %1371 = vmatprep.mubr.f32.mxu0 0.0
  %1372 = vmatmul.mubr.f32.gmra.mxu0 %v1282
  %v1373 = vpop.f32.mrf.mxu0
  %v1374 = vadd.f32 0.0, %v1373
  %v1375 = vpop.f32.mrf.mxu0
  %1376 = vdwg.mxu0
  %v1377 = vsel %vm410, %v1359, -inf
  %1378 = vmax.xlane.f32.xlu0 %v1377
  %v1379 = vpop.xlane.xlu0 %1378
  %v1380 = vsel %vm410, %v1364, -inf
  %1381 = vmax.xlane.f32.xlu0 %v1380
  %v1382 = vpop.xlane.xlu0 %1381
  %v1383 = vsel %vm410, %v1369, -inf
  %1384 = vmax.xlane.f32.xlu0 %v1383
  %v1385 = vpop.xlane.xlu0 %1384
  %v1386 = vsel %vm410, %v1374, -inf
  %1387 = vmax.xlane.f32.xlu0 %v1386
  %v1388 = vpop.xlane.xlu0 %1387
  %v1389 = vsub.f32 %v1359, %v1379
  %v1390 = vsub.f32 %v1364, %v1382
  %v1391 = vsub.f32 %v1369, %v1385
  %v1392 = vsub.f32 %v1374, %v1388
  %v1393 = vmul.f32 %v1389, 1.442695
  %v1394 = vpow.pop %v1393
  %v1395 = vmul.f32 %v1390, 1.442695
  %v1396 = vpow.pop %v1395
  %v1397 = vmul.f32 %v1391, 1.442695
  %v1398 = vpow.pop %v1397
  %v1399 = vmul.f32 %v1392, 1.442695
  %v1400 = vpow.pop %v1399
  %v1401 = vsel %vm410, %v1394, 0.0
  %1402 = vadd.xlane.f32.xlu0 %v1401
  %v1403 = vpop.xlane.xlu0 %1402
  %v1404 = vsel %vm410, %v1396, 0.0
  %1405 = vadd.xlane.f32.xlu0 %v1404
  %v1406 = vpop.xlane.xlu0 %1405
  %v1407 = vsel %vm410, %v1398, 0.0
  %1408 = vadd.xlane.f32.xlu0 %v1407
  %v1409 = vpop.xlane.xlu0 %1408
  %v1410 = vsel %vm410, %v1400, 0.0
  %1411 = vadd.xlane.f32.xlu0 %v1410
  %v1412 = vpop.xlane.xlu0 %1411
  %v1413 = vrcp.pop %v1403
  %v1414 = vrcp.pop %v1406
  %v1415 = vrcp.pop %v1409
  %v1416 = vrcp.pop %v1412
  %v1417 = vmul.f32 %v1394, %v1413
  %v1418 = vmul.f32 %v1396, %v1414
  %v1419 = vmul.f32 %v1398, %v1415
  %v1420 = vmul.f32 %v1400, %v1416
  %1425 = vrot.lane.b32.xlu0 %v1244, 96
  %v1426 = vpop.permute.xlu0 %1425
  %1427 = vrot.lane.b32.xlu0 %v1250, 96
  %v1428 = vpop.permute.xlu0 %1427
  %1429 = vrot.lane.b32.xlu0 %v1256, 96
  %v1430 = vpop.permute.xlu0 %1429
  %1431 = vrot.lane.b32.xlu0 %v1262, 96
  %v1432 = vpop.permute.xlu0 %1431
  %v1438 = vsel %vm410, %v1417, 0
  %v1441 = vsel %vm410, %v1418, 0
  %v1444 = vsel %vm410, %v1419, 0
  %v1447 = vsel %vm410, %v1420, 0
  %1449 = vmatprep.subr.mxu0 0.0
  %1450 = vmatpush1.msra.mxu0 0.0
  %1451 = vmatprep.subr.mxu0 0.0
  %1452 = vmatpush1.msra.mxu0 0.0
  %1453 = vmatprep.subr.mxu0 0.0
  %1454 = vmatpush1.msra.mxu0 0.0
  %1455 = vmatprep.subr.mxu0 0.0
  %1456 = vmatpush1.msra.mxu0 0.0
  %1457 = vmatprep.subr.mxu0 0.0
  %1458 = vmatpush1.msra.mxu0 0.0
  %1459 = vmatprep.subr.mxu0 0.0
  %1460 = vmatpush1.msra.mxu0 0.0
  %1461 = vmatprep.subr.mxu0 0.0
  %1462 = vmatpush1.msra.mxu0 0.0
  %1463 = vmatprep.subr.mxu0 0.0
  %1464 = vmatpush1.msra.mxu0 0.0
  %1465 = vmatprep.subr.mxu0 0.0
  %1466 = vmatpush1.msra.mxu0 0.0
  %1467 = vmatprep.subr.mxu0 0.0
  %1468 = vmatpush1.msra.mxu0 0.0
  %1469 = vmatprep.subr.mxu0 0.0
  %1470 = vmatpush1.msra.mxu0 0.0
  %1471 = vmatprep.subr.mxu0 0.0
  %1472 = vmatpush1.msra.mxu0 0.0
  %1473 = vmatprep.subr.mxu0 0.0
  %1474 = vmatpush1.msra.mxu0 %v1432
  %1475 = vmatprep.subr.mxu0 0.0
  %1476 = vmatpush1.msra.mxu0 %v1430
  %1477 = vmatprep.subr.mxu0 0.0
  %1478 = vmatpush1.msra.mxu0 %v1428
  %1479 = vmatprep.subr.mxu0 0.0
  %1480 = vmatpush1.msra.mxu0 %v1426
  %1481 = vmatprep.subr.mxu0 0.0
  %1482 = vmatpush2.msra.mxu0 0.0
  %1483 = vmatprep.subr.mxu0 0.0
  %1484 = vmatpush2.msra.mxu0 0.0
  %1485 = vmatprep.subr.mxu0 0.0
  %1486 = vmatpush2.msra.mxu0 0.0
  %1487 = vmatprep.subr.mxu0 0.0
  %1488 = vmatpush2.msra.mxu0 0.0
  %1489 = vmatprep.subr.mxu0 0.0
  %1490 = vmatpush2.msra.mxu0 0.0
  %1491 = vmatprep.subr.mxu0 0.0
  %1492 = vmatpush2.msra.mxu0 0.0
  %1493 = vmatprep.subr.mxu0 0.0
  %1494 = vmatpush2.msra.mxu0 0.0
  %1495 = vmatprep.subr.mxu0 0.0
  %1496 = vmatpush2.msra.mxu0 0.0
  %1497 = vmatprep.subr.mxu0 0.0
  %1498 = vmatpush2.msra.mxu0 0.0
  %1499 = vmatprep.subr.mxu0 0.0
  %1500 = vmatpush2.msra.mxu0 0.0
  %1501 = vmatprep.subr.mxu0 0.0
  %1502 = vmatpush2.msra.mxu0 0.0
  %1503 = vmatprep.subr.mxu0 0.0
  %1504 = vmatpush2.msra.mxu0 0.0
  %1505 = vmatprep.subr.mxu0 0.0
  %1506 = vmatpush2.msra.mxu0 0.0
  %1507 = vmatprep.subr.mxu0 0.0
  %1508 = vmatpush2.msra.mxu0 0.0
  %1509 = vmatprep.subr.mxu0 0.0
  %1510 = vmatpush2.msra.mxu0 0.0
  %1511 = vmatprep.subr.mxu0 0.0
  %1512 = vmatpush2.msra.mxu0 0.0
  %1513 = vmatprep.mubr.f32.mxu0 0.0
  %1514 = vmatmul.mubr.f32.gmra.mxu0 %v1438
  %v1515 = vpop.f32.mrf.mxu0
  %v1516 = vadd.f32 0.0, %v1515
  %v1517 = vpop.f32.mrf.mxu0
  %1518 = vmatprep.mubr.f32.mxu0 0.0
  %1519 = vmatmul.mubr.f32.gmra.mxu0 %v1441
  %v1520 = vpop.f32.mrf.mxu0
  %v1521 = vadd.f32 0.0, %v1520
  %v1522 = vpop.f32.mrf.mxu0
  %1523 = vmatprep.mubr.f32.mxu0 0.0
  %1524 = vmatmul.mubr.f32.gmra.mxu0 %v1444
  %v1525 = vpop.f32.mrf.mxu0
  %v1526 = vadd.f32 0.0, %v1525
  %v1527 = vpop.f32.mrf.mxu0
  %1528 = vmatprep.mubr.f32.mxu0 0.0
  %1529 = vmatmul.mubr.f32.gmra.mxu0 %v1447
  %v1530 = vpop.f32.mrf.mxu0
  %v1531 = vadd.f32 0.0, %v1530
  %v1532 = vpop.f32.mrf.mxu0
  %1533 = vdwg.mxu0
  %1534 = vrot.lane.b32.xlu0 %v1242, 112
  %v1535 = vpop.permute.xlu0 %1534
  %1536 = vrot.lane.b32.xlu0 %v1248, 112
  %v1537 = vpop.permute.xlu0 %1536
  %1538 = vrot.lane.b32.xlu0 %v1254, 112
  %v1539 = vpop.permute.xlu0 %1538
  %1540 = vrot.lane.b32.xlu0 %v1260, 112
  %v1541 = vpop.permute.xlu0 %1540
  %1542 = vrot.lane.b32.xlu0 %v1242, 32
  %v1543 = vpop.permute.xlu0 %1542
  %1544 = vrot.lane.b32.xlu0 %v1248, 32
  %v1545 = vpop.permute.xlu0 %1544
  %1546 = vrot.lane.b32.xlu0 %v1254, 32
  %v1547 = vpop.permute.xlu0 %1546
  %1548 = vrot.lane.b32.xlu0 %v1260, 32
  %v1549 = vpop.permute.xlu0 %1548
  %v1550 = vsel %vm148, %v1535, 0
  %v1552 = vsel %vm148, %v1537, 0
  %v1554 = vsel %vm148, %v1539, 0
  %v1556 = vsel %vm148, %v1541, 0
  %v1558 = vsel %vm148, %v1543, 0
  %v1560 = vsel %vm148, %v1545, 0
  %v1562 = vsel %vm148, %v1547, 0
  %v1564 = vsel %vm148, %v1549, 0
  %1566 = vmatprep.subr.mxu0 0.0
  %1567 = vmatpush1.xpose.msra.mxu0 0.0
  %1568 = vmatprep.subr.mxu0 0.0
  %1569 = vmatpush1.xpose.msra.mxu0 0.0
  %1570 = vmatprep.subr.mxu0 0.0
  %1571 = vmatpush1.xpose.msra.mxu0 0.0
  %1572 = vmatprep.subr.mxu0 0.0
  %1573 = vmatpush1.xpose.msra.mxu0 0.0
  %1574 = vmatprep.subr.mxu0 0.0
  %1575 = vmatpush1.xpose.msra.mxu0 0.0
  %1576 = vmatprep.subr.mxu0 0.0
  %1577 = vmatpush1.xpose.msra.mxu0 0.0
  %1578 = vmatprep.subr.mxu0 0.0
  %1579 = vmatpush1.xpose.msra.mxu0 0.0
  %1580 = vmatprep.subr.mxu0 0.0
  %1581 = vmatpush1.xpose.msra.mxu0 0.0
  %1582 = vmatprep.subr.mxu0 0.0
  %1583 = vmatpush1.xpose.msra.mxu0 0.0
  %1584 = vmatprep.subr.mxu0 0.0
  %1585 = vmatpush1.xpose.msra.mxu0 0.0
  %1586 = vmatprep.subr.mxu0 0.0
  %1587 = vmatpush1.xpose.msra.mxu0 0.0
  %1588 = vmatprep.subr.mxu0 0.0
  %1589 = vmatpush1.xpose.msra.mxu0 0.0
  %1590 = vmatprep.subr.mxu0 0.0
  %1591 = vmatpush1.xpose.msra.mxu0 %v1564
  %1592 = vmatprep.subr.mxu0 0.0
  %1593 = vmatpush1.xpose.msra.mxu0 %v1562
  %1594 = vmatprep.subr.mxu0 0.0
  %1595 = vmatpush1.xpose.msra.mxu0 %v1560
  %1596 = vmatprep.subr.mxu0 0.0
  %1597 = vmatpush1.xpose.msra.mxu0 %v1558
  %1598 = vmatprep.subr.mxu0 0.0
  %1599 = vmatpush2.xpose.msra.mxu0 0.0
  %1600 = vmatprep.subr.mxu0 0.0
  %1601 = vmatpush2.xpose.msra.mxu0 0.0
  %1602 = vmatprep.subr.mxu0 0.0
  %1603 = vmatpush2.xpose.msra.mxu0 0.0
  %1604 = vmatprep.subr.mxu0 0.0
  %1605 = vmatpush2.xpose.msra.mxu0 0.0
  %1606 = vmatprep.subr.mxu0 0.0
  %1607 = vmatpush2.xpose.msra.mxu0 0.0
  %1608 = vmatprep.subr.mxu0 0.0
  %1609 = vmatpush2.xpose.msra.mxu0 0.0
  %1610 = vmatprep.subr.mxu0 0.0
  %1611 = vmatpush2.xpose.msra.mxu0 0.0
  %1612 = vmatprep.subr.mxu0 0.0
  %1613 = vmatpush2.xpose.msra.mxu0 0.0
  %1614 = vmatprep.subr.mxu0 0.0
  %1615 = vmatpush2.xpose.msra.mxu0 0.0
  %1616 = vmatprep.subr.mxu0 0.0
  %1617 = vmatpush2.xpose.msra.mxu0 0.0
  %1618 = vmatprep.subr.mxu0 0.0
  %1619 = vmatpush2.xpose.msra.mxu0 0.0
  %1620 = vmatprep.subr.mxu0 0.0
  %1621 = vmatpush2.xpose.msra.mxu0 0.0
  %1622 = vmatprep.subr.mxu0 0.0
  %1623 = vmatpush2.xpose.msra.mxu0 0.0
  %1624 = vmatprep.subr.mxu0 0.0
  %1625 = vmatpush2.xpose.msra.mxu0 0.0
  %1626 = vmatprep.subr.mxu0 0.0
  %1627 = vmatpush2.xpose.msra.mxu0 0.0
  %1628 = vmatprep.subr.mxu0 0.0
  %1629 = vmatpush2.xpose.msra.mxu0 0.0
  %1630 = vmatprep.mubr.f32.mxu0 0.0
  %1631 = vmatmul.mubr.f32.gmra.mxu0 %v1550
  %v1632 = vpop.f32.mrf.mxu0
  %v1633 = vadd.f32 0.0, %v1632
  %v1634 = vpop.f32.mrf.mxu0
  %1635 = vmatprep.mubr.f32.mxu0 0.0
  %1636 = vmatmul.mubr.f32.gmra.mxu0 %v1552
  %v1637 = vpop.f32.mrf.mxu0
  %v1638 = vadd.f32 0.0, %v1637
  %v1639 = vpop.f32.mrf.mxu0
  %1640 = vmatprep.mubr.f32.mxu0 0.0
  %1641 = vmatmul.mubr.f32.gmra.mxu0 %v1554
  %v1642 = vpop.f32.mrf.mxu0
  %v1643 = vadd.f32 0.0, %v1642
  %v1644 = vpop.f32.mrf.mxu0
  %1645 = vmatprep.mubr.f32.mxu0 0.0
  %1646 = vmatmul.mubr.f32.gmra.mxu0 %v1556
  %v1647 = vpop.f32.mrf.mxu0
  %v1648 = vadd.f32 0.0, %v1647
  %v1649 = vpop.f32.mrf.mxu0
  %1650 = vdwg.mxu0
  %v1651 = vsel %vm410, %v1633, -inf
  %1652 = vmax.xlane.f32.xlu0 %v1651
  %v1653 = vpop.xlane.xlu0 %1652
  %v1654 = vsel %vm410, %v1638, -inf
  %1655 = vmax.xlane.f32.xlu0 %v1654
  %v1656 = vpop.xlane.xlu0 %1655
  %v1657 = vsel %vm410, %v1643, -inf
  %1658 = vmax.xlane.f32.xlu0 %v1657
  %v1659 = vpop.xlane.xlu0 %1658
  %v1660 = vsel %vm410, %v1648, -inf
  %1661 = vmax.xlane.f32.xlu0 %v1660
  %v1662 = vpop.xlane.xlu0 %1661
  %v1663 = vsub.f32 %v1633, %v1653
  %v1664 = vsub.f32 %v1638, %v1656
  %v1665 = vsub.f32 %v1643, %v1659
  %v1666 = vsub.f32 %v1648, %v1662
  %v1667 = vmul.f32 %v1663, 1.442695
  %v1668 = vpow.pop %v1667
  %v1669 = vmul.f32 %v1664, 1.442695
  %v1670 = vpow.pop %v1669
  %v1671 = vmul.f32 %v1665, 1.442695
  %v1672 = vpow.pop %v1671
  %v1673 = vmul.f32 %v1666, 1.442695
  %v1674 = vpow.pop %v1673
  %v1675 = vsel %vm410, %v1668, 0.0
  %1676 = vadd.xlane.f32.xlu0 %v1675
  %v1677 = vpop.xlane.xlu0 %1676
  %v1678 = vsel %vm410, %v1670, 0.0
  %1679 = vadd.xlane.f32.xlu0 %v1678
  %v1680 = vpop.xlane.xlu0 %1679
  %v1681 = vsel %vm410, %v1672, 0.0
  %1682 = vadd.xlane.f32.xlu0 %v1681
  %v1683 = vpop.xlane.xlu0 %1682
  %v1684 = vsel %vm410, %v1674, 0.0
  %1685 = vadd.xlane.f32.xlu0 %v1684
  %v1686 = vpop.xlane.xlu0 %1685
  %v1687 = vrcp.pop %v1677
  %v1688 = vrcp.pop %v1680
  %v1689 = vrcp.pop %v1683
  %v1690 = vrcp.pop %v1686
  %v1691 = vmul.f32 %v1668, %v1687
  %v1692 = vmul.f32 %v1670, %v1688
  %v1693 = vmul.f32 %v1672, %v1689
  %v1694 = vmul.f32 %v1674, %v1690
  %1695 = vrot.lane.b32.xlu0 %v1244, 80
  %v1696 = vpop.permute.xlu0 %1695
  %1697 = vrot.lane.b32.xlu0 %v1250, 80
  %v1698 = vpop.permute.xlu0 %1697
  %1699 = vrot.lane.b32.xlu0 %v1256, 80
  %v1700 = vpop.permute.xlu0 %1699
  %1701 = vrot.lane.b32.xlu0 %v1262, 80
  %v1702 = vpop.permute.xlu0 %1701
  %v1708 = vsel %vm410, %v1691, 0
  %v1711 = vsel %vm410, %v1692, 0
  %v1714 = vsel %vm410, %v1693, 0
  %v1717 = vsel %vm410, %v1694, 0
  %1719 = vmatprep.subr.mxu0 0.0
  %1720 = vmatpush1.msra.mxu0 0.0
  %1721 = vmatprep.subr.mxu0 0.0
  %1722 = vmatpush1.msra.mxu0 0.0
  %1723 = vmatprep.subr.mxu0 0.0
  %1724 = vmatpush1.msra.mxu0 0.0
  %1725 = vmatprep.subr.mxu0 0.0
  %1726 = vmatpush1.msra.mxu0 0.0
  %1727 = vmatprep.subr.mxu0 0.0
  %1728 = vmatpush1.msra.mxu0 0.0
  %1729 = vmatprep.subr.mxu0 0.0
  %1730 = vmatpush1.msra.mxu0 0.0
  %1731 = vmatprep.subr.mxu0 0.0
  %1732 = vmatpush1.msra.mxu0 0.0
  %1733 = vmatprep.subr.mxu0 0.0
  %1734 = vmatpush1.msra.mxu0 0.0
  %1735 = vmatprep.subr.mxu0 0.0
  %1736 = vmatpush1.msra.mxu0 0.0
  %1737 = vmatprep.subr.mxu0 0.0
  %1738 = vmatpush1.msra.mxu0 0.0
  %1739 = vmatprep.subr.mxu0 0.0
  %1740 = vmatpush1.msra.mxu0 0.0
  %1741 = vmatprep.subr.mxu0 0.0
  %1742 = vmatpush1.msra.mxu0 0.0
  %1743 = vmatprep.subr.mxu0 0.0
  %1744 = vmatpush1.msra.mxu0 %v1702
  %1745 = vmatprep.subr.mxu0 0.0
  %1746 = vmatpush1.msra.mxu0 %v1700
  %1747 = vmatprep.subr.mxu0 0.0
  %1748 = vmatpush1.msra.mxu0 %v1698
  %1749 = vmatprep.subr.mxu0 0.0
  %1750 = vmatpush1.msra.mxu0 %v1696
  %1751 = vmatprep.subr.mxu0 0.0
  %1752 = vmatpush2.msra.mxu0 0.0
  %1753 = vmatprep.subr.mxu0 0.0
  %1754 = vmatpush2.msra.mxu0 0.0
  %1755 = vmatprep.subr.mxu0 0.0
  %1756 = vmatpush2.msra.mxu0 0.0
  %1757 = vmatprep.subr.mxu0 0.0
  %1758 = vmatpush2.msra.mxu0 0.0
  %1759 = vmatprep.subr.mxu0 0.0
  %1760 = vmatpush2.msra.mxu0 0.0
  %1761 = vmatprep.subr.mxu0 0.0
  %1762 = vmatpush2.msra.mxu0 0.0
  %1763 = vmatprep.subr.mxu0 0.0
  %1764 = vmatpush2.msra.mxu0 0.0
  %1765 = vmatprep.subr.mxu0 0.0
  %1766 = vmatpush2.msra.mxu0 0.0
  %1767 = vmatprep.subr.mxu0 0.0
  %1768 = vmatpush2.msra.mxu0 0.0
  %1769 = vmatprep.subr.mxu0 0.0
  %1770 = vmatpush2.msra.mxu0 0.0
  %1771 = vmatprep.subr.mxu0 0.0
  %1772 = vmatpush2.msra.mxu0 0.0
  %1773 = vmatprep.subr.mxu0 0.0
  %1774 = vmatpush2.msra.mxu0 0.0
  %1775 = vmatprep.subr.mxu0 0.0
  %1776 = vmatpush2.msra.mxu0 0.0
  %1777 = vmatprep.subr.mxu0 0.0
  %1778 = vmatpush2.msra.mxu0 0.0
  %1779 = vmatprep.subr.mxu0 0.0
  %1780 = vmatpush2.msra.mxu0 0.0
  %1781 = vmatprep.subr.mxu0 0.0
  %1782 = vmatpush2.msra.mxu0 0.0
  %1783 = vmatprep.mubr.f32.mxu0 0.0
  %1784 = vmatmul.mubr.f32.gmra.mxu0 %v1708
  %v1785 = vpop.f32.mrf.mxu0
  %v1786 = vadd.f32 0.0, %v1785
  %v1787 = vpop.f32.mrf.mxu0
  %1788 = vmatprep.mubr.f32.mxu0 0.0
  %1789 = vmatmul.mubr.f32.gmra.mxu0 %v1711
  %v1790 = vpop.f32.mrf.mxu0
  %v1791 = vadd.f32 0.0, %v1790
  %v1792 = vpop.f32.mrf.mxu0
  %1793 = vmatprep.mubr.f32.mxu0 0.0
  %1794 = vmatmul.mubr.f32.gmra.mxu0 %v1714
  %v1795 = vpop.f32.mrf.mxu0
  %v1796 = vadd.f32 0.0, %v1795
  %v1797 = vpop.f32.mrf.mxu0
  %1798 = vmatprep.mubr.f32.mxu0 0.0
  %1799 = vmatmul.mubr.f32.gmra.mxu0 %v1717
  %v1800 = vpop.f32.mrf.mxu0
  %v1801 = vadd.f32 0.0, %v1800
  %v1802 = vpop.f32.mrf.mxu0
  %1803 = vdwg.mxu0
  %v1805 = vsel %vm148, %v1786, 0
  %v1808 = vsel %vm148, %v1791, 0
  %v1811 = vsel %vm148, %v1796, 0
  %v1814 = vsel %vm148, %v1801, 0
  %1816 = vmatprep.subr.mxu0 0.0
  %1817 = vmatpush1.msra.mxu0 0.0
  %1818 = vmatprep.subr.mxu0 0.0
  %1819 = vmatpush1.msra.mxu0 0.0
  %1820 = vmatprep.subr.mxu0 0.0
  %1821 = vmatpush1.msra.mxu0 0.0
  %1822 = vmatprep.subr.mxu0 0.0
  %1823 = vmatpush1.msra.mxu0 0.0
  %1824 = vmatprep.subr.mxu0 0.0
  %1825 = vmatpush1.msra.mxu0 0.0
  %1826 = vmatprep.subr.mxu0 0.0
  %1827 = vmatpush1.msra.mxu0 0.0
  %1828 = vmatprep.subr.mxu0 0.0
  %1829 = vmatpush1.msra.mxu0 0.0
  %1830 = vmatprep.subr.mxu0 0.0
  %1831 = vmatpush1.msra.mxu0 0.0
  %1832 = vmatprep.subr.mxu0 0.0
  %1833 = vmatpush1.msra.mxu0 0.0
  %1834 = vmatprep.subr.mxu0 0.0
  %1835 = vmatpush1.msra.mxu0 0.0
  %1836 = vmatprep.subr.mxu0 0.0
  %1837 = vmatpush1.msra.mxu0 0.0
  %1838 = vmatprep.subr.mxu0 0.0
  %1839 = vmatpush1.msra.mxu0 0.0
  %1840 = vmatprep.subr.mxu0 0.0
  %1841 = vmatpush1.msra.mxu0 0.0
  %1842 = vmatprep.subr.mxu0 0.0
  %1843 = vmatpush1.msra.mxu0 0.0
  %1844 = vmatprep.subr.mxu0 0.0
  %1845 = vmatpush1.msra.mxu0 %v119
  %1846 = vmatprep.subr.mxu0 0.0
  %1847 = vmatpush1.msra.mxu0 %v118
  %1848 = vmatprep.subr.mxu0 0.0
  %1849 = vmatpush2.msra.mxu0 0.0
  %1850 = vmatprep.subr.mxu0 0.0
  %1851 = vmatpush2.msra.mxu0 0.0
  %1852 = vmatprep.subr.mxu0 0.0
  %1853 = vmatpush2.msra.mxu0 0.0
  %1854 = vmatprep.subr.mxu0 0.0
  %1855 = vmatpush2.msra.mxu0 0.0
  %1856 = vmatprep.subr.mxu0 0.0
  %1857 = vmatpush2.msra.mxu0 0.0
  %1858 = vmatprep.subr.mxu0 0.0
  %1859 = vmatpush2.msra.mxu0 0.0
  %1860 = vmatprep.subr.mxu0 0.0
  %1861 = vmatpush2.msra.mxu0 0.0
  %1862 = vmatprep.subr.mxu0 0.0
  %1863 = vmatpush2.msra.mxu0 0.0
  %1864 = vmatprep.subr.mxu0 0.0
  %1865 = vmatpush2.msra.mxu0 0.0
  %1866 = vmatprep.subr.mxu0 0.0
  %1867 = vmatpush2.msra.mxu0 0.0
  %1868 = vmatprep.subr.mxu0 0.0
  %1869 = vmatpush2.msra.mxu0 0.0
  %1870 = vmatprep.subr.mxu0 0.0
  %1871 = vmatpush2.msra.mxu0 0.0
  %1872 = vmatprep.subr.mxu0 0.0
  %1873 = vmatpush2.msra.mxu0 0.0
  %1874 = vmatprep.subr.mxu0 0.0
  %1875 = vmatpush2.msra.mxu0 0.0
  %1876 = vmatprep.subr.mxu0 0.0
  %1877 = vmatpush2.msra.mxu0 0.0
  %1878 = vmatprep.subr.mxu0 0.0
  %1879 = vmatpush2.msra.mxu0 0.0
  %1880 = vmatprep.mubr.f32.mxu0 0.0
  %1881 = vmatmul.mubr.f32.gmra.mxu0 %v1805
  %v1882 = vpop.f32.mrf.mxu0
  %v1883 = vadd.f32 0.0, %v1882
  %v1884 = vpop.f32.mrf.mxu0
  %1885 = vmatprep.mubr.f32.mxu0 0.0
  %1886 = vmatmul.mubr.f32.gmra.mxu0 %v1808
  %v1887 = vpop.f32.mrf.mxu0
  %v1888 = vadd.f32 0.0, %v1887
  %v1889 = vpop.f32.mrf.mxu0
  %1890 = vmatprep.mubr.f32.mxu0 0.0
  %1891 = vmatmul.mubr.f32.gmra.mxu0 %v1811
  %v1892 = vpop.f32.mrf.mxu0
  %v1893 = vadd.f32 0.0, %v1892
  %v1894 = vpop.f32.mrf.mxu0
  %1895 = vmatprep.mubr.f32.mxu0 0.0
  %1896 = vmatmul.mubr.f32.gmra.mxu0 %v1814
  %v1897 = vpop.f32.mrf.mxu0
  %v1898 = vadd.f32 0.0, %v1897
  %v1899 = vpop.f32.mrf.mxu0
  %1900 = vdwg.mxu0
  %v1902 = vsel %vm148, %v1516, 0
  %v1905 = vsel %vm148, %v1521, 0
  %v1908 = vsel %vm148, %v1526, 0
  %v1911 = vsel %vm148, %v1531, 0
  %1913 = vmatprep.subr.mxu0 0.0
  %1914 = vmatpush1.msra.mxu0 0.0
  %1915 = vmatprep.subr.mxu0 0.0
  %1916 = vmatpush1.msra.mxu0 0.0
  %1917 = vmatprep.subr.mxu0 0.0
  %1918 = vmatpush1.msra.mxu0 0.0
  %1919 = vmatprep.subr.mxu0 0.0
  %1920 = vmatpush1.msra.mxu0 0.0
  %1921 = vmatprep.subr.mxu0 0.0
  %1922 = vmatpush1.msra.mxu0 0.0
  %1923 = vmatprep.subr.mxu0 0.0
  %1924 = vmatpush1.msra.mxu0 0.0
  %1925 = vmatprep.subr.mxu0 0.0
  %1926 = vmatpush1.msra.mxu0 0.0
  %1927 = vmatprep.subr.mxu0 0.0
  %1928 = vmatpush1.msra.mxu0 0.0
  %1929 = vmatprep.subr.mxu0 0.0
  %1930 = vmatpush1.msra.mxu0 0.0
  %1931 = vmatprep.subr.mxu0 0.0
  %1932 = vmatpush1.msra.mxu0 0.0
  %1933 = vmatprep.subr.mxu0 0.0
  %1934 = vmatpush1.msra.mxu0 0.0
  %1935 = vmatprep.subr.mxu0 0.0
  %1936 = vmatpush1.msra.mxu0 0.0
  %1937 = vmatprep.subr.mxu0 0.0
  %1938 = vmatpush1.msra.mxu0 0.0
  %1939 = vmatprep.subr.mxu0 0.0
  %1940 = vmatpush1.msra.mxu0 0.0
  %1941 = vmatprep.subr.mxu0 0.0
  %1942 = vmatpush1.msra.mxu0 %v117
  %1943 = vmatprep.subr.mxu0 0.0
  %1944 = vmatpush1.msra.mxu0 %v116
  %1945 = vmatprep.subr.mxu0 0.0
  %1946 = vmatpush2.msra.mxu0 0.0
  %1947 = vmatprep.subr.mxu0 0.0
  %1948 = vmatpush2.msra.mxu0 0.0
  %1949 = vmatprep.subr.mxu0 0.0
  %1950 = vmatpush2.msra.mxu0 0.0
  %1951 = vmatprep.subr.mxu0 0.0
  %1952 = vmatpush2.msra.mxu0 0.0
  %1953 = vmatprep.subr.mxu0 0.0
  %1954 = vmatpush2.msra.mxu0 0.0
  %1955 = vmatprep.subr.mxu0 0.0
  %1956 = vmatpush2.msra.mxu0 0.0
  %1957 = vmatprep.subr.mxu0 0.0
  %1958 = vmatpush2.msra.mxu0 0.0
  %1959 = vmatprep.subr.mxu0 0.0
  %1960 = vmatpush2.msra.mxu0 0.0
  %1961 = vmatprep.subr.mxu0 0.0
  %1962 = vmatpush2.msra.mxu0 0.0
  %1963 = vmatprep.subr.mxu0 0.0
  %1964 = vmatpush2.msra.mxu0 0.0
  %1965 = vmatprep.subr.mxu0 0.0
  %1966 = vmatpush2.msra.mxu0 0.0
  %1967 = vmatprep.subr.mxu0 0.0
  %1968 = vmatpush2.msra.mxu0 0.0
  %1969 = vmatprep.subr.mxu0 0.0
  %1970 = vmatpush2.msra.mxu0 0.0
  %1971 = vmatprep.subr.mxu0 0.0
  %1972 = vmatpush2.msra.mxu0 0.0
  %1973 = vmatprep.subr.mxu0 0.0
  %1974 = vmatpush2.msra.mxu0 0.0
  %1975 = vmatprep.subr.mxu0 0.0
  %1976 = vmatpush2.msra.mxu0 0.0
  %1977 = vmatprep.mubr.f32.mxu0 0.0
  %1978 = vmatmul.mubr.f32.gmra.mxu0 %v1902
  %v1979 = vpop.f32.mrf.mxu0
  %v1980 = vadd.f32 %v1883, %v1979
  %v1981 = vpop.f32.mrf.mxu0
  %1982 = vmatprep.mubr.f32.mxu0 0.0
  %1983 = vmatmul.mubr.f32.gmra.mxu0 %v1905
  %v1984 = vpop.f32.mrf.mxu0
  %v1985 = vadd.f32 %v1888, %v1984
  %v1986 = vpop.f32.mrf.mxu0
  %1987 = vmatprep.mubr.f32.mxu0 0.0
  %1988 = vmatmul.mubr.f32.gmra.mxu0 %v1908
  %v1989 = vpop.f32.mrf.mxu0
  %v1990 = vadd.f32 %v1893, %v1989
  %v1991 = vpop.f32.mrf.mxu0
  %1992 = vmatprep.mubr.f32.mxu0 0.0
  %1993 = vmatmul.mubr.f32.gmra.mxu0 %v1911
  %v1994 = vpop.f32.mrf.mxu0
  %v1995 = vadd.f32 %v1898, %v1994
  %v1996 = vpop.f32.mrf.mxu0
  %1997 = vdwg.mxu0
  %1998 = vrot.lane.b32.xlu0 %v1242, 96
  %v1999 = vpop.permute.xlu0 %1998
  %2000 = vrot.lane.b32.xlu0 %v1248, 96
  %v2001 = vpop.permute.xlu0 %2000
  %2002 = vrot.lane.b32.xlu0 %v1254, 96
  %v2003 = vpop.permute.xlu0 %2002
  %2004 = vrot.lane.b32.xlu0 %v1260, 96
  %v2005 = vpop.permute.xlu0 %2004
  %2006 = vrot.lane.b32.xlu0 %v1242, 16
  %v2007 = vpop.permute.xlu0 %2006
  %2008 = vrot.lane.b32.xlu0 %v1248, 16
  %v2009 = vpop.permute.xlu0 %2008
  %2010 = vrot.lane.b32.xlu0 %v1254, 16
  %v2011 = vpop.permute.xlu0 %2010
  %2012 = vrot.lane.b32.xlu0 %v1260, 16
  %v2013 = vpop.permute.xlu0 %2012
  %v2014 = vsel %vm148, %v1999, 0
  %v2016 = vsel %vm148, %v2001, 0
  %v2018 = vsel %vm148, %v2003, 0
  %v2020 = vsel %vm148, %v2005, 0
  %v2022 = vsel %vm148, %v2007, 0
  %v2024 = vsel %vm148, %v2009, 0
  %v2026 = vsel %vm148, %v2011, 0
  %v2028 = vsel %vm148, %v2013, 0
  %2030 = vmatprep.subr.mxu0 0.0
  %2031 = vmatpush1.xpose.msra.mxu0 0.0
  %2032 = vmatprep.subr.mxu0 0.0
  %2033 = vmatpush1.xpose.msra.mxu0 0.0
  %2034 = vmatprep.subr.mxu0 0.0
  %2035 = vmatpush1.xpose.msra.mxu0 0.0
  %2036 = vmatprep.subr.mxu0 0.0
  %2037 = vmatpush1.xpose.msra.mxu0 0.0
  %2038 = vmatprep.subr.mxu0 0.0
  %2039 = vmatpush1.xpose.msra.mxu0 0.0
  %2040 = vmatprep.subr.mxu0 0.0
  %2041 = vmatpush1.xpose.msra.mxu0 0.0
  %2042 = vmatprep.subr.mxu0 0.0
  %2043 = vmatpush1.xpose.msra.mxu0 0.0
  %2044 = vmatprep.subr.mxu0 0.0
  %2045 = vmatpush1.xpose.msra.mxu0 0.0
  %2046 = vmatprep.subr.mxu0 0.0
  %2047 = vmatpush1.xpose.msra.mxu0 0.0
  %2048 = vmatprep.subr.mxu0 0.0
  %2049 = vmatpush1.xpose.msra.mxu0 0.0
  %2050 = vmatprep.subr.mxu0 0.0
  %2051 = vmatpush1.xpose.msra.mxu0 0.0
  %2052 = vmatprep.subr.mxu0 0.0
  %2053 = vmatpush1.xpose.msra.mxu0 0.0
  %2054 = vmatprep.subr.mxu0 0.0
  %2055 = vmatpush1.xpose.msra.mxu0 %v2028
  %2056 = vmatprep.subr.mxu0 0.0
  %2057 = vmatpush1.xpose.msra.mxu0 %v2026
  %2058 = vmatprep.subr.mxu0 0.0
  %2059 = vmatpush1.xpose.msra.mxu0 %v2024
  %2060 = vmatprep.subr.mxu0 0.0
  %2061 = vmatpush1.xpose.msra.mxu0 %v2022
  %2062 = vmatprep.subr.mxu0 0.0
  %2063 = vmatpush2.xpose.msra.mxu0 0.0
  %2064 = vmatprep.subr.mxu0 0.0
  %2065 = vmatpush2.xpose.msra.mxu0 0.0
  %2066 = vmatprep.subr.mxu0 0.0
  %2067 = vmatpush2.xpose.msra.mxu0 0.0
  %2068 = vmatprep.subr.mxu0 0.0
  %2069 = vmatpush2.xpose.msra.mxu0 0.0
  %2070 = vmatprep.subr.mxu0 0.0
  %2071 = vmatpush2.xpose.msra.mxu0 0.0
  %2072 = vmatprep.subr.mxu0 0.0
  %2073 = vmatpush2.xpose.msra.mxu0 0.0
  %2074 = vmatprep.subr.mxu0 0.0
  %2075 = vmatpush2.xpose.msra.mxu0 0.0
  %2076 = vmatprep.subr.mxu0 0.0
  %2077 = vmatpush2.xpose.msra.mxu0 0.0
  %2078 = vmatprep.subr.mxu0 0.0
  %2079 = vmatpush2.xpose.msra.mxu0 0.0
  %2080 = vmatprep.subr.mxu0 0.0
  %2081 = vmatpush2.xpose.msra.mxu0 0.0
  %2082 = vmatprep.subr.mxu0 0.0
  %2083 = vmatpush2.xpose.msra.mxu0 0.0
  %2084 = vmatprep.subr.mxu0 0.0
  %2085 = vmatpush2.xpose.msra.mxu0 0.0
  %2086 = vmatprep.subr.mxu0 0.0
  %2087 = vmatpush2.xpose.msra.mxu0 0.0
  %2088 = vmatprep.subr.mxu0 0.0
  %2089 = vmatpush2.xpose.msra.mxu0 0.0
  %2090 = vmatprep.subr.mxu0 0.0
  %2091 = vmatpush2.xpose.msra.mxu0 0.0
  %2092 = vmatprep.subr.mxu0 0.0
  %2093 = vmatpush2.xpose.msra.mxu0 0.0
  %2094 = vmatprep.mubr.f32.mxu0 0.0
  %2095 = vmatmul.mubr.f32.gmra.mxu0 %v2014
  %v2096 = vpop.f32.mrf.mxu0
  %v2097 = vadd.f32 0.0, %v2096
  %v2098 = vpop.f32.mrf.mxu0
  %2099 = vmatprep.mubr.f32.mxu0 0.0
  %2100 = vmatmul.mubr.f32.gmra.mxu0 %v2016
  %v2101 = vpop.f32.mrf.mxu0
  %v2102 = vadd.f32 0.0, %v2101
  %v2103 = vpop.f32.mrf.mxu0
  %2104 = vmatprep.mubr.f32.mxu0 0.0
  %2105 = vmatmul.mubr.f32.gmra.mxu0 %v2018
  %v2106 = vpop.f32.mrf.mxu0
  %v2107 = vadd.f32 0.0, %v2106
  %v2108 = vpop.f32.mrf.mxu0
  %2109 = vmatprep.mubr.f32.mxu0 0.0
  %2110 = vmatmul.mubr.f32.gmra.mxu0 %v2020
  %v2111 = vpop.f32.mrf.mxu0
  %v2112 = vadd.f32 0.0, %v2111
  %v2113 = vpop.f32.mrf.mxu0
  %2114 = vdwg.mxu0
  %v2115 = vsel %vm410, %v2097, -inf
  %2116 = vmax.xlane.f32.xlu0 %v2115
  %v2117 = vpop.xlane.xlu0 %2116
  %v2118 = vsel %vm410, %v2102, -inf
  %2119 = vmax.xlane.f32.xlu0 %v2118
  %v2120 = vpop.xlane.xlu0 %2119
  %v2121 = vsel %vm410, %v2107, -inf
  %2122 = vmax.xlane.f32.xlu0 %v2121
  %v2123 = vpop.xlane.xlu0 %2122
  %v2124 = vsel %vm410, %v2112, -inf
  %2125 = vmax.xlane.f32.xlu0 %v2124
  %v2126 = vpop.xlane.xlu0 %2125
  %v2127 = vsub.f32 %v2097, %v2117
  %v2128 = vsub.f32 %v2102, %v2120
  %v2129 = vsub.f32 %v2107, %v2123
  %v2130 = vsub.f32 %v2112, %v2126
  %v2131 = vmul.f32 %v2127, 1.442695
  %v2132 = vpow.pop %v2131
  %v2133 = vmul.f32 %v2128, 1.442695
  %v2134 = vpow.pop %v2133
  %v2135 = vmul.f32 %v2129, 1.442695
  %v2136 = vpow.pop %v2135
  %v2137 = vmul.f32 %v2130, 1.442695
  %v2138 = vpow.pop %v2137
  %v2139 = vsel %vm410, %v2132, 0.0
  %2140 = vadd.xlane.f32.xlu0 %v2139
  %v2141 = vpop.xlane.xlu0 %2140
  %v2142 = vsel %vm410, %v2134, 0.0
  %2143 = vadd.xlane.f32.xlu0 %v2142
  %v2144 = vpop.xlane.xlu0 %2143
  %v2145 = vsel %vm410, %v2136, 0.0
  %2146 = vadd.xlane.f32.xlu0 %v2145
  %v2147 = vpop.xlane.xlu0 %2146
  %v2148 = vsel %vm410, %v2138, 0.0
  %2149 = vadd.xlane.f32.xlu0 %v2148
  %v2150 = vpop.xlane.xlu0 %2149
  %v2151 = vrcp.pop %v2141
  %v2152 = vrcp.pop %v2144
  %v2153 = vrcp.pop %v2147
  %v2154 = vrcp.pop %v2150
  %v2155 = vmul.f32 %v2132, %v2151
  %v2156 = vmul.f32 %v2134, %v2152
  %v2157 = vmul.f32 %v2136, %v2153
  %v2158 = vmul.f32 %v2138, %v2154
  %2159 = vrot.lane.b32.xlu0 %v1244, 64
  %v2160 = vpop.permute.xlu0 %2159
  %2161 = vrot.lane.b32.xlu0 %v1250, 64
  %v2162 = vpop.permute.xlu0 %2161
  %2163 = vrot.lane.b32.xlu0 %v1256, 64
  %v2164 = vpop.permute.xlu0 %2163
  %2165 = vrot.lane.b32.xlu0 %v1262, 64
  %v2166 = vpop.permute.xlu0 %2165
  %v2172 = vsel %vm410, %v2155, 0
  %v2175 = vsel %vm410, %v2156, 0
  %v2178 = vsel %vm410, %v2157, 0
  %v2181 = vsel %vm410, %v2158, 0
  %2183 = vmatprep.subr.mxu0 0.0
  %2184 = vmatpush1.msra.mxu0 0.0
  %2185 = vmatprep.subr.mxu0 0.0
  %2186 = vmatpush1.msra.mxu0 0.0
  %2187 = vmatprep.subr.mxu0 0.0
  %2188 = vmatpush1.msra.mxu0 0.0
  %2189 = vmatprep.subr.mxu0 0.0
  %2190 = vmatpush1.msra.mxu0 0.0
  %2191 = vmatprep.subr.mxu0 0.0
  %2192 = vmatpush1.msra.mxu0 0.0
  %2193 = vmatprep.subr.mxu0 0.0
  %2194 = vmatpush1.msra.mxu0 0.0
  %2195 = vmatprep.subr.mxu0 0.0
  %2196 = vmatpush1.msra.mxu0 0.0
  %2197 = vmatprep.subr.mxu0 0.0
  %2198 = vmatpush1.msra.mxu0 0.0
  %2199 = vmatprep.subr.mxu0 0.0
  %2200 = vmatpush1.msra.mxu0 0.0
  %2201 = vmatprep.subr.mxu0 0.0
  %2202 = vmatpush1.msra.mxu0 0.0
  %2203 = vmatprep.subr.mxu0 0.0
  %2204 = vmatpush1.msra.mxu0 0.0
  %2205 = vmatprep.subr.mxu0 0.0
  %2206 = vmatpush1.msra.mxu0 0.0
  %2207 = vmatprep.subr.mxu0 0.0
  %2208 = vmatpush1.msra.mxu0 %v2166
  %2209 = vmatprep.subr.mxu0 0.0
  %2210 = vmatpush1.msra.mxu0 %v2164
  %2211 = vmatprep.subr.mxu0 0.0
  %2212 = vmatpush1.msra.mxu0 %v2162
  %2213 = vmatprep.subr.mxu0 0.0
  %2214 = vmatpush1.msra.mxu0 %v2160
  %2215 = vmatprep.subr.mxu0 0.0
  %2216 = vmatpush2.msra.mxu0 0.0
  %2217 = vmatprep.subr.mxu0 0.0
  %2218 = vmatpush2.msra.mxu0 0.0
  %2219 = vmatprep.subr.mxu0 0.0
  %2220 = vmatpush2.msra.mxu0 0.0
  %2221 = vmatprep.subr.mxu0 0.0
  %2222 = vmatpush2.msra.mxu0 0.0
  %2223 = vmatprep.subr.mxu0 0.0
  %2224 = vmatpush2.msra.mxu0 0.0
  %2225 = vmatprep.subr.mxu0 0.0
  %2226 = vmatpush2.msra.mxu0 0.0
  %2227 = vmatprep.subr.mxu0 0.0
  %2228 = vmatpush2.msra.mxu0 0.0
  %2229 = vmatprep.subr.mxu0 0.0
  %2230 = vmatpush2.msra.mxu0 0.0
  %2231 = vmatprep.subr.mxu0 0.0
  %2232 = vmatpush2.msra.mxu0 0.0
  %2233 = vmatprep.subr.mxu0 0.0
  %2234 = vmatpush2.msra.mxu0 0.0
  %2235 = vmatprep.subr.mxu0 0.0
  %2236 = vmatpush2.msra.mxu0 0.0
  %2237 = vmatprep.subr.mxu0 0.0
  %2238 = vmatpush2.msra.mxu0 0.0
  %2239 = vmatprep.subr.mxu0 0.0
  %2240 = vmatpush2.msra.mxu0 0.0
  %2241 = vmatprep.subr.mxu0 0.0
  %2242 = vmatpush2.msra.mxu0 0.0
  %2243 = vmatprep.subr.mxu0 0.0
  %2244 = vmatpush2.msra.mxu0 0.0
  %2245 = vmatprep.subr.mxu0 0.0
  %2246 = vmatpush2.msra.mxu0 0.0
  %2247 = vmatprep.mubr.f32.mxu0 0.0
  %2248 = vmatmul.mubr.f32.gmra.mxu0 %v2172
  %v2249 = vpop.f32.mrf.mxu0
  %v2250 = vadd.f32 0.0, %v2249
  %v2251 = vpop.f32.mrf.mxu0
  %2252 = vmatprep.mubr.f32.mxu0 0.0
  %2253 = vmatmul.mubr.f32.gmra.mxu0 %v2175
  %v2254 = vpop.f32.mrf.mxu0
  %v2255 = vadd.f32 0.0, %v2254
  %v2256 = vpop.f32.mrf.mxu0
  %2257 = vmatprep.mubr.f32.mxu0 0.0
  %2258 = vmatmul.mubr.f32.gmra.mxu0 %v2178
  %v2259 = vpop.f32.mrf.mxu0
  %v2260 = vadd.f32 0.0, %v2259
  %v2261 = vpop.f32.mrf.mxu0
  %2262 = vmatprep.mubr.f32.mxu0 0.0
  %2263 = vmatmul.mubr.f32.gmra.mxu0 %v2181
  %v2264 = vpop.f32.mrf.mxu0
  %v2265 = vadd.f32 0.0, %v2264
  %v2266 = vpop.f32.mrf.mxu0
  %2267 = vdwg.mxu0
  %v2269 = vsel %vm148, %v2250, 0
  %v2272 = vsel %vm148, %v2255, 0
  %v2275 = vsel %vm148, %v2260, 0
  %v2278 = vsel %vm148, %v2265, 0
  %2280 = vmatprep.subr.mxu0 0.0
  %2281 = vmatpush1.msra.mxu0 0.0
  %2282 = vmatprep.subr.mxu0 0.0
  %2283 = vmatpush1.msra.mxu0 0.0
  %2284 = vmatprep.subr.mxu0 0.0
  %2285 = vmatpush1.msra.mxu0 0.0
  %2286 = vmatprep.subr.mxu0 0.0
  %2287 = vmatpush1.msra.mxu0 0.0
  %2288 = vmatprep.subr.mxu0 0.0
  %2289 = vmatpush1.msra.mxu0 0.0
  %2290 = vmatprep.subr.mxu0 0.0
  %2291 = vmatpush1.msra.mxu0 0.0
  %2292 = vmatprep.subr.mxu0 0.0
  %2293 = vmatpush1.msra.mxu0 0.0
  %2294 = vmatprep.subr.mxu0 0.0
  %2295 = vmatpush1.msra.mxu0 0.0
  %2296 = vmatprep.subr.mxu0 0.0
  %2297 = vmatpush1.msra.mxu0 0.0
  %2298 = vmatprep.subr.mxu0 0.0
  %2299 = vmatpush1.msra.mxu0 0.0
  %2300 = vmatprep.subr.mxu0 0.0
  %2301 = vmatpush1.msra.mxu0 0.0
  %2302 = vmatprep.subr.mxu0 0.0
  %2303 = vmatpush1.msra.mxu0 0.0
  %2304 = vmatprep.subr.mxu0 0.0
  %2305 = vmatpush1.msra.mxu0 0.0
  %2306 = vmatprep.subr.mxu0 0.0
  %2307 = vmatpush1.msra.mxu0 0.0
  %2308 = vmatprep.subr.mxu0 0.0
  %2309 = vmatpush1.msra.mxu0 %v121
  %2310 = vmatprep.subr.mxu0 0.0
  %2311 = vmatpush1.msra.mxu0 %v120
  %2312 = vmatprep.subr.mxu0 0.0
  %2313 = vmatpush2.msra.mxu0 0.0
  %2314 = vmatprep.subr.mxu0 0.0
  %2315 = vmatpush2.msra.mxu0 0.0
  %2316 = vmatprep.subr.mxu0 0.0
  %2317 = vmatpush2.msra.mxu0 0.0
  %2318 = vmatprep.subr.mxu0 0.0
  %2319 = vmatpush2.msra.mxu0 0.0
  %2320 = vmatprep.subr.mxu0 0.0
  %2321 = vmatpush2.msra.mxu0 0.0
  %2322 = vmatprep.subr.mxu0 0.0
  %2323 = vmatpush2.msra.mxu0 0.0
  %2324 = vmatprep.subr.mxu0 0.0
  %2325 = vmatpush2.msra.mxu0 0.0
  %2326 = vmatprep.subr.mxu0 0.0
  %2327 = vmatpush2.msra.mxu0 0.0
  %2328 = vmatprep.subr.mxu0 0.0
  %2329 = vmatpush2.msra.mxu0 0.0
  %2330 = vmatprep.subr.mxu0 0.0
  %2331 = vmatpush2.msra.mxu0 0.0
  %2332 = vmatprep.subr.mxu0 0.0
  %2333 = vmatpush2.msra.mxu0 0.0
  %2334 = vmatprep.subr.mxu0 0.0
  %2335 = vmatpush2.msra.mxu0 0.0
  %2336 = vmatprep.subr.mxu0 0.0
  %2337 = vmatpush2.msra.mxu0 0.0
  %2338 = vmatprep.subr.mxu0 0.0
  %2339 = vmatpush2.msra.mxu0 0.0
  %2340 = vmatprep.subr.mxu0 0.0
  %2341 = vmatpush2.msra.mxu0 0.0
  %2342 = vmatprep.subr.mxu0 0.0
  %2343 = vmatpush2.msra.mxu0 0.0
  %2344 = vmatprep.mubr.f32.mxu0 0.0
  %2345 = vmatmul.mubr.f32.gmra.mxu0 %v2269
  %v2346 = vpop.f32.mrf.mxu0
  %v2347 = vadd.f32 0.0, %v2346
  %v2348 = vpop.f32.mrf.mxu0
  %2349 = vmatprep.mubr.f32.mxu0 0.0
  %2350 = vmatmul.mubr.f32.gmra.mxu0 %v2272
  %v2351 = vpop.f32.mrf.mxu0
  %v2352 = vadd.f32 0.0, %v2351
  %v2353 = vpop.f32.mrf.mxu0
  %2354 = vmatprep.mubr.f32.mxu0 0.0
  %2355 = vmatmul.mubr.f32.gmra.mxu0 %v2275
  %v2356 = vpop.f32.mrf.mxu0
  %v2357 = vadd.f32 0.0, %v2356
  %v2358 = vpop.f32.mrf.mxu0
  %2359 = vmatprep.mubr.f32.mxu0 0.0
  %2360 = vmatmul.mubr.f32.gmra.mxu0 %v2278
  %v2361 = vpop.f32.mrf.mxu0
  %v2362 = vadd.f32 0.0, %v2361
  %v2363 = vpop.f32.mrf.mxu0
  %2364 = vdwg.mxu0
  %v2365 = vadd.f32 %v1980, %v2347
  %v2366 = vadd.f32 %v1985, %v2352
  %v2367 = vadd.f32 %v1990, %v2357
  %v2368 = vadd.f32 %v1995, %v2362
  %2369 = vrot.lane.b32.xlu0 %v1242, 80
  %v2370 = vpop.permute.xlu0 %2369
  %2371 = vrot.lane.b32.xlu0 %v1248, 80
  %v2372 = vpop.permute.xlu0 %2371
  %2373 = vrot.lane.b32.xlu0 %v1254, 80
  %v2374 = vpop.permute.xlu0 %2373
  %2375 = vrot.lane.b32.xlu0 %v1260, 80
  %v2376 = vpop.permute.xlu0 %2375
  %v2377 = vsel %vm148, %v2370, 0
  %v2379 = vsel %vm148, %v2372, 0
  %v2381 = vsel %vm148, %v2374, 0
  %v2383 = vsel %vm148, %v2376, 0
  %v2385 = vsel %vm148, %v1244, 0
  %v2387 = vsel %vm148, %v1250, 0
  %v2389 = vsel %vm148, %v1256, 0
  %v2391 = vsel %vm148, %v1262, 0
  %2393 = vmatprep.subr.mxu0 0.0
  %2394 = vmatpush1.xpose.msra.mxu0 0.0
  %2395 = vmatprep.subr.mxu0 0.0
  %2396 = vmatpush1.xpose.msra.mxu0 0.0
  %2397 = vmatprep.subr.mxu0 0.0
  %2398 = vmatpush1.xpose.msra.mxu0 0.0
  %2399 = vmatprep.subr.mxu0 0.0
  %2400 = vmatpush1.xpose.msra.mxu0 0.0
  %2401 = vmatprep.subr.mxu0 0.0
  %2402 = vmatpush1.xpose.msra.mxu0 0.0
  %2403 = vmatprep.subr.mxu0 0.0
  %2404 = vmatpush1.xpose.msra.mxu0 0.0
  %2405 = vmatprep.subr.mxu0 0.0
  %2406 = vmatpush1.xpose.msra.mxu0 0.0
  %2407 = vmatprep.subr.mxu0 0.0
  %2408 = vmatpush1.xpose.msra.mxu0 0.0
  %2409 = vmatprep.subr.mxu0 0.0
  %2410 = vmatpush1.xpose.msra.mxu0 0.0
  %2411 = vmatprep.subr.mxu0 0.0
  %2412 = vmatpush1.xpose.msra.mxu0 0.0
  %2413 = vmatprep.subr.mxu0 0.0
  %2414 = vmatpush1.xpose.msra.mxu0 0.0
  %2415 = vmatprep.subr.mxu0 0.0
  %2416 = vmatpush1.xpose.msra.mxu0 0.0
  %2417 = vmatprep.subr.mxu0 0.0
  %2418 = vmatpush1.xpose.msra.mxu0 %v2391
  %2419 = vmatprep.subr.mxu0 0.0
  %2420 = vmatpush1.xpose.msra.mxu0 %v2389
  %2421 = vmatprep.subr.mxu0 0.0
  %2422 = vmatpush1.xpose.msra.mxu0 %v2387
  %2423 = vmatprep.subr.mxu0 0.0
  %2424 = vmatpush1.xpose.msra.mxu0 %v2385
  %2425 = vmatprep.subr.mxu0 0.0
  %2426 = vmatpush2.xpose.msra.mxu0 0.0
  %2427 = vmatprep.subr.mxu0 0.0
  %2428 = vmatpush2.xpose.msra.mxu0 0.0
  %2429 = vmatprep.subr.mxu0 0.0
  %2430 = vmatpush2.xpose.msra.mxu0 0.0
  %2431 = vmatprep.subr.mxu0 0.0
  %2432 = vmatpush2.xpose.msra.mxu0 0.0
  %2433 = vmatprep.subr.mxu0 0.0
  %2434 = vmatpush2.xpose.msra.mxu0 0.0
  %2435 = vmatprep.subr.mxu0 0.0
  %2436 = vmatpush2.xpose.msra.mxu0 0.0
  %2437 = vmatprep.subr.mxu0 0.0
  %2438 = vmatpush2.xpose.msra.mxu0 0.0
  %2439 = vmatprep.subr.mxu0 0.0
  %2440 = vmatpush2.xpose.msra.mxu0 0.0
  %2441 = vmatprep.subr.mxu0 0.0
  %2442 = vmatpush2.xpose.msra.mxu0 0.0
  %2443 = vmatprep.subr.mxu0 0.0
  %2444 = vmatpush2.xpose.msra.mxu0 0.0
  %2445 = vmatprep.subr.mxu0 0.0
  %2446 = vmatpush2.xpose.msra.mxu0 0.0
  %2447 = vmatprep.subr.mxu0 0.0
  %2448 = vmatpush2.xpose.msra.mxu0 0.0
  %2449 = vmatprep.subr.mxu0 0.0
  %2450 = vmatpush2.xpose.msra.mxu0 0.0
  %2451 = vmatprep.subr.mxu0 0.0
  %2452 = vmatpush2.xpose.msra.mxu0 0.0
  %2453 = vmatprep.subr.mxu0 0.0
  %2454 = vmatpush2.xpose.msra.mxu0 0.0
  %2455 = vmatprep.subr.mxu0 0.0
  %2456 = vmatpush2.xpose.msra.mxu0 0.0
  %2457 = vmatprep.mubr.f32.mxu0 0.0
  %2458 = vmatmul.mubr.f32.gmra.mxu0 %v2377
  %v2459 = vpop.f32.mrf.mxu0
  %v2460 = vadd.f32 0.0, %v2459
  %v2461 = vpop.f32.mrf.mxu0
  %2462 = vmatprep.mubr.f32.mxu0 0.0
  %2463 = vmatmul.mubr.f32.gmra.mxu0 %v2379
  %v2464 = vpop.f32.mrf.mxu0
  %v2465 = vadd.f32 0.0, %v2464
  %v2466 = vpop.f32.mrf.mxu0
  %2467 = vmatprep.mubr.f32.mxu0 0.0
  %2468 = vmatmul.mubr.f32.gmra.mxu0 %v2381
  %v2469 = vpop.f32.mrf.mxu0
  %v2470 = vadd.f32 0.0, %v2469
  %v2471 = vpop.f32.mrf.mxu0
  %2472 = vmatprep.mubr.f32.mxu0 0.0
  %2473 = vmatmul.mubr.f32.gmra.mxu0 %v2383
  %v2474 = vpop.f32.mrf.mxu0
  %v2475 = vadd.f32 0.0, %v2474
  %v2476 = vpop.f32.mrf.mxu0
  %2477 = vdwg.mxu0
  %v2478 = vsel %vm410, %v2460, -inf
  %2479 = vmax.xlane.f32.xlu0 %v2478
  %v2480 = vpop.xlane.xlu0 %2479
  %v2481 = vsel %vm410, %v2465, -inf
  %2482 = vmax.xlane.f32.xlu0 %v2481
  %v2483 = vpop.xlane.xlu0 %2482
  %v2484 = vsel %vm410, %v2470, -inf
  %2485 = vmax.xlane.f32.xlu0 %v2484
  %v2486 = vpop.xlane.xlu0 %2485
  %v2487 = vsel %vm410, %v2475, -inf
  %2488 = vmax.xlane.f32.xlu0 %v2487
  %v2489 = vpop.xlane.xlu0 %2488
  %v2490 = vsub.f32 %v2460, %v2480
  %v2491 = vsub.f32 %v2465, %v2483
  %v2492 = vsub.f32 %v2470, %v2486
  %v2493 = vsub.f32 %v2475, %v2489
  %v2494 = vmul.f32 %v2490, 1.442695
  %v2495 = vpow.pop %v2494
  %v2496 = vmul.f32 %v2491, 1.442695
  %v2497 = vpow.pop %v2496
  %v2498 = vmul.f32 %v2492, 1.442695
  %v2499 = vpow.pop %v2498
  %v2500 = vmul.f32 %v2493, 1.442695
  %v2501 = vpow.pop %v2500
  %v2502 = vsel %vm410, %v2495, 0.0
  %2503 = vadd.xlane.f32.xlu0 %v2502
  %v2504 = vpop.xlane.xlu0 %2503
  %v2505 = vsel %vm410, %v2497, 0.0
  %2506 = vadd.xlane.f32.xlu0 %v2505
  %v2507 = vpop.xlane.xlu0 %2506
  %v2508 = vsel %vm410, %v2499, 0.0
  %2509 = vadd.xlane.f32.xlu0 %v2508
  %v2510 = vpop.xlane.xlu0 %2509
  %v2511 = vsel %vm410, %v2501, 0.0
  %2512 = vadd.xlane.f32.xlu0 %v2511
  %v2513 = vpop.xlane.xlu0 %2512
  %v2514 = vrcp.pop %v2504
  %v2515 = vrcp.pop %v2507
  %v2516 = vrcp.pop %v2510
  %v2517 = vrcp.pop %v2513
  %v2518 = vmul.f32 %v2495, %v2514
  %v2519 = vmul.f32 %v2497, %v2515
  %v2520 = vmul.f32 %v2499, %v2516
  %v2521 = vmul.f32 %v2501, %v2517
  %2522 = vrot.lane.b32.xlu0 %v1244, 48
  %v2523 = vpop.permute.xlu0 %2522
  %2524 = vrot.lane.b32.xlu0 %v1250, 48
  %v2525 = vpop.permute.xlu0 %2524
  %2526 = vrot.lane.b32.xlu0 %v1256, 48
  %v2527 = vpop.permute.xlu0 %2526
  %2528 = vrot.lane.b32.xlu0 %v1262, 48
  %v2529 = vpop.permute.xlu0 %2528
  %v2535 = vsel %vm410, %v2518, 0
  %v2538 = vsel %vm410, %v2519, 0
  %v2541 = vsel %vm410, %v2520, 0
  %v2544 = vsel %vm410, %v2521, 0
  %2546 = vmatprep.subr.mxu0 0.0
  %2547 = vmatpush1.msra.mxu0 0.0
  %2548 = vmatprep.subr.mxu0 0.0
  %2549 = vmatpush1.msra.mxu0 0.0
  %2550 = vmatprep.subr.mxu0 0.0
  %2551 = vmatpush1.msra.mxu0 0.0
  %2552 = vmatprep.subr.mxu0 0.0
  %2553 = vmatpush1.msra.mxu0 0.0
  %2554 = vmatprep.subr.mxu0 0.0
  %2555 = vmatpush1.msra.mxu0 0.0
  %2556 = vmatprep.subr.mxu0 0.0
  %2557 = vmatpush1.msra.mxu0 0.0
  %2558 = vmatprep.subr.mxu0 0.0
  %2559 = vmatpush1.msra.mxu0 0.0
  %2560 = vmatprep.subr.mxu0 0.0
  %2561 = vmatpush1.msra.mxu0 0.0
  %2562 = vmatprep.subr.mxu0 0.0
  %2563 = vmatpush1.msra.mxu0 0.0
  %2564 = vmatprep.subr.mxu0 0.0
  %2565 = vmatpush1.msra.mxu0 0.0
  %2566 = vmatprep.subr.mxu0 0.0
  %2567 = vmatpush1.msra.mxu0 0.0
  %2568 = vmatprep.subr.mxu0 0.0
  %2569 = vmatpush1.msra.mxu0 0.0
  %2570 = vmatprep.subr.mxu0 0.0
  %2571 = vmatpush1.msra.mxu0 %v2529
  %2572 = vmatprep.subr.mxu0 0.0
  %2573 = vmatpush1.msra.mxu0 %v2527
  %2574 = vmatprep.subr.mxu0 0.0
  %2575 = vmatpush1.msra.mxu0 %v2525
  %2576 = vmatprep.subr.mxu0 0.0
  %2577 = vmatpush1.msra.mxu0 %v2523
  %2578 = vmatprep.subr.mxu0 0.0
  %2579 = vmatpush2.msra.mxu0 0.0
  %2580 = vmatprep.subr.mxu0 0.0
  %2581 = vmatpush2.msra.mxu0 0.0
  %2582 = vmatprep.subr.mxu0 0.0
  %2583 = vmatpush2.msra.mxu0 0.0
  %2584 = vmatprep.subr.mxu0 0.0
  %2585 = vmatpush2.msra.mxu0 0.0
  %2586 = vmatprep.subr.mxu0 0.0
  %2587 = vmatpush2.msra.mxu0 0.0
  %2588 = vmatprep.subr.mxu0 0.0
  %2589 = vmatpush2.msra.mxu0 0.0
  %2590 = vmatprep.subr.mxu0 0.0
  %2591 = vmatpush2.msra.mxu0 0.0
  %2592 = vmatprep.subr.mxu0 0.0
  %2593 = vmatpush2.msra.mxu0 0.0
  %2594 = vmatprep.subr.mxu0 0.0
  %2595 = vmatpush2.msra.mxu0 0.0
  %2596 = vmatprep.subr.mxu0 0.0
  %2597 = vmatpush2.msra.mxu0 0.0
  %2598 = vmatprep.subr.mxu0 0.0
  %2599 = vmatpush2.msra.mxu0 0.0
  %2600 = vmatprep.subr.mxu0 0.0
  %2601 = vmatpush2.msra.mxu0 0.0
  %2602 = vmatprep.subr.mxu0 0.0
  %2603 = vmatpush2.msra.mxu0 0.0
  %2604 = vmatprep.subr.mxu0 0.0
  %2605 = vmatpush2.msra.mxu0 0.0
  %2606 = vmatprep.subr.mxu0 0.0
  %2607 = vmatpush2.msra.mxu0 0.0
  %2608 = vmatprep.subr.mxu0 0.0
  %2609 = vmatpush2.msra.mxu0 0.0
  %2610 = vmatprep.mubr.f32.mxu0 0.0
  %2611 = vmatmul.mubr.f32.gmra.mxu0 %v2535
  %v2612 = vpop.f32.mrf.mxu0
  %v2613 = vadd.f32 0.0, %v2612
  %v2614 = vpop.f32.mrf.mxu0
  %2615 = vmatprep.mubr.f32.mxu0 0.0
  %2616 = vmatmul.mubr.f32.gmra.mxu0 %v2538
  %v2617 = vpop.f32.mrf.mxu0
  %v2618 = vadd.f32 0.0, %v2617
  %v2619 = vpop.f32.mrf.mxu0
  %2620 = vmatprep.mubr.f32.mxu0 0.0
  %2621 = vmatmul.mubr.f32.gmra.mxu0 %v2541
  %v2622 = vpop.f32.mrf.mxu0
  %v2623 = vadd.f32 0.0, %v2622
  %v2624 = vpop.f32.mrf.mxu0
  %2625 = vmatprep.mubr.f32.mxu0 0.0
  %2626 = vmatmul.mubr.f32.gmra.mxu0 %v2544
  %v2627 = vpop.f32.mrf.mxu0
  %v2628 = vadd.f32 0.0, %v2627
  %v2629 = vpop.f32.mrf.mxu0
  %2630 = vdwg.mxu0
  %v2632 = vsel %vm148, %v2613, 0
  %v2635 = vsel %vm148, %v2618, 0
  %v2638 = vsel %vm148, %v2623, 0
  %v2641 = vsel %vm148, %v2628, 0
  %2643 = vmatprep.subr.mxu0 0.0
  %2644 = vmatpush1.msra.mxu0 0.0
  %2645 = vmatprep.subr.mxu0 0.0
  %2646 = vmatpush1.msra.mxu0 0.0
  %2647 = vmatprep.subr.mxu0 0.0
  %2648 = vmatpush1.msra.mxu0 0.0
  %2649 = vmatprep.subr.mxu0 0.0
  %2650 = vmatpush1.msra.mxu0 0.0
  %2651 = vmatprep.subr.mxu0 0.0
  %2652 = vmatpush1.msra.mxu0 0.0
  %2653 = vmatprep.subr.mxu0 0.0
  %2654 = vmatpush1.msra.mxu0 0.0
  %2655 = vmatprep.subr.mxu0 0.0
  %2656 = vmatpush1.msra.mxu0 0.0
  %2657 = vmatprep.subr.mxu0 0.0
  %2658 = vmatpush1.msra.mxu0 0.0
  %2659 = vmatprep.subr.mxu0 0.0
  %2660 = vmatpush1.msra.mxu0 0.0
  %2661 = vmatprep.subr.mxu0 0.0
  %2662 = vmatpush1.msra.mxu0 0.0
  %2663 = vmatprep.subr.mxu0 0.0
  %2664 = vmatpush1.msra.mxu0 0.0
  %2665 = vmatprep.subr.mxu0 0.0
  %2666 = vmatpush1.msra.mxu0 0.0
  %2667 = vmatprep.subr.mxu0 0.0
  %2668 = vmatpush1.msra.mxu0 0.0
  %2669 = vmatprep.subr.mxu0 0.0
  %2670 = vmatpush1.msra.mxu0 0.0
  %2671 = vmatprep.subr.mxu0 0.0
  %2672 = vmatpush1.msra.mxu0 %v123
  %2673 = vmatprep.subr.mxu0 0.0
  %2674 = vmatpush1.msra.mxu0 %v122
  %2675 = vmatprep.subr.mxu0 0.0
  %2676 = vmatpush2.msra.mxu0 0.0
  %2677 = vmatprep.subr.mxu0 0.0
  %2678 = vmatpush2.msra.mxu0 0.0
  %2679 = vmatprep.subr.mxu0 0.0
  %2680 = vmatpush2.msra.mxu0 0.0
  %2681 = vmatprep.subr.mxu0 0.0
  %2682 = vmatpush2.msra.mxu0 0.0
  %2683 = vmatprep.subr.mxu0 0.0
  %2684 = vmatpush2.msra.mxu0 0.0
  %2685 = vmatprep.subr.mxu0 0.0
  %2686 = vmatpush2.msra.mxu0 0.0
  %2687 = vmatprep.subr.mxu0 0.0
  %2688 = vmatpush2.msra.mxu0 0.0
  %2689 = vmatprep.subr.mxu0 0.0
  %2690 = vmatpush2.msra.mxu0 0.0
  %2691 = vmatprep.subr.mxu0 0.0
  %2692 = vmatpush2.msra.mxu0 0.0
  %2693 = vmatprep.subr.mxu0 0.0
  %2694 = vmatpush2.msra.mxu0 0.0
  %2695 = vmatprep.subr.mxu0 0.0
  %2696 = vmatpush2.msra.mxu0 0.0
  %2697 = vmatprep.subr.mxu0 0.0
  %2698 = vmatpush2.msra.mxu0 0.0
  %2699 = vmatprep.subr.mxu0 0.0
  %2700 = vmatpush2.msra.mxu0 0.0
  %2701 = vmatprep.subr.mxu0 0.0
  %2702 = vmatpush2.msra.mxu0 0.0
  %2703 = vmatprep.subr.mxu0 0.0
  %2704 = vmatpush2.msra.mxu0 0.0
  %2705 = vmatprep.subr.mxu0 0.0
  %2706 = vmatpush2.msra.mxu0 0.0
  %2707 = vmatprep.mubr.f32.mxu0 0.0
  %2708 = vmatmul.mubr.f32.gmra.mxu0 %v2632
  %v2709 = vpop.f32.mrf.mxu0
  %v2710 = vadd.f32 0.0, %v2709
  %v2711 = vpop.f32.mrf.mxu0
  %2712 = vmatprep.mubr.f32.mxu0 0.0
  %2713 = vmatmul.mubr.f32.gmra.mxu0 %v2635
  %v2714 = vpop.f32.mrf.mxu0
  %v2715 = vadd.f32 0.0, %v2714
  %v2716 = vpop.f32.mrf.mxu0
  %2717 = vmatprep.mubr.f32.mxu0 0.0
  %2718 = vmatmul.mubr.f32.gmra.mxu0 %v2638
  %v2719 = vpop.f32.mrf.mxu0
  %v2720 = vadd.f32 0.0, %v2719
  %v2721 = vpop.f32.mrf.mxu0
  %2722 = vmatprep.mubr.f32.mxu0 0.0
  %2723 = vmatmul.mubr.f32.gmra.mxu0 %v2641
  %v2724 = vpop.f32.mrf.mxu0
  %v2725 = vadd.f32 0.0, %v2724
  %v2726 = vpop.f32.mrf.mxu0
  %2727 = vdwg.mxu0
  %v2728 = vadd.f32 %v2365, %v2710
  %v2729 = vadd.f32 %v2366, %v2715
  %v2730 = vadd.f32 %v2367, %v2720
  %v2731 = vadd.f32 %v2368, %v2725
  %2732 = vrot.lane.b32.xlu0 %v1242, 64
  %v2733 = vpop.permute.xlu0 %2732
  %2734 = vrot.lane.b32.xlu0 %v1248, 64
  %v2735 = vpop.permute.xlu0 %2734
  %2736 = vrot.lane.b32.xlu0 %v1254, 64
  %v2737 = vpop.permute.xlu0 %2736
  %2738 = vrot.lane.b32.xlu0 %v1260, 64
  %v2739 = vpop.permute.xlu0 %2738
  %2740 = vrot.lane.b32.xlu0 %v1244, 112
  %v2741 = vpop.permute.xlu0 %2740
  %2742 = vrot.lane.b32.xlu0 %v1250, 112
  %v2743 = vpop.permute.xlu0 %2742
  %2744 = vrot.lane.b32.xlu0 %v1256, 112
  %v2745 = vpop.permute.xlu0 %2744
  %2746 = vrot.lane.b32.xlu0 %v1262, 112
  %v2747 = vpop.permute.xlu0 %2746
  %v2748 = vsel %vm148, %v2733, 0
  %v2750 = vsel %vm148, %v2735, 0
  %v2752 = vsel %vm148, %v2737, 0
  %v2754 = vsel %vm148, %v2739, 0
  %v2756 = vsel %vm148, %v2741, 0
  %v2758 = vsel %vm148, %v2743, 0
  %v2760 = vsel %vm148, %v2745, 0
  %v2762 = vsel %vm148, %v2747, 0
  %2764 = vmatprep.subr.mxu0 0.0
  %2765 = vmatpush1.xpose.msra.mxu0 0.0
  %2766 = vmatprep.subr.mxu0 0.0
  %2767 = vmatpush1.xpose.msra.mxu0 0.0
  %2768 = vmatprep.subr.mxu0 0.0
  %2769 = vmatpush1.xpose.msra.mxu0 0.0
  %2770 = vmatprep.subr.mxu0 0.0
  %2771 = vmatpush1.xpose.msra.mxu0 0.0
  %2772 = vmatprep.subr.mxu0 0.0
  %2773 = vmatpush1.xpose.msra.mxu0 0.0
  %2774 = vmatprep.subr.mxu0 0.0
  %2775 = vmatpush1.xpose.msra.mxu0 0.0
  %2776 = vmatprep.subr.mxu0 0.0
  %2777 = vmatpush1.xpose.msra.mxu0 0.0
  %2778 = vmatprep.subr.mxu0 0.0
  %2779 = vmatpush1.xpose.msra.mxu0 0.0
  %2780 = vmatprep.subr.mxu0 0.0
  %2781 = vmatpush1.xpose.msra.mxu0 0.0
  %2782 = vmatprep.subr.mxu0 0.0
  %2783 = vmatpush1.xpose.msra.mxu0 0.0
  %2784 = vmatprep.subr.mxu0 0.0
  %2785 = vmatpush1.xpose.msra.mxu0 0.0
  %2786 = vmatprep.subr.mxu0 0.0
  %2787 = vmatpush1.xpose.msra.mxu0 0.0
  %2788 = vmatprep.subr.mxu0 0.0
  %2789 = vmatpush1.xpose.msra.mxu0 %v2762
  %2790 = vmatprep.subr.mxu0 0.0
  %2791 = vmatpush1.xpose.msra.mxu0 %v2760
  %2792 = vmatprep.subr.mxu0 0.0
  %2793 = vmatpush1.xpose.msra.mxu0 %v2758
  %2794 = vmatprep.subr.mxu0 0.0
  %2795 = vmatpush1.xpose.msra.mxu0 %v2756
  %2796 = vmatprep.subr.mxu0 0.0
  %2797 = vmatpush2.xpose.msra.mxu0 0.0
  %2798 = vmatprep.subr.mxu0 0.0
  %2799 = vmatpush2.xpose.msra.mxu0 0.0
  %2800 = vmatprep.subr.mxu0 0.0
  %2801 = vmatpush2.xpose.msra.mxu0 0.0
  %2802 = vmatprep.subr.mxu0 0.0
  %2803 = vmatpush2.xpose.msra.mxu0 0.0
  %2804 = vmatprep.subr.mxu0 0.0
  %2805 = vmatpush2.xpose.msra.mxu0 0.0
  %2806 = vmatprep.subr.mxu0 0.0
  %2807 = vmatpush2.xpose.msra.mxu0 0.0
  %2808 = vmatprep.subr.mxu0 0.0
  %2809 = vmatpush2.xpose.msra.mxu0 0.0
  %2810 = vmatprep.subr.mxu0 0.0
  %2811 = vmatpush2.xpose.msra.mxu0 0.0
  %2812 = vmatprep.subr.mxu0 0.0
  %2813 = vmatpush2.xpose.msra.mxu0 0.0
  %2814 = vmatprep.subr.mxu0 0.0
  %2815 = vmatpush2.xpose.msra.mxu0 0.0
  %2816 = vmatprep.subr.mxu0 0.0
  %2817 = vmatpush2.xpose.msra.mxu0 0.0
  %2818 = vmatprep.subr.mxu0 0.0
  %2819 = vmatpush2.xpose.msra.mxu0 0.0
  %2820 = vmatprep.subr.mxu0 0.0
  %2821 = vmatpush2.xpose.msra.mxu0 0.0
  %2822 = vmatprep.subr.mxu0 0.0
  %2823 = vmatpush2.xpose.msra.mxu0 0.0
  %2824 = vmatprep.subr.mxu0 0.0
  %2825 = vmatpush2.xpose.msra.mxu0 0.0
  %2826 = vmatprep.subr.mxu0 0.0
  %2827 = vmatpush2.xpose.msra.mxu0 0.0
  %2828 = vmatprep.mubr.f32.mxu0 0.0
  %2829 = vmatmul.mubr.f32.gmra.mxu0 %v2748
  %v2830 = vpop.f32.mrf.mxu0
  %v2831 = vadd.f32 0.0, %v2830
  %v2832 = vpop.f32.mrf.mxu0
  %2833 = vmatprep.mubr.f32.mxu0 0.0
  %2834 = vmatmul.mubr.f32.gmra.mxu0 %v2750
  %v2835 = vpop.f32.mrf.mxu0
  %v2836 = vadd.f32 0.0, %v2835
  %v2837 = vpop.f32.mrf.mxu0
  %2838 = vmatprep.mubr.f32.mxu0 0.0
  %2839 = vmatmul.mubr.f32.gmra.mxu0 %v2752
  %v2840 = vpop.f32.mrf.mxu0
  %v2841 = vadd.f32 0.0, %v2840
  %v2842 = vpop.f32.mrf.mxu0
  %2843 = vmatprep.mubr.f32.mxu0 0.0
  %2844 = vmatmul.mubr.f32.gmra.mxu0 %v2754
  %v2845 = vpop.f32.mrf.mxu0
  %v2846 = vadd.f32 0.0, %v2845
  %v2847 = vpop.f32.mrf.mxu0
  %2848 = vdwg.mxu0
  %v2849 = vsel %vm410, %v2831, -inf
  %2850 = vmax.xlane.f32.xlu0 %v2849
  %v2851 = vpop.xlane.xlu0 %2850
  %v2852 = vsel %vm410, %v2836, -inf
  %2853 = vmax.xlane.f32.xlu0 %v2852
  %v2854 = vpop.xlane.xlu0 %2853
  %v2855 = vsel %vm410, %v2841, -inf
  %2856 = vmax.xlane.f32.xlu0 %v2855
  %v2857 = vpop.xlane.xlu0 %2856
  %v2858 = vsel %vm410, %v2846, -inf
  %2859 = vmax.xlane.f32.xlu0 %v2858
  %v2860 = vpop.xlane.xlu0 %2859
  %v2861 = vsub.f32 %v2831, %v2851
  %v2862 = vsub.f32 %v2836, %v2854
  %v2863 = vsub.f32 %v2841, %v2857
  %v2864 = vsub.f32 %v2846, %v2860
  %v2865 = vmul.f32 %v2861, 1.442695
  %v2866 = vpow.pop %v2865
  %v2867 = vmul.f32 %v2862, 1.442695
  %v2868 = vpow.pop %v2867
  %v2869 = vmul.f32 %v2863, 1.442695
  %v2870 = vpow.pop %v2869
  %v2871 = vmul.f32 %v2864, 1.442695
  %v2872 = vpow.pop %v2871
  %v2873 = vsel %vm410, %v2866, 0.0
  %2874 = vadd.xlane.f32.xlu0 %v2873
  %v2875 = vpop.xlane.xlu0 %2874
  %v2876 = vsel %vm410, %v2868, 0.0
  %2877 = vadd.xlane.f32.xlu0 %v2876
  %v2878 = vpop.xlane.xlu0 %2877
  %v2879 = vsel %vm410, %v2870, 0.0
  %2880 = vadd.xlane.f32.xlu0 %v2879
  %v2881 = vpop.xlane.xlu0 %2880
  %v2882 = vsel %vm410, %v2872, 0.0
  %2883 = vadd.xlane.f32.xlu0 %v2882
  %v2884 = vpop.xlane.xlu0 %2883
  %v2885 = vrcp.pop %v2875
  %v2886 = vrcp.pop %v2878
  %v2887 = vrcp.pop %v2881
  %v2888 = vrcp.pop %v2884
  %v2889 = vmul.f32 %v2866, %v2885
  %v2890 = vmul.f32 %v2868, %v2886
  %v2891 = vmul.f32 %v2870, %v2887
  %v2892 = vmul.f32 %v2872, %v2888
  %2893 = vrot.lane.b32.xlu0 %v1244, 32
  %v2894 = vpop.permute.xlu0 %2893
  %2895 = vrot.lane.b32.xlu0 %v1250, 32
  %v2896 = vpop.permute.xlu0 %2895
  %2897 = vrot.lane.b32.xlu0 %v1256, 32
  %v2898 = vpop.permute.xlu0 %2897
  %2899 = vrot.lane.b32.xlu0 %v1262, 32
  %v2900 = vpop.permute.xlu0 %2899
  %v2906 = vsel %vm410, %v2889, 0
  %v2909 = vsel %vm410, %v2890, 0
  %v2912 = vsel %vm410, %v2891, 0
  %v2915 = vsel %vm410, %v2892, 0
  %2917 = vmatprep.subr.mxu0 0.0
  %2918 = vmatpush1.msra.mxu0 0.0
  %2919 = vmatprep.subr.mxu0 0.0
  %2920 = vmatpush1.msra.mxu0 0.0
  %2921 = vmatprep.subr.mxu0 0.0
  %2922 = vmatpush1.msra.mxu0 0.0
  %2923 = vmatprep.subr.mxu0 0.0
  %2924 = vmatpush1.msra.mxu0 0.0
  %2925 = vmatprep.subr.mxu0 0.0
  %2926 = vmatpush1.msra.mxu0 0.0
  %2927 = vmatprep.subr.mxu0 0.0
  %2928 = vmatpush1.msra.mxu0 0.0
  %2929 = vmatprep.subr.mxu0 0.0
  %2930 = vmatpush1.msra.mxu0 0.0
  %2931 = vmatprep.subr.mxu0 0.0
  %2932 = vmatpush1.msra.mxu0 0.0
  %2933 = vmatprep.subr.mxu0 0.0
  %2934 = vmatpush1.msra.mxu0 0.0
  %2935 = vmatprep.subr.mxu0 0.0
  %2936 = vmatpush1.msra.mxu0 0.0
  %2937 = vmatprep.subr.mxu0 0.0
  %2938 = vmatpush1.msra.mxu0 0.0
  %2939 = vmatprep.subr.mxu0 0.0
  %2940 = vmatpush1.msra.mxu0 0.0
  %2941 = vmatprep.subr.mxu0 0.0
  %2942 = vmatpush1.msra.mxu0 %v2900
  %2943 = vmatprep.subr.mxu0 0.0
  %2944 = vmatpush1.msra.mxu0 %v2898
  %2945 = vmatprep.subr.mxu0 0.0
  %2946 = vmatpush1.msra.mxu0 %v2896
  %2947 = vmatprep.subr.mxu0 0.0
  %2948 = vmatpush1.msra.mxu0 %v2894
  %2949 = vmatprep.subr.mxu0 0.0
  %2950 = vmatpush2.msra.mxu0 0.0
  %2951 = vmatprep.subr.mxu0 0.0
  %2952 = vmatpush2.msra.mxu0 0.0
  %2953 = vmatprep.subr.mxu0 0.0
  %2954 = vmatpush2.msra.mxu0 0.0
  %2955 = vmatprep.subr.mxu0 0.0
  %2956 = vmatpush2.msra.mxu0 0.0
  %2957 = vmatprep.subr.mxu0 0.0
  %2958 = vmatpush2.msra.mxu0 0.0
  %2959 = vmatprep.subr.mxu0 0.0
  %2960 = vmatpush2.msra.mxu0 0.0
  %2961 = vmatprep.subr.mxu0 0.0
  %2962 = vmatpush2.msra.mxu0 0.0
  %2963 = vmatprep.subr.mxu0 0.0
  %2964 = vmatpush2.msra.mxu0 0.0
  %2965 = vmatprep.subr.mxu0 0.0
  %2966 = vmatpush2.msra.mxu0 0.0
  %2967 = vmatprep.subr.mxu0 0.0
  %2968 = vmatpush2.msra.mxu0 0.0
  %2969 = vmatprep.subr.mxu0 0.0
  %2970 = vmatpush2.msra.mxu0 0.0
  %2971 = vmatprep.subr.mxu0 0.0
  %2972 = vmatpush2.msra.mxu0 0.0
  %2973 = vmatprep.subr.mxu0 0.0
  %2974 = vmatpush2.msra.mxu0 0.0
  %2975 = vmatprep.subr.mxu0 0.0
  %2976 = vmatpush2.msra.mxu0 0.0
  %2977 = vmatprep.subr.mxu0 0.0
  %2978 = vmatpush2.msra.mxu0 0.0
  %2979 = vmatprep.subr.mxu0 0.0
  %2980 = vmatpush2.msra.mxu0 0.0
  %2981 = vmatprep.mubr.f32.mxu0 0.0
  %2982 = vmatmul.mubr.f32.gmra.mxu0 %v2906
  %v2983 = vpop.f32.mrf.mxu0
  %v2984 = vadd.f32 0.0, %v2983
  %v2985 = vpop.f32.mrf.mxu0
  %2986 = vmatprep.mubr.f32.mxu0 0.0
  %2987 = vmatmul.mubr.f32.gmra.mxu0 %v2909
  %v2988 = vpop.f32.mrf.mxu0
  %v2989 = vadd.f32 0.0, %v2988
  %v2990 = vpop.f32.mrf.mxu0
  %2991 = vmatprep.mubr.f32.mxu0 0.0
  %2992 = vmatmul.mubr.f32.gmra.mxu0 %v2912
  %v2993 = vpop.f32.mrf.mxu0
  %v2994 = vadd.f32 0.0, %v2993
  %v2995 = vpop.f32.mrf.mxu0
  %2996 = vmatprep.mubr.f32.mxu0 0.0
  %2997 = vmatmul.mubr.f32.gmra.mxu0 %v2915
  %v2998 = vpop.f32.mrf.mxu0
  %v2999 = vadd.f32 0.0, %v2998
  %v3000 = vpop.f32.mrf.mxu0
  %3001 = vdwg.mxu0
  %v3003 = vsel %vm148, %v2984, 0
  %v3006 = vsel %vm148, %v2989, 0
  %v3009 = vsel %vm148, %v2994, 0
  %v3012 = vsel %vm148, %v2999, 0
  %3014 = vmatprep.subr.mxu0 0.0
  %3015 = vmatpush1.msra.mxu0 0.0
  %3016 = vmatprep.subr.mxu0 0.0
  %3017 = vmatpush1.msra.mxu0 0.0
  %3018 = vmatprep.subr.mxu0 0.0
  %3019 = vmatpush1.msra.mxu0 0.0
  %3020 = vmatprep.subr.mxu0 0.0
  %3021 = vmatpush1.msra.mxu0 0.0
  %3022 = vmatprep.subr.mxu0 0.0
  %3023 = vmatpush1.msra.mxu0 0.0
  %3024 = vmatprep.subr.mxu0 0.0
  %3025 = vmatpush1.msra.mxu0 0.0
  %3026 = vmatprep.subr.mxu0 0.0
  %3027 = vmatpush1.msra.mxu0 0.0
  %3028 = vmatprep.subr.mxu0 0.0
  %3029 = vmatpush1.msra.mxu0 0.0
  %3030 = vmatprep.subr.mxu0 0.0
  %3031 = vmatpush1.msra.mxu0 0.0
  %3032 = vmatprep.subr.mxu0 0.0
  %3033 = vmatpush1.msra.mxu0 0.0
  %3034 = vmatprep.subr.mxu0 0.0
  %3035 = vmatpush1.msra.mxu0 0.0
  %3036 = vmatprep.subr.mxu0 0.0
  %3037 = vmatpush1.msra.mxu0 0.0
  %3038 = vmatprep.subr.mxu0 0.0
  %3039 = vmatpush1.msra.mxu0 0.0
  %3040 = vmatprep.subr.mxu0 0.0
  %3041 = vmatpush1.msra.mxu0 0.0
  %3042 = vmatprep.subr.mxu0 0.0
  %3043 = vmatpush1.msra.mxu0 %v125
  %3044 = vmatprep.subr.mxu0 0.0
  %3045 = vmatpush1.msra.mxu0 %v124
  %3046 = vmatprep.subr.mxu0 0.0
  %3047 = vmatpush2.msra.mxu0 0.0
  %3048 = vmatprep.subr.mxu0 0.0
  %3049 = vmatpush2.msra.mxu0 0.0
  %3050 = vmatprep.subr.mxu0 0.0
  %3051 = vmatpush2.msra.mxu0 0.0
  %3052 = vmatprep.subr.mxu0 0.0
  %3053 = vmatpush2.msra.mxu0 0.0
  %3054 = vmatprep.subr.mxu0 0.0
  %3055 = vmatpush2.msra.mxu0 0.0
  %3056 = vmatprep.subr.mxu0 0.0
  %3057 = vmatpush2.msra.mxu0 0.0
  %3058 = vmatprep.subr.mxu0 0.0
  %3059 = vmatpush2.msra.mxu0 0.0
  %3060 = vmatprep.subr.mxu0 0.0
  %3061 = vmatpush2.msra.mxu0 0.0
  %3062 = vmatprep.subr.mxu0 0.0
  %3063 = vmatpush2.msra.mxu0 0.0
  %3064 = vmatprep.subr.mxu0 0.0
  %3065 = vmatpush2.msra.mxu0 0.0
  %3066 = vmatprep.subr.mxu0 0.0
  %3067 = vmatpush2.msra.mxu0 0.0
  %3068 = vmatprep.subr.mxu0 0.0
  %3069 = vmatpush2.msra.mxu0 0.0
  %3070 = vmatprep.subr.mxu0 0.0
  %3071 = vmatpush2.msra.mxu0 0.0
  %3072 = vmatprep.subr.mxu0 0.0
  %3073 = vmatpush2.msra.mxu0 0.0
  %3074 = vmatprep.subr.mxu0 0.0
  %3075 = vmatpush2.msra.mxu0 0.0
  %3076 = vmatprep.subr.mxu0 0.0
  %3077 = vmatpush2.msra.mxu0 0.0
  %3078 = vmatprep.mubr.f32.mxu0 0.0
  %3079 = vmatmul.mubr.f32.gmra.mxu0 %v3003
  %v3080 = vpop.f32.mrf.mxu0
  %v3081 = vadd.f32 0.0, %v3080
  %v3082 = vpop.f32.mrf.mxu0
  %3083 = vmatprep.mubr.f32.mxu0 0.0
  %3084 = vmatmul.mubr.f32.gmra.mxu0 %v3006
  %v3085 = vpop.f32.mrf.mxu0
  %v3086 = vadd.f32 0.0, %v3085
  %v3087 = vpop.f32.mrf.mxu0
  %3088 = vmatprep.mubr.f32.mxu0 0.0
  %3089 = vmatmul.mubr.f32.gmra.mxu0 %v3009
  %v3090 = vpop.f32.mrf.mxu0
  %v3091 = vadd.f32 0.0, %v3090
  %v3092 = vpop.f32.mrf.mxu0
  %3093 = vmatprep.mubr.f32.mxu0 0.0
  %3094 = vmatmul.mubr.f32.gmra.mxu0 %v3012
  %v3095 = vpop.f32.mrf.mxu0
  %v3096 = vadd.f32 0.0, %v3095
  %v3097 = vpop.f32.mrf.mxu0
  %3098 = vdwg.mxu0
  %v3099 = vadd.f32 %v2728, %v3081
  %v3100 = vadd.f32 %v2729, %v3086
  %v3101 = vadd.f32 %v2730, %v3091
  %v3102 = vadd.f32 %v2731, %v3096
  %v3103 = vlaneseq
  %v3104 = vshrl.u32 %v3103, 7
  %v3105 = vsub.s32 0, %v3104
  %v3106 = vrot.slane %v126, %v3105
  %v3107 = vadd.f32 %v3099, %v3106
  %v3108 = vadd.f32 %v3100, %v3106
  %v3109 = vadd.f32 %v3101, %v3106
  %v3110 = vadd.f32 %v3102, %v3106
  %3111 = vxpose.xlu0.b32.start [1/16] %v3107, 128
  %3112 = vxpose.xlu0.b32.cont [2/16] %v3108, 128
  %3113 = vxpose.xlu0.b32.cont [3/16] %v3109, 128
  %3114 = vxpose.xlu0.b32.cont [4/16] %v3110, 128
  %3115 = vxpose.xlu0.b32.cont [5/16] 0.0, 128
  %3116 = vxpose.xlu0.b32.cont [6/16] 0.0, 128
  %3117 = vxpose.xlu0.b32.cont [7/16] 0.0, 128
  %3118 = vxpose.xlu0.b32.cont [8/16] 0.0, 128
  %3119 = vxpose.xlu0.b32.cont [9/16] 0.0, 128
  %3120 = vxpose.xlu0.b32.cont [10/16] 0.0, 128
  %3121 = vxpose.xlu0.b32.cont [11/16] 0.0, 128
  %3122 = vxpose.xlu0.b32.cont [12/16] 0.0, 128
  %3123 = vxpose.xlu0.b32.cont [13/16] 0.0, 128
  %3124 = vxpose.xlu0.b32.cont [14/16] 0.0, 128
  %3125 = vxpose.xlu0.b32.cont [15/16] 0.0, 128
  %3126 = vxpose.xlu0.b32.end [16/16] 0.0, 128
  %v3127 = vpop.trf.xlu0
  %v3128 = vpop.trf.xlu0
  %v3129 = vpop.trf.xlu0
  %v3130 = vpop.trf.xlu0
  %v3131 = vpop.trf.xlu0
  %v3132 = vpop.trf.xlu0
  %v3133 = vpop.trf.xlu0
  %v3134 = vpop.trf.xlu0
  %v3135 = vpop.trf.xlu0
  %v3136 = vpop.trf.xlu0
  %v3137 = vpop.trf.xlu0
  %v3138 = vpop.trf.xlu0
  %v3139 = vpop.trf.xlu0
  %v3140 = vpop.trf.xlu0
  %v3141 = vpop.trf.xlu0
  %v3142 = vpop.trf.xlu0
  %3149 = vrot.lane.b32.xlu0 %v580, 96
  %v3150 = vpop.permute.xlu0 %3149
  %3151 = vrot.lane.b32.xlu0 %v585, 96
  %v3152 = vpop.permute.xlu0 %3151
  %3153 = vrot.lane.b32.xlu0 %v590, 96
  %v3154 = vpop.permute.xlu0 %3153
  %3155 = vrot.lane.b32.xlu0 %v595, 96
  %v3156 = vpop.permute.xlu0 %3155
  %3157 = vrot.lane.b32.xlu0 %v600, 96
  %v3158 = vpop.permute.xlu0 %3157
  %3159 = vrot.lane.b32.xlu0 %v605, 96
  %v3160 = vpop.permute.xlu0 %3159
  %v3161 = vsel %vm410, %v580, 0
  %v3163 = vsel %vm410, %v585, 0
  %v3165 = vsel %vm410, %v590, 0
  %v3167 = vsel %vm410, %v595, 0
  %v3169 = vsel %vm410, %v600, 0
  %v3171 = vsel %vm410, %v605, 0
  %v3173 = vsel %vm410, %v3150, 0
  %v3175 = vsel %vm410, %v3152, 0
  %v3177 = vsel %vm410, %v3154, 0
  %v3179 = vsel %vm410, %v3156, 0
  %v3181 = vsel %vm410, %v3158, 0
  %v3183 = vsel %vm410, %v3160, 0
  %3185 = vmatprep.subr.mxu0 0.0
  %3186 = vmatpush1.xpose.msra.mxu0 0.0
  %3187 = vmatprep.subr.mxu0 0.0
  %3188 = vmatpush1.xpose.msra.mxu0 0.0
  %3189 = vmatprep.subr.mxu0 0.0
  %3190 = vmatpush1.xpose.msra.mxu0 0.0
  %3191 = vmatprep.subr.mxu0 0.0
  %3192 = vmatpush1.xpose.msra.mxu0 0.0
  %3193 = vmatprep.subr.mxu0 0.0
  %3194 = vmatpush1.xpose.msra.mxu0 0.0
  %3195 = vmatprep.subr.mxu0 0.0
  %3196 = vmatpush1.xpose.msra.mxu0 0.0
  %3197 = vmatprep.subr.mxu0 0.0
  %3198 = vmatpush1.xpose.msra.mxu0 0.0
  %3199 = vmatprep.subr.mxu0 0.0
  %3200 = vmatpush1.xpose.msra.mxu0 0.0
  %3201 = vmatprep.subr.mxu0 0.0
  %3202 = vmatpush1.xpose.msra.mxu0 0.0
  %3203 = vmatprep.subr.mxu0 0.0
  %3204 = vmatpush1.xpose.msra.mxu0 0.0
  %3205 = vmatprep.subr.mxu0 0.0
  %3206 = vmatpush1.xpose.msra.mxu0 %v3183
  %3207 = vmatprep.subr.mxu0 0.0
  %3208 = vmatpush1.xpose.msra.mxu0 %v3181
  %3209 = vmatprep.subr.mxu0 0.0
  %3210 = vmatpush1.xpose.msra.mxu0 %v3179
  %3211 = vmatprep.subr.mxu0 0.0
  %3212 = vmatpush1.xpose.msra.mxu0 %v3177
  %3213 = vmatprep.subr.mxu0 0.0
  %3214 = vmatpush1.xpose.msra.mxu0 %v3175
  %3215 = vmatprep.subr.mxu0 0.0
  %3216 = vmatpush1.xpose.msra.mxu0 %v3173
  %3217 = vmatprep.subr.mxu0 0.0
  %3218 = vmatpush2.xpose.msra.mxu0 0.0
  %3219 = vmatprep.subr.mxu0 0.0
  %3220 = vmatpush2.xpose.msra.mxu0 0.0
  %3221 = vmatprep.subr.mxu0 0.0
  %3222 = vmatpush2.xpose.msra.mxu0 0.0
  %3223 = vmatprep.subr.mxu0 0.0
  %3224 = vmatpush2.xpose.msra.mxu0 0.0
  %3225 = vmatprep.subr.mxu0 0.0
  %3226 = vmatpush2.xpose.msra.mxu0 0.0
  %3227 = vmatprep.subr.mxu0 0.0
  %3228 = vmatpush2.xpose.msra.mxu0 0.0
  %3229 = vmatprep.subr.mxu0 0.0
  %3230 = vmatpush2.xpose.msra.mxu0 0.0
  %3231 = vmatprep.subr.mxu0 0.0
  %3232 = vmatpush2.xpose.msra.mxu0 0.0
  %3233 = vmatprep.subr.mxu0 0.0
  %3234 = vmatpush2.xpose.msra.mxu0 0.0
  %3235 = vmatprep.subr.mxu0 0.0
  %3236 = vmatpush2.xpose.msra.mxu0 0.0
  %3237 = vmatprep.subr.mxu0 0.0
  %3238 = vmatpush2.xpose.msra.mxu0 0.0
  %3239 = vmatprep.subr.mxu0 0.0
  %3240 = vmatpush2.xpose.msra.mxu0 0.0
  %3241 = vmatprep.subr.mxu0 0.0
  %3242 = vmatpush2.xpose.msra.mxu0 0.0
  %3243 = vmatprep.subr.mxu0 0.0
  %3244 = vmatpush2.xpose.msra.mxu0 0.0
  %3245 = vmatprep.subr.mxu0 0.0
  %3246 = vmatpush2.xpose.msra.mxu0 0.0
  %3247 = vmatprep.subr.mxu0 0.0
  %3248 = vmatpush2.xpose.msra.mxu0 0.0
  %3249 = vmatprep.mubr.f32.mxu0 0.0
  %3250 = vmatmul.mubr.f32.gmra.mxu0 %v3161
  %v3251 = vpop.f32.mrf.mxu0
  %v3252 = vadd.f32 %v147, %v3251
  %v3253 = vpop.f32.mrf.mxu0
  %3254 = vmatprep.mubr.f32.mxu0 0.0
  %3255 = vmatmul.mubr.f32.gmra.mxu0 %v3163
  %v3256 = vpop.f32.mrf.mxu0
  %v3257 = vadd.f32 %v147, %v3256
  %v3258 = vpop.f32.mrf.mxu0
  %3259 = vmatprep.mubr.f32.mxu0 0.0
  %3260 = vmatmul.mubr.f32.gmra.mxu0 %v3165
  %v3261 = vpop.f32.mrf.mxu0
  %v3262 = vadd.f32 %v147, %v3261
  %v3263 = vpop.f32.mrf.mxu0
  %3264 = vmatprep.mubr.f32.mxu0 0.0
  %3265 = vmatmul.mubr.f32.gmra.mxu0 %v3167
  %v3266 = vpop.f32.mrf.mxu0
  %v3267 = vadd.f32 %v147, %v3266
  %v3268 = vpop.f32.mrf.mxu0
  %3269 = vmatprep.mubr.f32.mxu0 0.0
  %3270 = vmatmul.mubr.f32.gmra.mxu0 %v3169
  %v3271 = vpop.f32.mrf.mxu0
  %v3272 = vadd.f32 %v147, %v3271
  %v3273 = vpop.f32.mrf.mxu0
  %3274 = vmatprep.mubr.f32.mxu0 0.0
  %3275 = vmatmul.mubr.f32.gmra.mxu0 %v3171
  %v3276 = vpop.f32.mrf.mxu0
  %v3277 = vadd.f32 %v147, %v3276
  %v3278 = vpop.f32.mrf.mxu0
  %3279 = vdwg.mxu0
  %v3280 = vsel %vm805, %v3252, -inf
  %3281 = vmax.xlane.f32.xlu0 %v3280
  %v3282 = vpop.xlane.xlu0 %3281
  %v3283 = vsel %vm805, %v3257, -inf
  %3284 = vmax.xlane.f32.xlu0 %v3283
  %v3285 = vpop.xlane.xlu0 %3284
  %v3286 = vsel %vm805, %v3262, -inf
  %3287 = vmax.xlane.f32.xlu0 %v3286
  %v3288 = vpop.xlane.xlu0 %3287
  %v3289 = vsel %vm805, %v3267, -inf
  %3290 = vmax.xlane.f32.xlu0 %v3289
  %v3291 = vpop.xlane.xlu0 %3290
  %v3292 = vsel %vm805, %v3272, -inf
  %3293 = vmax.xlane.f32.xlu0 %v3292
  %v3294 = vpop.xlane.xlu0 %3293
  %v3295 = vsel %vm805, %v3277, -inf
  %3296 = vmax.xlane.f32.xlu0 %v3295
  %v3297 = vpop.xlane.xlu0 %3296
  %v3298 = vsub.f32 %v3252, %v3282
  %v3299 = vsub.f32 %v3257, %v3285
  %v3300 = vsub.f32 %v3262, %v3288
  %v3301 = vsub.f32 %v3267, %v3291
  %v3302 = vsub.f32 %v3272, %v3294
  %v3303 = vsub.f32 %v3277, %v3297
  %v3304 = vmul.f32 %v3298, 1.442695
  %v3305 = vpow.pop %v3304
  %v3306 = vmul.f32 %v3299, 1.442695
  %v3307 = vpow.pop %v3306
  %v3308 = vmul.f32 %v3300, 1.442695
  %v3309 = vpow.pop %v3308
  %v3310 = vmul.f32 %v3301, 1.442695
  %v3311 = vpow.pop %v3310
  %v3312 = vmul.f32 %v3302, 1.442695
  %v3313 = vpow.pop %v3312
  %v3314 = vmul.f32 %v3303, 1.442695
  %v3315 = vpow.pop %v3314
  %v3316 = vsel %vm805, %v3305, 0.0
  %3317 = vadd.xlane.f32.xlu0 %v3316
  %v3318 = vpop.xlane.xlu0 %3317
  %v3319 = vsel %vm805, %v3307, 0.0
  %3320 = vadd.xlane.f32.xlu0 %v3319
  %v3321 = vpop.xlane.xlu0 %3320
  %v3322 = vsel %vm805, %v3309, 0.0
  %3323 = vadd.xlane.f32.xlu0 %v3322
  %v3324 = vpop.xlane.xlu0 %3323
  %v3325 = vsel %vm805, %v3311, 0.0
  %3326 = vadd.xlane.f32.xlu0 %v3325
  %v3327 = vpop.xlane.xlu0 %3326
  %v3328 = vsel %vm805, %v3313, 0.0
  %3329 = vadd.xlane.f32.xlu0 %v3328
  %v3330 = vpop.xlane.xlu0 %3329
  %v3331 = vsel %vm805, %v3315, 0.0
  %3332 = vadd.xlane.f32.xlu0 %v3331
  %v3333 = vpop.xlane.xlu0 %3332
  %v3334 = vrcp.pop %v3318
  %v3335 = vrcp.pop %v3321
  %v3336 = vrcp.pop %v3324
  %v3337 = vrcp.pop %v3327
  %v3338 = vrcp.pop %v3330
  %v3339 = vrcp.pop %v3333
  %v3340 = vmul.f32 %v3305, %v3334
  %v3341 = vmul.f32 %v3307, %v3335
  %v3342 = vmul.f32 %v3309, %v3336
  %v3343 = vmul.f32 %v3311, %v3337
  %v3344 = vmul.f32 %v3313, %v3338
  %v3345 = vmul.f32 %v3315, %v3339
  %3346 = vrot.lane.b32.xlu0 %v580, 64
  %v3347 = vpop.permute.xlu0 %3346
  %3348 = vrot.lane.b32.xlu0 %v585, 64
  %v3349 = vpop.permute.xlu0 %3348
  %3350 = vrot.lane.b32.xlu0 %v590, 64
  %v3351 = vpop.permute.xlu0 %3350
  %3352 = vrot.lane.b32.xlu0 %v595, 64
  %v3353 = vpop.permute.xlu0 %3352
  %3354 = vrot.lane.b32.xlu0 %v600, 64
  %v3355 = vpop.permute.xlu0 %3354
  %3356 = vrot.lane.b32.xlu0 %v605, 64
  %v3357 = vpop.permute.xlu0 %3356
  %v3365 = vsel %vm805, %v3340, 0
  %v3368 = vsel %vm805, %v3341, 0
  %v3371 = vsel %vm805, %v3342, 0
  %v3374 = vsel %vm805, %v3343, 0
  %v3377 = vsel %vm805, %v3344, 0
  %v3380 = vsel %vm805, %v3345, 0
  %3382 = vmatprep.subr.mxu0 0.0
  %3383 = vmatpush1.msra.mxu0 0.0
  %3384 = vmatprep.subr.mxu0 0.0
  %3385 = vmatpush1.msra.mxu0 0.0
  %3386 = vmatprep.subr.mxu0 0.0
  %3387 = vmatpush1.msra.mxu0 0.0
  %3388 = vmatprep.subr.mxu0 0.0
  %3389 = vmatpush1.msra.mxu0 0.0
  %3390 = vmatprep.subr.mxu0 0.0
  %3391 = vmatpush1.msra.mxu0 0.0
  %3392 = vmatprep.subr.mxu0 0.0
  %3393 = vmatpush1.msra.mxu0 0.0
  %3394 = vmatprep.subr.mxu0 0.0
  %3395 = vmatpush1.msra.mxu0 0.0
  %3396 = vmatprep.subr.mxu0 0.0
  %3397 = vmatpush1.msra.mxu0 0.0
  %3398 = vmatprep.subr.mxu0 0.0
  %3399 = vmatpush1.msra.mxu0 0.0
  %3400 = vmatprep.subr.mxu0 0.0
  %3401 = vmatpush1.msra.mxu0 0.0
  %3402 = vmatprep.subr.mxu0 0.0
  %3403 = vmatpush1.msra.mxu0 %v3357
  %3404 = vmatprep.subr.mxu0 0.0
  %3405 = vmatpush1.msra.mxu0 %v3355
  %3406 = vmatprep.subr.mxu0 0.0
  %3407 = vmatpush1.msra.mxu0 %v3353
  %3408 = vmatprep.subr.mxu0 0.0
  %3409 = vmatpush1.msra.mxu0 %v3351
  %3410 = vmatprep.subr.mxu0 0.0
  %3411 = vmatpush1.msra.mxu0 %v3349
  %3412 = vmatprep.subr.mxu0 0.0
  %3413 = vmatpush1.msra.mxu0 %v3347
  %3414 = vmatprep.subr.mxu0 0.0
  %3415 = vmatpush2.msra.mxu0 0.0
  %3416 = vmatprep.subr.mxu0 0.0
  %3417 = vmatpush2.msra.mxu0 0.0
  %3418 = vmatprep.subr.mxu0 0.0
  %3419 = vmatpush2.msra.mxu0 0.0
  %3420 = vmatprep.subr.mxu0 0.0
  %3421 = vmatpush2.msra.mxu0 0.0
  %3422 = vmatprep.subr.mxu0 0.0
  %3423 = vmatpush2.msra.mxu0 0.0
  %3424 = vmatprep.subr.mxu0 0.0
  %3425 = vmatpush2.msra.mxu0 0.0
  %3426 = vmatprep.subr.mxu0 0.0
  %3427 = vmatpush2.msra.mxu0 0.0
  %3428 = vmatprep.subr.mxu0 0.0
  %3429 = vmatpush2.msra.mxu0 0.0
  %3430 = vmatprep.subr.mxu0 0.0
  %3431 = vmatpush2.msra.mxu0 0.0
  %3432 = vmatprep.subr.mxu0 0.0
  %3433 = vmatpush2.msra.mxu0 0.0
  %3434 = vmatprep.subr.mxu0 0.0
  %3435 = vmatpush2.msra.mxu0 0.0
  %3436 = vmatprep.subr.mxu0 0.0
  %3437 = vmatpush2.msra.mxu0 0.0
  %3438 = vmatprep.subr.mxu0 0.0
  %3439 = vmatpush2.msra.mxu0 0.0
  %3440 = vmatprep.subr.mxu0 0.0
  %3441 = vmatpush2.msra.mxu0 0.0
  %3442 = vmatprep.subr.mxu0 0.0
  %3443 = vmatpush2.msra.mxu0 0.0
  %3444 = vmatprep.subr.mxu0 0.0
  %3445 = vmatpush2.msra.mxu0 0.0
  %3446 = vmatprep.mubr.f32.mxu0 0.0
  %3447 = vmatmul.mubr.f32.gmra.mxu0 %v3365
  %v3448 = vpop.f32.mrf.mxu0
  %v3449 = vadd.f32 0.0, %v3448
  %v3450 = vpop.f32.mrf.mxu0
  %3451 = vmatprep.mubr.f32.mxu0 0.0
  %3452 = vmatmul.mubr.f32.gmra.mxu0 %v3368
  %v3453 = vpop.f32.mrf.mxu0
  %v3454 = vadd.f32 0.0, %v3453
  %v3455 = vpop.f32.mrf.mxu0
  %3456 = vmatprep.mubr.f32.mxu0 0.0
  %3457 = vmatmul.mubr.f32.gmra.mxu0 %v3371
  %v3458 = vpop.f32.mrf.mxu0
  %v3459 = vadd.f32 0.0, %v3458
  %v3460 = vpop.f32.mrf.mxu0
  %3461 = vmatprep.mubr.f32.mxu0 0.0
  %3462 = vmatmul.mubr.f32.gmra.mxu0 %v3374
  %v3463 = vpop.f32.mrf.mxu0
  %v3464 = vadd.f32 0.0, %v3463
  %v3465 = vpop.f32.mrf.mxu0
  %3466 = vmatprep.mubr.f32.mxu0 0.0
  %3467 = vmatmul.mubr.f32.gmra.mxu0 %v3377
  %v3468 = vpop.f32.mrf.mxu0
  %v3469 = vadd.f32 0.0, %v3468
  %v3470 = vpop.f32.mrf.mxu0
  %3471 = vmatprep.mubr.f32.mxu0 0.0
  %3472 = vmatmul.mubr.f32.gmra.mxu0 %v3380
  %v3473 = vpop.f32.mrf.mxu0
  %v3474 = vadd.f32 0.0, %v3473
  %v3475 = vpop.f32.mrf.mxu0
  %3476 = vdwg.mxu0
  %v3478 = vsel %vm410, %v3449, 0
  %v3481 = vsel %vm410, %v3454, 0
  %v3484 = vsel %vm410, %v3459, 0
  %v3487 = vsel %vm410, %v3464, 0
  %v3490 = vsel %vm410, %v3469, 0
  %v3493 = vsel %vm410, %v3474, 0
  %3495 = vmatprep.subr.mxu0 0.0
  %3496 = vmatpush1.msra.mxu0 0.0
  %3497 = vmatprep.subr.mxu0 0.0
  %3498 = vmatpush1.msra.mxu0 0.0
  %3499 = vmatprep.subr.mxu0 0.0
  %3500 = vmatpush1.msra.mxu0 0.0
  %3501 = vmatprep.subr.mxu0 0.0
  %3502 = vmatpush1.msra.mxu0 0.0
  %3503 = vmatprep.subr.mxu0 0.0
  %3504 = vmatpush1.msra.mxu0 0.0
  %3505 = vmatprep.subr.mxu0 0.0
  %3506 = vmatpush1.msra.mxu0 0.0
  %3507 = vmatprep.subr.mxu0 0.0
  %3508 = vmatpush1.msra.mxu0 0.0
  %3509 = vmatprep.subr.mxu0 0.0
  %3510 = vmatpush1.msra.mxu0 0.0
  %3511 = vmatprep.subr.mxu0 0.0
  %3512 = vmatpush1.msra.mxu0 0.0
  %3513 = vmatprep.subr.mxu0 0.0
  %3514 = vmatpush1.msra.mxu0 0.0
  %3515 = vmatprep.subr.mxu0 0.0
  %3516 = vmatpush1.msra.mxu0 0.0
  %3517 = vmatprep.subr.mxu0 0.0
  %3518 = vmatpush1.msra.mxu0 0.0
  %3519 = vmatprep.subr.mxu0 0.0
  %3520 = vmatpush1.msra.mxu0 %v82
  %3521 = vmatprep.subr.mxu0 0.0
  %3522 = vmatpush1.msra.mxu0 %v81
  %3523 = vmatprep.subr.mxu0 0.0
  %3524 = vmatpush1.msra.mxu0 %v80
  %3525 = vmatprep.subr.mxu0 0.0
  %3526 = vmatpush1.msra.mxu0 %v79
  %3527 = vmatprep.subr.mxu0 0.0
  %3528 = vmatpush2.msra.mxu0 0.0
  %3529 = vmatprep.subr.mxu0 0.0
  %3530 = vmatpush2.msra.mxu0 0.0
  %3531 = vmatprep.subr.mxu0 0.0
  %3532 = vmatpush2.msra.mxu0 0.0
  %3533 = vmatprep.subr.mxu0 0.0
  %3534 = vmatpush2.msra.mxu0 0.0
  %3535 = vmatprep.subr.mxu0 0.0
  %3536 = vmatpush2.msra.mxu0 0.0
  %3537 = vmatprep.subr.mxu0 0.0
  %3538 = vmatpush2.msra.mxu0 0.0
  %3539 = vmatprep.subr.mxu0 0.0
  %3540 = vmatpush2.msra.mxu0 0.0
  %3541 = vmatprep.subr.mxu0 0.0
  %3542 = vmatpush2.msra.mxu0 0.0
  %3543 = vmatprep.subr.mxu0 0.0
  %3544 = vmatpush2.msra.mxu0 0.0
  %3545 = vmatprep.subr.mxu0 0.0
  %3546 = vmatpush2.msra.mxu0 0.0
  %3547 = vmatprep.subr.mxu0 0.0
  %3548 = vmatpush2.msra.mxu0 0.0
  %3549 = vmatprep.subr.mxu0 0.0
  %3550 = vmatpush2.msra.mxu0 0.0
  %3551 = vmatprep.subr.mxu0 0.0
  %3552 = vmatpush2.msra.mxu0 0.0
  %3553 = vmatprep.subr.mxu0 0.0
  %3554 = vmatpush2.msra.mxu0 0.0
  %3555 = vmatprep.subr.mxu0 0.0
  %3556 = vmatpush2.msra.mxu0 0.0
  %3557 = vmatprep.subr.mxu0 0.0
  %3558 = vmatpush2.msra.mxu0 0.0
  %3559 = vmatprep.mubr.f32.mxu0 0.0
  %3560 = vmatmul.mubr.f32.gmra.mxu0 %v3478
  %v3561 = vpop.f32.mrf.mxu0
  %v3562 = vadd.f32 %v1006, %v3561
  %v3563 = vpop.f32.mrf.mxu0
  %3564 = vmatprep.mubr.f32.mxu0 0.0
  %3565 = vmatmul.mubr.f32.gmra.mxu0 %v3481
  %v3566 = vpop.f32.mrf.mxu0
  %v3567 = vadd.f32 %v1006, %v3566
  %v3568 = vpop.f32.mrf.mxu0
  %3569 = vmatprep.mubr.f32.mxu0 0.0
  %3570 = vmatmul.mubr.f32.gmra.mxu0 %v3484
  %v3571 = vpop.f32.mrf.mxu0
  %v3572 = vadd.f32 %v1006, %v3571
  %v3573 = vpop.f32.mrf.mxu0
  %3574 = vmatprep.mubr.f32.mxu0 0.0
  %3575 = vmatmul.mubr.f32.gmra.mxu0 %v3487
  %v3576 = vpop.f32.mrf.mxu0
  %v3577 = vadd.f32 %v1006, %v3576
  %v3578 = vpop.f32.mrf.mxu0
  %3579 = vmatprep.mubr.f32.mxu0 0.0
  %3580 = vmatmul.mubr.f32.gmra.mxu0 %v3490
  %v3581 = vpop.f32.mrf.mxu0
  %v3582 = vadd.f32 %v1006, %v3581
  %v3583 = vpop.f32.mrf.mxu0
  %3584 = vmatprep.mubr.f32.mxu0 0.0
  %3585 = vmatmul.mubr.f32.gmra.mxu0 %v3493
  %v3586 = vpop.f32.mrf.mxu0
  %v3587 = vadd.f32 %v1006, %v3586
  %v3588 = vpop.f32.mrf.mxu0
  %3589 = vdwg.mxu0
  %3590 = vxpose.xlu0.b32.start [1/16] %v3562, 128
  %3591 = vxpose.xlu0.b32.cont [2/16] %v3567, 128
  %3592 = vxpose.xlu0.b32.cont [3/16] %v3572, 128
  %3593 = vxpose.xlu0.b32.cont [4/16] %v3577, 128
  %3594 = vxpose.xlu0.b32.cont [5/16] %v3582, 128
  %3595 = vxpose.xlu0.b32.cont [6/16] %v3587, 128
  %3596 = vxpose.xlu0.b32.cont [7/16] 0.0, 128
  %3597 = vxpose.xlu0.b32.cont [8/16] 0.0, 128
  %3598 = vxpose.xlu0.b32.cont [9/16] 0.0, 128
  %3599 = vxpose.xlu0.b32.cont [10/16] 0.0, 128
  %3600 = vxpose.xlu0.b32.cont [11/16] 0.0, 128
  %3601 = vxpose.xlu0.b32.cont [12/16] 0.0, 128
  %3602 = vxpose.xlu0.b32.cont [13/16] 0.0, 128
  %3603 = vxpose.xlu0.b32.cont [14/16] 0.0, 128
  %3604 = vxpose.xlu0.b32.cont [15/16] 0.0, 128
  %3605 = vxpose.xlu0.b32.end [16/16] 0.0, 128
  %v3606 = vpop.trf.xlu0
  %v3607 = vpop.trf.xlu0
  %v3608 = vpop.trf.xlu0
  %v3609 = vpop.trf.xlu0
  %v3610 = vpop.trf.xlu0
  %v3611 = vpop.trf.xlu0
  %v3612 = vpop.trf.xlu0
  %v3613 = vpop.trf.xlu0
  %v3614 = vpop.trf.xlu0
  %v3615 = vpop.trf.xlu0
  %v3616 = vpop.trf.xlu0
  %v3617 = vpop.trf.xlu0
  %v3618 = vpop.trf.xlu0
  %v3619 = vpop.trf.xlu0
  %v3620 = vpop.trf.xlu0
  %v3621 = vpop.trf.xlu0
  %v3623 = vsel %vm805, %v3606, 0
  %v3626 = vsel %vm805, %v3607, 0
  %v3629 = vsel %vm805, %v3608, 0
  %v3632 = vsel %vm805, %v3609, 0
  %3634 = vmatprep.subr.mxu0 0.0
  %3635 = vmatpush1.msra.mxu0 0.0
  %3636 = vmatprep.subr.mxu0 0.0
  %3637 = vmatpush1.msra.mxu0 0.0
  %3638 = vmatprep.subr.mxu0 0.0
  %3639 = vmatpush1.msra.mxu0 0.0
  %3640 = vmatprep.subr.mxu0 0.0
  %3641 = vmatpush1.msra.mxu0 0.0
  %3642 = vmatprep.subr.mxu0 0.0
  %3643 = vmatpush1.msra.mxu0 0.0
  %3644 = vmatprep.subr.mxu0 0.0
  %3645 = vmatpush1.msra.mxu0 0.0
  %3646 = vmatprep.subr.mxu0 0.0
  %3647 = vmatpush1.msra.mxu0 0.0
  %3648 = vmatprep.subr.mxu0 0.0
  %3649 = vmatpush1.msra.mxu0 0.0
  %3650 = vmatprep.subr.mxu0 0.0
  %3651 = vmatpush1.msra.mxu0 0.0
  %3652 = vmatprep.subr.mxu0 0.0
  %3653 = vmatpush1.msra.mxu0 0.0
  %3654 = vmatprep.subr.mxu0 %v113
  %3655 = vmatpush1.msra.mxu0 %v112
  %3656 = vmatprep.subr.mxu0 %v111
  %3657 = vmatpush1.msra.mxu0 %v110
  %3658 = vmatprep.subr.mxu0 %v109
  %3659 = vmatpush1.msra.mxu0 %v108
  %3660 = vmatprep.subr.mxu0 %v107
  %3661 = vmatpush1.msra.mxu0 %v106
  %3662 = vmatprep.subr.mxu0 %v105
  %3663 = vmatpush1.msra.mxu0 %v104
  %3664 = vmatprep.subr.mxu0 %v103
  %3665 = vmatpush1.msra.mxu0 %v102
  %3666 = vmatprep.subr.mxu0 0.0
  %3667 = vmatpush2.msra.mxu0 0.0
  %3668 = vmatprep.subr.mxu0 0.0
  %3669 = vmatpush2.msra.mxu0 0.0
  %3670 = vmatprep.subr.mxu0 0.0
  %3671 = vmatpush2.msra.mxu0 0.0
  %3672 = vmatprep.subr.mxu0 0.0
  %3673 = vmatpush2.msra.mxu0 0.0
  %3674 = vmatprep.subr.mxu0 0.0
  %3675 = vmatpush2.msra.mxu0 0.0
  %3676 = vmatprep.subr.mxu0 0.0
  %3677 = vmatpush2.msra.mxu0 0.0
  %3678 = vmatprep.subr.mxu0 0.0
  %3679 = vmatpush2.msra.mxu0 0.0
  %3680 = vmatprep.subr.mxu0 0.0
  %3681 = vmatpush2.msra.mxu0 0.0
  %3682 = vmatprep.subr.mxu0 0.0
  %3683 = vmatpush2.msra.mxu0 0.0
  %3684 = vmatprep.subr.mxu0 0.0
  %3685 = vmatpush2.msra.mxu0 0.0
  %3686 = vmatprep.subr.mxu0 0.0
  %3687 = vmatpush2.msra.mxu0 0.0
  %3688 = vmatprep.subr.mxu0 0.0
  %3689 = vmatpush2.msra.mxu0 0.0
  %3690 = vmatprep.subr.mxu0 0.0
  %3691 = vmatpush2.msra.mxu0 0.0
  %3692 = vmatprep.subr.mxu0 0.0
  %3693 = vmatpush2.msra.mxu0 0.0
  %3694 = vmatprep.subr.mxu0 0.0
  %3695 = vmatpush2.msra.mxu0 0.0
  %3696 = vmatprep.subr.mxu0 0.0
  %3697 = vmatpush2.msra.mxu0 0.0
  %3698 = vmatprep.mubr.f32.mxu0 0.0
  %3699 = vmatmul.mubr.f32.gmra.mxu0 %v3623
  %v3700 = vpop.f32.mrf.mxu0
  %v3701 = vadd.f32 %v1156, %v3700
  %v3702 = vpop.f32.mrf.mxu0
  %v3703 = vadd.f32 %v1160, %v3702
  %3704 = vmatprep.mubr.f32.mxu0 0.0
  %3705 = vmatmul.mubr.f32.gmra.mxu0 %v3626
  %v3706 = vpop.f32.mrf.mxu0
  %v3707 = vadd.f32 %v1156, %v3706
  %v3708 = vpop.f32.mrf.mxu0
  %v3709 = vadd.f32 %v1160, %v3708
  %3710 = vmatprep.mubr.f32.mxu0 0.0
  %3711 = vmatmul.mubr.f32.gmra.mxu0 %v3629
  %v3712 = vpop.f32.mrf.mxu0
  %v3713 = vadd.f32 %v1156, %v3712
  %v3714 = vpop.f32.mrf.mxu0
  %v3715 = vadd.f32 %v1160, %v3714
  %3716 = vmatprep.mubr.f32.mxu0 0.0
  %3717 = vmatmul.mubr.f32.gmra.mxu0 %v3632
  %v3718 = vpop.f32.mrf.mxu0
  %v3719 = vadd.f32 %v1156, %v3718
  %v3720 = vpop.f32.mrf.mxu0
  %v3721 = vadd.f32 %v1160, %v3720
  %3722 = vdwg.mxu0
  %3727 = vrot.lane.b32.xlu0 %v3701, 48
  %v3728 = vpop.permute.xlu0 %3727
  %3729 = vrot.lane.b32.xlu0 %v3707, 48
  %v3730 = vpop.permute.xlu0 %3729
  %3731 = vrot.lane.b32.xlu0 %v3713, 48
  %v3732 = vpop.permute.xlu0 %3731
  %3733 = vrot.lane.b32.xlu0 %v3719, 48
  %v3734 = vpop.permute.xlu0 %3733
  %v3735 = vsel %vm148, %v3701, 0
  %v3737 = vsel %vm148, %v3707, 0
  %v3739 = vsel %vm148, %v3713, 0
  %v3741 = vsel %vm148, %v3719, 0
  %v3743 = vsel %vm148, %v3728, 0
  %v3745 = vsel %vm148, %v3730, 0
  %v3747 = vsel %vm148, %v3732, 0
  %v3749 = vsel %vm148, %v3734, 0
  %3751 = vmatprep.subr.mxu0 0.0
  %3752 = vmatpush1.xpose.msra.mxu0 0.0
  %3753 = vmatprep.subr.mxu0 0.0
  %3754 = vmatpush1.xpose.msra.mxu0 0.0
  %3755 = vmatprep.subr.mxu0 0.0
  %3756 = vmatpush1.xpose.msra.mxu0 0.0
  %3757 = vmatprep.subr.mxu0 0.0
  %3758 = vmatpush1.xpose.msra.mxu0 0.0
  %3759 = vmatprep.subr.mxu0 0.0
  %3760 = vmatpush1.xpose.msra.mxu0 0.0
  %3761 = vmatprep.subr.mxu0 0.0
  %3762 = vmatpush1.xpose.msra.mxu0 0.0
  %3763 = vmatprep.subr.mxu0 0.0
  %3764 = vmatpush1.xpose.msra.mxu0 0.0
  %3765 = vmatprep.subr.mxu0 0.0
  %3766 = vmatpush1.xpose.msra.mxu0 0.0
  %3767 = vmatprep.subr.mxu0 0.0
  %3768 = vmatpush1.xpose.msra.mxu0 0.0
  %3769 = vmatprep.subr.mxu0 0.0
  %3770 = vmatpush1.xpose.msra.mxu0 0.0
  %3771 = vmatprep.subr.mxu0 0.0
  %3772 = vmatpush1.xpose.msra.mxu0 0.0
  %3773 = vmatprep.subr.mxu0 0.0
  %3774 = vmatpush1.xpose.msra.mxu0 0.0
  %3775 = vmatprep.subr.mxu0 0.0
  %3776 = vmatpush1.xpose.msra.mxu0 %v3749
  %3777 = vmatprep.subr.mxu0 0.0
  %3778 = vmatpush1.xpose.msra.mxu0 %v3747
  %3779 = vmatprep.subr.mxu0 0.0
  %3780 = vmatpush1.xpose.msra.mxu0 %v3745
  %3781 = vmatprep.subr.mxu0 0.0
  %3782 = vmatpush1.xpose.msra.mxu0 %v3743
  %3783 = vmatprep.subr.mxu0 0.0
  %3784 = vmatpush2.xpose.msra.mxu0 0.0
  %3785 = vmatprep.subr.mxu0 0.0
  %3786 = vmatpush2.xpose.msra.mxu0 0.0
  %3787 = vmatprep.subr.mxu0 0.0
  %3788 = vmatpush2.xpose.msra.mxu0 0.0
  %3789 = vmatprep.subr.mxu0 0.0
  %3790 = vmatpush2.xpose.msra.mxu0 0.0
  %3791 = vmatprep.subr.mxu0 0.0
  %3792 = vmatpush2.xpose.msra.mxu0 0.0
  %3793 = vmatprep.subr.mxu0 0.0
  %3794 = vmatpush2.xpose.msra.mxu0 0.0
  %3795 = vmatprep.subr.mxu0 0.0
  %3796 = vmatpush2.xpose.msra.mxu0 0.0
  %3797 = vmatprep.subr.mxu0 0.0
  %3798 = vmatpush2.xpose.msra.mxu0 0.0
  %3799 = vmatprep.subr.mxu0 0.0
  %3800 = vmatpush2.xpose.msra.mxu0 0.0
  %3801 = vmatprep.subr.mxu0 0.0
  %3802 = vmatpush2.xpose.msra.mxu0 0.0
  %3803 = vmatprep.subr.mxu0 0.0
  %3804 = vmatpush2.xpose.msra.mxu0 0.0
  %3805 = vmatprep.subr.mxu0 0.0
  %3806 = vmatpush2.xpose.msra.mxu0 0.0
  %3807 = vmatprep.subr.mxu0 0.0
  %3808 = vmatpush2.xpose.msra.mxu0 0.0
  %3809 = vmatprep.subr.mxu0 0.0
  %3810 = vmatpush2.xpose.msra.mxu0 0.0
  %3811 = vmatprep.subr.mxu0 0.0
  %3812 = vmatpush2.xpose.msra.mxu0 0.0
  %3813 = vmatprep.subr.mxu0 0.0
  %3814 = vmatpush2.xpose.msra.mxu0 0.0
  %3815 = vmatprep.mubr.f32.mxu0 0.0
  %3816 = vmatmul.mubr.f32.gmra.mxu0 %v3735
  %v3817 = vpop.f32.mrf.mxu0
  %v3818 = vadd.f32 0.0, %v3817
  %v3819 = vpop.f32.mrf.mxu0
  %3820 = vmatprep.mubr.f32.mxu0 0.0
  %3821 = vmatmul.mubr.f32.gmra.mxu0 %v3737
  %v3822 = vpop.f32.mrf.mxu0
  %v3823 = vadd.f32 0.0, %v3822
  %v3824 = vpop.f32.mrf.mxu0
  %3825 = vmatprep.mubr.f32.mxu0 0.0
  %3826 = vmatmul.mubr.f32.gmra.mxu0 %v3739
  %v3827 = vpop.f32.mrf.mxu0
  %v3828 = vadd.f32 0.0, %v3827
  %v3829 = vpop.f32.mrf.mxu0
  %3830 = vmatprep.mubr.f32.mxu0 0.0
  %3831 = vmatmul.mubr.f32.gmra.mxu0 %v3741
  %v3832 = vpop.f32.mrf.mxu0
  %v3833 = vadd.f32 0.0, %v3832
  %v3834 = vpop.f32.mrf.mxu0
  %3835 = vdwg.mxu0
  %v3836 = vsel %vm410, %v3818, -inf
  %3837 = vmax.xlane.f32.xlu0 %v3836
  %v3838 = vpop.xlane.xlu0 %3837
  %v3839 = vsel %vm410, %v3823, -inf
  %3840 = vmax.xlane.f32.xlu0 %v3839
  %v3841 = vpop.xlane.xlu0 %3840
  %v3842 = vsel %vm410, %v3828, -inf
  %3843 = vmax.xlane.f32.xlu0 %v3842
  %v3844 = vpop.xlane.xlu0 %3843
  %v3845 = vsel %vm410, %v3833, -inf
  %3846 = vmax.xlane.f32.xlu0 %v3845
  %v3847 = vpop.xlane.xlu0 %3846
  %v3848 = vsub.f32 %v3818, %v3838
  %v3849 = vsub.f32 %v3823, %v3841
  %v3850 = vsub.f32 %v3828, %v3844
  %v3851 = vsub.f32 %v3833, %v3847
  %v3852 = vmul.f32 %v3848, 1.442695
  %v3853 = vpow.pop %v3852
  %v3854 = vmul.f32 %v3849, 1.442695
  %v3855 = vpow.pop %v3854
  %v3856 = vmul.f32 %v3850, 1.442695
  %v3857 = vpow.pop %v3856
  %v3858 = vmul.f32 %v3851, 1.442695
  %v3859 = vpow.pop %v3858
  %v3860 = vsel %vm410, %v3853, 0.0
  %3861 = vadd.xlane.f32.xlu0 %v3860
  %v3862 = vpop.xlane.xlu0 %3861
  %v3863 = vsel %vm410, %v3855, 0.0
  %3864 = vadd.xlane.f32.xlu0 %v3863
  %v3865 = vpop.xlane.xlu0 %3864
  %v3866 = vsel %vm410, %v3857, 0.0
  %3867 = vadd.xlane.f32.xlu0 %v3866
  %v3868 = vpop.xlane.xlu0 %3867
  %v3869 = vsel %vm410, %v3859, 0.0
  %3870 = vadd.xlane.f32.xlu0 %v3869
  %v3871 = vpop.xlane.xlu0 %3870
  %v3872 = vrcp.pop %v3862
  %v3873 = vrcp.pop %v3865
  %v3874 = vrcp.pop %v3868
  %v3875 = vrcp.pop %v3871
  %v3876 = vmul.f32 %v3853, %v3872
  %v3877 = vmul.f32 %v3855, %v3873
  %v3878 = vmul.f32 %v3857, %v3874
  %v3879 = vmul.f32 %v3859, %v3875
  %3884 = vrot.lane.b32.xlu0 %v3703, 96
  %v3885 = vpop.permute.xlu0 %3884
  %3886 = vrot.lane.b32.xlu0 %v3709, 96
  %v3887 = vpop.permute.xlu0 %3886
  %3888 = vrot.lane.b32.xlu0 %v3715, 96
  %v3889 = vpop.permute.xlu0 %3888
  %3890 = vrot.lane.b32.xlu0 %v3721, 96
  %v3891 = vpop.permute.xlu0 %3890
  %v3897 = vsel %vm410, %v3876, 0
  %v3900 = vsel %vm410, %v3877, 0
  %v3903 = vsel %vm410, %v3878, 0
  %v3906 = vsel %vm410, %v3879, 0
  %3908 = vmatprep.subr.mxu0 0.0
  %3909 = vmatpush1.msra.mxu0 0.0
  %3910 = vmatprep.subr.mxu0 0.0
  %3911 = vmatpush1.msra.mxu0 0.0
  %3912 = vmatprep.subr.mxu0 0.0
  %3913 = vmatpush1.msra.mxu0 0.0
  %3914 = vmatprep.subr.mxu0 0.0
  %3915 = vmatpush1.msra.mxu0 0.0
  %3916 = vmatprep.subr.mxu0 0.0
  %3917 = vmatpush1.msra.mxu0 0.0
  %3918 = vmatprep.subr.mxu0 0.0
  %3919 = vmatpush1.msra.mxu0 0.0
  %3920 = vmatprep.subr.mxu0 0.0
  %3921 = vmatpush1.msra.mxu0 0.0
  %3922 = vmatprep.subr.mxu0 0.0
  %3923 = vmatpush1.msra.mxu0 0.0
  %3924 = vmatprep.subr.mxu0 0.0
  %3925 = vmatpush1.msra.mxu0 0.0
  %3926 = vmatprep.subr.mxu0 0.0
  %3927 = vmatpush1.msra.mxu0 0.0
  %3928 = vmatprep.subr.mxu0 0.0
  %3929 = vmatpush1.msra.mxu0 0.0
  %3930 = vmatprep.subr.mxu0 0.0
  %3931 = vmatpush1.msra.mxu0 0.0
  %3932 = vmatprep.subr.mxu0 0.0
  %3933 = vmatpush1.msra.mxu0 %v3891
  %3934 = vmatprep.subr.mxu0 0.0
  %3935 = vmatpush1.msra.mxu0 %v3889
  %3936 = vmatprep.subr.mxu0 0.0
  %3937 = vmatpush1.msra.mxu0 %v3887
  %3938 = vmatprep.subr.mxu0 0.0
  %3939 = vmatpush1.msra.mxu0 %v3885
  %3940 = vmatprep.subr.mxu0 0.0
  %3941 = vmatpush2.msra.mxu0 0.0
  %3942 = vmatprep.subr.mxu0 0.0
  %3943 = vmatpush2.msra.mxu0 0.0
  %3944 = vmatprep.subr.mxu0 0.0
  %3945 = vmatpush2.msra.mxu0 0.0
  %3946 = vmatprep.subr.mxu0 0.0
  %3947 = vmatpush2.msra.mxu0 0.0
  %3948 = vmatprep.subr.mxu0 0.0
  %3949 = vmatpush2.msra.mxu0 0.0
  %3950 = vmatprep.subr.mxu0 0.0
  %3951 = vmatpush2.msra.mxu0 0.0
  %3952 = vmatprep.subr.mxu0 0.0
  %3953 = vmatpush2.msra.mxu0 0.0
  %3954 = vmatprep.subr.mxu0 0.0
  %3955 = vmatpush2.msra.mxu0 0.0
  %3956 = vmatprep.subr.mxu0 0.0
  %3957 = vmatpush2.msra.mxu0 0.0
  %3958 = vmatprep.subr.mxu0 0.0
  %3959 = vmatpush2.msra.mxu0 0.0
  %3960 = vmatprep.subr.mxu0 0.0
  %3961 = vmatpush2.msra.mxu0 0.0
  %3962 = vmatprep.subr.mxu0 0.0
  %3963 = vmatpush2.msra.mxu0 0.0
  %3964 = vmatprep.subr.mxu0 0.0
  %3965 = vmatpush2.msra.mxu0 0.0
  %3966 = vmatprep.subr.mxu0 0.0
  %3967 = vmatpush2.msra.mxu0 0.0
  %3968 = vmatprep.subr.mxu0 0.0
  %3969 = vmatpush2.msra.mxu0 0.0
  %3970 = vmatprep.subr.mxu0 0.0
  %3971 = vmatpush2.msra.mxu0 0.0
  %3972 = vmatprep.mubr.f32.mxu0 0.0
  %3973 = vmatmul.mubr.f32.gmra.mxu0 %v3897
  %v3974 = vpop.f32.mrf.mxu0
  %v3975 = vadd.f32 0.0, %v3974
  %v3976 = vpop.f32.mrf.mxu0
  %3977 = vmatprep.mubr.f32.mxu0 0.0
  %3978 = vmatmul.mubr.f32.gmra.mxu0 %v3900
  %v3979 = vpop.f32.mrf.mxu0
  %v3980 = vadd.f32 0.0, %v3979
  %v3981 = vpop.f32.mrf.mxu0
  %3982 = vmatprep.mubr.f32.mxu0 0.0
  %3983 = vmatmul.mubr.f32.gmra.mxu0 %v3903
  %v3984 = vpop.f32.mrf.mxu0
  %v3985 = vadd.f32 0.0, %v3984
  %v3986 = vpop.f32.mrf.mxu0
  %3987 = vmatprep.mubr.f32.mxu0 0.0
  %3988 = vmatmul.mubr.f32.gmra.mxu0 %v3906
  %v3989 = vpop.f32.mrf.mxu0
  %v3990 = vadd.f32 0.0, %v3989
  %v3991 = vpop.f32.mrf.mxu0
  %3992 = vdwg.mxu0
  %3993 = vrot.lane.b32.xlu0 %v3701, 112
  %v3994 = vpop.permute.xlu0 %3993
  %3995 = vrot.lane.b32.xlu0 %v3707, 112
  %v3996 = vpop.permute.xlu0 %3995
  %3997 = vrot.lane.b32.xlu0 %v3713, 112
  %v3998 = vpop.permute.xlu0 %3997
  %3999 = vrot.lane.b32.xlu0 %v3719, 112
  %v4000 = vpop.permute.xlu0 %3999
  %4001 = vrot.lane.b32.xlu0 %v3701, 32
  %v4002 = vpop.permute.xlu0 %4001
  %4003 = vrot.lane.b32.xlu0 %v3707, 32
  %v4004 = vpop.permute.xlu0 %4003
  %4005 = vrot.lane.b32.xlu0 %v3713, 32
  %v4006 = vpop.permute.xlu0 %4005
  %4007 = vrot.lane.b32.xlu0 %v3719, 32
  %v4008 = vpop.permute.xlu0 %4007
  %v4009 = vsel %vm148, %v3994, 0
  %v4011 = vsel %vm148, %v3996, 0
  %v4013 = vsel %vm148, %v3998, 0
  %v4015 = vsel %vm148, %v4000, 0
  %v4017 = vsel %vm148, %v4002, 0
  %v4019 = vsel %vm148, %v4004, 0
  %v4021 = vsel %vm148, %v4006, 0
  %v4023 = vsel %vm148, %v4008, 0
  %4025 = vmatprep.subr.mxu0 0.0
  %4026 = vmatpush1.xpose.msra.mxu0 0.0
  %4027 = vmatprep.subr.mxu0 0.0
  %4028 = vmatpush1.xpose.msra.mxu0 0.0
  %4029 = vmatprep.subr.mxu0 0.0
  %4030 = vmatpush1.xpose.msra.mxu0 0.0
  %4031 = vmatprep.subr.mxu0 0.0
  %4032 = vmatpush1.xpose.msra.mxu0 0.0
  %4033 = vmatprep.subr.mxu0 0.0
  %4034 = vmatpush1.xpose.msra.mxu0 0.0
  %4035 = vmatprep.subr.mxu0 0.0
  %4036 = vmatpush1.xpose.msra.mxu0 0.0
  %4037 = vmatprep.subr.mxu0 0.0
  %4038 = vmatpush1.xpose.msra.mxu0 0.0
  %4039 = vmatprep.subr.mxu0 0.0
  %4040 = vmatpush1.xpose.msra.mxu0 0.0
  %4041 = vmatprep.subr.mxu0 0.0
  %4042 = vmatpush1.xpose.msra.mxu0 0.0
  %4043 = vmatprep.subr.mxu0 0.0
  %4044 = vmatpush1.xpose.msra.mxu0 0.0
  %4045 = vmatprep.subr.mxu0 0.0
  %4046 = vmatpush1.xpose.msra.mxu0 0.0
  %4047 = vmatprep.subr.mxu0 0.0
  %4048 = vmatpush1.xpose.msra.mxu0 0.0
  %4049 = vmatprep.subr.mxu0 0.0
  %4050 = vmatpush1.xpose.msra.mxu0 %v4023
  %4051 = vmatprep.subr.mxu0 0.0
  %4052 = vmatpush1.xpose.msra.mxu0 %v4021
  %4053 = vmatprep.subr.mxu0 0.0
  %4054 = vmatpush1.xpose.msra.mxu0 %v4019
  %4055 = vmatprep.subr.mxu0 0.0
  %4056 = vmatpush1.xpose.msra.mxu0 %v4017
  %4057 = vmatprep.subr.mxu0 0.0
  %4058 = vmatpush2.xpose.msra.mxu0 0.0
  %4059 = vmatprep.subr.mxu0 0.0
  %4060 = vmatpush2.xpose.msra.mxu0 0.0
  %4061 = vmatprep.subr.mxu0 0.0
  %4062 = vmatpush2.xpose.msra.mxu0 0.0
  %4063 = vmatprep.subr.mxu0 0.0
  %4064 = vmatpush2.xpose.msra.mxu0 0.0
  %4065 = vmatprep.subr.mxu0 0.0
  %4066 = vmatpush2.xpose.msra.mxu0 0.0
  %4067 = vmatprep.subr.mxu0 0.0
  %4068 = vmatpush2.xpose.msra.mxu0 0.0
  %4069 = vmatprep.subr.mxu0 0.0
  %4070 = vmatpush2.xpose.msra.mxu0 0.0
  %4071 = vmatprep.subr.mxu0 0.0
  %4072 = vmatpush2.xpose.msra.mxu0 0.0
  %4073 = vmatprep.subr.mxu0 0.0
  %4074 = vmatpush2.xpose.msra.mxu0 0.0
  %4075 = vmatprep.subr.mxu0 0.0
  %4076 = vmatpush2.xpose.msra.mxu0 0.0
  %4077 = vmatprep.subr.mxu0 0.0
  %4078 = vmatpush2.xpose.msra.mxu0 0.0
  %4079 = vmatprep.subr.mxu0 0.0
  %4080 = vmatpush2.xpose.msra.mxu0 0.0
  %4081 = vmatprep.subr.mxu0 0.0
  %4082 = vmatpush2.xpose.msra.mxu0 0.0
  %4083 = vmatprep.subr.mxu0 0.0
  %4084 = vmatpush2.xpose.msra.mxu0 0.0
  %4085 = vmatprep.subr.mxu0 0.0
  %4086 = vmatpush2.xpose.msra.mxu0 0.0
  %4087 = vmatprep.subr.mxu0 0.0
  %4088 = vmatpush2.xpose.msra.mxu0 0.0
  %4089 = vmatprep.mubr.f32.mxu0 0.0
  %4090 = vmatmul.mubr.f32.gmra.mxu0 %v4009
  %v4091 = vpop.f32.mrf.mxu0
  %v4092 = vadd.f32 0.0, %v4091
  %v4093 = vpop.f32.mrf.mxu0
  %4094 = vmatprep.mubr.f32.mxu0 0.0
  %4095 = vmatmul.mubr.f32.gmra.mxu0 %v4011
  %v4096 = vpop.f32.mrf.mxu0
  %v4097 = vadd.f32 0.0, %v4096
  %v4098 = vpop.f32.mrf.mxu0
  %4099 = vmatprep.mubr.f32.mxu0 0.0
  %4100 = vmatmul.mubr.f32.gmra.mxu0 %v4013
  %v4101 = vpop.f32.mrf.mxu0
  %v4102 = vadd.f32 0.0, %v4101
  %v4103 = vpop.f32.mrf.mxu0
  %4104 = vmatprep.mubr.f32.mxu0 0.0
  %4105 = vmatmul.mubr.f32.gmra.mxu0 %v4015
  %v4106 = vpop.f32.mrf.mxu0
  %v4107 = vadd.f32 0.0, %v4106
  %v4108 = vpop.f32.mrf.mxu0
  %4109 = vdwg.mxu0
  %v4110 = vsel %vm410, %v4092, -inf
  %4111 = vmax.xlane.f32.xlu0 %v4110
  %v4112 = vpop.xlane.xlu0 %4111
  %v4113 = vsel %vm410, %v4097, -inf
  %4114 = vmax.xlane.f32.xlu0 %v4113
  %v4115 = vpop.xlane.xlu0 %4114
  %v4116 = vsel %vm410, %v4102, -inf
  %4117 = vmax.xlane.f32.xlu0 %v4116
  %v4118 = vpop.xlane.xlu0 %4117
  %v4119 = vsel %vm410, %v4107, -inf
  %4120 = vmax.xlane.f32.xlu0 %v4119
  %v4121 = vpop.xlane.xlu0 %4120
  %v4122 = vsub.f32 %v4092, %v4112
  %v4123 = vsub.f32 %v4097, %v4115
  %v4124 = vsub.f32 %v4102, %v4118
  %v4125 = vsub.f32 %v4107, %v4121
  %v4126 = vmul.f32 %v4122, 1.442695
  %v4127 = vpow.pop %v4126
  %v4128 = vmul.f32 %v4123, 1.442695
  %v4129 = vpow.pop %v4128
  %v4130 = vmul.f32 %v4124, 1.442695
  %v4131 = vpow.pop %v4130
  %v4132 = vmul.f32 %v4125, 1.442695
  %v4133 = vpow.pop %v4132
  %v4134 = vsel %vm410, %v4127, 0.0
  %4135 = vadd.xlane.f32.xlu0 %v4134
  %v4136 = vpop.xlane.xlu0 %4135
  %v4137 = vsel %vm410, %v4129, 0.0
  %4138 = vadd.xlane.f32.xlu0 %v4137
  %v4139 = vpop.xlane.xlu0 %4138
  %v4140 = vsel %vm410, %v4131, 0.0
  %4141 = vadd.xlane.f32.xlu0 %v4140
  %v4142 = vpop.xlane.xlu0 %4141
  %v4143 = vsel %vm410, %v4133, 0.0
  %4144 = vadd.xlane.f32.xlu0 %v4143
  %v4145 = vpop.xlane.xlu0 %4144
  %v4146 = vrcp.pop %v4136
  %v4147 = vrcp.pop %v4139
  %v4148 = vrcp.pop %v4142
  %v4149 = vrcp.pop %v4145
  %v4150 = vmul.f32 %v4127, %v4146
  %v4151 = vmul.f32 %v4129, %v4147
  %v4152 = vmul.f32 %v4131, %v4148
  %v4153 = vmul.f32 %v4133, %v4149
  %4154 = vrot.lane.b32.xlu0 %v3703, 80
  %v4155 = vpop.permute.xlu0 %4154
  %4156 = vrot.lane.b32.xlu0 %v3709, 80
  %v4157 = vpop.permute.xlu0 %4156
  %4158 = vrot.lane.b32.xlu0 %v3715, 80
  %v4159 = vpop.permute.xlu0 %4158
  %4160 = vrot.lane.b32.xlu0 %v3721, 80
  %v4161 = vpop.permute.xlu0 %4160
  %v4167 = vsel %vm410, %v4150, 0
  %v4170 = vsel %vm410, %v4151, 0
  %v4173 = vsel %vm410, %v4152, 0
  %v4176 = vsel %vm410, %v4153, 0
  %4178 = vmatprep.subr.mxu0 0.0
  %4179 = vmatpush1.msra.mxu0 0.0
  %4180 = vmatprep.subr.mxu0 0.0
  %4181 = vmatpush1.msra.mxu0 0.0
  %4182 = vmatprep.subr.mxu0 0.0
  %4183 = vmatpush1.msra.mxu0 0.0
  %4184 = vmatprep.subr.mxu0 0.0
  %4185 = vmatpush1.msra.mxu0 0.0
  %4186 = vmatprep.subr.mxu0 0.0
  %4187 = vmatpush1.msra.mxu0 0.0
  %4188 = vmatprep.subr.mxu0 0.0
  %4189 = vmatpush1.msra.mxu0 0.0
  %4190 = vmatprep.subr.mxu0 0.0
  %4191 = vmatpush1.msra.mxu0 0.0
  %4192 = vmatprep.subr.mxu0 0.0
  %4193 = vmatpush1.msra.mxu0 0.0
  %4194 = vmatprep.subr.mxu0 0.0
  %4195 = vmatpush1.msra.mxu0 0.0
  %4196 = vmatprep.subr.mxu0 0.0
  %4197 = vmatpush1.msra.mxu0 0.0
  %4198 = vmatprep.subr.mxu0 0.0
  %4199 = vmatpush1.msra.mxu0 0.0
  %4200 = vmatprep.subr.mxu0 0.0
  %4201 = vmatpush1.msra.mxu0 0.0
  %4202 = vmatprep.subr.mxu0 0.0
  %4203 = vmatpush1.msra.mxu0 %v4161
  %4204 = vmatprep.subr.mxu0 0.0
  %4205 = vmatpush1.msra.mxu0 %v4159
  %4206 = vmatprep.subr.mxu0 0.0
  %4207 = vmatpush1.msra.mxu0 %v4157
  %4208 = vmatprep.subr.mxu0 0.0
  %4209 = vmatpush1.msra.mxu0 %v4155
  %4210 = vmatprep.subr.mxu0 0.0
  %4211 = vmatpush2.msra.mxu0 0.0
  %4212 = vmatprep.subr.mxu0 0.0
  %4213 = vmatpush2.msra.mxu0 0.0
  %4214 = vmatprep.subr.mxu0 0.0
  %4215 = vmatpush2.msra.mxu0 0.0
  %4216 = vmatprep.subr.mxu0 0.0
  %4217 = vmatpush2.msra.mxu0 0.0
  %4218 = vmatprep.subr.mxu0 0.0
  %4219 = vmatpush2.msra.mxu0 0.0
  %4220 = vmatprep.subr.mxu0 0.0
  %4221 = vmatpush2.msra.mxu0 0.0
  %4222 = vmatprep.subr.mxu0 0.0
  %4223 = vmatpush2.msra.mxu0 0.0
  %4224 = vmatprep.subr.mxu0 0.0
  %4225 = vmatpush2.msra.mxu0 0.0
  %4226 = vmatprep.subr.mxu0 0.0
  %4227 = vmatpush2.msra.mxu0 0.0
  %4228 = vmatprep.subr.mxu0 0.0
  %4229 = vmatpush2.msra.mxu0 0.0
  %4230 = vmatprep.subr.mxu0 0.0
  %4231 = vmatpush2.msra.mxu0 0.0
  %4232 = vmatprep.subr.mxu0 0.0
  %4233 = vmatpush2.msra.mxu0 0.0
  %4234 = vmatprep.subr.mxu0 0.0
  %4235 = vmatpush2.msra.mxu0 0.0
  %4236 = vmatprep.subr.mxu0 0.0
  %4237 = vmatpush2.msra.mxu0 0.0
  %4238 = vmatprep.subr.mxu0 0.0
  %4239 = vmatpush2.msra.mxu0 0.0
  %4240 = vmatprep.subr.mxu0 0.0
  %4241 = vmatpush2.msra.mxu0 0.0
  %4242 = vmatprep.mubr.f32.mxu0 0.0
  %4243 = vmatmul.mubr.f32.gmra.mxu0 %v4167
  %v4244 = vpop.f32.mrf.mxu0
  %v4245 = vadd.f32 0.0, %v4244
  %v4246 = vpop.f32.mrf.mxu0
  %4247 = vmatprep.mubr.f32.mxu0 0.0
  %4248 = vmatmul.mubr.f32.gmra.mxu0 %v4170
  %v4249 = vpop.f32.mrf.mxu0
  %v4250 = vadd.f32 0.0, %v4249
  %v4251 = vpop.f32.mrf.mxu0
  %4252 = vmatprep.mubr.f32.mxu0 0.0
  %4253 = vmatmul.mubr.f32.gmra.mxu0 %v4173
  %v4254 = vpop.f32.mrf.mxu0
  %v4255 = vadd.f32 0.0, %v4254
  %v4256 = vpop.f32.mrf.mxu0
  %4257 = vmatprep.mubr.f32.mxu0 0.0
  %4258 = vmatmul.mubr.f32.gmra.mxu0 %v4176
  %v4259 = vpop.f32.mrf.mxu0
  %v4260 = vadd.f32 0.0, %v4259
  %v4261 = vpop.f32.mrf.mxu0
  %4262 = vdwg.mxu0
  %v4264 = vsel %vm148, %v4245, 0
  %v4267 = vsel %vm148, %v4250, 0
  %v4270 = vsel %vm148, %v4255, 0
  %v4273 = vsel %vm148, %v4260, 0
  %4275 = vmatprep.subr.mxu0 0.0
  %4276 = vmatpush1.msra.mxu0 0.0
  %4277 = vmatprep.subr.mxu0 0.0
  %4278 = vmatpush1.msra.mxu0 0.0
  %4279 = vmatprep.subr.mxu0 0.0
  %4280 = vmatpush1.msra.mxu0 0.0
  %4281 = vmatprep.subr.mxu0 0.0
  %4282 = vmatpush1.msra.mxu0 0.0
  %4283 = vmatprep.subr.mxu0 0.0
  %4284 = vmatpush1.msra.mxu0 0.0
  %4285 = vmatprep.subr.mxu0 0.0
  %4286 = vmatpush1.msra.mxu0 0.0
  %4287 = vmatprep.subr.mxu0 0.0
  %4288 = vmatpush1.msra.mxu0 0.0
  %4289 = vmatprep.subr.mxu0 0.0
  %4290 = vmatpush1.msra.mxu0 0.0
  %4291 = vmatprep.subr.mxu0 0.0
  %4292 = vmatpush1.msra.mxu0 0.0
  %4293 = vmatprep.subr.mxu0 0.0
  %4294 = vmatpush1.msra.mxu0 0.0
  %4295 = vmatprep.subr.mxu0 0.0
  %4296 = vmatpush1.msra.mxu0 0.0
  %4297 = vmatprep.subr.mxu0 0.0
  %4298 = vmatpush1.msra.mxu0 0.0
  %4299 = vmatprep.subr.mxu0 0.0
  %4300 = vmatpush1.msra.mxu0 0.0
  %4301 = vmatprep.subr.mxu0 0.0
  %4302 = vmatpush1.msra.mxu0 0.0
  %4303 = vmatprep.subr.mxu0 0.0
  %4304 = vmatpush1.msra.mxu0 %v119
  %4305 = vmatprep.subr.mxu0 0.0
  %4306 = vmatpush1.msra.mxu0 %v118
  %4307 = vmatprep.subr.mxu0 0.0
  %4308 = vmatpush2.msra.mxu0 0.0
  %4309 = vmatprep.subr.mxu0 0.0
  %4310 = vmatpush2.msra.mxu0 0.0
  %4311 = vmatprep.subr.mxu0 0.0
  %4312 = vmatpush2.msra.mxu0 0.0
  %4313 = vmatprep.subr.mxu0 0.0
  %4314 = vmatpush2.msra.mxu0 0.0
  %4315 = vmatprep.subr.mxu0 0.0
  %4316 = vmatpush2.msra.mxu0 0.0
  %4317 = vmatprep.subr.mxu0 0.0
  %4318 = vmatpush2.msra.mxu0 0.0
  %4319 = vmatprep.subr.mxu0 0.0
  %4320 = vmatpush2.msra.mxu0 0.0
  %4321 = vmatprep.subr.mxu0 0.0
  %4322 = vmatpush2.msra.mxu0 0.0
  %4323 = vmatprep.subr.mxu0 0.0
  %4324 = vmatpush2.msra.mxu0 0.0
  %4325 = vmatprep.subr.mxu0 0.0
  %4326 = vmatpush2.msra.mxu0 0.0
  %4327 = vmatprep.subr.mxu0 0.0
  %4328 = vmatpush2.msra.mxu0 0.0
  %4329 = vmatprep.subr.mxu0 0.0
  %4330 = vmatpush2.msra.mxu0 0.0
  %4331 = vmatprep.subr.mxu0 0.0
  %4332 = vmatpush2.msra.mxu0 0.0
  %4333 = vmatprep.subr.mxu0 0.0
  %4334 = vmatpush2.msra.mxu0 0.0
  %4335 = vmatprep.subr.mxu0 0.0
  %4336 = vmatpush2.msra.mxu0 0.0
  %4337 = vmatprep.subr.mxu0 0.0
  %4338 = vmatpush2.msra.mxu0 0.0
  %4339 = vmatprep.mubr.f32.mxu0 0.0
  %4340 = vmatmul.mubr.f32.gmra.mxu0 %v4264
  %v4341 = vpop.f32.mrf.mxu0
  %v4342 = vadd.f32 0.0, %v4341
  %v4343 = vpop.f32.mrf.mxu0
  %4344 = vmatprep.mubr.f32.mxu0 0.0
  %4345 = vmatmul.mubr.f32.gmra.mxu0 %v4267
  %v4346 = vpop.f32.mrf.mxu0
  %v4347 = vadd.f32 0.0, %v4346
  %v4348 = vpop.f32.mrf.mxu0
  %4349 = vmatprep.mubr.f32.mxu0 0.0
  %4350 = vmatmul.mubr.f32.gmra.mxu0 %v4270
  %v4351 = vpop.f32.mrf.mxu0
  %v4352 = vadd.f32 0.0, %v4351
  %v4353 = vpop.f32.mrf.mxu0
  %4354 = vmatprep.mubr.f32.mxu0 0.0
  %4355 = vmatmul.mubr.f32.gmra.mxu0 %v4273
  %v4356 = vpop.f32.mrf.mxu0
  %v4357 = vadd.f32 0.0, %v4356
  %v4358 = vpop.f32.mrf.mxu0
  %4359 = vdwg.mxu0
  %v4361 = vsel %vm148, %v3975, 0
  %v4364 = vsel %vm148, %v3980, 0
  %v4367 = vsel %vm148, %v3985, 0
  %v4370 = vsel %vm148, %v3990, 0
  %4372 = vmatprep.subr.mxu0 0.0
  %4373 = vmatpush1.msra.mxu0 0.0
  %4374 = vmatprep.subr.mxu0 0.0
  %4375 = vmatpush1.msra.mxu0 0.0
  %4376 = vmatprep.subr.mxu0 0.0
  %4377 = vmatpush1.msra.mxu0 0.0
  %4378 = vmatprep.subr.mxu0 0.0
  %4379 = vmatpush1.msra.mxu0 0.0
  %4380 = vmatprep.subr.mxu0 0.0
  %4381 = vmatpush1.msra.mxu0 0.0
  %4382 = vmatprep.subr.mxu0 0.0
  %4383 = vmatpush1.msra.mxu0 0.0
  %4384 = vmatprep.subr.mxu0 0.0
  %4385 = vmatpush1.msra.mxu0 0.0
  %4386 = vmatprep.subr.mxu0 0.0
  %4387 = vmatpush1.msra.mxu0 0.0
  %4388 = vmatprep.subr.mxu0 0.0
  %4389 = vmatpush1.msra.mxu0 0.0
  %4390 = vmatprep.subr.mxu0 0.0
  %4391 = vmatpush1.msra.mxu0 0.0
  %4392 = vmatprep.subr.mxu0 0.0
  %4393 = vmatpush1.msra.mxu0 0.0
  %4394 = vmatprep.subr.mxu0 0.0
  %4395 = vmatpush1.msra.mxu0 0.0
  %4396 = vmatprep.subr.mxu0 0.0
  %4397 = vmatpush1.msra.mxu0 0.0
  %4398 = vmatprep.subr.mxu0 0.0
  %4399 = vmatpush1.msra.mxu0 0.0
  %4400 = vmatprep.subr.mxu0 0.0
  %4401 = vmatpush1.msra.mxu0 %v117
  %4402 = vmatprep.subr.mxu0 0.0
  %4403 = vmatpush1.msra.mxu0 %v116
  %4404 = vmatprep.subr.mxu0 0.0
  %4405 = vmatpush2.msra.mxu0 0.0
  %4406 = vmatprep.subr.mxu0 0.0
  %4407 = vmatpush2.msra.mxu0 0.0
  %4408 = vmatprep.subr.mxu0 0.0
  %4409 = vmatpush2.msra.mxu0 0.0
  %4410 = vmatprep.subr.mxu0 0.0
  %4411 = vmatpush2.msra.mxu0 0.0
  %4412 = vmatprep.subr.mxu0 0.0
  %4413 = vmatpush2.msra.mxu0 0.0
  %4414 = vmatprep.subr.mxu0 0.0
  %4415 = vmatpush2.msra.mxu0 0.0
  %4416 = vmatprep.subr.mxu0 0.0
  %4417 = vmatpush2.msra.mxu0 0.0
  %4418 = vmatprep.subr.mxu0 0.0
  %4419 = vmatpush2.msra.mxu0 0.0
  %4420 = vmatprep.subr.mxu0 0.0
  %4421 = vmatpush2.msra.mxu0 0.0
  %4422 = vmatprep.subr.mxu0 0.0
  %4423 = vmatpush2.msra.mxu0 0.0
  %4424 = vmatprep.subr.mxu0 0.0
  %4425 = vmatpush2.msra.mxu0 0.0
  %4426 = vmatprep.subr.mxu0 0.0
  %4427 = vmatpush2.msra.mxu0 0.0
  %4428 = vmatprep.subr.mxu0 0.0
  %4429 = vmatpush2.msra.mxu0 0.0
  %4430 = vmatprep.subr.mxu0 0.0
  %4431 = vmatpush2.msra.mxu0 0.0
  %4432 = vmatprep.subr.mxu0 0.0
  %4433 = vmatpush2.msra.mxu0 0.0
  %4434 = vmatprep.subr.mxu0 0.0
  %4435 = vmatpush2.msra.mxu0 0.0
  %4436 = vmatprep.mubr.f32.mxu0 0.0
  %4437 = vmatmul.mubr.f32.gmra.mxu0 %v4361
  %v4438 = vpop.f32.mrf.mxu0
  %v4439 = vadd.f32 %v4342, %v4438
  %v4440 = vpop.f32.mrf.mxu0
  %4441 = vmatprep.mubr.f32.mxu0 0.0
  %4442 = vmatmul.mubr.f32.gmra.mxu0 %v4364
  %v4443 = vpop.f32.mrf.mxu0
  %v4444 = vadd.f32 %v4347, %v4443
  %v4445 = vpop.f32.mrf.mxu0
  %4446 = vmatprep.mubr.f32.mxu0 0.0
  %4447 = vmatmul.mubr.f32.gmra.mxu0 %v4367
  %v4448 = vpop.f32.mrf.mxu0
  %v4449 = vadd.f32 %v4352, %v4448
  %v4450 = vpop.f32.mrf.mxu0
  %4451 = vmatprep.mubr.f32.mxu0 0.0
  %4452 = vmatmul.mubr.f32.gmra.mxu0 %v4370
  %v4453 = vpop.f32.mrf.mxu0
  %v4454 = vadd.f32 %v4357, %v4453
  %v4455 = vpop.f32.mrf.mxu0
  %4456 = vdwg.mxu0
  %4457 = vrot.lane.b32.xlu0 %v3701, 96
  %v4458 = vpop.permute.xlu0 %4457
  %4459 = vrot.lane.b32.xlu0 %v3707, 96
  %v4460 = vpop.permute.xlu0 %4459
  %4461 = vrot.lane.b32.xlu0 %v3713, 96
  %v4462 = vpop.permute.xlu0 %4461
  %4463 = vrot.lane.b32.xlu0 %v3719, 96
  %v4464 = vpop.permute.xlu0 %4463
  %4465 = vrot.lane.b32.xlu0 %v3701, 16
  %v4466 = vpop.permute.xlu0 %4465
  %4467 = vrot.lane.b32.xlu0 %v3707, 16
  %v4468 = vpop.permute.xlu0 %4467
  %4469 = vrot.lane.b32.xlu0 %v3713, 16
  %v4470 = vpop.permute.xlu0 %4469
  %4471 = vrot.lane.b32.xlu0 %v3719, 16
  %v4472 = vpop.permute.xlu0 %4471
  %v4473 = vsel %vm148, %v4458, 0
  %v4475 = vsel %vm148, %v4460, 0
  %v4477 = vsel %vm148, %v4462, 0
  %v4479 = vsel %vm148, %v4464, 0
  %v4481 = vsel %vm148, %v4466, 0
  %v4483 = vsel %vm148, %v4468, 0
  %v4485 = vsel %vm148, %v4470, 0
  %v4487 = vsel %vm148, %v4472, 0
  %4489 = vmatprep.subr.mxu0 0.0
  %4490 = vmatpush1.xpose.msra.mxu0 0.0
  %4491 = vmatprep.subr.mxu0 0.0
  %4492 = vmatpush1.xpose.msra.mxu0 0.0
  %4493 = vmatprep.subr.mxu0 0.0
  %4494 = vmatpush1.xpose.msra.mxu0 0.0
  %4495 = vmatprep.subr.mxu0 0.0
  %4496 = vmatpush1.xpose.msra.mxu0 0.0
  %4497 = vmatprep.subr.mxu0 0.0
  %4498 = vmatpush1.xpose.msra.mxu0 0.0
  %4499 = vmatprep.subr.mxu0 0.0
  %4500 = vmatpush1.xpose.msra.mxu0 0.0
  %4501 = vmatprep.subr.mxu0 0.0
  %4502 = vmatpush1.xpose.msra.mxu0 0.0
  %4503 = vmatprep.subr.mxu0 0.0
  %4504 = vmatpush1.xpose.msra.mxu0 0.0
  %4505 = vmatprep.subr.mxu0 0.0
  %4506 = vmatpush1.xpose.msra.mxu0 0.0
  %4507 = vmatprep.subr.mxu0 0.0
  %4508 = vmatpush1.xpose.msra.mxu0 0.0
  %4509 = vmatprep.subr.mxu0 0.0
  %4510 = vmatpush1.xpose.msra.mxu0 0.0
  %4511 = vmatprep.subr.mxu0 0.0
  %4512 = vmatpush1.xpose.msra.mxu0 0.0
  %4513 = vmatprep.subr.mxu0 0.0
  %4514 = vmatpush1.xpose.msra.mxu0 %v4487
  %4515 = vmatprep.subr.mxu0 0.0
  %4516 = vmatpush1.xpose.msra.mxu0 %v4485
  %4517 = vmatprep.subr.mxu0 0.0
  %4518 = vmatpush1.xpose.msra.mxu0 %v4483
  %4519 = vmatprep.subr.mxu0 0.0
  %4520 = vmatpush1.xpose.msra.mxu0 %v4481
  %4521 = vmatprep.subr.mxu0 0.0
  %4522 = vmatpush2.xpose.msra.mxu0 0.0
  %4523 = vmatprep.subr.mxu0 0.0
  %4524 = vmatpush2.xpose.msra.mxu0 0.0
  %4525 = vmatprep.subr.mxu0 0.0
  %4526 = vmatpush2.xpose.msra.mxu0 0.0
  %4527 = vmatprep.subr.mxu0 0.0
  %4528 = vmatpush2.xpose.msra.mxu0 0.0
  %4529 = vmatprep.subr.mxu0 0.0
  %4530 = vmatpush2.xpose.msra.mxu0 0.0
  %4531 = vmatprep.subr.mxu0 0.0
  %4532 = vmatpush2.xpose.msra.mxu0 0.0
  %4533 = vmatprep.subr.mxu0 0.0
  %4534 = vmatpush2.xpose.msra.mxu0 0.0
  %4535 = vmatprep.subr.mxu0 0.0
  %4536 = vmatpush2.xpose.msra.mxu0 0.0
  %4537 = vmatprep.subr.mxu0 0.0
  %4538 = vmatpush2.xpose.msra.mxu0 0.0
  %4539 = vmatprep.subr.mxu0 0.0
  %4540 = vmatpush2.xpose.msra.mxu0 0.0
  %4541 = vmatprep.subr.mxu0 0.0
  %4542 = vmatpush2.xpose.msra.mxu0 0.0
  %4543 = vmatprep.subr.mxu0 0.0
  %4544 = vmatpush2.xpose.msra.mxu0 0.0
  %4545 = vmatprep.subr.mxu0 0.0
  %4546 = vmatpush2.xpose.msra.mxu0 0.0
  %4547 = vmatprep.subr.mxu0 0.0
  %4548 = vmatpush2.xpose.msra.mxu0 0.0
  %4549 = vmatprep.subr.mxu0 0.0
  %4550 = vmatpush2.xpose.msra.mxu0 0.0
  %4551 = vmatprep.subr.mxu0 0.0
  %4552 = vmatpush2.xpose.msra.mxu0 0.0
  %4553 = vmatprep.mubr.f32.mxu0 0.0
  %4554 = vmatmul.mubr.f32.gmra.mxu0 %v4473
  %v4555 = vpop.f32.mrf.mxu0
  %v4556 = vadd.f32 0.0, %v4555
  %v4557 = vpop.f32.mrf.mxu0
  %4558 = vmatprep.mubr.f32.mxu0 0.0
  %4559 = vmatmul.mubr.f32.gmra.mxu0 %v4475
  %v4560 = vpop.f32.mrf.mxu0
  %v4561 = vadd.f32 0.0, %v4560
  %v4562 = vpop.f32.mrf.mxu0
  %4563 = vmatprep.mubr.f32.mxu0 0.0
  %4564 = vmatmul.mubr.f32.gmra.mxu0 %v4477
  %v4565 = vpop.f32.mrf.mxu0
  %v4566 = vadd.f32 0.0, %v4565
  %v4567 = vpop.f32.mrf.mxu0
  %4568 = vmatprep.mubr.f32.mxu0 0.0
  %4569 = vmatmul.mubr.f32.gmra.mxu0 %v4479
  %v4570 = vpop.f32.mrf.mxu0
  %v4571 = vadd.f32 0.0, %v4570
  %v4572 = vpop.f32.mrf.mxu0
  %4573 = vdwg.mxu0
  %v4574 = vsel %vm410, %v4556, -inf
  %4575 = vmax.xlane.f32.xlu0 %v4574
  %v4576 = vpop.xlane.xlu0 %4575
  %v4577 = vsel %vm410, %v4561, -inf
  %4578 = vmax.xlane.f32.xlu0 %v4577
  %v4579 = vpop.xlane.xlu0 %4578
  %v4580 = vsel %vm410, %v4566, -inf
  %4581 = vmax.xlane.f32.xlu0 %v4580
  %v4582 = vpop.xlane.xlu0 %4581
  %v4583 = vsel %vm410, %v4571, -inf
  %4584 = vmax.xlane.f32.xlu0 %v4583
  %v4585 = vpop.xlane.xlu0 %4584
  %v4586 = vsub.f32 %v4556, %v4576
  %v4587 = vsub.f32 %v4561, %v4579
  %v4588 = vsub.f32 %v4566, %v4582
  %v4589 = vsub.f32 %v4571, %v4585
  %v4590 = vmul.f32 %v4586, 1.442695
  %v4591 = vpow.pop %v4590
  %v4592 = vmul.f32 %v4587, 1.442695
  %v4593 = vpow.pop %v4592
  %v4594 = vmul.f32 %v4588, 1.442695
  %v4595 = vpow.pop %v4594
  %v4596 = vmul.f32 %v4589, 1.442695
  %v4597 = vpow.pop %v4596
  %v4598 = vsel %vm410, %v4591, 0.0
  %4599 = vadd.xlane.f32.xlu0 %v4598
  %v4600 = vpop.xlane.xlu0 %4599
  %v4601 = vsel %vm410, %v4593, 0.0
  %4602 = vadd.xlane.f32.xlu0 %v4601
  %v4603 = vpop.xlane.xlu0 %4602
  %v4604 = vsel %vm410, %v4595, 0.0
  %4605 = vadd.xlane.f32.xlu0 %v4604
  %v4606 = vpop.xlane.xlu0 %4605
  %v4607 = vsel %vm410, %v4597, 0.0
  %4608 = vadd.xlane.f32.xlu0 %v4607
  %v4609 = vpop.xlane.xlu0 %4608
  %v4610 = vrcp.pop %v4600
  %v4611 = vrcp.pop %v4603
  %v4612 = vrcp.pop %v4606
  %v4613 = vrcp.pop %v4609
  %v4614 = vmul.f32 %v4591, %v4610
  %v4615 = vmul.f32 %v4593, %v4611
  %v4616 = vmul.f32 %v4595, %v4612
  %v4617 = vmul.f32 %v4597, %v4613
  %4618 = vrot.lane.b32.xlu0 %v3703, 64
  %v4619 = vpop.permute.xlu0 %4618
  %4620 = vrot.lane.b32.xlu0 %v3709, 64
  %v4621 = vpop.permute.xlu0 %4620
  %4622 = vrot.lane.b32.xlu0 %v3715, 64
  %v4623 = vpop.permute.xlu0 %4622
  %4624 = vrot.lane.b32.xlu0 %v3721, 64
  %v4625 = vpop.permute.xlu0 %4624
  %v4631 = vsel %vm410, %v4614, 0
  %v4634 = vsel %vm410, %v4615, 0
  %v4637 = vsel %vm410, %v4616, 0
  %v4640 = vsel %vm410, %v4617, 0
  %4642 = vmatprep.subr.mxu0 0.0
  %4643 = vmatpush1.msra.mxu0 0.0
  %4644 = vmatprep.subr.mxu0 0.0
  %4645 = vmatpush1.msra.mxu0 0.0
  %4646 = vmatprep.subr.mxu0 0.0
  %4647 = vmatpush1.msra.mxu0 0.0
  %4648 = vmatprep.subr.mxu0 0.0
  %4649 = vmatpush1.msra.mxu0 0.0
  %4650 = vmatprep.subr.mxu0 0.0
  %4651 = vmatpush1.msra.mxu0 0.0
  %4652 = vmatprep.subr.mxu0 0.0
  %4653 = vmatpush1.msra.mxu0 0.0
  %4654 = vmatprep.subr.mxu0 0.0
  %4655 = vmatpush1.msra.mxu0 0.0
  %4656 = vmatprep.subr.mxu0 0.0
  %4657 = vmatpush1.msra.mxu0 0.0
  %4658 = vmatprep.subr.mxu0 0.0
  %4659 = vmatpush1.msra.mxu0 0.0
  %4660 = vmatprep.subr.mxu0 0.0
  %4661 = vmatpush1.msra.mxu0 0.0
  %4662 = vmatprep.subr.mxu0 0.0
  %4663 = vmatpush1.msra.mxu0 0.0
  %4664 = vmatprep.subr.mxu0 0.0
  %4665 = vmatpush1.msra.mxu0 0.0
  %4666 = vmatprep.subr.mxu0 0.0
  %4667 = vmatpush1.msra.mxu0 %v4625
  %4668 = vmatprep.subr.mxu0 0.0
  %4669 = vmatpush1.msra.mxu0 %v4623
  %4670 = vmatprep.subr.mxu0 0.0
  %4671 = vmatpush1.msra.mxu0 %v4621
  %4672 = vmatprep.subr.mxu0 0.0
  %4673 = vmatpush1.msra.mxu0 %v4619
  %4674 = vmatprep.subr.mxu0 0.0
  %4675 = vmatpush2.msra.mxu0 0.0
  %4676 = vmatprep.subr.mxu0 0.0
  %4677 = vmatpush2.msra.mxu0 0.0
  %4678 = vmatprep.subr.mxu0 0.0
  %4679 = vmatpush2.msra.mxu0 0.0
  %4680 = vmatprep.subr.mxu0 0.0
  %4681 = vmatpush2.msra.mxu0 0.0
  %4682 = vmatprep.subr.mxu0 0.0
  %4683 = vmatpush2.msra.mxu0 0.0
  %4684 = vmatprep.subr.mxu0 0.0
  %4685 = vmatpush2.msra.mxu0 0.0
  %4686 = vmatprep.subr.mxu0 0.0
  %4687 = vmatpush2.msra.mxu0 0.0
  %4688 = vmatprep.subr.mxu0 0.0
  %4689 = vmatpush2.msra.mxu0 0.0
  %4690 = vmatprep.subr.mxu0 0.0
  %4691 = vmatpush2.msra.mxu0 0.0
  %4692 = vmatprep.subr.mxu0 0.0
  %4693 = vmatpush2.msra.mxu0 0.0
  %4694 = vmatprep.subr.mxu0 0.0
  %4695 = vmatpush2.msra.mxu0 0.0
  %4696 = vmatprep.subr.mxu0 0.0
  %4697 = vmatpush2.msra.mxu0 0.0
  %4698 = vmatprep.subr.mxu0 0.0
  %4699 = vmatpush2.msra.mxu0 0.0
  %4700 = vmatprep.subr.mxu0 0.0
  %4701 = vmatpush2.msra.mxu0 0.0
  %4702 = vmatprep.subr.mxu0 0.0
  %4703 = vmatpush2.msra.mxu0 0.0
  %4704 = vmatprep.subr.mxu0 0.0
  %4705 = vmatpush2.msra.mxu0 0.0
  %4706 = vmatprep.mubr.f32.mxu0 0.0
  %4707 = vmatmul.mubr.f32.gmra.mxu0 %v4631
  %v4708 = vpop.f32.mrf.mxu0
  %v4709 = vadd.f32 0.0, %v4708
  %v4710 = vpop.f32.mrf.mxu0
  %4711 = vmatprep.mubr.f32.mxu0 0.0
  %4712 = vmatmul.mubr.f32.gmra.mxu0 %v4634
  %v4713 = vpop.f32.mrf.mxu0
  %v4714 = vadd.f32 0.0, %v4713
  %v4715 = vpop.f32.mrf.mxu0
  %4716 = vmatprep.mubr.f32.mxu0 0.0
  %4717 = vmatmul.mubr.f32.gmra.mxu0 %v4637
  %v4718 = vpop.f32.mrf.mxu0
  %v4719 = vadd.f32 0.0, %v4718
  %v4720 = vpop.f32.mrf.mxu0
  %4721 = vmatprep.mubr.f32.mxu0 0.0
  %4722 = vmatmul.mubr.f32.gmra.mxu0 %v4640
  %v4723 = vpop.f32.mrf.mxu0
  %v4724 = vadd.f32 0.0, %v4723
  %v4725 = vpop.f32.mrf.mxu0
  %4726 = vdwg.mxu0
  %v4728 = vsel %vm148, %v4709, 0
  %v4731 = vsel %vm148, %v4714, 0
  %v4734 = vsel %vm148, %v4719, 0
  %v4737 = vsel %vm148, %v4724, 0
  %4739 = vmatprep.subr.mxu0 0.0
  %4740 = vmatpush1.msra.mxu0 0.0
  %4741 = vmatprep.subr.mxu0 0.0
  %4742 = vmatpush1.msra.mxu0 0.0
  %4743 = vmatprep.subr.mxu0 0.0
  %4744 = vmatpush1.msra.mxu0 0.0
  %4745 = vmatprep.subr.mxu0 0.0
  %4746 = vmatpush1.msra.mxu0 0.0
  %4747 = vmatprep.subr.mxu0 0.0
  %4748 = vmatpush1.msra.mxu0 0.0
  %4749 = vmatprep.subr.mxu0 0.0
  %4750 = vmatpush1.msra.mxu0 0.0
  %4751 = vmatprep.subr.mxu0 0.0
  %4752 = vmatpush1.msra.mxu0 0.0
  %4753 = vmatprep.subr.mxu0 0.0
  %4754 = vmatpush1.msra.mxu0 0.0
  %4755 = vmatprep.subr.mxu0 0.0
  %4756 = vmatpush1.msra.mxu0 0.0
  %4757 = vmatprep.subr.mxu0 0.0
  %4758 = vmatpush1.msra.mxu0 0.0
  %4759 = vmatprep.subr.mxu0 0.0
  %4760 = vmatpush1.msra.mxu0 0.0
  %4761 = vmatprep.subr.mxu0 0.0
  %4762 = vmatpush1.msra.mxu0 0.0
  %4763 = vmatprep.subr.mxu0 0.0
  %4764 = vmatpush1.msra.mxu0 0.0
  %4765 = vmatprep.subr.mxu0 0.0
  %4766 = vmatpush1.msra.mxu0 0.0
  %4767 = vmatprep.subr.mxu0 0.0
  %4768 = vmatpush1.msra.mxu0 %v121
  %4769 = vmatprep.subr.mxu0 0.0
  %4770 = vmatpush1.msra.mxu0 %v120
  %4771 = vmatprep.subr.mxu0 0.0
  %4772 = vmatpush2.msra.mxu0 0.0
  %4773 = vmatprep.subr.mxu0 0.0
  %4774 = vmatpush2.msra.mxu0 0.0
  %4775 = vmatprep.subr.mxu0 0.0
  %4776 = vmatpush2.msra.mxu0 0.0
  %4777 = vmatprep.subr.mxu0 0.0
  %4778 = vmatpush2.msra.mxu0 0.0
  %4779 = vmatprep.subr.mxu0 0.0
  %4780 = vmatpush2.msra.mxu0 0.0
  %4781 = vmatprep.subr.mxu0 0.0
  %4782 = vmatpush2.msra.mxu0 0.0
  %4783 = vmatprep.subr.mxu0 0.0
  %4784 = vmatpush2.msra.mxu0 0.0
  %4785 = vmatprep.subr.mxu0 0.0
  %4786 = vmatpush2.msra.mxu0 0.0
  %4787 = vmatprep.subr.mxu0 0.0
  %4788 = vmatpush2.msra.mxu0 0.0
  %4789 = vmatprep.subr.mxu0 0.0
  %4790 = vmatpush2.msra.mxu0 0.0
  %4791 = vmatprep.subr.mxu0 0.0
  %4792 = vmatpush2.msra.mxu0 0.0
  %4793 = vmatprep.subr.mxu0 0.0
  %4794 = vmatpush2.msra.mxu0 0.0
  %4795 = vmatprep.subr.mxu0 0.0
  %4796 = vmatpush2.msra.mxu0 0.0
  %4797 = vmatprep.subr.mxu0 0.0
  %4798 = vmatpush2.msra.mxu0 0.0
  %4799 = vmatprep.subr.mxu0 0.0
  %4800 = vmatpush2.msra.mxu0 0.0
  %4801 = vmatprep.subr.mxu0 0.0
  %4802 = vmatpush2.msra.mxu0 0.0
  %4803 = vmatprep.mubr.f32.mxu0 0.0
  %4804 = vmatmul.mubr.f32.gmra.mxu0 %v4728
  %v4805 = vpop.f32.mrf.mxu0
  %v4806 = vadd.f32 0.0, %v4805
  %v4807 = vpop.f32.mrf.mxu0
  %4808 = vmatprep.mubr.f32.mxu0 0.0
  %4809 = vmatmul.mubr.f32.gmra.mxu0 %v4731
  %v4810 = vpop.f32.mrf.mxu0
  %v4811 = vadd.f32 0.0, %v4810
  %v4812 = vpop.f32.mrf.mxu0
  %4813 = vmatprep.mubr.f32.mxu0 0.0
  %4814 = vmatmul.mubr.f32.gmra.mxu0 %v4734
  %v4815 = vpop.f32.mrf.mxu0
  %v4816 = vadd.f32 0.0, %v4815
  %v4817 = vpop.f32.mrf.mxu0
  %4818 = vmatprep.mubr.f32.mxu0 0.0
  %4819 = vmatmul.mubr.f32.gmra.mxu0 %v4737
  %v4820 = vpop.f32.mrf.mxu0
  %v4821 = vadd.f32 0.0, %v4820
  %v4822 = vpop.f32.mrf.mxu0
  %4823 = vdwg.mxu0
  %v4824 = vadd.f32 %v4439, %v4806
  %v4825 = vadd.f32 %v4444, %v4811
  %v4826 = vadd.f32 %v4449, %v4816
  %v4827 = vadd.f32 %v4454, %v4821
  %4828 = vrot.lane.b32.xlu0 %v3701, 80
  %v4829 = vpop.permute.xlu0 %4828
  %4830 = vrot.lane.b32.xlu0 %v3707, 80
  %v4831 = vpop.permute.xlu0 %4830
  %4832 = vrot.lane.b32.xlu0 %v3713, 80
  %v4833 = vpop.permute.xlu0 %4832
  %4834 = vrot.lane.b32.xlu0 %v3719, 80
  %v4835 = vpop.permute.xlu0 %4834
  %v4836 = vsel %vm148, %v4829, 0
  %v4838 = vsel %vm148, %v4831, 0
  %v4840 = vsel %vm148, %v4833, 0
  %v4842 = vsel %vm148, %v4835, 0
  %v4844 = vsel %vm148, %v3703, 0
  %v4846 = vsel %vm148, %v3709, 0
  %v4848 = vsel %vm148, %v3715, 0
  %v4850 = vsel %vm148, %v3721, 0
  %4852 = vmatprep.subr.mxu0 0.0
  %4853 = vmatpush1.xpose.msra.mxu0 0.0
  %4854 = vmatprep.subr.mxu0 0.0
  %4855 = vmatpush1.xpose.msra.mxu0 0.0
  %4856 = vmatprep.subr.mxu0 0.0
  %4857 = vmatpush1.xpose.msra.mxu0 0.0
  %4858 = vmatprep.subr.mxu0 0.0
  %4859 = vmatpush1.xpose.msra.mxu0 0.0
  %4860 = vmatprep.subr.mxu0 0.0
  %4861 = vmatpush1.xpose.msra.mxu0 0.0
  %4862 = vmatprep.subr.mxu0 0.0
  %4863 = vmatpush1.xpose.msra.mxu0 0.0
  %4864 = vmatprep.subr.mxu0 0.0
  %4865 = vmatpush1.xpose.msra.mxu0 0.0
  %4866 = vmatprep.subr.mxu0 0.0
  %4867 = vmatpush1.xpose.msra.mxu0 0.0
  %4868 = vmatprep.subr.mxu0 0.0
  %4869 = vmatpush1.xpose.msra.mxu0 0.0
  %4870 = vmatprep.subr.mxu0 0.0
  %4871 = vmatpush1.xpose.msra.mxu0 0.0
  %4872 = vmatprep.subr.mxu0 0.0
  %4873 = vmatpush1.xpose.msra.mxu0 0.0
  %4874 = vmatprep.subr.mxu0 0.0
  %4875 = vmatpush1.xpose.msra.mxu0 0.0
  %4876 = vmatprep.subr.mxu0 0.0
  %4877 = vmatpush1.xpose.msra.mxu0 %v4850
  %4878 = vmatprep.subr.mxu0 0.0
  %4879 = vmatpush1.xpose.msra.mxu0 %v4848
  %4880 = vmatprep.subr.mxu0 0.0
  %4881 = vmatpush1.xpose.msra.mxu0 %v4846
  %4882 = vmatprep.subr.mxu0 0.0
  %4883 = vmatpush1.xpose.msra.mxu0 %v4844
  %4884 = vmatprep.subr.mxu0 0.0
  %4885 = vmatpush2.xpose.msra.mxu0 0.0
  %4886 = vmatprep.subr.mxu0 0.0
  %4887 = vmatpush2.xpose.msra.mxu0 0.0
  %4888 = vmatprep.subr.mxu0 0.0
  %4889 = vmatpush2.xpose.msra.mxu0 0.0
  %4890 = vmatprep.subr.mxu0 0.0
  %4891 = vmatpush2.xpose.msra.mxu0 0.0
  %4892 = vmatprep.subr.mxu0 0.0
  %4893 = vmatpush2.xpose.msra.mxu0 0.0
  %4894 = vmatprep.subr.mxu0 0.0
  %4895 = vmatpush2.xpose.msra.mxu0 0.0
  %4896 = vmatprep.subr.mxu0 0.0
  %4897 = vmatpush2.xpose.msra.mxu0 0.0
  %4898 = vmatprep.subr.mxu0 0.0
  %4899 = vmatpush2.xpose.msra.mxu0 0.0
  %4900 = vmatprep.subr.mxu0 0.0
  %4901 = vmatpush2.xpose.msra.mxu0 0.0
  %4902 = vmatprep.subr.mxu0 0.0
  %4903 = vmatpush2.xpose.msra.mxu0 0.0
  %4904 = vmatprep.subr.mxu0 0.0
  %4905 = vmatpush2.xpose.msra.mxu0 0.0
  %4906 = vmatprep.subr.mxu0 0.0
  %4907 = vmatpush2.xpose.msra.mxu0 0.0
  %4908 = vmatprep.subr.mxu0 0.0
  %4909 = vmatpush2.xpose.msra.mxu0 0.0
  %4910 = vmatprep.subr.mxu0 0.0
  %4911 = vmatpush2.xpose.msra.mxu0 0.0
  %4912 = vmatprep.subr.mxu0 0.0
  %4913 = vmatpush2.xpose.msra.mxu0 0.0
  %4914 = vmatprep.subr.mxu0 0.0
  %4915 = vmatpush2.xpose.msra.mxu0 0.0
  %4916 = vmatprep.mubr.f32.mxu0 0.0
  %4917 = vmatmul.mubr.f32.gmra.mxu0 %v4836
  %v4918 = vpop.f32.mrf.mxu0
  %v4919 = vadd.f32 0.0, %v4918
  %v4920 = vpop.f32.mrf.mxu0
  %4921 = vmatprep.mubr.f32.mxu0 0.0
  %4922 = vmatmul.mubr.f32.gmra.mxu0 %v4838
  %v4923 = vpop.f32.mrf.mxu0
  %v4924 = vadd.f32 0.0, %v4923
  %v4925 = vpop.f32.mrf.mxu0
  %4926 = vmatprep.mubr.f32.mxu0 0.0
  %4927 = vmatmul.mubr.f32.gmra.mxu0 %v4840
  %v4928 = vpop.f32.mrf.mxu0
  %v4929 = vadd.f32 0.0, %v4928
  %v4930 = vpop.f32.mrf.mxu0
  %4931 = vmatprep.mubr.f32.mxu0 0.0
  %4932 = vmatmul.mubr.f32.gmra.mxu0 %v4842
  %v4933 = vpop.f32.mrf.mxu0
  %v4934 = vadd.f32 0.0, %v4933
  %v4935 = vpop.f32.mrf.mxu0
  %4936 = vdwg.mxu0
  %v4937 = vsel %vm410, %v4919, -inf
  %4938 = vmax.xlane.f32.xlu0 %v4937
  %v4939 = vpop.xlane.xlu0 %4938
  %v4940 = vsel %vm410, %v4924, -inf
  %4941 = vmax.xlane.f32.xlu0 %v4940
  %v4942 = vpop.xlane.xlu0 %4941
  %v4943 = vsel %vm410, %v4929, -inf
  %4944 = vmax.xlane.f32.xlu0 %v4943
  %v4945 = vpop.xlane.xlu0 %4944
  %v4946 = vsel %vm410, %v4934, -inf
  %4947 = vmax.xlane.f32.xlu0 %v4946
  %v4948 = vpop.xlane.xlu0 %4947
  %v4949 = vsub.f32 %v4919, %v4939
  %v4950 = vsub.f32 %v4924, %v4942
  %v4951 = vsub.f32 %v4929, %v4945
  %v4952 = vsub.f32 %v4934, %v4948
  %v4953 = vmul.f32 %v4949, 1.442695
  %v4954 = vpow.pop %v4953
  %v4955 = vmul.f32 %v4950, 1.442695
  %v4956 = vpow.pop %v4955
  %v4957 = vmul.f32 %v4951, 1.442695
  %v4958 = vpow.pop %v4957
  %v4959 = vmul.f32 %v4952, 1.442695
  %v4960 = vpow.pop %v4959
  %v4961 = vsel %vm410, %v4954, 0.0
  %4962 = vadd.xlane.f32.xlu0 %v4961
  %v4963 = vpop.xlane.xlu0 %4962
  %v4964 = vsel %vm410, %v4956, 0.0
  %4965 = vadd.xlane.f32.xlu0 %v4964
  %v4966 = vpop.xlane.xlu0 %4965
  %v4967 = vsel %vm410, %v4958, 0.0
  %4968 = vadd.xlane.f32.xlu0 %v4967
  %v4969 = vpop.xlane.xlu0 %4968
  %v4970 = vsel %vm410, %v4960, 0.0
  %4971 = vadd.xlane.f32.xlu0 %v4970
  %v4972 = vpop.xlane.xlu0 %4971
  %v4973 = vrcp.pop %v4963
  %v4974 = vrcp.pop %v4966
  %v4975 = vrcp.pop %v4969
  %v4976 = vrcp.pop %v4972
  %v4977 = vmul.f32 %v4954, %v4973
  %v4978 = vmul.f32 %v4956, %v4974
  %v4979 = vmul.f32 %v4958, %v4975
  %v4980 = vmul.f32 %v4960, %v4976
  %4981 = vrot.lane.b32.xlu0 %v3703, 48
  %v4982 = vpop.permute.xlu0 %4981
  %4983 = vrot.lane.b32.xlu0 %v3709, 48
  %v4984 = vpop.permute.xlu0 %4983
  %4985 = vrot.lane.b32.xlu0 %v3715, 48
  %v4986 = vpop.permute.xlu0 %4985
  %4987 = vrot.lane.b32.xlu0 %v3721, 48
  %v4988 = vpop.permute.xlu0 %4987
  %v4994 = vsel %vm410, %v4977, 0
  %v4997 = vsel %vm410, %v4978, 0
  %v5000 = vsel %vm410, %v4979, 0
  %v5003 = vsel %vm410, %v4980, 0
  %5005 = vmatprep.subr.mxu0 0.0
  %5006 = vmatpush1.msra.mxu0 0.0
  %5007 = vmatprep.subr.mxu0 0.0
  %5008 = vmatpush1.msra.mxu0 0.0
  %5009 = vmatprep.subr.mxu0 0.0
  %5010 = vmatpush1.msra.mxu0 0.0
  %5011 = vmatprep.subr.mxu0 0.0
  %5012 = vmatpush1.msra.mxu0 0.0
  %5013 = vmatprep.subr.mxu0 0.0
  %5014 = vmatpush1.msra.mxu0 0.0
  %5015 = vmatprep.subr.mxu0 0.0
  %5016 = vmatpush1.msra.mxu0 0.0
  %5017 = vmatprep.subr.mxu0 0.0
  %5018 = vmatpush1.msra.mxu0 0.0
  %5019 = vmatprep.subr.mxu0 0.0
  %5020 = vmatpush1.msra.mxu0 0.0
  %5021 = vmatprep.subr.mxu0 0.0
  %5022 = vmatpush1.msra.mxu0 0.0
  %5023 = vmatprep.subr.mxu0 0.0
  %5024 = vmatpush1.msra.mxu0 0.0
  %5025 = vmatprep.subr.mxu0 0.0
  %5026 = vmatpush1.msra.mxu0 0.0
  %5027 = vmatprep.subr.mxu0 0.0
  %5028 = vmatpush1.msra.mxu0 0.0
  %5029 = vmatprep.subr.mxu0 0.0
  %5030 = vmatpush1.msra.mxu0 %v4988
  %5031 = vmatprep.subr.mxu0 0.0
  %5032 = vmatpush1.msra.mxu0 %v4986
  %5033 = vmatprep.subr.mxu0 0.0
  %5034 = vmatpush1.msra.mxu0 %v4984
  %5035 = vmatprep.subr.mxu0 0.0
  %5036 = vmatpush1.msra.mxu0 %v4982
  %5037 = vmatprep.subr.mxu0 0.0
  %5038 = vmatpush2.msra.mxu0 0.0
  %5039 = vmatprep.subr.mxu0 0.0
  %5040 = vmatpush2.msra.mxu0 0.0
  %5041 = vmatprep.subr.mxu0 0.0
  %5042 = vmatpush2.msra.mxu0 0.0
  %5043 = vmatprep.subr.mxu0 0.0
  %5044 = vmatpush2.msra.mxu0 0.0
  %5045 = vmatprep.subr.mxu0 0.0
  %5046 = vmatpush2.msra.mxu0 0.0
  %5047 = vmatprep.subr.mxu0 0.0
  %5048 = vmatpush2.msra.mxu0 0.0
  %5049 = vmatprep.subr.mxu0 0.0
  %5050 = vmatpush2.msra.mxu0 0.0
  %5051 = vmatprep.subr.mxu0 0.0
  %5052 = vmatpush2.msra.mxu0 0.0
  %5053 = vmatprep.subr.mxu0 0.0
  %5054 = vmatpush2.msra.mxu0 0.0
  %5055 = vmatprep.subr.mxu0 0.0
  %5056 = vmatpush2.msra.mxu0 0.0
  %5057 = vmatprep.subr.mxu0 0.0
  %5058 = vmatpush2.msra.mxu0 0.0
  %5059 = vmatprep.subr.mxu0 0.0
  %5060 = vmatpush2.msra.mxu0 0.0
  %5061 = vmatprep.subr.mxu0 0.0
  %5062 = vmatpush2.msra.mxu0 0.0
  %5063 = vmatprep.subr.mxu0 0.0
  %5064 = vmatpush2.msra.mxu0 0.0
  %5065 = vmatprep.subr.mxu0 0.0
  %5066 = vmatpush2.msra.mxu0 0.0
  %5067 = vmatprep.subr.mxu0 0.0
  %5068 = vmatpush2.msra.mxu0 0.0
  %5069 = vmatprep.mubr.f32.mxu0 0.0
  %5070 = vmatmul.mubr.f32.gmra.mxu0 %v4994
  %v5071 = vpop.f32.mrf.mxu0
  %v5072 = vadd.f32 0.0, %v5071
  %v5073 = vpop.f32.mrf.mxu0
  %5074 = vmatprep.mubr.f32.mxu0 0.0
  %5075 = vmatmul.mubr.f32.gmra.mxu0 %v4997
  %v5076 = vpop.f32.mrf.mxu0
  %v5077 = vadd.f32 0.0, %v5076
  %v5078 = vpop.f32.mrf.mxu0
  %5079 = vmatprep.mubr.f32.mxu0 0.0
  %5080 = vmatmul.mubr.f32.gmra.mxu0 %v5000
  %v5081 = vpop.f32.mrf.mxu0
  %v5082 = vadd.f32 0.0, %v5081
  %v5083 = vpop.f32.mrf.mxu0
  %5084 = vmatprep.mubr.f32.mxu0 0.0
  %5085 = vmatmul.mubr.f32.gmra.mxu0 %v5003
  %v5086 = vpop.f32.mrf.mxu0
  %v5087 = vadd.f32 0.0, %v5086
  %v5088 = vpop.f32.mrf.mxu0
  %5089 = vdwg.mxu0
  %v5091 = vsel %vm148, %v5072, 0
  %v5094 = vsel %vm148, %v5077, 0
  %v5097 = vsel %vm148, %v5082, 0
  %v5100 = vsel %vm148, %v5087, 0
  %5102 = vmatprep.subr.mxu0 0.0
  %5103 = vmatpush1.msra.mxu0 0.0
  %5104 = vmatprep.subr.mxu0 0.0
  %5105 = vmatpush1.msra.mxu0 0.0
  %5106 = vmatprep.subr.mxu0 0.0
  %5107 = vmatpush1.msra.mxu0 0.0
  %5108 = vmatprep.subr.mxu0 0.0
  %5109 = vmatpush1.msra.mxu0 0.0
  %5110 = vmatprep.subr.mxu0 0.0
  %5111 = vmatpush1.msra.mxu0 0.0
  %5112 = vmatprep.subr.mxu0 0.0
  %5113 = vmatpush1.msra.mxu0 0.0
  %5114 = vmatprep.subr.mxu0 0.0
  %5115 = vmatpush1.msra.mxu0 0.0
  %5116 = vmatprep.subr.mxu0 0.0
  %5117 = vmatpush1.msra.mxu0 0.0
  %5118 = vmatprep.subr.mxu0 0.0
  %5119 = vmatpush1.msra.mxu0 0.0
  %5120 = vmatprep.subr.mxu0 0.0
  %5121 = vmatpush1.msra.mxu0 0.0
  %5122 = vmatprep.subr.mxu0 0.0
  %5123 = vmatpush1.msra.mxu0 0.0
  %5124 = vmatprep.subr.mxu0 0.0
  %5125 = vmatpush1.msra.mxu0 0.0
  %5126 = vmatprep.subr.mxu0 0.0
  %5127 = vmatpush1.msra.mxu0 0.0
  %5128 = vmatprep.subr.mxu0 0.0
  %5129 = vmatpush1.msra.mxu0 0.0
  %5130 = vmatprep.subr.mxu0 0.0
  %5131 = vmatpush1.msra.mxu0 %v123
  %5132 = vmatprep.subr.mxu0 0.0
  %5133 = vmatpush1.msra.mxu0 %v122
  %5134 = vmatprep.subr.mxu0 0.0
  %5135 = vmatpush2.msra.mxu0 0.0
  %5136 = vmatprep.subr.mxu0 0.0
  %5137 = vmatpush2.msra.mxu0 0.0
  %5138 = vmatprep.subr.mxu0 0.0
  %5139 = vmatpush2.msra.mxu0 0.0
  %5140 = vmatprep.subr.mxu0 0.0
  %5141 = vmatpush2.msra.mxu0 0.0
  %5142 = vmatprep.subr.mxu0 0.0
  %5143 = vmatpush2.msra.mxu0 0.0
  %5144 = vmatprep.subr.mxu0 0.0
  %5145 = vmatpush2.msra.mxu0 0.0
  %5146 = vmatprep.subr.mxu0 0.0
  %5147 = vmatpush2.msra.mxu0 0.0
  %5148 = vmatprep.subr.mxu0 0.0
  %5149 = vmatpush2.msra.mxu0 0.0
  %5150 = vmatprep.subr.mxu0 0.0
  %5151 = vmatpush2.msra.mxu0 0.0
  %5152 = vmatprep.subr.mxu0 0.0
  %5153 = vmatpush2.msra.mxu0 0.0
  %5154 = vmatprep.subr.mxu0 0.0
  %5155 = vmatpush2.msra.mxu0 0.0
  %5156 = vmatprep.subr.mxu0 0.0
  %5157 = vmatpush2.msra.mxu0 0.0
  %5158 = vmatprep.subr.mxu0 0.0
  %5159 = vmatpush2.msra.mxu0 0.0
  %5160 = vmatprep.subr.mxu0 0.0
  %5161 = vmatpush2.msra.mxu0 0.0
  %5162 = vmatprep.subr.mxu0 0.0
  %5163 = vmatpush2.msra.mxu0 0.0
  %5164 = vmatprep.subr.mxu0 0.0
  %5165 = vmatpush2.msra.mxu0 0.0
  %5166 = vmatprep.mubr.f32.mxu0 0.0
  %5167 = vmatmul.mubr.f32.gmra.mxu0 %v5091
  %v5168 = vpop.f32.mrf.mxu0
  %v5169 = vadd.f32 0.0, %v5168
  %v5170 = vpop.f32.mrf.mxu0
  %5171 = vmatprep.mubr.f32.mxu0 0.0
  %5172 = vmatmul.mubr.f32.gmra.mxu0 %v5094
  %v5173 = vpop.f32.mrf.mxu0
  %v5174 = vadd.f32 0.0, %v5173
  %v5175 = vpop.f32.mrf.mxu0
  %5176 = vmatprep.mubr.f32.mxu0 0.0
  %5177 = vmatmul.mubr.f32.gmra.mxu0 %v5097
  %v5178 = vpop.f32.mrf.mxu0
  %v5179 = vadd.f32 0.0, %v5178
  %v5180 = vpop.f32.mrf.mxu0
  %5181 = vmatprep.mubr.f32.mxu0 0.0
  %5182 = vmatmul.mubr.f32.gmra.mxu0 %v5100
  %v5183 = vpop.f32.mrf.mxu0
  %v5184 = vadd.f32 0.0, %v5183
  %v5185 = vpop.f32.mrf.mxu0
  %5186 = vdwg.mxu0
  %v5187 = vadd.f32 %v4824, %v5169
  %v5188 = vadd.f32 %v4825, %v5174
  %v5189 = vadd.f32 %v4826, %v5179
  %v5190 = vadd.f32 %v4827, %v5184
  %5191 = vrot.lane.b32.xlu0 %v3701, 64
  %v5192 = vpop.permute.xlu0 %5191
  %5193 = vrot.lane.b32.xlu0 %v3707, 64
  %v5194 = vpop.permute.xlu0 %5193
  %5195 = vrot.lane.b32.xlu0 %v3713, 64
  %v5196 = vpop.permute.xlu0 %5195
  %5197 = vrot.lane.b32.xlu0 %v3719, 64
  %v5198 = vpop.permute.xlu0 %5197
  %5199 = vrot.lane.b32.xlu0 %v3703, 112
  %v5200 = vpop.permute.xlu0 %5199
  %5201 = vrot.lane.b32.xlu0 %v3709, 112
  %v5202 = vpop.permute.xlu0 %5201
  %5203 = vrot.lane.b32.xlu0 %v3715, 112
  %v5204 = vpop.permute.xlu0 %5203
  %5205 = vrot.lane.b32.xlu0 %v3721, 112
  %v5206 = vpop.permute.xlu0 %5205
  %v5207 = vsel %vm148, %v5192, 0
  %v5209 = vsel %vm148, %v5194, 0
  %v5211 = vsel %vm148, %v5196, 0
  %v5213 = vsel %vm148, %v5198, 0
  %v5215 = vsel %vm148, %v5200, 0
  %v5217 = vsel %vm148, %v5202, 0
  %v5219 = vsel %vm148, %v5204, 0
  %v5221 = vsel %vm148, %v5206, 0
  %5223 = vmatprep.subr.mxu0 0.0
  %5224 = vmatpush1.xpose.msra.mxu0 0.0
  %5225 = vmatprep.subr.mxu0 0.0
  %5226 = vmatpush1.xpose.msra.mxu0 0.0
  %5227 = vmatprep.subr.mxu0 0.0
  %5228 = vmatpush1.xpose.msra.mxu0 0.0
  %5229 = vmatprep.subr.mxu0 0.0
  %5230 = vmatpush1.xpose.msra.mxu0 0.0
  %5231 = vmatprep.subr.mxu0 0.0
  %5232 = vmatpush1.xpose.msra.mxu0 0.0
  %5233 = vmatprep.subr.mxu0 0.0
  %5234 = vmatpush1.xpose.msra.mxu0 0.0
  %5235 = vmatprep.subr.mxu0 0.0
  %5236 = vmatpush1.xpose.msra.mxu0 0.0
  %5237 = vmatprep.subr.mxu0 0.0
  %5238 = vmatpush1.xpose.msra.mxu0 0.0
  %5239 = vmatprep.subr.mxu0 0.0
  %5240 = vmatpush1.xpose.msra.mxu0 0.0
  %5241 = vmatprep.subr.mxu0 0.0
  %5242 = vmatpush1.xpose.msra.mxu0 0.0
  %5243 = vmatprep.subr.mxu0 0.0
  %5244 = vmatpush1.xpose.msra.mxu0 0.0
  %5245 = vmatprep.subr.mxu0 0.0
  %5246 = vmatpush1.xpose.msra.mxu0 0.0
  %5247 = vmatprep.subr.mxu0 0.0
  %5248 = vmatpush1.xpose.msra.mxu0 %v5221
  %5249 = vmatprep.subr.mxu0 0.0
  %5250 = vmatpush1.xpose.msra.mxu0 %v5219
  %5251 = vmatprep.subr.mxu0 0.0
  %5252 = vmatpush1.xpose.msra.mxu0 %v5217
  %5253 = vmatprep.subr.mxu0 0.0
  %5254 = vmatpush1.xpose.msra.mxu0 %v5215
  %5255 = vmatprep.subr.mxu0 0.0
  %5256 = vmatpush2.xpose.msra.mxu0 0.0
  %5257 = vmatprep.subr.mxu0 0.0
  %5258 = vmatpush2.xpose.msra.mxu0 0.0
  %5259 = vmatprep.subr.mxu0 0.0
  %5260 = vmatpush2.xpose.msra.mxu0 0.0
  %5261 = vmatprep.subr.mxu0 0.0
  %5262 = vmatpush2.xpose.msra.mxu0 0.0
  %5263 = vmatprep.subr.mxu0 0.0
  %5264 = vmatpush2.xpose.msra.mxu0 0.0
  %5265 = vmatprep.subr.mxu0 0.0
  %5266 = vmatpush2.xpose.msra.mxu0 0.0
  %5267 = vmatprep.subr.mxu0 0.0
  %5268 = vmatpush2.xpose.msra.mxu0 0.0
  %5269 = vmatprep.subr.mxu0 0.0
  %5270 = vmatpush2.xpose.msra.mxu0 0.0
  %5271 = vmatprep.subr.mxu0 0.0
  %5272 = vmatpush2.xpose.msra.mxu0 0.0
  %5273 = vmatprep.subr.mxu0 0.0
  %5274 = vmatpush2.xpose.msra.mxu0 0.0
  %5275 = vmatprep.subr.mxu0 0.0
  %5276 = vmatpush2.xpose.msra.mxu0 0.0
  %5277 = vmatprep.subr.mxu0 0.0
  %5278 = vmatpush2.xpose.msra.mxu0 0.0
  %5279 = vmatprep.subr.mxu0 0.0
  %5280 = vmatpush2.xpose.msra.mxu0 0.0
  %5281 = vmatprep.subr.mxu0 0.0
  %5282 = vmatpush2.xpose.msra.mxu0 0.0
  %5283 = vmatprep.subr.mxu0 0.0
  %5284 = vmatpush2.xpose.msra.mxu0 0.0
  %5285 = vmatprep.subr.mxu0 0.0
  %5286 = vmatpush2.xpose.msra.mxu0 0.0
  %5287 = vmatprep.mubr.f32.mxu0 0.0
  %5288 = vmatmul.mubr.f32.gmra.mxu0 %v5207
  %v5289 = vpop.f32.mrf.mxu0
  %v5290 = vadd.f32 0.0, %v5289
  %v5291 = vpop.f32.mrf.mxu0
  %5292 = vmatprep.mubr.f32.mxu0 0.0
  %5293 = vmatmul.mubr.f32.gmra.mxu0 %v5209
  %v5294 = vpop.f32.mrf.mxu0
  %v5295 = vadd.f32 0.0, %v5294
  %v5296 = vpop.f32.mrf.mxu0
  %5297 = vmatprep.mubr.f32.mxu0 0.0
  %5298 = vmatmul.mubr.f32.gmra.mxu0 %v5211
  %v5299 = vpop.f32.mrf.mxu0
  %v5300 = vadd.f32 0.0, %v5299
  %v5301 = vpop.f32.mrf.mxu0
  %5302 = vmatprep.mubr.f32.mxu0 0.0
  %5303 = vmatmul.mubr.f32.gmra.mxu0 %v5213
  %v5304 = vpop.f32.mrf.mxu0
  %v5305 = vadd.f32 0.0, %v5304
  %v5306 = vpop.f32.mrf.mxu0
  %5307 = vdwg.mxu0
  %v5308 = vsel %vm410, %v5290, -inf
  %5309 = vmax.xlane.f32.xlu0 %v5308
  %v5310 = vpop.xlane.xlu0 %5309
  %v5311 = vsel %vm410, %v5295, -inf
  %5312 = vmax.xlane.f32.xlu0 %v5311
  %v5313 = vpop.xlane.xlu0 %5312
  %v5314 = vsel %vm410, %v5300, -inf
  %5315 = vmax.xlane.f32.xlu0 %v5314
  %v5316 = vpop.xlane.xlu0 %5315
  %v5317 = vsel %vm410, %v5305, -inf
  %5318 = vmax.xlane.f32.xlu0 %v5317
  %v5319 = vpop.xlane.xlu0 %5318
  %v5320 = vsub.f32 %v5290, %v5310
  %v5321 = vsub.f32 %v5295, %v5313
  %v5322 = vsub.f32 %v5300, %v5316
  %v5323 = vsub.f32 %v5305, %v5319
  %v5324 = vmul.f32 %v5320, 1.442695
  %v5325 = vpow.pop %v5324
  %v5326 = vmul.f32 %v5321, 1.442695
  %v5327 = vpow.pop %v5326
  %v5328 = vmul.f32 %v5322, 1.442695
  %v5329 = vpow.pop %v5328
  %v5330 = vmul.f32 %v5323, 1.442695
  %v5331 = vpow.pop %v5330
  %v5332 = vsel %vm410, %v5325, 0.0
  %5333 = vadd.xlane.f32.xlu0 %v5332
  %v5334 = vpop.xlane.xlu0 %5333
  %v5335 = vsel %vm410, %v5327, 0.0
  %5336 = vadd.xlane.f32.xlu0 %v5335
  %v5337 = vpop.xlane.xlu0 %5336
  %v5338 = vsel %vm410, %v5329, 0.0
  %5339 = vadd.xlane.f32.xlu0 %v5338
  %v5340 = vpop.xlane.xlu0 %5339
  %v5341 = vsel %vm410, %v5331, 0.0
  %5342 = vadd.xlane.f32.xlu0 %v5341
  %v5343 = vpop.xlane.xlu0 %5342
  %v5344 = vrcp.pop %v5334
  %v5345 = vrcp.pop %v5337
  %v5346 = vrcp.pop %v5340
  %v5347 = vrcp.pop %v5343
  %v5348 = vmul.f32 %v5325, %v5344
  %v5349 = vmul.f32 %v5327, %v5345
  %v5350 = vmul.f32 %v5329, %v5346
  %v5351 = vmul.f32 %v5331, %v5347
  %5352 = vrot.lane.b32.xlu0 %v3703, 32
  %v5353 = vpop.permute.xlu0 %5352
  %5354 = vrot.lane.b32.xlu0 %v3709, 32
  %v5355 = vpop.permute.xlu0 %5354
  %5356 = vrot.lane.b32.xlu0 %v3715, 32
  %v5357 = vpop.permute.xlu0 %5356
  %5358 = vrot.lane.b32.xlu0 %v3721, 32
  %v5359 = vpop.permute.xlu0 %5358
  %v5365 = vsel %vm410, %v5348, 0
  %v5368 = vsel %vm410, %v5349, 0
  %v5371 = vsel %vm410, %v5350, 0
  %v5374 = vsel %vm410, %v5351, 0
  %5376 = vmatprep.subr.mxu0 0.0
  %5377 = vmatpush1.msra.mxu0 0.0
  %5378 = vmatprep.subr.mxu0 0.0
  %5379 = vmatpush1.msra.mxu0 0.0
  %5380 = vmatprep.subr.mxu0 0.0
  %5381 = vmatpush1.msra.mxu0 0.0
  %5382 = vmatprep.subr.mxu0 0.0
  %5383 = vmatpush1.msra.mxu0 0.0
  %5384 = vmatprep.subr.mxu0 0.0
  %5385 = vmatpush1.msra.mxu0 0.0
  %5386 = vmatprep.subr.mxu0 0.0
  %5387 = vmatpush1.msra.mxu0 0.0
  %5388 = vmatprep.subr.mxu0 0.0
  %5389 = vmatpush1.msra.mxu0 0.0
  %5390 = vmatprep.subr.mxu0 0.0
  %5391 = vmatpush1.msra.mxu0 0.0
  %5392 = vmatprep.subr.mxu0 0.0
  %5393 = vmatpush1.msra.mxu0 0.0
  %5394 = vmatprep.subr.mxu0 0.0
  %5395 = vmatpush1.msra.mxu0 0.0
  %5396 = vmatprep.subr.mxu0 0.0
  %5397 = vmatpush1.msra.mxu0 0.0
  %5398 = vmatprep.subr.mxu0 0.0
  %5399 = vmatpush1.msra.mxu0 0.0
  %5400 = vmatprep.subr.mxu0 0.0
  %5401 = vmatpush1.msra.mxu0 %v5359
  %5402 = vmatprep.subr.mxu0 0.0
  %5403 = vmatpush1.msra.mxu0 %v5357
  %5404 = vmatprep.subr.mxu0 0.0
  %5405 = vmatpush1.msra.mxu0 %v5355
  %5406 = vmatprep.subr.mxu0 0.0
  %5407 = vmatpush1.msra.mxu0 %v5353
  %5408 = vmatprep.subr.mxu0 0.0
  %5409 = vmatpush2.msra.mxu0 0.0
  %5410 = vmatprep.subr.mxu0 0.0
  %5411 = vmatpush2.msra.mxu0 0.0
  %5412 = vmatprep.subr.mxu0 0.0
  %5413 = vmatpush2.msra.mxu0 0.0
  %5414 = vmatprep.subr.mxu0 0.0
  %5415 = vmatpush2.msra.mxu0 0.0
  %5416 = vmatprep.subr.mxu0 0.0
  %5417 = vmatpush2.msra.mxu0 0.0
  %5418 = vmatprep.subr.mxu0 0.0
  %5419 = vmatpush2.msra.mxu0 0.0
  %5420 = vmatprep.subr.mxu0 0.0
  %5421 = vmatpush2.msra.mxu0 0.0
  %5422 = vmatprep.subr.mxu0 0.0
  %5423 = vmatpush2.msra.mxu0 0.0
  %5424 = vmatprep.subr.mxu0 0.0
  %5425 = vmatpush2.msra.mxu0 0.0
  %5426 = vmatprep.subr.mxu0 0.0
  %5427 = vmatpush2.msra.mxu0 0.0
  %5428 = vmatprep.subr.mxu0 0.0
  %5429 = vmatpush2.msra.mxu0 0.0
  %5430 = vmatprep.subr.mxu0 0.0
  %5431 = vmatpush2.msra.mxu0 0.0
  %5432 = vmatprep.subr.mxu0 0.0
  %5433 = vmatpush2.msra.mxu0 0.0
  %5434 = vmatprep.subr.mxu0 0.0
  %5435 = vmatpush2.msra.mxu0 0.0
  %5436 = vmatprep.subr.mxu0 0.0
  %5437 = vmatpush2.msra.mxu0 0.0
  %5438 = vmatprep.subr.mxu0 0.0
  %5439 = vmatpush2.msra.mxu0 0.0
  %5440 = vmatprep.mubr.f32.mxu0 0.0
  %5441 = vmatmul.mubr.f32.gmra.mxu0 %v5365
  %v5442 = vpop.f32.mrf.mxu0
  %v5443 = vadd.f32 0.0, %v5442
  %v5444 = vpop.f32.mrf.mxu0
  %5445 = vmatprep.mubr.f32.mxu0 0.0
  %5446 = vmatmul.mubr.f32.gmra.mxu0 %v5368
  %v5447 = vpop.f32.mrf.mxu0
  %v5448 = vadd.f32 0.0, %v5447
  %v5449 = vpop.f32.mrf.mxu0
  %5450 = vmatprep.mubr.f32.mxu0 0.0
  %5451 = vmatmul.mubr.f32.gmra.mxu0 %v5371
  %v5452 = vpop.f32.mrf.mxu0
  %v5453 = vadd.f32 0.0, %v5452
  %v5454 = vpop.f32.mrf.mxu0
  %5455 = vmatprep.mubr.f32.mxu0 0.0
  %5456 = vmatmul.mubr.f32.gmra.mxu0 %v5374
  %v5457 = vpop.f32.mrf.mxu0
  %v5458 = vadd.f32 0.0, %v5457
  %v5459 = vpop.f32.mrf.mxu0
  %5460 = vdwg.mxu0
  %v5462 = vsel %vm148, %v5443, 0
  %v5465 = vsel %vm148, %v5448, 0
  %v5468 = vsel %vm148, %v5453, 0
  %v5471 = vsel %vm148, %v5458, 0
  %5473 = vmatprep.subr.mxu0 0.0
  %5474 = vmatpush1.msra.mxu0 0.0
  %5475 = vmatprep.subr.mxu0 0.0
  %5476 = vmatpush1.msra.mxu0 0.0
  %5477 = vmatprep.subr.mxu0 0.0
  %5478 = vmatpush1.msra.mxu0 0.0
  %5479 = vmatprep.subr.mxu0 0.0
  %5480 = vmatpush1.msra.mxu0 0.0
  %5481 = vmatprep.subr.mxu0 0.0
  %5482 = vmatpush1.msra.mxu0 0.0
  %5483 = vmatprep.subr.mxu0 0.0
  %5484 = vmatpush1.msra.mxu0 0.0
  %5485 = vmatprep.subr.mxu0 0.0
  %5486 = vmatpush1.msra.mxu0 0.0
  %5487 = vmatprep.subr.mxu0 0.0
  %5488 = vmatpush1.msra.mxu0 0.0
  %5489 = vmatprep.subr.mxu0 0.0
  %5490 = vmatpush1.msra.mxu0 0.0
  %5491 = vmatprep.subr.mxu0 0.0
  %5492 = vmatpush1.msra.mxu0 0.0
  %5493 = vmatprep.subr.mxu0 0.0
  %5494 = vmatpush1.msra.mxu0 0.0
  %5495 = vmatprep.subr.mxu0 0.0
  %5496 = vmatpush1.msra.mxu0 0.0
  %5497 = vmatprep.subr.mxu0 0.0
  %5498 = vmatpush1.msra.mxu0 0.0
  %5499 = vmatprep.subr.mxu0 0.0
  %5500 = vmatpush1.msra.mxu0 0.0
  %5501 = vmatprep.subr.mxu0 0.0
  %5502 = vmatpush1.msra.mxu0 %v125
  %5503 = vmatprep.subr.mxu0 0.0
  %5504 = vmatpush1.msra.mxu0 %v124
  %5505 = vmatprep.subr.mxu0 0.0
  %5506 = vmatpush2.msra.mxu0 0.0
  %5507 = vmatprep.subr.mxu0 0.0
  %5508 = vmatpush2.msra.mxu0 0.0
  %5509 = vmatprep.subr.mxu0 0.0
  %5510 = vmatpush2.msra.mxu0 0.0
  %5511 = vmatprep.subr.mxu0 0.0
  %5512 = vmatpush2.msra.mxu0 0.0
  %5513 = vmatprep.subr.mxu0 0.0
  %5514 = vmatpush2.msra.mxu0 0.0
  %5515 = vmatprep.subr.mxu0 0.0
  %5516 = vmatpush2.msra.mxu0 0.0
  %5517 = vmatprep.subr.mxu0 0.0
  %5518 = vmatpush2.msra.mxu0 0.0
  %5519 = vmatprep.subr.mxu0 0.0
  %5520 = vmatpush2.msra.mxu0 0.0
  %5521 = vmatprep.subr.mxu0 0.0
  %5522 = vmatpush2.msra.mxu0 0.0
  %5523 = vmatprep.subr.mxu0 0.0
  %5524 = vmatpush2.msra.mxu0 0.0
  %5525 = vmatprep.subr.mxu0 0.0
  %5526 = vmatpush2.msra.mxu0 0.0
  %5527 = vmatprep.subr.mxu0 0.0
  %5528 = vmatpush2.msra.mxu0 0.0
  %5529 = vmatprep.subr.mxu0 0.0
  %5530 = vmatpush2.msra.mxu0 0.0
  %5531 = vmatprep.subr.mxu0 0.0
  %5532 = vmatpush2.msra.mxu0 0.0
  %5533 = vmatprep.subr.mxu0 0.0
  %5534 = vmatpush2.msra.mxu0 0.0
  %5535 = vmatprep.subr.mxu0 0.0
  %5536 = vmatpush2.msra.mxu0 0.0
  %5537 = vmatprep.mubr.f32.mxu0 0.0
  %5538 = vmatmul.mubr.f32.gmra.mxu0 %v5462
  %v5539 = vpop.f32.mrf.mxu0
  %v5540 = vadd.f32 0.0, %v5539
  %v5541 = vpop.f32.mrf.mxu0
  %5542 = vmatprep.mubr.f32.mxu0 0.0
  %5543 = vmatmul.mubr.f32.gmra.mxu0 %v5465
  %v5544 = vpop.f32.mrf.mxu0
  %v5545 = vadd.f32 0.0, %v5544
  %v5546 = vpop.f32.mrf.mxu0
  %5547 = vmatprep.mubr.f32.mxu0 0.0
  %5548 = vmatmul.mubr.f32.gmra.mxu0 %v5468
  %v5549 = vpop.f32.mrf.mxu0
  %v5550 = vadd.f32 0.0, %v5549
  %v5551 = vpop.f32.mrf.mxu0
  %5552 = vmatprep.mubr.f32.mxu0 0.0
  %5553 = vmatmul.mubr.f32.gmra.mxu0 %v5471
  %v5554 = vpop.f32.mrf.mxu0
  %v5555 = vadd.f32 0.0, %v5554
  %v5556 = vpop.f32.mrf.mxu0
  %5557 = vdwg.mxu0
  %v5558 = vadd.f32 %v5187, %v5540
  %v5559 = vadd.f32 %v5188, %v5545
  %v5560 = vadd.f32 %v5189, %v5550
  %v5561 = vadd.f32 %v5190, %v5555
  %v5562 = vadd.f32 %v5558, %v3106
  %v5563 = vadd.f32 %v5559, %v3106
  %v5564 = vadd.f32 %v5560, %v3106
  %v5565 = vadd.f32 %v5561, %v3106
  %5566 = vxpose.xlu0.b32.start [1/16] %v5562, 128
  %5567 = vxpose.xlu0.b32.cont [2/16] %v5563, 128
  %5568 = vxpose.xlu0.b32.cont [3/16] %v5564, 128
  %5569 = vxpose.xlu0.b32.cont [4/16] %v5565, 128
  %5570 = vxpose.xlu0.b32.cont [5/16] 0.0, 128
  %5571 = vxpose.xlu0.b32.cont [6/16] 0.0, 128
  %5572 = vxpose.xlu0.b32.cont [7/16] 0.0, 128
  %5573 = vxpose.xlu0.b32.cont [8/16] 0.0, 128
  %5574 = vxpose.xlu0.b32.cont [9/16] 0.0, 128
  %5575 = vxpose.xlu0.b32.cont [10/16] 0.0, 128
  %5576 = vxpose.xlu0.b32.cont [11/16] 0.0, 128
  %5577 = vxpose.xlu0.b32.cont [12/16] 0.0, 128
  %5578 = vxpose.xlu0.b32.cont [13/16] 0.0, 128
  %5579 = vxpose.xlu0.b32.cont [14/16] 0.0, 128
  %5580 = vxpose.xlu0.b32.cont [15/16] 0.0, 128
  %5581 = vxpose.xlu0.b32.end [16/16] 0.0, 128
  %v5582 = vpop.trf.xlu0
  %v5583 = vpop.trf.xlu0
  %v5584 = vpop.trf.xlu0
  %v5585 = vpop.trf.xlu0
  %v5586 = vpop.trf.xlu0
  %v5587 = vpop.trf.xlu0
  %v5588 = vpop.trf.xlu0
  %v5589 = vpop.trf.xlu0
  %v5590 = vpop.trf.xlu0
  %v5591 = vpop.trf.xlu0
  %v5592 = vpop.trf.xlu0
  %v5593 = vpop.trf.xlu0
  %v5594 = vpop.trf.xlu0
  %v5595 = vpop.trf.xlu0
  %v5596 = vpop.trf.xlu0
  %v5597 = vpop.trf.xlu0
  %5604 = vrot.lane.b32.xlu0 %v610, 96
  %v5605 = vpop.permute.xlu0 %5604
  %5606 = vrot.lane.b32.xlu0 %v615, 96
  %v5607 = vpop.permute.xlu0 %5606
  %5608 = vrot.lane.b32.xlu0 %v620, 96
  %v5609 = vpop.permute.xlu0 %5608
  %5610 = vrot.lane.b32.xlu0 %v625, 96
  %v5611 = vpop.permute.xlu0 %5610
  %5612 = vrot.lane.b32.xlu0 %v630, 96
  %v5613 = vpop.permute.xlu0 %5612
  %5614 = vrot.lane.b32.xlu0 %v635, 96
  %v5615 = vpop.permute.xlu0 %5614
  %v5616 = vsel %vm410, %v610, 0
  %v5618 = vsel %vm410, %v615, 0
  %v5620 = vsel %vm410, %v620, 0
  %v5622 = vsel %vm410, %v625, 0
  %v5624 = vsel %vm410, %v630, 0
  %v5626 = vsel %vm410, %v635, 0
  %v5628 = vsel %vm410, %v5605, 0
  %v5630 = vsel %vm410, %v5607, 0
  %v5632 = vsel %vm410, %v5609, 0
  %v5634 = vsel %vm410, %v5611, 0
  %v5636 = vsel %vm410, %v5613, 0
  %v5638 = vsel %vm410, %v5615, 0
  %5640 = vmatprep.subr.mxu0 0.0
  %5641 = vmatpush1.xpose.msra.mxu0 0.0
  %5642 = vmatprep.subr.mxu0 0.0
  %5643 = vmatpush1.xpose.msra.mxu0 0.0
  %5644 = vmatprep.subr.mxu0 0.0
  %5645 = vmatpush1.xpose.msra.mxu0 0.0
  %5646 = vmatprep.subr.mxu0 0.0
  %5647 = vmatpush1.xpose.msra.mxu0 0.0
  %5648 = vmatprep.subr.mxu0 0.0
  %5649 = vmatpush1.xpose.msra.mxu0 0.0
  %5650 = vmatprep.subr.mxu0 0.0
  %5651 = vmatpush1.xpose.msra.mxu0 0.0
  %5652 = vmatprep.subr.mxu0 0.0
  %5653 = vmatpush1.xpose.msra.mxu0 0.0
  %5654 = vmatprep.subr.mxu0 0.0
  %5655 = vmatpush1.xpose.msra.mxu0 0.0
  %5656 = vmatprep.subr.mxu0 0.0
  %5657 = vmatpush1.xpose.msra.mxu0 0.0
  %5658 = vmatprep.subr.mxu0 0.0
  %5659 = vmatpush1.xpose.msra.mxu0 0.0
  %5660 = vmatprep.subr.mxu0 0.0
  %5661 = vmatpush1.xpose.msra.mxu0 %v5638
  %5662 = vmatprep.subr.mxu0 0.0
  %5663 = vmatpush1.xpose.msra.mxu0 %v5636
  %5664 = vmatprep.subr.mxu0 0.0
  %5665 = vmatpush1.xpose.msra.mxu0 %v5634
  %5666 = vmatprep.subr.mxu0 0.0
  %5667 = vmatpush1.xpose.msra.mxu0 %v5632
  %5668 = vmatprep.subr.mxu0 0.0
  %5669 = vmatpush1.xpose.msra.mxu0 %v5630
  %5670 = vmatprep.subr.mxu0 0.0
  %5671 = vmatpush1.xpose.msra.mxu0 %v5628
  %5672 = vmatprep.subr.mxu0 0.0
  %5673 = vmatpush2.xpose.msra.mxu0 0.0
  %5674 = vmatprep.subr.mxu0 0.0
  %5675 = vmatpush2.xpose.msra.mxu0 0.0
  %5676 = vmatprep.subr.mxu0 0.0
  %5677 = vmatpush2.xpose.msra.mxu0 0.0
  %5678 = vmatprep.subr.mxu0 0.0
  %5679 = vmatpush2.xpose.msra.mxu0 0.0
  %5680 = vmatprep.subr.mxu0 0.0
  %5681 = vmatpush2.xpose.msra.mxu0 0.0
  %5682 = vmatprep.subr.mxu0 0.0
  %5683 = vmatpush2.xpose.msra.mxu0 0.0
  %5684 = vmatprep.subr.mxu0 0.0
  %5685 = vmatpush2.xpose.msra.mxu0 0.0
  %5686 = vmatprep.subr.mxu0 0.0
  %5687 = vmatpush2.xpose.msra.mxu0 0.0
  %5688 = vmatprep.subr.mxu0 0.0
  %5689 = vmatpush2.xpose.msra.mxu0 0.0
  %5690 = vmatprep.subr.mxu0 0.0
  %5691 = vmatpush2.xpose.msra.mxu0 0.0
  %5692 = vmatprep.subr.mxu0 0.0
  %5693 = vmatpush2.xpose.msra.mxu0 0.0
  %5694 = vmatprep.subr.mxu0 0.0
  %5695 = vmatpush2.xpose.msra.mxu0 0.0
  %5696 = vmatprep.subr.mxu0 0.0
  %5697 = vmatpush2.xpose.msra.mxu0 0.0
  %5698 = vmatprep.subr.mxu0 0.0
  %5699 = vmatpush2.xpose.msra.mxu0 0.0
  %5700 = vmatprep.subr.mxu0 0.0
  %5701 = vmatpush2.xpose.msra.mxu0 0.0
  %5702 = vmatprep.subr.mxu0 0.0
  %5703 = vmatpush2.xpose.msra.mxu0 0.0
  %5704 = vmatprep.mubr.f32.mxu0 0.0
  %5705 = vmatmul.mubr.f32.gmra.mxu0 %v5616
  %v5706 = vpop.f32.mrf.mxu0
  %v5707 = vadd.f32 %v147, %v5706
  %v5708 = vpop.f32.mrf.mxu0
  %5709 = vmatprep.mubr.f32.mxu0 0.0
  %5710 = vmatmul.mubr.f32.gmra.mxu0 %v5618
  %v5711 = vpop.f32.mrf.mxu0
  %v5712 = vadd.f32 %v147, %v5711
  %v5713 = vpop.f32.mrf.mxu0
  %5714 = vmatprep.mubr.f32.mxu0 0.0
  %5715 = vmatmul.mubr.f32.gmra.mxu0 %v5620
  %v5716 = vpop.f32.mrf.mxu0
  %v5717 = vadd.f32 %v147, %v5716
  %v5718 = vpop.f32.mrf.mxu0
  %5719 = vmatprep.mubr.f32.mxu0 0.0
  %5720 = vmatmul.mubr.f32.gmra.mxu0 %v5622
  %v5721 = vpop.f32.mrf.mxu0
  %v5722 = vadd.f32 %v147, %v5721
  %v5723 = vpop.f32.mrf.mxu0
  %5724 = vmatprep.mubr.f32.mxu0 0.0
  %5725 = vmatmul.mubr.f32.gmra.mxu0 %v5624
  %v5726 = vpop.f32.mrf.mxu0
  %v5727 = vadd.f32 %v147, %v5726
  %v5728 = vpop.f32.mrf.mxu0
  %5729 = vmatprep.mubr.f32.mxu0 0.0
  %5730 = vmatmul.mubr.f32.gmra.mxu0 %v5626
  %v5731 = vpop.f32.mrf.mxu0
  %v5732 = vadd.f32 %v147, %v5731
  %v5733 = vpop.f32.mrf.mxu0
  %5734 = vdwg.mxu0
  %v5735 = vsel %vm805, %v5707, -inf
  %5736 = vmax.xlane.f32.xlu0 %v5735
  %v5737 = vpop.xlane.xlu0 %5736
  %v5738 = vsel %vm805, %v5712, -inf
  %5739 = vmax.xlane.f32.xlu0 %v5738
  %v5740 = vpop.xlane.xlu0 %5739
  %v5741 = vsel %vm805, %v5717, -inf
  %5742 = vmax.xlane.f32.xlu0 %v5741
  %v5743 = vpop.xlane.xlu0 %5742
  %v5744 = vsel %vm805, %v5722, -inf
  %5745 = vmax.xlane.f32.xlu0 %v5744
  %v5746 = vpop.xlane.xlu0 %5745
  %v5747 = vsel %vm805, %v5727, -inf
  %5748 = vmax.xlane.f32.xlu0 %v5747
  %v5749 = vpop.xlane.xlu0 %5748
  %v5750 = vsel %vm805, %v5732, -inf
  %5751 = vmax.xlane.f32.xlu0 %v5750
  %v5752 = vpop.xlane.xlu0 %5751
  %v5753 = vsub.f32 %v5707, %v5737
  %v5754 = vsub.f32 %v5712, %v5740
  %v5755 = vsub.f32 %v5717, %v5743
  %v5756 = vsub.f32 %v5722, %v5746
  %v5757 = vsub.f32 %v5727, %v5749
  %v5758 = vsub.f32 %v5732, %v5752
  %v5759 = vmul.f32 %v5753, 1.442695
  %v5760 = vpow.pop %v5759
  %v5761 = vmul.f32 %v5754, 1.442695
  %v5762 = vpow.pop %v5761
  %v5763 = vmul.f32 %v5755, 1.442695
  %v5764 = vpow.pop %v5763
  %v5765 = vmul.f32 %v5756, 1.442695
  %v5766 = vpow.pop %v5765
  %v5767 = vmul.f32 %v5757, 1.442695
  %v5768 = vpow.pop %v5767
  %v5769 = vmul.f32 %v5758, 1.442695
  %v5770 = vpow.pop %v5769
  %v5771 = vsel %vm805, %v5760, 0.0
  %5772 = vadd.xlane.f32.xlu0 %v5771
  %v5773 = vpop.xlane.xlu0 %5772
  %v5774 = vsel %vm805, %v5762, 0.0
  %5775 = vadd.xlane.f32.xlu0 %v5774
  %v5776 = vpop.xlane.xlu0 %5775
  %v5777 = vsel %vm805, %v5764, 0.0
  %5778 = vadd.xlane.f32.xlu0 %v5777
  %v5779 = vpop.xlane.xlu0 %5778
  %v5780 = vsel %vm805, %v5766, 0.0
  %5781 = vadd.xlane.f32.xlu0 %v5780
  %v5782 = vpop.xlane.xlu0 %5781
  %v5783 = vsel %vm805, %v5768, 0.0
  %5784 = vadd.xlane.f32.xlu0 %v5783
  %v5785 = vpop.xlane.xlu0 %5784
  %v5786 = vsel %vm805, %v5770, 0.0
  %5787 = vadd.xlane.f32.xlu0 %v5786
  %v5788 = vpop.xlane.xlu0 %5787
  %v5789 = vrcp.pop %v5773
  %v5790 = vrcp.pop %v5776
  %v5791 = vrcp.pop %v5779
  %v5792 = vrcp.pop %v5782
  %v5793 = vrcp.pop %v5785
  %v5794 = vrcp.pop %v5788
  %v5795 = vmul.f32 %v5760, %v5789
  %v5796 = vmul.f32 %v5762, %v5790
  %v5797 = vmul.f32 %v5764, %v5791
  %v5798 = vmul.f32 %v5766, %v5792
  %v5799 = vmul.f32 %v5768, %v5793
  %v5800 = vmul.f32 %v5770, %v5794
  %5801 = vrot.lane.b32.xlu0 %v610, 64
  %v5802 = vpop.permute.xlu0 %5801
  %5803 = vrot.lane.b32.xlu0 %v615, 64
  %v5804 = vpop.permute.xlu0 %5803
  %5805 = vrot.lane.b32.xlu0 %v620, 64
  %v5806 = vpop.permute.xlu0 %5805
  %5807 = vrot.lane.b32.xlu0 %v625, 64
  %v5808 = vpop.permute.xlu0 %5807
  %5809 = vrot.lane.b32.xlu0 %v630, 64
  %v5810 = vpop.permute.xlu0 %5809
  %5811 = vrot.lane.b32.xlu0 %v635, 64
  %v5812 = vpop.permute.xlu0 %5811
  %v5820 = vsel %vm805, %v5795, 0
  %v5823 = vsel %vm805, %v5796, 0
  %v5826 = vsel %vm805, %v5797, 0
  %v5829 = vsel %vm805, %v5798, 0
  %v5832 = vsel %vm805, %v5799, 0
  %v5835 = vsel %vm805, %v5800, 0
  %5837 = vmatprep.subr.mxu0 0.0
  %5838 = vmatpush1.msra.mxu0 0.0
  %5839 = vmatprep.subr.mxu0 0.0
  %5840 = vmatpush1.msra.mxu0 0.0
  %5841 = vmatprep.subr.mxu0 0.0
  %5842 = vmatpush1.msra.mxu0 0.0
  %5843 = vmatprep.subr.mxu0 0.0
  %5844 = vmatpush1.msra.mxu0 0.0
  %5845 = vmatprep.subr.mxu0 0.0
  %5846 = vmatpush1.msra.mxu0 0.0
  %5847 = vmatprep.subr.mxu0 0.0
  %5848 = vmatpush1.msra.mxu0 0.0
  %5849 = vmatprep.subr.mxu0 0.0
  %5850 = vmatpush1.msra.mxu0 0.0
  %5851 = vmatprep.subr.mxu0 0.0
  %5852 = vmatpush1.msra.mxu0 0.0
  %5853 = vmatprep.subr.mxu0 0.0
  %5854 = vmatpush1.msra.mxu0 0.0
  %5855 = vmatprep.subr.mxu0 0.0
  %5856 = vmatpush1.msra.mxu0 0.0
  %5857 = vmatprep.subr.mxu0 0.0
  %5858 = vmatpush1.msra.mxu0 %v5812
  %5859 = vmatprep.subr.mxu0 0.0
  %5860 = vmatpush1.msra.mxu0 %v5810
  %5861 = vmatprep.subr.mxu0 0.0
  %5862 = vmatpush1.msra.mxu0 %v5808
  %5863 = vmatprep.subr.mxu0 0.0
  %5864 = vmatpush1.msra.mxu0 %v5806
  %5865 = vmatprep.subr.mxu0 0.0
  %5866 = vmatpush1.msra.mxu0 %v5804
  %5867 = vmatprep.subr.mxu0 0.0
  %5868 = vmatpush1.msra.mxu0 %v5802
  %5869 = vmatprep.subr.mxu0 0.0
  %5870 = vmatpush2.msra.mxu0 0.0
  %5871 = vmatprep.subr.mxu0 0.0
  %5872 = vmatpush2.msra.mxu0 0.0
  %5873 = vmatprep.subr.mxu0 0.0
  %5874 = vmatpush2.msra.mxu0 0.0
  %5875 = vmatprep.subr.mxu0 0.0
  %5876 = vmatpush2.msra.mxu0 0.0
  %5877 = vmatprep.subr.mxu0 0.0
  %5878 = vmatpush2.msra.mxu0 0.0
  %5879 = vmatprep.subr.mxu0 0.0
  %5880 = vmatpush2.msra.mxu0 0.0
  %5881 = vmatprep.subr.mxu0 0.0
  %5882 = vmatpush2.msra.mxu0 0.0
  %5883 = vmatprep.subr.mxu0 0.0
  %5884 = vmatpush2.msra.mxu0 0.0
  %5885 = vmatprep.subr.mxu0 0.0
  %5886 = vmatpush2.msra.mxu0 0.0
  %5887 = vmatprep.subr.mxu0 0.0
  %5888 = vmatpush2.msra.mxu0 0.0
  %5889 = vmatprep.subr.mxu0 0.0
  %5890 = vmatpush2.msra.mxu0 0.0
  %5891 = vmatprep.subr.mxu0 0.0
  %5892 = vmatpush2.msra.mxu0 0.0
  %5893 = vmatprep.subr.mxu0 0.0
  %5894 = vmatpush2.msra.mxu0 0.0
  %5895 = vmatprep.subr.mxu0 0.0
  %5896 = vmatpush2.msra.mxu0 0.0
  %5897 = vmatprep.subr.mxu0 0.0
  %5898 = vmatpush2.msra.mxu0 0.0
  %5899 = vmatprep.subr.mxu0 0.0
  %5900 = vmatpush2.msra.mxu0 0.0
  %5901 = vmatprep.mubr.f32.mxu0 0.0
  %5902 = vmatmul.mubr.f32.gmra.mxu0 %v5820
  %v5903 = vpop.f32.mrf.mxu0
  %v5904 = vadd.f32 0.0, %v5903
  %v5905 = vpop.f32.mrf.mxu0
  %5906 = vmatprep.mubr.f32.mxu0 0.0
  %5907 = vmatmul.mubr.f32.gmra.mxu0 %v5823
  %v5908 = vpop.f32.mrf.mxu0
  %v5909 = vadd.f32 0.0, %v5908
  %v5910 = vpop.f32.mrf.mxu0
  %5911 = vmatprep.mubr.f32.mxu0 0.0
  %5912 = vmatmul.mubr.f32.gmra.mxu0 %v5826
  %v5913 = vpop.f32.mrf.mxu0
  %v5914 = vadd.f32 0.0, %v5913
  %v5915 = vpop.f32.mrf.mxu0
  %5916 = vmatprep.mubr.f32.mxu0 0.0
  %5917 = vmatmul.mubr.f32.gmra.mxu0 %v5829
  %v5918 = vpop.f32.mrf.mxu0
  %v5919 = vadd.f32 0.0, %v5918
  %v5920 = vpop.f32.mrf.mxu0
  %5921 = vmatprep.mubr.f32.mxu0 0.0
  %5922 = vmatmul.mubr.f32.gmra.mxu0 %v5832
  %v5923 = vpop.f32.mrf.mxu0
  %v5924 = vadd.f32 0.0, %v5923
  %v5925 = vpop.f32.mrf.mxu0
  %5926 = vmatprep.mubr.f32.mxu0 0.0
  %5927 = vmatmul.mubr.f32.gmra.mxu0 %v5835
  %v5928 = vpop.f32.mrf.mxu0
  %v5929 = vadd.f32 0.0, %v5928
  %v5930 = vpop.f32.mrf.mxu0
  %5931 = vdwg.mxu0
  %v5933 = vsel %vm410, %v5904, 0
  %v5936 = vsel %vm410, %v5909, 0
  %v5939 = vsel %vm410, %v5914, 0
  %v5942 = vsel %vm410, %v5919, 0
  %v5945 = vsel %vm410, %v5924, 0
  %v5948 = vsel %vm410, %v5929, 0
  %5950 = vmatprep.subr.mxu0 0.0
  %5951 = vmatpush1.msra.mxu0 0.0
  %5952 = vmatprep.subr.mxu0 0.0
  %5953 = vmatpush1.msra.mxu0 0.0
  %5954 = vmatprep.subr.mxu0 0.0
  %5955 = vmatpush1.msra.mxu0 0.0
  %5956 = vmatprep.subr.mxu0 0.0
  %5957 = vmatpush1.msra.mxu0 0.0
  %5958 = vmatprep.subr.mxu0 0.0
  %5959 = vmatpush1.msra.mxu0 0.0
  %5960 = vmatprep.subr.mxu0 0.0
  %5961 = vmatpush1.msra.mxu0 0.0
  %5962 = vmatprep.subr.mxu0 0.0
  %5963 = vmatpush1.msra.mxu0 0.0
  %5964 = vmatprep.subr.mxu0 0.0
  %5965 = vmatpush1.msra.mxu0 0.0
  %5966 = vmatprep.subr.mxu0 0.0
  %5967 = vmatpush1.msra.mxu0 0.0
  %5968 = vmatprep.subr.mxu0 0.0
  %5969 = vmatpush1.msra.mxu0 0.0
  %5970 = vmatprep.subr.mxu0 0.0
  %5971 = vmatpush1.msra.mxu0 0.0
  %5972 = vmatprep.subr.mxu0 0.0
  %5973 = vmatpush1.msra.mxu0 0.0
  %5974 = vmatprep.subr.mxu0 0.0
  %5975 = vmatpush1.msra.mxu0 %v82
  %5976 = vmatprep.subr.mxu0 0.0
  %5977 = vmatpush1.msra.mxu0 %v81
  %5978 = vmatprep.subr.mxu0 0.0
  %5979 = vmatpush1.msra.mxu0 %v80
  %5980 = vmatprep.subr.mxu0 0.0
  %5981 = vmatpush1.msra.mxu0 %v79
  %5982 = vmatprep.subr.mxu0 0.0
  %5983 = vmatpush2.msra.mxu0 0.0
  %5984 = vmatprep.subr.mxu0 0.0
  %5985 = vmatpush2.msra.mxu0 0.0
  %5986 = vmatprep.subr.mxu0 0.0
  %5987 = vmatpush2.msra.mxu0 0.0
  %5988 = vmatprep.subr.mxu0 0.0
  %5989 = vmatpush2.msra.mxu0 0.0
  %5990 = vmatprep.subr.mxu0 0.0
  %5991 = vmatpush2.msra.mxu0 0.0
  %5992 = vmatprep.subr.mxu0 0.0
  %5993 = vmatpush2.msra.mxu0 0.0
  %5994 = vmatprep.subr.mxu0 0.0
  %5995 = vmatpush2.msra.mxu0 0.0
  %5996 = vmatprep.subr.mxu0 0.0
  %5997 = vmatpush2.msra.mxu0 0.0
  %5998 = vmatprep.subr.mxu0 0.0
  %5999 = vmatpush2.msra.mxu0 0.0
  %6000 = vmatprep.subr.mxu0 0.0
  %6001 = vmatpush2.msra.mxu0 0.0
  %6002 = vmatprep.subr.mxu0 0.0
  %6003 = vmatpush2.msra.mxu0 0.0
  %6004 = vmatprep.subr.mxu0 0.0
  %6005 = vmatpush2.msra.mxu0 0.0
  %6006 = vmatprep.subr.mxu0 0.0
  %6007 = vmatpush2.msra.mxu0 0.0
  %6008 = vmatprep.subr.mxu0 0.0
  %6009 = vmatpush2.msra.mxu0 0.0
  %6010 = vmatprep.subr.mxu0 0.0
  %6011 = vmatpush2.msra.mxu0 0.0
  %6012 = vmatprep.subr.mxu0 0.0
  %6013 = vmatpush2.msra.mxu0 0.0
  %6014 = vmatprep.mubr.f32.mxu0 0.0
  %6015 = vmatmul.mubr.f32.gmra.mxu0 %v5933
  %v6016 = vpop.f32.mrf.mxu0
  %v6017 = vadd.f32 %v1006, %v6016
  %v6018 = vpop.f32.mrf.mxu0
  %6019 = vmatprep.mubr.f32.mxu0 0.0
  %6020 = vmatmul.mubr.f32.gmra.mxu0 %v5936
  %v6021 = vpop.f32.mrf.mxu0
  %v6022 = vadd.f32 %v1006, %v6021
  %v6023 = vpop.f32.mrf.mxu0
  %6024 = vmatprep.mubr.f32.mxu0 0.0
  %6025 = vmatmul.mubr.f32.gmra.mxu0 %v5939
  %v6026 = vpop.f32.mrf.mxu0
  %v6027 = vadd.f32 %v1006, %v6026
  %v6028 = vpop.f32.mrf.mxu0
  %6029 = vmatprep.mubr.f32.mxu0 0.0
  %6030 = vmatmul.mubr.f32.gmra.mxu0 %v5942
  %v6031 = vpop.f32.mrf.mxu0
  %v6032 = vadd.f32 %v1006, %v6031
  %v6033 = vpop.f32.mrf.mxu0
  %6034 = vmatprep.mubr.f32.mxu0 0.0
  %6035 = vmatmul.mubr.f32.gmra.mxu0 %v5945
  %v6036 = vpop.f32.mrf.mxu0
  %v6037 = vadd.f32 %v1006, %v6036
  %v6038 = vpop.f32.mrf.mxu0
  %6039 = vmatprep.mubr.f32.mxu0 0.0
  %6040 = vmatmul.mubr.f32.gmra.mxu0 %v5948
  %v6041 = vpop.f32.mrf.mxu0
  %v6042 = vadd.f32 %v1006, %v6041
  %v6043 = vpop.f32.mrf.mxu0
  %6044 = vdwg.mxu0
  %6045 = vxpose.xlu0.b32.start [1/16] %v6017, 128
  %6046 = vxpose.xlu0.b32.cont [2/16] %v6022, 128
  %6047 = vxpose.xlu0.b32.cont [3/16] %v6027, 128
  %6048 = vxpose.xlu0.b32.cont [4/16] %v6032, 128
  %6049 = vxpose.xlu0.b32.cont [5/16] %v6037, 128
  %6050 = vxpose.xlu0.b32.cont [6/16] %v6042, 128
  %6051 = vxpose.xlu0.b32.cont [7/16] 0.0, 128
  %6052 = vxpose.xlu0.b32.cont [8/16] 0.0, 128
  %6053 = vxpose.xlu0.b32.cont [9/16] 0.0, 128
  %6054 = vxpose.xlu0.b32.cont [10/16] 0.0, 128
  %6055 = vxpose.xlu0.b32.cont [11/16] 0.0, 128
  %6056 = vxpose.xlu0.b32.cont [12/16] 0.0, 128
  %6057 = vxpose.xlu0.b32.cont [13/16] 0.0, 128
  %6058 = vxpose.xlu0.b32.cont [14/16] 0.0, 128
  %6059 = vxpose.xlu0.b32.cont [15/16] 0.0, 128
  %6060 = vxpose.xlu0.b32.end [16/16] 0.0, 128
  %v6061 = vpop.trf.xlu0
  %v6062 = vpop.trf.xlu0
  %v6063 = vpop.trf.xlu0
  %v6064 = vpop.trf.xlu0
  %v6065 = vpop.trf.xlu0
  %v6066 = vpop.trf.xlu0
  %v6067 = vpop.trf.xlu0
  %v6068 = vpop.trf.xlu0
  %v6069 = vpop.trf.xlu0
  %v6070 = vpop.trf.xlu0
  %v6071 = vpop.trf.xlu0
  %v6072 = vpop.trf.xlu0
  %v6073 = vpop.trf.xlu0
  %v6074 = vpop.trf.xlu0
  %v6075 = vpop.trf.xlu0
  %v6076 = vpop.trf.xlu0
  %v6078 = vsel %vm805, %v6061, 0
  %v6081 = vsel %vm805, %v6062, 0
  %v6084 = vsel %vm805, %v6063, 0
  %v6087 = vsel %vm805, %v6064, 0
  %6089 = vmatprep.subr.mxu0 0.0
  %6090 = vmatpush1.msra.mxu0 0.0
  %6091 = vmatprep.subr.mxu0 0.0
  %6092 = vmatpush1.msra.mxu0 0.0
  %6093 = vmatprep.subr.mxu0 0.0
  %6094 = vmatpush1.msra.mxu0 0.0
  %6095 = vmatprep.subr.mxu0 0.0
  %6096 = vmatpush1.msra.mxu0 0.0
  %6097 = vmatprep.subr.mxu0 0.0
  %6098 = vmatpush1.msra.mxu0 0.0
  %6099 = vmatprep.subr.mxu0 0.0
  %6100 = vmatpush1.msra.mxu0 0.0
  %6101 = vmatprep.subr.mxu0 0.0
  %6102 = vmatpush1.msra.mxu0 0.0
  %6103 = vmatprep.subr.mxu0 0.0
  %6104 = vmatpush1.msra.mxu0 0.0
  %6105 = vmatprep.subr.mxu0 0.0
  %6106 = vmatpush1.msra.mxu0 0.0
  %6107 = vmatprep.subr.mxu0 0.0
  %6108 = vmatpush1.msra.mxu0 0.0
  %6109 = vmatprep.subr.mxu0 %v113
  %6110 = vmatpush1.msra.mxu0 %v112
  %6111 = vmatprep.subr.mxu0 %v111
  %6112 = vmatpush1.msra.mxu0 %v110
  %6113 = vmatprep.subr.mxu0 %v109
  %6114 = vmatpush1.msra.mxu0 %v108
  %6115 = vmatprep.subr.mxu0 %v107
  %6116 = vmatpush1.msra.mxu0 %v106
  %6117 = vmatprep.subr.mxu0 %v105
  %6118 = vmatpush1.msra.mxu0 %v104
  %6119 = vmatprep.subr.mxu0 %v103
  %6120 = vmatpush1.msra.mxu0 %v102
  %6121 = vmatprep.subr.mxu0 0.0
  %6122 = vmatpush2.msra.mxu0 0.0
  %6123 = vmatprep.subr.mxu0 0.0
  %6124 = vmatpush2.msra.mxu0 0.0
  %6125 = vmatprep.subr.mxu0 0.0
  %6126 = vmatpush2.msra.mxu0 0.0
  %6127 = vmatprep.subr.mxu0 0.0
  %6128 = vmatpush2.msra.mxu0 0.0
  %6129 = vmatprep.subr.mxu0 0.0
  %6130 = vmatpush2.msra.mxu0 0.0
  %6131 = vmatprep.subr.mxu0 0.0
  %6132 = vmatpush2.msra.mxu0 0.0
  %6133 = vmatprep.subr.mxu0 0.0
  %6134 = vmatpush2.msra.mxu0 0.0
  %6135 = vmatprep.subr.mxu0 0.0
  %6136 = vmatpush2.msra.mxu0 0.0
  %6137 = vmatprep.subr.mxu0 0.0
  %6138 = vmatpush2.msra.mxu0 0.0
  %6139 = vmatprep.subr.mxu0 0.0
  %6140 = vmatpush2.msra.mxu0 0.0
  %6141 = vmatprep.subr.mxu0 0.0
  %6142 = vmatpush2.msra.mxu0 0.0
  %6143 = vmatprep.subr.mxu0 0.0
  %6144 = vmatpush2.msra.mxu0 0.0
  %6145 = vmatprep.subr.mxu0 0.0
  %6146 = vmatpush2.msra.mxu0 0.0
  %6147 = vmatprep.subr.mxu0 0.0
  %6148 = vmatpush2.msra.mxu0 0.0
  %6149 = vmatprep.subr.mxu0 0.0
  %6150 = vmatpush2.msra.mxu0 0.0
  %6151 = vmatprep.subr.mxu0 0.0
  %6152 = vmatpush2.msra.mxu0 0.0
  %6153 = vmatprep.mubr.f32.mxu0 0.0
  %6154 = vmatmul.mubr.f32.gmra.mxu0 %v6078
  %v6155 = vpop.f32.mrf.mxu0
  %v6156 = vadd.f32 %v1156, %v6155
  %v6157 = vpop.f32.mrf.mxu0
  %v6158 = vadd.f32 %v1160, %v6157
  %6159 = vmatprep.mubr.f32.mxu0 0.0
  %6160 = vmatmul.mubr.f32.gmra.mxu0 %v6081
  %v6161 = vpop.f32.mrf.mxu0
  %v6162 = vadd.f32 %v1156, %v6161
  %v6163 = vpop.f32.mrf.mxu0
  %v6164 = vadd.f32 %v1160, %v6163
  %6165 = vmatprep.mubr.f32.mxu0 0.0
  %6166 = vmatmul.mubr.f32.gmra.mxu0 %v6084
  %v6167 = vpop.f32.mrf.mxu0
  %v6168 = vadd.f32 %v1156, %v6167
  %v6169 = vpop.f32.mrf.mxu0
  %v6170 = vadd.f32 %v1160, %v6169
  %6171 = vmatprep.mubr.f32.mxu0 0.0
  %6172 = vmatmul.mubr.f32.gmra.mxu0 %v6087
  %v6173 = vpop.f32.mrf.mxu0
  %v6174 = vadd.f32 %v1156, %v6173
  %v6175 = vpop.f32.mrf.mxu0
  %v6176 = vadd.f32 %v1160, %v6175
  %6177 = vdwg.mxu0
  %6182 = vrot.lane.b32.xlu0 %v6156, 48
  %v6183 = vpop.permute.xlu0 %6182
  %6184 = vrot.lane.b32.xlu0 %v6162, 48
  %v6185 = vpop.permute.xlu0 %6184
  %6186 = vrot.lane.b32.xlu0 %v6168, 48
  %v6187 = vpop.permute.xlu0 %6186
  %6188 = vrot.lane.b32.xlu0 %v6174, 48
  %v6189 = vpop.permute.xlu0 %6188
  %v6190 = vsel %vm148, %v6156, 0
  %v6192 = vsel %vm148, %v6162, 0
  %v6194 = vsel %vm148, %v6168, 0
  %v6196 = vsel %vm148, %v6174, 0
  %v6198 = vsel %vm148, %v6183, 0
  %v6200 = vsel %vm148, %v6185, 0
  %v6202 = vsel %vm148, %v6187, 0
  %v6204 = vsel %vm148, %v6189, 0
  %6206 = vmatprep.subr.mxu0 0.0
  %6207 = vmatpush1.xpose.msra.mxu0 0.0
  %6208 = vmatprep.subr.mxu0 0.0
  %6209 = vmatpush1.xpose.msra.mxu0 0.0
  %6210 = vmatprep.subr.mxu0 0.0
  %6211 = vmatpush1.xpose.msra.mxu0 0.0
  %6212 = vmatprep.subr.mxu0 0.0
  %6213 = vmatpush1.xpose.msra.mxu0 0.0
  %6214 = vmatprep.subr.mxu0 0.0
  %6215 = vmatpush1.xpose.msra.mxu0 0.0
  %6216 = vmatprep.subr.mxu0 0.0
  %6217 = vmatpush1.xpose.msra.mxu0 0.0
  %6218 = vmatprep.subr.mxu0 0.0
  %6219 = vmatpush1.xpose.msra.mxu0 0.0
  %6220 = vmatprep.subr.mxu0 0.0
  %6221 = vmatpush1.xpose.msra.mxu0 0.0
  %6222 = vmatprep.subr.mxu0 0.0
  %6223 = vmatpush1.xpose.msra.mxu0 0.0
  %6224 = vmatprep.subr.mxu0 0.0
  %6225 = vmatpush1.xpose.msra.mxu0 0.0
  %6226 = vmatprep.subr.mxu0 0.0
  %6227 = vmatpush1.xpose.msra.mxu0 0.0
  %6228 = vmatprep.subr.mxu0 0.0
  %6229 = vmatpush1.xpose.msra.mxu0 0.0
  %6230 = vmatprep.subr.mxu0 0.0
  %6231 = vmatpush1.xpose.msra.mxu0 %v6204
  %6232 = vmatprep.subr.mxu0 0.0
  %6233 = vmatpush1.xpose.msra.mxu0 %v6202
  %6234 = vmatprep.subr.mxu0 0.0
  %6235 = vmatpush1.xpose.msra.mxu0 %v6200
  %6236 = vmatprep.subr.mxu0 0.0
  %6237 = vmatpush1.xpose.msra.mxu0 %v6198
  %6238 = vmatprep.subr.mxu0 0.0
  %6239 = vmatpush2.xpose.msra.mxu0 0.0
  %6240 = vmatprep.subr.mxu0 0.0
  %6241 = vmatpush2.xpose.msra.mxu0 0.0
  %6242 = vmatprep.subr.mxu0 0.0
  %6243 = vmatpush2.xpose.msra.mxu0 0.0
  %6244 = vmatprep.subr.mxu0 0.0
  %6245 = vmatpush2.xpose.msra.mxu0 0.0
  %6246 = vmatprep.subr.mxu0 0.0
  %6247 = vmatpush2.xpose.msra.mxu0 0.0
  %6248 = vmatprep.subr.mxu0 0.0
  %6249 = vmatpush2.xpose.msra.mxu0 0.0
  %6250 = vmatprep.subr.mxu0 0.0
  %6251 = vmatpush2.xpose.msra.mxu0 0.0
  %6252 = vmatprep.subr.mxu0 0.0
  %6253 = vmatpush2.xpose.msra.mxu0 0.0
  %6254 = vmatprep.subr.mxu0 0.0
  %6255 = vmatpush2.xpose.msra.mxu0 0.0
  %6256 = vmatprep.subr.mxu0 0.0
  %6257 = vmatpush2.xpose.msra.mxu0 0.0
  %6258 = vmatprep.subr.mxu0 0.0
  %6259 = vmatpush2.xpose.msra.mxu0 0.0
  %6260 = vmatprep.subr.mxu0 0.0
  %6261 = vmatpush2.xpose.msra.mxu0 0.0
  %6262 = vmatprep.subr.mxu0 0.0
  %6263 = vmatpush2.xpose.msra.mxu0 0.0
  %6264 = vmatprep.subr.mxu0 0.0
  %6265 = vmatpush2.xpose.msra.mxu0 0.0
  %6266 = vmatprep.subr.mxu0 0.0
  %6267 = vmatpush2.xpose.msra.mxu0 0.0
  %6268 = vmatprep.subr.mxu0 0.0
  %6269 = vmatpush2.xpose.msra.mxu0 0.0
  %6270 = vmatprep.mubr.f32.mxu0 0.0
  %6271 = vmatmul.mubr.f32.gmra.mxu0 %v6190
  %v6272 = vpop.f32.mrf.mxu0
  %v6273 = vadd.f32 0.0, %v6272
  %v6274 = vpop.f32.mrf.mxu0
  %6275 = vmatprep.mubr.f32.mxu0 0.0
  %6276 = vmatmul.mubr.f32.gmra.mxu0 %v6192
  %v6277 = vpop.f32.mrf.mxu0
  %v6278 = vadd.f32 0.0, %v6277
  %v6279 = vpop.f32.mrf.mxu0
  %6280 = vmatprep.mubr.f32.mxu0 0.0
  %6281 = vmatmul.mubr.f32.gmra.mxu0 %v6194
  %v6282 = vpop.f32.mrf.mxu0
  %v6283 = vadd.f32 0.0, %v6282
  %v6284 = vpop.f32.mrf.mxu0
  %6285 = vmatprep.mubr.f32.mxu0 0.0
  %6286 = vmatmul.mubr.f32.gmra.mxu0 %v6196
  %v6287 = vpop.f32.mrf.mxu0
  %v6288 = vadd.f32 0.0, %v6287
  %v6289 = vpop.f32.mrf.mxu0
  %6290 = vdwg.mxu0
  %v6291 = vsel %vm410, %v6273, -inf
  %6292 = vmax.xlane.f32.xlu0 %v6291
  %v6293 = vpop.xlane.xlu0 %6292
  %v6294 = vsel %vm410, %v6278, -inf
  %6295 = vmax.xlane.f32.xlu0 %v6294
  %v6296 = vpop.xlane.xlu0 %6295
  %v6297 = vsel %vm410, %v6283, -inf
  %6298 = vmax.xlane.f32.xlu0 %v6297
  %v6299 = vpop.xlane.xlu0 %6298
  %v6300 = vsel %vm410, %v6288, -inf
  %6301 = vmax.xlane.f32.xlu0 %v6300
  %v6302 = vpop.xlane.xlu0 %6301
  %v6303 = vsub.f32 %v6273, %v6293
  %v6304 = vsub.f32 %v6278, %v6296
  %v6305 = vsub.f32 %v6283, %v6299
  %v6306 = vsub.f32 %v6288, %v6302
  %v6307 = vmul.f32 %v6303, 1.442695
  %v6308 = vpow.pop %v6307
  %v6309 = vmul.f32 %v6304, 1.442695
  %v6310 = vpow.pop %v6309
  %v6311 = vmul.f32 %v6305, 1.442695
  %v6312 = vpow.pop %v6311
  %v6313 = vmul.f32 %v6306, 1.442695
  %v6314 = vpow.pop %v6313
  %v6315 = vsel %vm410, %v6308, 0.0
  %6316 = vadd.xlane.f32.xlu0 %v6315
  %v6317 = vpop.xlane.xlu0 %6316
  %v6318 = vsel %vm410, %v6310, 0.0
  %6319 = vadd.xlane.f32.xlu0 %v6318
  %v6320 = vpop.xlane.xlu0 %6319
  %v6321 = vsel %vm410, %v6312, 0.0
  %6322 = vadd.xlane.f32.xlu0 %v6321
  %v6323 = vpop.xlane.xlu0 %6322
  %v6324 = vsel %vm410, %v6314, 0.0
  %6325 = vadd.xlane.f32.xlu0 %v6324
  %v6326 = vpop.xlane.xlu0 %6325
  %v6327 = vrcp.pop %v6317
  %v6328 = vrcp.pop %v6320
  %v6329 = vrcp.pop %v6323
  %v6330 = vrcp.pop %v6326
  %v6331 = vmul.f32 %v6308, %v6327
  %v6332 = vmul.f32 %v6310, %v6328
  %v6333 = vmul.f32 %v6312, %v6329
  %v6334 = vmul.f32 %v6314, %v6330
  %6339 = vrot.lane.b32.xlu0 %v6158, 96
  %v6340 = vpop.permute.xlu0 %6339
  %6341 = vrot.lane.b32.xlu0 %v6164, 96
  %v6342 = vpop.permute.xlu0 %6341
  %6343 = vrot.lane.b32.xlu0 %v6170, 96
  %v6344 = vpop.permute.xlu0 %6343
  %6345 = vrot.lane.b32.xlu0 %v6176, 96
  %v6346 = vpop.permute.xlu0 %6345
  %v6352 = vsel %vm410, %v6331, 0
  %v6355 = vsel %vm410, %v6332, 0
  %v6358 = vsel %vm410, %v6333, 0
  %v6361 = vsel %vm410, %v6334, 0
  %6363 = vmatprep.subr.mxu0 0.0
  %6364 = vmatpush1.msra.mxu0 0.0
  %6365 = vmatprep.subr.mxu0 0.0
  %6366 = vmatpush1.msra.mxu0 0.0
  %6367 = vmatprep.subr.mxu0 0.0
  %6368 = vmatpush1.msra.mxu0 0.0
  %6369 = vmatprep.subr.mxu0 0.0
  %6370 = vmatpush1.msra.mxu0 0.0
  %6371 = vmatprep.subr.mxu0 0.0
  %6372 = vmatpush1.msra.mxu0 0.0
  %6373 = vmatprep.subr.mxu0 0.0
  %6374 = vmatpush1.msra.mxu0 0.0
  %6375 = vmatprep.subr.mxu0 0.0
  %6376 = vmatpush1.msra.mxu0 0.0
  %6377 = vmatprep.subr.mxu0 0.0
  %6378 = vmatpush1.msra.mxu0 0.0
  %6379 = vmatprep.subr.mxu0 0.0
  %6380 = vmatpush1.msra.mxu0 0.0
  %6381 = vmatprep.subr.mxu0 0.0
  %6382 = vmatpush1.msra.mxu0 0.0
  %6383 = vmatprep.subr.mxu0 0.0
  %6384 = vmatpush1.msra.mxu0 0.0
  %6385 = vmatprep.subr.mxu0 0.0
  %6386 = vmatpush1.msra.mxu0 0.0
  %6387 = vmatprep.subr.mxu0 0.0
  %6388 = vmatpush1.msra.mxu0 %v6346
  %6389 = vmatprep.subr.mxu0 0.0
  %6390 = vmatpush1.msra.mxu0 %v6344
  %6391 = vmatprep.subr.mxu0 0.0
  %6392 = vmatpush1.msra.mxu0 %v6342
  %6393 = vmatprep.subr.mxu0 0.0
  %6394 = vmatpush1.msra.mxu0 %v6340
  %6395 = vmatprep.subr.mxu0 0.0
  %6396 = vmatpush2.msra.mxu0 0.0
  %6397 = vmatprep.subr.mxu0 0.0
  %6398 = vmatpush2.msra.mxu0 0.0
  %6399 = vmatprep.subr.mxu0 0.0
  %6400 = vmatpush2.msra.mxu0 0.0
  %6401 = vmatprep.subr.mxu0 0.0
  %6402 = vmatpush2.msra.mxu0 0.0
  %6403 = vmatprep.subr.mxu0 0.0
  %6404 = vmatpush2.msra.mxu0 0.0
  %6405 = vmatprep.subr.mxu0 0.0
  %6406 = vmatpush2.msra.mxu0 0.0
  %6407 = vmatprep.subr.mxu0 0.0
  %6408 = vmatpush2.msra.mxu0 0.0
  %6409 = vmatprep.subr.mxu0 0.0
  %6410 = vmatpush2.msra.mxu0 0.0
  %6411 = vmatprep.subr.mxu0 0.0
  %6412 = vmatpush2.msra.mxu0 0.0
  %6413 = vmatprep.subr.mxu0 0.0
  %6414 = vmatpush2.msra.mxu0 0.0
  %6415 = vmatprep.subr.mxu0 0.0
  %6416 = vmatpush2.msra.mxu0 0.0
  %6417 = vmatprep.subr.mxu0 0.0
  %6418 = vmatpush2.msra.mxu0 0.0
  %6419 = vmatprep.subr.mxu0 0.0
  %6420 = vmatpush2.msra.mxu0 0.0
  %6421 = vmatprep.subr.mxu0 0.0
  %6422 = vmatpush2.msra.mxu0 0.0
  %6423 = vmatprep.subr.mxu0 0.0
  %6424 = vmatpush2.msra.mxu0 0.0
  %6425 = vmatprep.subr.mxu0 0.0
  %6426 = vmatpush2.msra.mxu0 0.0
  %6427 = vmatprep.mubr.f32.mxu0 0.0
  %6428 = vmatmul.mubr.f32.gmra.mxu0 %v6352
  %v6429 = vpop.f32.mrf.mxu0
  %v6430 = vadd.f32 0.0, %v6429
  %v6431 = vpop.f32.mrf.mxu0
  %6432 = vmatprep.mubr.f32.mxu0 0.0
  %6433 = vmatmul.mubr.f32.gmra.mxu0 %v6355
  %v6434 = vpop.f32.mrf.mxu0
  %v6435 = vadd.f32 0.0, %v6434
  %v6436 = vpop.f32.mrf.mxu0
  %6437 = vmatprep.mubr.f32.mxu0 0.0
  %6438 = vmatmul.mubr.f32.gmra.mxu0 %v6358
  %v6439 = vpop.f32.mrf.mxu0
  %v6440 = vadd.f32 0.0, %v6439
  %v6441 = vpop.f32.mrf.mxu0
  %6442 = vmatprep.mubr.f32.mxu0 0.0
  %6443 = vmatmul.mubr.f32.gmra.mxu0 %v6361
  %v6444 = vpop.f32.mrf.mxu0
  %v6445 = vadd.f32 0.0, %v6444
  %v6446 = vpop.f32.mrf.mxu0
  %6447 = vdwg.mxu0
  %6448 = vrot.lane.b32.xlu0 %v6156, 112
  %v6449 = vpop.permute.xlu0 %6448
  %6450 = vrot.lane.b32.xlu0 %v6162, 112
  %v6451 = vpop.permute.xlu0 %6450
  %6452 = vrot.lane.b32.xlu0 %v6168, 112
  %v6453 = vpop.permute.xlu0 %6452
  %6454 = vrot.lane.b32.xlu0 %v6174, 112
  %v6455 = vpop.permute.xlu0 %6454
  %6456 = vrot.lane.b32.xlu0 %v6156, 32
  %v6457 = vpop.permute.xlu0 %6456
  %6458 = vrot.lane.b32.xlu0 %v6162, 32
  %v6459 = vpop.permute.xlu0 %6458
  %6460 = vrot.lane.b32.xlu0 %v6168, 32
  %v6461 = vpop.permute.xlu0 %6460
  %6462 = vrot.lane.b32.xlu0 %v6174, 32
  %v6463 = vpop.permute.xlu0 %6462
  %v6464 = vsel %vm148, %v6449, 0
  %v6466 = vsel %vm148, %v6451, 0
  %v6468 = vsel %vm148, %v6453, 0
  %v6470 = vsel %vm148, %v6455, 0
  %v6472 = vsel %vm148, %v6457, 0
  %v6474 = vsel %vm148, %v6459, 0
  %v6476 = vsel %vm148, %v6461, 0
  %v6478 = vsel %vm148, %v6463, 0
  %6480 = vmatprep.subr.mxu0 0.0
  %6481 = vmatpush1.xpose.msra.mxu0 0.0
  %6482 = vmatprep.subr.mxu0 0.0
  %6483 = vmatpush1.xpose.msra.mxu0 0.0
  %6484 = vmatprep.subr.mxu0 0.0
  %6485 = vmatpush1.xpose.msra.mxu0 0.0
  %6486 = vmatprep.subr.mxu0 0.0
  %6487 = vmatpush1.xpose.msra.mxu0 0.0
  %6488 = vmatprep.subr.mxu0 0.0
  %6489 = vmatpush1.xpose.msra.mxu0 0.0
  %6490 = vmatprep.subr.mxu0 0.0
  %6491 = vmatpush1.xpose.msra.mxu0 0.0
  %6492 = vmatprep.subr.mxu0 0.0
  %6493 = vmatpush1.xpose.msra.mxu0 0.0
  %6494 = vmatprep.subr.mxu0 0.0
  %6495 = vmatpush1.xpose.msra.mxu0 0.0
  %6496 = vmatprep.subr.mxu0 0.0
  %6497 = vmatpush1.xpose.msra.mxu0 0.0
  %6498 = vmatprep.subr.mxu0 0.0
  %6499 = vmatpush1.xpose.msra.mxu0 0.0
  %6500 = vmatprep.subr.mxu0 0.0
  %6501 = vmatpush1.xpose.msra.mxu0 0.0
  %6502 = vmatprep.subr.mxu0 0.0
  %6503 = vmatpush1.xpose.msra.mxu0 0.0
  %6504 = vmatprep.subr.mxu0 0.0
  %6505 = vmatpush1.xpose.msra.mxu0 %v6478
  %6506 = vmatprep.subr.mxu0 0.0
  %6507 = vmatpush1.xpose.msra.mxu0 %v6476
  %6508 = vmatprep.subr.mxu0 0.0
  %6509 = vmatpush1.xpose.msra.mxu0 %v6474
  %6510 = vmatprep.subr.mxu0 0.0
  %6511 = vmatpush1.xpose.msra.mxu0 %v6472
  %6512 = vmatprep.subr.mxu0 0.0
  %6513 = vmatpush2.xpose.msra.mxu0 0.0
  %6514 = vmatprep.subr.mxu0 0.0
  %6515 = vmatpush2.xpose.msra.mxu0 0.0
  %6516 = vmatprep.subr.mxu0 0.0
  %6517 = vmatpush2.xpose.msra.mxu0 0.0
  %6518 = vmatprep.subr.mxu0 0.0
  %6519 = vmatpush2.xpose.msra.mxu0 0.0
  %6520 = vmatprep.subr.mxu0 0.0
  %6521 = vmatpush2.xpose.msra.mxu0 0.0
  %6522 = vmatprep.subr.mxu0 0.0
  %6523 = vmatpush2.xpose.msra.mxu0 0.0
  %6524 = vmatprep.subr.mxu0 0.0
  %6525 = vmatpush2.xpose.msra.mxu0 0.0
  %6526 = vmatprep.subr.mxu0 0.0
  %6527 = vmatpush2.xpose.msra.mxu0 0.0
  %6528 = vmatprep.subr.mxu0 0.0
  %6529 = vmatpush2.xpose.msra.mxu0 0.0
  %6530 = vmatprep.subr.mxu0 0.0
  %6531 = vmatpush2.xpose.msra.mxu0 0.0
  %6532 = vmatprep.subr.mxu0 0.0
  %6533 = vmatpush2.xpose.msra.mxu0 0.0
  %6534 = vmatprep.subr.mxu0 0.0
  %6535 = vmatpush2.xpose.msra.mxu0 0.0
  %6536 = vmatprep.subr.mxu0 0.0
  %6537 = vmatpush2.xpose.msra.mxu0 0.0
  %6538 = vmatprep.subr.mxu0 0.0
  %6539 = vmatpush2.xpose.msra.mxu0 0.0
  %6540 = vmatprep.subr.mxu0 0.0
  %6541 = vmatpush2.xpose.msra.mxu0 0.0
  %6542 = vmatprep.subr.mxu0 0.0
  %6543 = vmatpush2.xpose.msra.mxu0 0.0
  %6544 = vmatprep.mubr.f32.mxu0 0.0
  %6545 = vmatmul.mubr.f32.gmra.mxu0 %v6464
  %v6546 = vpop.f32.mrf.mxu0
  %v6547 = vadd.f32 0.0, %v6546
  %v6548 = vpop.f32.mrf.mxu0
  %6549 = vmatprep.mubr.f32.mxu0 0.0
  %6550 = vmatmul.mubr.f32.gmra.mxu0 %v6466
  %v6551 = vpop.f32.mrf.mxu0
  %v6552 = vadd.f32 0.0, %v6551
  %v6553 = vpop.f32.mrf.mxu0
  %6554 = vmatprep.mubr.f32.mxu0 0.0
  %6555 = vmatmul.mubr.f32.gmra.mxu0 %v6468
  %v6556 = vpop.f32.mrf.mxu0
  %v6557 = vadd.f32 0.0, %v6556
  %v6558 = vpop.f32.mrf.mxu0
  %6559 = vmatprep.mubr.f32.mxu0 0.0
  %6560 = vmatmul.mubr.f32.gmra.mxu0 %v6470
  %v6561 = vpop.f32.mrf.mxu0
  %v6562 = vadd.f32 0.0, %v6561
  %v6563 = vpop.f32.mrf.mxu0
  %6564 = vdwg.mxu0
  %v6565 = vsel %vm410, %v6547, -inf
  %6566 = vmax.xlane.f32.xlu0 %v6565
  %v6567 = vpop.xlane.xlu0 %6566
  %v6568 = vsel %vm410, %v6552, -inf
  %6569 = vmax.xlane.f32.xlu0 %v6568
  %v6570 = vpop.xlane.xlu0 %6569
  %v6571 = vsel %vm410, %v6557, -inf
  %6572 = vmax.xlane.f32.xlu0 %v6571
  %v6573 = vpop.xlane.xlu0 %6572
  %v6574 = vsel %vm410, %v6562, -inf
  %6575 = vmax.xlane.f32.xlu0 %v6574
  %v6576 = vpop.xlane.xlu0 %6575
  %v6577 = vsub.f32 %v6547, %v6567
  %v6578 = vsub.f32 %v6552, %v6570
  %v6579 = vsub.f32 %v6557, %v6573
  %v6580 = vsub.f32 %v6562, %v6576
  %v6581 = vmul.f32 %v6577, 1.442695
  %v6582 = vpow.pop %v6581
  %v6583 = vmul.f32 %v6578, 1.442695
  %v6584 = vpow.pop %v6583
  %v6585 = vmul.f32 %v6579, 1.442695
  %v6586 = vpow.pop %v6585
  %v6587 = vmul.f32 %v6580, 1.442695
  %v6588 = vpow.pop %v6587
  %v6589 = vsel %vm410, %v6582, 0.0
  %6590 = vadd.xlane.f32.xlu0 %v6589
  %v6591 = vpop.xlane.xlu0 %6590
  %v6592 = vsel %vm410, %v6584, 0.0
  %6593 = vadd.xlane.f32.xlu0 %v6592
  %v6594 = vpop.xlane.xlu0 %6593
  %v6595 = vsel %vm410, %v6586, 0.0
  %6596 = vadd.xlane.f32.xlu0 %v6595
  %v6597 = vpop.xlane.xlu0 %6596
  %v6598 = vsel %vm410, %v6588, 0.0
  %6599 = vadd.xlane.f32.xlu0 %v6598
  %v6600 = vpop.xlane.xlu0 %6599
  %v6601 = vrcp.pop %v6591
  %v6602 = vrcp.pop %v6594
  %v6603 = vrcp.pop %v6597
  %v6604 = vrcp.pop %v6600
  %v6605 = vmul.f32 %v6582, %v6601
  %v6606 = vmul.f32 %v6584, %v6602
  %v6607 = vmul.f32 %v6586, %v6603
  %v6608 = vmul.f32 %v6588, %v6604
  %6609 = vrot.lane.b32.xlu0 %v6158, 80
  %v6610 = vpop.permute.xlu0 %6609
  %6611 = vrot.lane.b32.xlu0 %v6164, 80
  %v6612 = vpop.permute.xlu0 %6611
  %6613 = vrot.lane.b32.xlu0 %v6170, 80
  %v6614 = vpop.permute.xlu0 %6613
  %6615 = vrot.lane.b32.xlu0 %v6176, 80
  %v6616 = vpop.permute.xlu0 %6615
  %v6622 = vsel %vm410, %v6605, 0
  %v6625 = vsel %vm410, %v6606, 0
  %v6628 = vsel %vm410, %v6607, 0
  %v6631 = vsel %vm410, %v6608, 0
  %6633 = vmatprep.subr.mxu0 0.0
  %6634 = vmatpush1.msra.mxu0 0.0
  %6635 = vmatprep.subr.mxu0 0.0
  %6636 = vmatpush1.msra.mxu0 0.0
  %6637 = vmatprep.subr.mxu0 0.0
  %6638 = vmatpush1.msra.mxu0 0.0
  %6639 = vmatprep.subr.mxu0 0.0
  %6640 = vmatpush1.msra.mxu0 0.0
  %6641 = vmatprep.subr.mxu0 0.0
  %6642 = vmatpush1.msra.mxu0 0.0
  %6643 = vmatprep.subr.mxu0 0.0
  %6644 = vmatpush1.msra.mxu0 0.0
  %6645 = vmatprep.subr.mxu0 0.0
  %6646 = vmatpush1.msra.mxu0 0.0
  %6647 = vmatprep.subr.mxu0 0.0
  %6648 = vmatpush1.msra.mxu0 0.0
  %6649 = vmatprep.subr.mxu0 0.0
  %6650 = vmatpush1.msra.mxu0 0.0
  %6651 = vmatprep.subr.mxu0 0.0
  %6652 = vmatpush1.msra.mxu0 0.0
  %6653 = vmatprep.subr.mxu0 0.0
  %6654 = vmatpush1.msra.mxu0 0.0
  %6655 = vmatprep.subr.mxu0 0.0
  %6656 = vmatpush1.msra.mxu0 0.0
  %6657 = vmatprep.subr.mxu0 0.0
  %6658 = vmatpush1.msra.mxu0 %v6616
  %6659 = vmatprep.subr.mxu0 0.0
  %6660 = vmatpush1.msra.mxu0 %v6614
  %6661 = vmatprep.subr.mxu0 0.0
  %6662 = vmatpush1.msra.mxu0 %v6612
  %6663 = vmatprep.subr.mxu0 0.0
  %6664 = vmatpush1.msra.mxu0 %v6610
  %6665 = vmatprep.subr.mxu0 0.0
  %6666 = vmatpush2.msra.mxu0 0.0
  %6667 = vmatprep.subr.mxu0 0.0
  %6668 = vmatpush2.msra.mxu0 0.0
  %6669 = vmatprep.subr.mxu0 0.0
  %6670 = vmatpush2.msra.mxu0 0.0
  %6671 = vmatprep.subr.mxu0 0.0
  %6672 = vmatpush2.msra.mxu0 0.0
  %6673 = vmatprep.subr.mxu0 0.0
  %6674 = vmatpush2.msra.mxu0 0.0
  %6675 = vmatprep.subr.mxu0 0.0
  %6676 = vmatpush2.msra.mxu0 0.0
  %6677 = vmatprep.subr.mxu0 0.0
  %6678 = vmatpush2.msra.mxu0 0.0
  %6679 = vmatprep.subr.mxu0 0.0
  %6680 = vmatpush2.msra.mxu0 0.0
  %6681 = vmatprep.subr.mxu0 0.0
  %6682 = vmatpush2.msra.mxu0 0.0
  %6683 = vmatprep.subr.mxu0 0.0
  %6684 = vmatpush2.msra.mxu0 0.0
  %6685 = vmatprep.subr.mxu0 0.0
  %6686 = vmatpush2.msra.mxu0 0.0
  %6687 = vmatprep.subr.mxu0 0.0
  %6688 = vmatpush2.msra.mxu0 0.0
  %6689 = vmatprep.subr.mxu0 0.0
  %6690 = vmatpush2.msra.mxu0 0.0
  %6691 = vmatprep.subr.mxu0 0.0
  %6692 = vmatpush2.msra.mxu0 0.0
  %6693 = vmatprep.subr.mxu0 0.0
  %6694 = vmatpush2.msra.mxu0 0.0
  %6695 = vmatprep.subr.mxu0 0.0
  %6696 = vmatpush2.msra.mxu0 0.0
  %6697 = vmatprep.mubr.f32.mxu0 0.0
  %6698 = vmatmul.mubr.f32.gmra.mxu0 %v6622
  %v6699 = vpop.f32.mrf.mxu0
  %v6700 = vadd.f32 0.0, %v6699
  %v6701 = vpop.f32.mrf.mxu0
  %6702 = vmatprep.mubr.f32.mxu0 0.0
  %6703 = vmatmul.mubr.f32.gmra.mxu0 %v6625
  %v6704 = vpop.f32.mrf.mxu0
  %v6705 = vadd.f32 0.0, %v6704
  %v6706 = vpop.f32.mrf.mxu0
  %6707 = vmatprep.mubr.f32.mxu0 0.0
  %6708 = vmatmul.mubr.f32.gmra.mxu0 %v6628
  %v6709 = vpop.f32.mrf.mxu0
  %v6710 = vadd.f32 0.0, %v6709
  %v6711 = vpop.f32.mrf.mxu0
  %6712 = vmatprep.mubr.f32.mxu0 0.0
  %6713 = vmatmul.mubr.f32.gmra.mxu0 %v6631
  %v6714 = vpop.f32.mrf.mxu0
  %v6715 = vadd.f32 0.0, %v6714
  %v6716 = vpop.f32.mrf.mxu0
  %6717 = vdwg.mxu0
  %v6719 = vsel %vm148, %v6700, 0
  %v6722 = vsel %vm148, %v6705, 0
  %v6725 = vsel %vm148, %v6710, 0
  %v6728 = vsel %vm148, %v6715, 0
  %6730 = vmatprep.subr.mxu0 0.0
  %6731 = vmatpush1.msra.mxu0 0.0
  %6732 = vmatprep.subr.mxu0 0.0
  %6733 = vmatpush1.msra.mxu0 0.0
  %6734 = vmatprep.subr.mxu0 0.0
  %6735 = vmatpush1.msra.mxu0 0.0
  %6736 = vmatprep.subr.mxu0 0.0
  %6737 = vmatpush1.msra.mxu0 0.0
  %6738 = vmatprep.subr.mxu0 0.0
  %6739 = vmatpush1.msra.mxu0 0.0
  %6740 = vmatprep.subr.mxu0 0.0
  %6741 = vmatpush1.msra.mxu0 0.0
  %6742 = vmatprep.subr.mxu0 0.0
  %6743 = vmatpush1.msra.mxu0 0.0
  %6744 = vmatprep.subr.mxu0 0.0
  %6745 = vmatpush1.msra.mxu0 0.0
  %6746 = vmatprep.subr.mxu0 0.0
  %6747 = vmatpush1.msra.mxu0 0.0
  %6748 = vmatprep.subr.mxu0 0.0
  %6749 = vmatpush1.msra.mxu0 0.0
  %6750 = vmatprep.subr.mxu0 0.0
  %6751 = vmatpush1.msra.mxu0 0.0
  %6752 = vmatprep.subr.mxu0 0.0
  %6753 = vmatpush1.msra.mxu0 0.0
  %6754 = vmatprep.subr.mxu0 0.0
  %6755 = vmatpush1.msra.mxu0 0.0
  %6756 = vmatprep.subr.mxu0 0.0
  %6757 = vmatpush1.msra.mxu0 0.0
  %6758 = vmatprep.subr.mxu0 0.0
  %6759 = vmatpush1.msra.mxu0 %v119
  %6760 = vmatprep.subr.mxu0 0.0
  %6761 = vmatpush1.msra.mxu0 %v118
  %6762 = vmatprep.subr.mxu0 0.0
  %6763 = vmatpush2.msra.mxu0 0.0
  %6764 = vmatprep.subr.mxu0 0.0
  %6765 = vmatpush2.msra.mxu0 0.0
  %6766 = vmatprep.subr.mxu0 0.0
  %6767 = vmatpush2.msra.mxu0 0.0
  %6768 = vmatprep.subr.mxu0 0.0
  %6769 = vmatpush2.msra.mxu0 0.0
  %6770 = vmatprep.subr.mxu0 0.0
  %6771 = vmatpush2.msra.mxu0 0.0
  %6772 = vmatprep.subr.mxu0 0.0
  %6773 = vmatpush2.msra.mxu0 0.0
  %6774 = vmatprep.subr.mxu0 0.0
  %6775 = vmatpush2.msra.mxu0 0.0
  %6776 = vmatprep.subr.mxu0 0.0
  %6777 = vmatpush2.msra.mxu0 0.0
  %6778 = vmatprep.subr.mxu0 0.0
  %6779 = vmatpush2.msra.mxu0 0.0
  %6780 = vmatprep.subr.mxu0 0.0
  %6781 = vmatpush2.msra.mxu0 0.0
  %6782 = vmatprep.subr.mxu0 0.0
  %6783 = vmatpush2.msra.mxu0 0.0
  %6784 = vmatprep.subr.mxu0 0.0
  %6785 = vmatpush2.msra.mxu0 0.0
  %6786 = vmatprep.subr.mxu0 0.0
  %6787 = vmatpush2.msra.mxu0 0.0
  %6788 = vmatprep.subr.mxu0 0.0
  %6789 = vmatpush2.msra.mxu0 0.0
  %6790 = vmatprep.subr.mxu0 0.0
  %6791 = vmatpush2.msra.mxu0 0.0
  %6792 = vmatprep.subr.mxu0 0.0
  %6793 = vmatpush2.msra.mxu0 0.0
  %6794 = vmatprep.mubr.f32.mxu0 0.0
  %6795 = vmatmul.mubr.f32.gmra.mxu0 %v6719
  %v6796 = vpop.f32.mrf.mxu0
  %v6797 = vadd.f32 0.0, %v6796
  %v6798 = vpop.f32.mrf.mxu0
  %6799 = vmatprep.mubr.f32.mxu0 0.0
  %6800 = vmatmul.mubr.f32.gmra.mxu0 %v6722
  %v6801 = vpop.f32.mrf.mxu0
  %v6802 = vadd.f32 0.0, %v6801
  %v6803 = vpop.f32.mrf.mxu0
  %6804 = vmatprep.mubr.f32.mxu0 0.0
  %6805 = vmatmul.mubr.f32.gmra.mxu0 %v6725
  %v6806 = vpop.f32.mrf.mxu0
  %v6807 = vadd.f32 0.0, %v6806
  %v6808 = vpop.f32.mrf.mxu0
  %6809 = vmatprep.mubr.f32.mxu0 0.0
  %6810 = vmatmul.mubr.f32.gmra.mxu0 %v6728
  %v6811 = vpop.f32.mrf.mxu0
  %v6812 = vadd.f32 0.0, %v6811
  %v6813 = vpop.f32.mrf.mxu0
  %6814 = vdwg.mxu0
  %v6816 = vsel %vm148, %v6430, 0
  %v6819 = vsel %vm148, %v6435, 0
  %v6822 = vsel %vm148, %v6440, 0
  %v6825 = vsel %vm148, %v6445, 0
  %6827 = vmatprep.subr.mxu0 0.0
  %6828 = vmatpush1.msra.mxu0 0.0
  %6829 = vmatprep.subr.mxu0 0.0
  %6830 = vmatpush1.msra.mxu0 0.0
  %6831 = vmatprep.subr.mxu0 0.0
  %6832 = vmatpush1.msra.mxu0 0.0
  %6833 = vmatprep.subr.mxu0 0.0
  %6834 = vmatpush1.msra.mxu0 0.0
  %6835 = vmatprep.subr.mxu0 0.0
  %6836 = vmatpush1.msra.mxu0 0.0
  %6837 = vmatprep.subr.mxu0 0.0
  %6838 = vmatpush1.msra.mxu0 0.0
  %6839 = vmatprep.subr.mxu0 0.0
  %6840 = vmatpush1.msra.mxu0 0.0
  %6841 = vmatprep.subr.mxu0 0.0
  %6842 = vmatpush1.msra.mxu0 0.0
  %6843 = vmatprep.subr.mxu0 0.0
  %6844 = vmatpush1.msra.mxu0 0.0
  %6845 = vmatprep.subr.mxu0 0.0
  %6846 = vmatpush1.msra.mxu0 0.0
  %6847 = vmatprep.subr.mxu0 0.0
  %6848 = vmatpush1.msra.mxu0 0.0
  %6849 = vmatprep.subr.mxu0 0.0
  %6850 = vmatpush1.msra.mxu0 0.0
  %6851 = vmatprep.subr.mxu0 0.0
  %6852 = vmatpush1.msra.mxu0 0.0
  %6853 = vmatprep.subr.mxu0 0.0
  %6854 = vmatpush1.msra.mxu0 0.0
  %6855 = vmatprep.subr.mxu0 0.0
  %6856 = vmatpush1.msra.mxu0 %v117
  %6857 = vmatprep.subr.mxu0 0.0
  %6858 = vmatpush1.msra.mxu0 %v116
  %6859 = vmatprep.subr.mxu0 0.0
  %6860 = vmatpush2.msra.mxu0 0.0
  %6861 = vmatprep.subr.mxu0 0.0
  %6862 = vmatpush2.msra.mxu0 0.0
  %6863 = vmatprep.subr.mxu0 0.0
  %6864 = vmatpush2.msra.mxu0 0.0
  %6865 = vmatprep.subr.mxu0 0.0
  %6866 = vmatpush2.msra.mxu0 0.0
  %6867 = vmatprep.subr.mxu0 0.0
  %6868 = vmatpush2.msra.mxu0 0.0
  %6869 = vmatprep.subr.mxu0 0.0
  %6870 = vmatpush2.msra.mxu0 0.0
  %6871 = vmatprep.subr.mxu0 0.0
  %6872 = vmatpush2.msra.mxu0 0.0
  %6873 = vmatprep.subr.mxu0 0.0
  %6874 = vmatpush2.msra.mxu0 0.0
  %6875 = vmatprep.subr.mxu0 0.0
  %6876 = vmatpush2.msra.mxu0 0.0
  %6877 = vmatprep.subr.mxu0 0.0
  %6878 = vmatpush2.msra.mxu0 0.0
  %6879 = vmatprep.subr.mxu0 0.0
  %6880 = vmatpush2.msra.mxu0 0.0
  %6881 = vmatprep.subr.mxu0 0.0
  %6882 = vmatpush2.msra.mxu0 0.0
  %6883 = vmatprep.subr.mxu0 0.0
  %6884 = vmatpush2.msra.mxu0 0.0
  %6885 = vmatprep.subr.mxu0 0.0
  %6886 = vmatpush2.msra.mxu0 0.0
  %6887 = vmatprep.subr.mxu0 0.0
  %6888 = vmatpush2.msra.mxu0 0.0
  %6889 = vmatprep.subr.mxu0 0.0
  %6890 = vmatpush2.msra.mxu0 0.0
  %6891 = vmatprep.mubr.f32.mxu0 0.0
  %6892 = vmatmul.mubr.f32.gmra.mxu0 %v6816
  %v6893 = vpop.f32.mrf.mxu0
  %v6894 = vadd.f32 %v6797, %v6893
  %v6895 = vpop.f32.mrf.mxu0
  %6896 = vmatprep.mubr.f32.mxu0 0.0
  %6897 = vmatmul.mubr.f32.gmra.mxu0 %v6819
  %v6898 = vpop.f32.mrf.mxu0
  %v6899 = vadd.f32 %v6802, %v6898
  %v6900 = vpop.f32.mrf.mxu0
  %6901 = vmatprep.mubr.f32.mxu0 0.0
  %6902 = vmatmul.mubr.f32.gmra.mxu0 %v6822
  %v6903 = vpop.f32.mrf.mxu0
  %v6904 = vadd.f32 %v6807, %v6903
  %v6905 = vpop.f32.mrf.mxu0
  %6906 = vmatprep.mubr.f32.mxu0 0.0
  %6907 = vmatmul.mubr.f32.gmra.mxu0 %v6825
  %v6908 = vpop.f32.mrf.mxu0
  %v6909 = vadd.f32 %v6812, %v6908
  %v6910 = vpop.f32.mrf.mxu0
  %6911 = vdwg.mxu0
  %6912 = vrot.lane.b32.xlu0 %v6156, 96
  %v6913 = vpop.permute.xlu0 %6912
  %6914 = vrot.lane.b32.xlu0 %v6162, 96
  %v6915 = vpop.permute.xlu0 %6914
  %6916 = vrot.lane.b32.xlu0 %v6168, 96
  %v6917 = vpop.permute.xlu0 %6916
  %6918 = vrot.lane.b32.xlu0 %v6174, 96
  %v6919 = vpop.permute.xlu0 %6918
  %6920 = vrot.lane.b32.xlu0 %v6156, 16
  %v6921 = vpop.permute.xlu0 %6920
  %6922 = vrot.lane.b32.xlu0 %v6162, 16
  %v6923 = vpop.permute.xlu0 %6922
  %6924 = vrot.lane.b32.xlu0 %v6168, 16
  %v6925 = vpop.permute.xlu0 %6924
  %6926 = vrot.lane.b32.xlu0 %v6174, 16
  %v6927 = vpop.permute.xlu0 %6926
  %v6928 = vsel %vm148, %v6913, 0
  %v6930 = vsel %vm148, %v6915, 0
  %v6932 = vsel %vm148, %v6917, 0
  %v6934 = vsel %vm148, %v6919, 0
  %v6936 = vsel %vm148, %v6921, 0
  %v6938 = vsel %vm148, %v6923, 0
  %v6940 = vsel %vm148, %v6925, 0
  %v6942 = vsel %vm148, %v6927, 0
  %6944 = vmatprep.subr.mxu0 0.0
  %6945 = vmatpush1.xpose.msra.mxu0 0.0
  %6946 = vmatprep.subr.mxu0 0.0
  %6947 = vmatpush1.xpose.msra.mxu0 0.0
  %6948 = vmatprep.subr.mxu0 0.0
  %6949 = vmatpush1.xpose.msra.mxu0 0.0
  %6950 = vmatprep.subr.mxu0 0.0
  %6951 = vmatpush1.xpose.msra.mxu0 0.0
  %6952 = vmatprep.subr.mxu0 0.0
  %6953 = vmatpush1.xpose.msra.mxu0 0.0
  %6954 = vmatprep.subr.mxu0 0.0
  %6955 = vmatpush1.xpose.msra.mxu0 0.0
  %6956 = vmatprep.subr.mxu0 0.0
  %6957 = vmatpush1.xpose.msra.mxu0 0.0
  %6958 = vmatprep.subr.mxu0 0.0
  %6959 = vmatpush1.xpose.msra.mxu0 0.0
  %6960 = vmatprep.subr.mxu0 0.0
  %6961 = vmatpush1.xpose.msra.mxu0 0.0
  %6962 = vmatprep.subr.mxu0 0.0
  %6963 = vmatpush1.xpose.msra.mxu0 0.0
  %6964 = vmatprep.subr.mxu0 0.0
  %6965 = vmatpush1.xpose.msra.mxu0 0.0
  %6966 = vmatprep.subr.mxu0 0.0
  %6967 = vmatpush1.xpose.msra.mxu0 0.0
  %6968 = vmatprep.subr.mxu0 0.0
  %6969 = vmatpush1.xpose.msra.mxu0 %v6942
  %6970 = vmatprep.subr.mxu0 0.0
  %6971 = vmatpush1.xpose.msra.mxu0 %v6940
  %6972 = vmatprep.subr.mxu0 0.0
  %6973 = vmatpush1.xpose.msra.mxu0 %v6938
  %6974 = vmatprep.subr.mxu0 0.0
  %6975 = vmatpush1.xpose.msra.mxu0 %v6936
  %6976 = vmatprep.subr.mxu0 0.0
  %6977 = vmatpush2.xpose.msra.mxu0 0.0
  %6978 = vmatprep.subr.mxu0 0.0
  %6979 = vmatpush2.xpose.msra.mxu0 0.0
  %6980 = vmatprep.subr.mxu0 0.0
  %6981 = vmatpush2.xpose.msra.mxu0 0.0
  %6982 = vmatprep.subr.mxu0 0.0
  %6983 = vmatpush2.xpose.msra.mxu0 0.0
  %6984 = vmatprep.subr.mxu0 0.0
  %6985 = vmatpush2.xpose.msra.mxu0 0.0
  %6986 = vmatprep.subr.mxu0 0.0
  %6987 = vmatpush2.xpose.msra.mxu0 0.0
  %6988 = vmatprep.subr.mxu0 0.0
  %6989 = vmatpush2.xpose.msra.mxu0 0.0
  %6990 = vmatprep.subr.mxu0 0.0
  %6991 = vmatpush2.xpose.msra.mxu0 0.0
  %6992 = vmatprep.subr.mxu0 0.0
  %6993 = vmatpush2.xpose.msra.mxu0 0.0
  %6994 = vmatprep.subr.mxu0 0.0
  %6995 = vmatpush2.xpose.msra.mxu0 0.0
  %6996 = vmatprep.subr.mxu0 0.0
  %6997 = vmatpush2.xpose.msra.mxu0 0.0
  %6998 = vmatprep.subr.mxu0 0.0
  %6999 = vmatpush2.xpose.msra.mxu0 0.0
  %7000 = vmatprep.subr.mxu0 0.0
  %7001 = vmatpush2.xpose.msra.mxu0 0.0
  %7002 = vmatprep.subr.mxu0 0.0
  %7003 = vmatpush2.xpose.msra.mxu0 0.0
  %7004 = vmatprep.subr.mxu0 0.0
  %7005 = vmatpush2.xpose.msra.mxu0 0.0
  %7006 = vmatprep.subr.mxu0 0.0
  %7007 = vmatpush2.xpose.msra.mxu0 0.0
  %7008 = vmatprep.mubr.f32.mxu0 0.0
  %7009 = vmatmul.mubr.f32.gmra.mxu0 %v6928
  %v7010 = vpop.f32.mrf.mxu0
  %v7011 = vadd.f32 0.0, %v7010
  %v7012 = vpop.f32.mrf.mxu0
  %7013 = vmatprep.mubr.f32.mxu0 0.0
  %7014 = vmatmul.mubr.f32.gmra.mxu0 %v6930
  %v7015 = vpop.f32.mrf.mxu0
  %v7016 = vadd.f32 0.0, %v7015
  %v7017 = vpop.f32.mrf.mxu0
  %7018 = vmatprep.mubr.f32.mxu0 0.0
  %7019 = vmatmul.mubr.f32.gmra.mxu0 %v6932
  %v7020 = vpop.f32.mrf.mxu0
  %v7021 = vadd.f32 0.0, %v7020
  %v7022 = vpop.f32.mrf.mxu0
  %7023 = vmatprep.mubr.f32.mxu0 0.0
  %7024 = vmatmul.mubr.f32.gmra.mxu0 %v6934
  %v7025 = vpop.f32.mrf.mxu0
  %v7026 = vadd.f32 0.0, %v7025
  %v7027 = vpop.f32.mrf.mxu0
  %7028 = vdwg.mxu0
  %v7029 = vsel %vm410, %v7011, -inf
  %7030 = vmax.xlane.f32.xlu0 %v7029
  %v7031 = vpop.xlane.xlu0 %7030
  %v7032 = vsel %vm410, %v7016, -inf
  %7033 = vmax.xlane.f32.xlu0 %v7032
  %v7034 = vpop.xlane.xlu0 %7033
  %v7035 = vsel %vm410, %v7021, -inf
  %7036 = vmax.xlane.f32.xlu0 %v7035
  %v7037 = vpop.xlane.xlu0 %7036
  %v7038 = vsel %vm410, %v7026, -inf
  %7039 = vmax.xlane.f32.xlu0 %v7038
  %v7040 = vpop.xlane.xlu0 %7039
  %v7041 = vsub.f32 %v7011, %v7031
  %v7042 = vsub.f32 %v7016, %v7034
  %v7043 = vsub.f32 %v7021, %v7037
  %v7044 = vsub.f32 %v7026, %v7040
  %v7045 = vmul.f32 %v7041, 1.442695
  %v7046 = vpow.pop %v7045
  %v7047 = vmul.f32 %v7042, 1.442695
  %v7048 = vpow.pop %v7047
  %v7049 = vmul.f32 %v7043, 1.442695
  %v7050 = vpow.pop %v7049
  %v7051 = vmul.f32 %v7044, 1.442695
  %v7052 = vpow.pop %v7051
  %v7053 = vsel %vm410, %v7046, 0.0
  %7054 = vadd.xlane.f32.xlu0 %v7053
  %v7055 = vpop.xlane.xlu0 %7054
  %v7056 = vsel %vm410, %v7048, 0.0
  %7057 = vadd.xlane.f32.xlu0 %v7056
  %v7058 = vpop.xlane.xlu0 %7057
  %v7059 = vsel %vm410, %v7050, 0.0
  %7060 = vadd.xlane.f32.xlu0 %v7059
  %v7061 = vpop.xlane.xlu0 %7060
  %v7062 = vsel %vm410, %v7052, 0.0
  %7063 = vadd.xlane.f32.xlu0 %v7062
  %v7064 = vpop.xlane.xlu0 %7063
  %v7065 = vrcp.pop %v7055
  %v7066 = vrcp.pop %v7058
  %v7067 = vrcp.pop %v7061
  %v7068 = vrcp.pop %v7064
  %v7069 = vmul.f32 %v7046, %v7065
  %v7070 = vmul.f32 %v7048, %v7066
  %v7071 = vmul.f32 %v7050, %v7067
  %v7072 = vmul.f32 %v7052, %v7068
  %7073 = vrot.lane.b32.xlu0 %v6158, 64
  %v7074 = vpop.permute.xlu0 %7073
  %7075 = vrot.lane.b32.xlu0 %v6164, 64
  %v7076 = vpop.permute.xlu0 %7075
  %7077 = vrot.lane.b32.xlu0 %v6170, 64
  %v7078 = vpop.permute.xlu0 %7077
  %7079 = vrot.lane.b32.xlu0 %v6176, 64
  %v7080 = vpop.permute.xlu0 %7079
  %v7086 = vsel %vm410, %v7069, 0
  %v7089 = vsel %vm410, %v7070, 0
  %v7092 = vsel %vm410, %v7071, 0
  %v7095 = vsel %vm410, %v7072, 0
  %7097 = vmatprep.subr.mxu0 0.0
  %7098 = vmatpush1.msra.mxu0 0.0
  %7099 = vmatprep.subr.mxu0 0.0
  %7100 = vmatpush1.msra.mxu0 0.0
  %7101 = vmatprep.subr.mxu0 0.0
  %7102 = vmatpush1.msra.mxu0 0.0
  %7103 = vmatprep.subr.mxu0 0.0
  %7104 = vmatpush1.msra.mxu0 0.0
  %7105 = vmatprep.subr.mxu0 0.0
  %7106 = vmatpush1.msra.mxu0 0.0
  %7107 = vmatprep.subr.mxu0 0.0
  %7108 = vmatpush1.msra.mxu0 0.0
  %7109 = vmatprep.subr.mxu0 0.0
  %7110 = vmatpush1.msra.mxu0 0.0
  %7111 = vmatprep.subr.mxu0 0.0
  %7112 = vmatpush1.msra.mxu0 0.0
  %7113 = vmatprep.subr.mxu0 0.0
  %7114 = vmatpush1.msra.mxu0 0.0
  %7115 = vmatprep.subr.mxu0 0.0
  %7116 = vmatpush1.msra.mxu0 0.0
  %7117 = vmatprep.subr.mxu0 0.0
  %7118 = vmatpush1.msra.mxu0 0.0
  %7119 = vmatprep.subr.mxu0 0.0
  %7120 = vmatpush1.msra.mxu0 0.0
  %7121 = vmatprep.subr.mxu0 0.0
  %7122 = vmatpush1.msra.mxu0 %v7080
  %7123 = vmatprep.subr.mxu0 0.0
  %7124 = vmatpush1.msra.mxu0 %v7078
  %7125 = vmatprep.subr.mxu0 0.0
  %7126 = vmatpush1.msra.mxu0 %v7076
  %7127 = vmatprep.subr.mxu0 0.0
  %7128 = vmatpush1.msra.mxu0 %v7074
  %7129 = vmatprep.subr.mxu0 0.0
  %7130 = vmatpush2.msra.mxu0 0.0
  %7131 = vmatprep.subr.mxu0 0.0
  %7132 = vmatpush2.msra.mxu0 0.0
  %7133 = vmatprep.subr.mxu0 0.0
  %7134 = vmatpush2.msra.mxu0 0.0
  %7135 = vmatprep.subr.mxu0 0.0
  %7136 = vmatpush2.msra.mxu0 0.0
  %7137 = vmatprep.subr.mxu0 0.0
  %7138 = vmatpush2.msra.mxu0 0.0
  %7139 = vmatprep.subr.mxu0 0.0
  %7140 = vmatpush2.msra.mxu0 0.0
  %7141 = vmatprep.subr.mxu0 0.0
  %7142 = vmatpush2.msra.mxu0 0.0
  %7143 = vmatprep.subr.mxu0 0.0
  %7144 = vmatpush2.msra.mxu0 0.0
  %7145 = vmatprep.subr.mxu0 0.0
  %7146 = vmatpush2.msra.mxu0 0.0
  %7147 = vmatprep.subr.mxu0 0.0
  %7148 = vmatpush2.msra.mxu0 0.0
  %7149 = vmatprep.subr.mxu0 0.0
  %7150 = vmatpush2.msra.mxu0 0.0
  %7151 = vmatprep.subr.mxu0 0.0
  %7152 = vmatpush2.msra.mxu0 0.0
  %7153 = vmatprep.subr.mxu0 0.0
  %7154 = vmatpush2.msra.mxu0 0.0
  %7155 = vmatprep.subr.mxu0 0.0
  %7156 = vmatpush2.msra.mxu0 0.0
  %7157 = vmatprep.subr.mxu0 0.0
  %7158 = vmatpush2.msra.mxu0 0.0
  %7159 = vmatprep.subr.mxu0 0.0
  %7160 = vmatpush2.msra.mxu0 0.0
  %7161 = vmatprep.mubr.f32.mxu0 0.0
  %7162 = vmatmul.mubr.f32.gmra.mxu0 %v7086
  %v7163 = vpop.f32.mrf.mxu0
  %v7164 = vadd.f32 0.0, %v7163
  %v7165 = vpop.f32.mrf.mxu0
  %7166 = vmatprep.mubr.f32.mxu0 0.0
  %7167 = vmatmul.mubr.f32.gmra.mxu0 %v7089
  %v7168 = vpop.f32.mrf.mxu0
  %v7169 = vadd.f32 0.0, %v7168
  %v7170 = vpop.f32.mrf.mxu0
  %7171 = vmatprep.mubr.f32.mxu0 0.0
  %7172 = vmatmul.mubr.f32.gmra.mxu0 %v7092
  %v7173 = vpop.f32.mrf.mxu0
  %v7174 = vadd.f32 0.0, %v7173
  %v7175 = vpop.f32.mrf.mxu0
  %7176 = vmatprep.mubr.f32.mxu0 0.0
  %7177 = vmatmul.mubr.f32.gmra.mxu0 %v7095
  %v7178 = vpop.f32.mrf.mxu0
  %v7179 = vadd.f32 0.0, %v7178
  %v7180 = vpop.f32.mrf.mxu0
  %7181 = vdwg.mxu0
  %v7183 = vsel %vm148, %v7164, 0
  %v7186 = vsel %vm148, %v7169, 0
  %v7189 = vsel %vm148, %v7174, 0
  %v7192 = vsel %vm148, %v7179, 0
  %7194 = vmatprep.subr.mxu0 0.0
  %7195 = vmatpush1.msra.mxu0 0.0
  %7196 = vmatprep.subr.mxu0 0.0
  %7197 = vmatpush1.msra.mxu0 0.0
  %7198 = vmatprep.subr.mxu0 0.0
  %7199 = vmatpush1.msra.mxu0 0.0
  %7200 = vmatprep.subr.mxu0 0.0
  %7201 = vmatpush1.msra.mxu0 0.0
  %7202 = vmatprep.subr.mxu0 0.0
  %7203 = vmatpush1.msra.mxu0 0.0
  %7204 = vmatprep.subr.mxu0 0.0
  %7205 = vmatpush1.msra.mxu0 0.0
  %7206 = vmatprep.subr.mxu0 0.0
  %7207 = vmatpush1.msra.mxu0 0.0
  %7208 = vmatprep.subr.mxu0 0.0
  %7209 = vmatpush1.msra.mxu0 0.0
  %7210 = vmatprep.subr.mxu0 0.0
  %7211 = vmatpush1.msra.mxu0 0.0
  %7212 = vmatprep.subr.mxu0 0.0
  %7213 = vmatpush1.msra.mxu0 0.0
  %7214 = vmatprep.subr.mxu0 0.0
  %7215 = vmatpush1.msra.mxu0 0.0
  %7216 = vmatprep.subr.mxu0 0.0
  %7217 = vmatpush1.msra.mxu0 0.0
  %7218 = vmatprep.subr.mxu0 0.0
  %7219 = vmatpush1.msra.mxu0 0.0
  %7220 = vmatprep.subr.mxu0 0.0
  %7221 = vmatpush1.msra.mxu0 0.0
  %7222 = vmatprep.subr.mxu0 0.0
  %7223 = vmatpush1.msra.mxu0 %v121
  %7224 = vmatprep.subr.mxu0 0.0
  %7225 = vmatpush1.msra.mxu0 %v120
  %7226 = vmatprep.subr.mxu0 0.0
  %7227 = vmatpush2.msra.mxu0 0.0
  %7228 = vmatprep.subr.mxu0 0.0
  %7229 = vmatpush2.msra.mxu0 0.0
  %7230 = vmatprep.subr.mxu0 0.0
  %7231 = vmatpush2.msra.mxu0 0.0
  %7232 = vmatprep.subr.mxu0 0.0
  %7233 = vmatpush2.msra.mxu0 0.0
  %7234 = vmatprep.subr.mxu0 0.0
  %7235 = vmatpush2.msra.mxu0 0.0
  %7236 = vmatprep.subr.mxu0 0.0
  %7237 = vmatpush2.msra.mxu0 0.0
  %7238 = vmatprep.subr.mxu0 0.0
  %7239 = vmatpush2.msra.mxu0 0.0
  %7240 = vmatprep.subr.mxu0 0.0
  %7241 = vmatpush2.msra.mxu0 0.0
  %7242 = vmatprep.subr.mxu0 0.0
  %7243 = vmatpush2.msra.mxu0 0.0
  %7244 = vmatprep.subr.mxu0 0.0
  %7245 = vmatpush2.msra.mxu0 0.0
  %7246 = vmatprep.subr.mxu0 0.0
  %7247 = vmatpush2.msra.mxu0 0.0
  %7248 = vmatprep.subr.mxu0 0.0
  %7249 = vmatpush2.msra.mxu0 0.0
  %7250 = vmatprep.subr.mxu0 0.0
  %7251 = vmatpush2.msra.mxu0 0.0
  %7252 = vmatprep.subr.mxu0 0.0
  %7253 = vmatpush2.msra.mxu0 0.0
  %7254 = vmatprep.subr.mxu0 0.0
  %7255 = vmatpush2.msra.mxu0 0.0
  %7256 = vmatprep.subr.mxu0 0.0
  %7257 = vmatpush2.msra.mxu0 0.0
  %7258 = vmatprep.mubr.f32.mxu0 0.0
  %7259 = vmatmul.mubr.f32.gmra.mxu0 %v7183
  %v7260 = vpop.f32.mrf.mxu0
  %v7261 = vadd.f32 0.0, %v7260
  %v7262 = vpop.f32.mrf.mxu0
  %7263 = vmatprep.mubr.f32.mxu0 0.0
  %7264 = vmatmul.mubr.f32.gmra.mxu0 %v7186
  %v7265 = vpop.f32.mrf.mxu0
  %v7266 = vadd.f32 0.0, %v7265
  %v7267 = vpop.f32.mrf.mxu0
  %7268 = vmatprep.mubr.f32.mxu0 0.0
  %7269 = vmatmul.mubr.f32.gmra.mxu0 %v7189
  %v7270 = vpop.f32.mrf.mxu0
  %v7271 = vadd.f32 0.0, %v7270
  %v7272 = vpop.f32.mrf.mxu0
  %7273 = vmatprep.mubr.f32.mxu0 0.0
  %7274 = vmatmul.mubr.f32.gmra.mxu0 %v7192
  %v7275 = vpop.f32.mrf.mxu0
  %v7276 = vadd.f32 0.0, %v7275
  %v7277 = vpop.f32.mrf.mxu0
  %7278 = vdwg.mxu0
  %v7279 = vadd.f32 %v6894, %v7261
  %v7280 = vadd.f32 %v6899, %v7266
  %v7281 = vadd.f32 %v6904, %v7271
  %v7282 = vadd.f32 %v6909, %v7276
  %7283 = vrot.lane.b32.xlu0 %v6156, 80
  %v7284 = vpop.permute.xlu0 %7283
  %7285 = vrot.lane.b32.xlu0 %v6162, 80
  %v7286 = vpop.permute.xlu0 %7285
  %7287 = vrot.lane.b32.xlu0 %v6168, 80
  %v7288 = vpop.permute.xlu0 %7287
  %7289 = vrot.lane.b32.xlu0 %v6174, 80
  %v7290 = vpop.permute.xlu0 %7289
  %v7291 = vsel %vm148, %v7284, 0
  %v7293 = vsel %vm148, %v7286, 0
  %v7295 = vsel %vm148, %v7288, 0
  %v7297 = vsel %vm148, %v7290, 0
  %v7299 = vsel %vm148, %v6158, 0
  %v7301 = vsel %vm148, %v6164, 0
  %v7303 = vsel %vm148, %v6170, 0
  %v7305 = vsel %vm148, %v6176, 0
  %7307 = vmatprep.subr.mxu0 0.0
  %7308 = vmatpush1.xpose.msra.mxu0 0.0
  %7309 = vmatprep.subr.mxu0 0.0
  %7310 = vmatpush1.xpose.msra.mxu0 0.0
  %7311 = vmatprep.subr.mxu0 0.0
  %7312 = vmatpush1.xpose.msra.mxu0 0.0
  %7313 = vmatprep.subr.mxu0 0.0
  %7314 = vmatpush1.xpose.msra.mxu0 0.0
  %7315 = vmatprep.subr.mxu0 0.0
  %7316 = vmatpush1.xpose.msra.mxu0 0.0
  %7317 = vmatprep.subr.mxu0 0.0
  %7318 = vmatpush1.xpose.msra.mxu0 0.0
  %7319 = vmatprep.subr.mxu0 0.0
  %7320 = vmatpush1.xpose.msra.mxu0 0.0
  %7321 = vmatprep.subr.mxu0 0.0
  %7322 = vmatpush1.xpose.msra.mxu0 0.0
  %7323 = vmatprep.subr.mxu0 0.0
  %7324 = vmatpush1.xpose.msra.mxu0 0.0
  %7325 = vmatprep.subr.mxu0 0.0
  %7326 = vmatpush1.xpose.msra.mxu0 0.0
  %7327 = vmatprep.subr.mxu0 0.0
  %7328 = vmatpush1.xpose.msra.mxu0 0.0
  %7329 = vmatprep.subr.mxu0 0.0
  %7330 = vmatpush1.xpose.msra.mxu0 0.0
  %7331 = vmatprep.subr.mxu0 0.0
  %7332 = vmatpush1.xpose.msra.mxu0 %v7305
  %7333 = vmatprep.subr.mxu0 0.0
  %7334 = vmatpush1.xpose.msra.mxu0 %v7303
  %7335 = vmatprep.subr.mxu0 0.0
  %7336 = vmatpush1.xpose.msra.mxu0 %v7301
  %7337 = vmatprep.subr.mxu0 0.0
  %7338 = vmatpush1.xpose.msra.mxu0 %v7299
  %7339 = vmatprep.subr.mxu0 0.0
  %7340 = vmatpush2.xpose.msra.mxu0 0.0
  %7341 = vmatprep.subr.mxu0 0.0
  %7342 = vmatpush2.xpose.msra.mxu0 0.0
  %7343 = vmatprep.subr.mxu0 0.0
  %7344 = vmatpush2.xpose.msra.mxu0 0.0
  %7345 = vmatprep.subr.mxu0 0.0
  %7346 = vmatpush2.xpose.msra.mxu0 0.0
  %7347 = vmatprep.subr.mxu0 0.0
  %7348 = vmatpush2.xpose.msra.mxu0 0.0
  %7349 = vmatprep.subr.mxu0 0.0
  %7350 = vmatpush2.xpose.msra.mxu0 0.0
  %7351 = vmatprep.subr.mxu0 0.0
  %7352 = vmatpush2.xpose.msra.mxu0 0.0
  %7353 = vmatprep.subr.mxu0 0.0
  %7354 = vmatpush2.xpose.msra.mxu0 0.0
  %7355 = vmatprep.subr.mxu0 0.0
  %7356 = vmatpush2.xpose.msra.mxu0 0.0
  %7357 = vmatprep.subr.mxu0 0.0
  %7358 = vmatpush2.xpose.msra.mxu0 0.0
  %7359 = vmatprep.subr.mxu0 0.0
  %7360 = vmatpush2.xpose.msra.mxu0 0.0
  %7361 = vmatprep.subr.mxu0 0.0
  %7362 = vmatpush2.xpose.msra.mxu0 0.0
  %7363 = vmatprep.subr.mxu0 0.0
  %7364 = vmatpush2.xpose.msra.mxu0 0.0
  %7365 = vmatprep.subr.mxu0 0.0
  %7366 = vmatpush2.xpose.msra.mxu0 0.0
  %7367 = vmatprep.subr.mxu0 0.0
  %7368 = vmatpush2.xpose.msra.mxu0 0.0
  %7369 = vmatprep.subr.mxu0 0.0
  %7370 = vmatpush2.xpose.msra.mxu0 0.0
  %7371 = vmatprep.mubr.f32.mxu0 0.0
  %7372 = vmatmul.mubr.f32.gmra.mxu0 %v7291
  %v7373 = vpop.f32.mrf.mxu0
  %v7374 = vadd.f32 0.0, %v7373
  %v7375 = vpop.f32.mrf.mxu0
  %7376 = vmatprep.mubr.f32.mxu0 0.0
  %7377 = vmatmul.mubr.f32.gmra.mxu0 %v7293
  %v7378 = vpop.f32.mrf.mxu0
  %v7379 = vadd.f32 0.0, %v7378
  %v7380 = vpop.f32.mrf.mxu0
  %7381 = vmatprep.mubr.f32.mxu0 0.0
  %7382 = vmatmul.mubr.f32.gmra.mxu0 %v7295
  %v7383 = vpop.f32.mrf.mxu0
  %v7384 = vadd.f32 0.0, %v7383
  %v7385 = vpop.f32.mrf.mxu0
  %7386 = vmatprep.mubr.f32.mxu0 0.0
  %7387 = vmatmul.mubr.f32.gmra.mxu0 %v7297
  %v7388 = vpop.f32.mrf.mxu0
  %v7389 = vadd.f32 0.0, %v7388
  %v7390 = vpop.f32.mrf.mxu0
  %7391 = vdwg.mxu0
  %v7392 = vsel %vm410, %v7374, -inf
  %7393 = vmax.xlane.f32.xlu0 %v7392
  %v7394 = vpop.xlane.xlu0 %7393
  %v7395 = vsel %vm410, %v7379, -inf
  %7396 = vmax.xlane.f32.xlu0 %v7395
  %v7397 = vpop.xlane.xlu0 %7396
  %v7398 = vsel %vm410, %v7384, -inf
  %7399 = vmax.xlane.f32.xlu0 %v7398
  %v7400 = vpop.xlane.xlu0 %7399
  %v7401 = vsel %vm410, %v7389, -inf
  %7402 = vmax.xlane.f32.xlu0 %v7401
  %v7403 = vpop.xlane.xlu0 %7402
  %v7404 = vsub.f32 %v7374, %v7394
  %v7405 = vsub.f32 %v7379, %v7397
  %v7406 = vsub.f32 %v7384, %v7400
  %v7407 = vsub.f32 %v7389, %v7403
  %v7408 = vmul.f32 %v7404, 1.442695
  %v7409 = vpow.pop %v7408
  %v7410 = vmul.f32 %v7405, 1.442695
  %v7411 = vpow.pop %v7410
  %v7412 = vmul.f32 %v7406, 1.442695
  %v7413 = vpow.pop %v7412
  %v7414 = vmul.f32 %v7407, 1.442695
  %v7415 = vpow.pop %v7414
  %v7416 = vsel %vm410, %v7409, 0.0
  %7417 = vadd.xlane.f32.xlu0 %v7416
  %v7418 = vpop.xlane.xlu0 %7417
  %v7419 = vsel %vm410, %v7411, 0.0
  %7420 = vadd.xlane.f32.xlu0 %v7419
  %v7421 = vpop.xlane.xlu0 %7420
  %v7422 = vsel %vm410, %v7413, 0.0
  %7423 = vadd.xlane.f32.xlu0 %v7422
  %v7424 = vpop.xlane.xlu0 %7423
  %v7425 = vsel %vm410, %v7415, 0.0
  %7426 = vadd.xlane.f32.xlu0 %v7425
  %v7427 = vpop.xlane.xlu0 %7426
  %v7428 = vrcp.pop %v7418
  %v7429 = vrcp.pop %v7421
  %v7430 = vrcp.pop %v7424
  %v7431 = vrcp.pop %v7427
  %v7432 = vmul.f32 %v7409, %v7428
  %v7433 = vmul.f32 %v7411, %v7429
  %v7434 = vmul.f32 %v7413, %v7430
  %v7435 = vmul.f32 %v7415, %v7431
  %7436 = vrot.lane.b32.xlu0 %v6158, 48
  %v7437 = vpop.permute.xlu0 %7436
  %7438 = vrot.lane.b32.xlu0 %v6164, 48
  %v7439 = vpop.permute.xlu0 %7438
  %7440 = vrot.lane.b32.xlu0 %v6170, 48
  %v7441 = vpop.permute.xlu0 %7440
  %7442 = vrot.lane.b32.xlu0 %v6176, 48
  %v7443 = vpop.permute.xlu0 %7442
  %v7449 = vsel %vm410, %v7432, 0
  %v7452 = vsel %vm410, %v7433, 0
  %v7455 = vsel %vm410, %v7434, 0
  %v7458 = vsel %vm410, %v7435, 0
  %7460 = vmatprep.subr.mxu0 0.0
  %7461 = vmatpush1.msra.mxu0 0.0
  %7462 = vmatprep.subr.mxu0 0.0
  %7463 = vmatpush1.msra.mxu0 0.0
  %7464 = vmatprep.subr.mxu0 0.0
  %7465 = vmatpush1.msra.mxu0 0.0
  %7466 = vmatprep.subr.mxu0 0.0
  %7467 = vmatpush1.msra.mxu0 0.0
  %7468 = vmatprep.subr.mxu0 0.0
  %7469 = vmatpush1.msra.mxu0 0.0
  %7470 = vmatprep.subr.mxu0 0.0
  %7471 = vmatpush1.msra.mxu0 0.0
  %7472 = vmatprep.subr.mxu0 0.0
  %7473 = vmatpush1.msra.mxu0 0.0
  %7474 = vmatprep.subr.mxu0 0.0
  %7475 = vmatpush1.msra.mxu0 0.0
  %7476 = vmatprep.subr.mxu0 0.0
  %7477 = vmatpush1.msra.mxu0 0.0
  %7478 = vmatprep.subr.mxu0 0.0
  %7479 = vmatpush1.msra.mxu0 0.0
  %7480 = vmatprep.subr.mxu0 0.0
  %7481 = vmatpush1.msra.mxu0 0.0
  %7482 = vmatprep.subr.mxu0 0.0
  %7483 = vmatpush1.msra.mxu0 0.0
  %7484 = vmatprep.subr.mxu0 0.0
  %7485 = vmatpush1.msra.mxu0 %v7443
  %7486 = vmatprep.subr.mxu0 0.0
  %7487 = vmatpush1.msra.mxu0 %v7441
  %7488 = vmatprep.subr.mxu0 0.0
  %7489 = vmatpush1.msra.mxu0 %v7439
  %7490 = vmatprep.subr.mxu0 0.0
  %7491 = vmatpush1.msra.mxu0 %v7437
  %7492 = vmatprep.subr.mxu0 0.0
  %7493 = vmatpush2.msra.mxu0 0.0
  %7494 = vmatprep.subr.mxu0 0.0
  %7495 = vmatpush2.msra.mxu0 0.0
  %7496 = vmatprep.subr.mxu0 0.0
  %7497 = vmatpush2.msra.mxu0 0.0
  %7498 = vmatprep.subr.mxu0 0.0
  %7499 = vmatpush2.msra.mxu0 0.0
  %7500 = vmatprep.subr.mxu0 0.0
  %7501 = vmatpush2.msra.mxu0 0.0
  %7502 = vmatprep.subr.mxu0 0.0
  %7503 = vmatpush2.msra.mxu0 0.0
  %7504 = vmatprep.subr.mxu0 0.0
  %7505 = vmatpush2.msra.mxu0 0.0
  %7506 = vmatprep.subr.mxu0 0.0
  %7507 = vmatpush2.msra.mxu0 0.0
  %7508 = vmatprep.subr.mxu0 0.0
  %7509 = vmatpush2.msra.mxu0 0.0
  %7510 = vmatprep.subr.mxu0 0.0
  %7511 = vmatpush2.msra.mxu0 0.0
  %7512 = vmatprep.subr.mxu0 0.0
  %7513 = vmatpush2.msra.mxu0 0.0
  %7514 = vmatprep.subr.mxu0 0.0
  %7515 = vmatpush2.msra.mxu0 0.0
  %7516 = vmatprep.subr.mxu0 0.0
  %7517 = vmatpush2.msra.mxu0 0.0
  %7518 = vmatprep.subr.mxu0 0.0
  %7519 = vmatpush2.msra.mxu0 0.0
  %7520 = vmatprep.subr.mxu0 0.0
  %7521 = vmatpush2.msra.mxu0 0.0
  %7522 = vmatprep.subr.mxu0 0.0
  %7523 = vmatpush2.msra.mxu0 0.0
  %7524 = vmatprep.mubr.f32.mxu0 0.0
  %7525 = vmatmul.mubr.f32.gmra.mxu0 %v7449
  %v7526 = vpop.f32.mrf.mxu0
  %v7527 = vadd.f32 0.0, %v7526
  %v7528 = vpop.f32.mrf.mxu0
  %7529 = vmatprep.mubr.f32.mxu0 0.0
  %7530 = vmatmul.mubr.f32.gmra.mxu0 %v7452
  %v7531 = vpop.f32.mrf.mxu0
  %v7532 = vadd.f32 0.0, %v7531
  %v7533 = vpop.f32.mrf.mxu0
  %7534 = vmatprep.mubr.f32.mxu0 0.0
  %7535 = vmatmul.mubr.f32.gmra.mxu0 %v7455
  %v7536 = vpop.f32.mrf.mxu0
  %v7537 = vadd.f32 0.0, %v7536
  %v7538 = vpop.f32.mrf.mxu0
  %7539 = vmatprep.mubr.f32.mxu0 0.0
  %7540 = vmatmul.mubr.f32.gmra.mxu0 %v7458
  %v7541 = vpop.f32.mrf.mxu0
  %v7542 = vadd.f32 0.0, %v7541
  %v7543 = vpop.f32.mrf.mxu0
  %7544 = vdwg.mxu0
  %v7546 = vsel %vm148, %v7527, 0
  %v7549 = vsel %vm148, %v7532, 0
  %v7552 = vsel %vm148, %v7537, 0
  %v7555 = vsel %vm148, %v7542, 0
  %7557 = vmatprep.subr.mxu0 0.0
  %7558 = vmatpush1.msra.mxu0 0.0
  %7559 = vmatprep.subr.mxu0 0.0
  %7560 = vmatpush1.msra.mxu0 0.0
  %7561 = vmatprep.subr.mxu0 0.0
  %7562 = vmatpush1.msra.mxu0 0.0
  %7563 = vmatprep.subr.mxu0 0.0
  %7564 = vmatpush1.msra.mxu0 0.0
  %7565 = vmatprep.subr.mxu0 0.0
  %7566 = vmatpush1.msra.mxu0 0.0
  %7567 = vmatprep.subr.mxu0 0.0
  %7568 = vmatpush1.msra.mxu0 0.0
  %7569 = vmatprep.subr.mxu0 0.0
  %7570 = vmatpush1.msra.mxu0 0.0
  %7571 = vmatprep.subr.mxu0 0.0
  %7572 = vmatpush1.msra.mxu0 0.0
  %7573 = vmatprep.subr.mxu0 0.0
  %7574 = vmatpush1.msra.mxu0 0.0
  %7575 = vmatprep.subr.mxu0 0.0
  %7576 = vmatpush1.msra.mxu0 0.0
  %7577 = vmatprep.subr.mxu0 0.0
  %7578 = vmatpush1.msra.mxu0 0.0
  %7579 = vmatprep.subr.mxu0 0.0
  %7580 = vmatpush1.msra.mxu0 0.0
  %7581 = vmatprep.subr.mxu0 0.0
  %7582 = vmatpush1.msra.mxu0 0.0
  %7583 = vmatprep.subr.mxu0 0.0
  %7584 = vmatpush1.msra.mxu0 0.0
  %7585 = vmatprep.subr.mxu0 0.0
  %7586 = vmatpush1.msra.mxu0 %v123
  %7587 = vmatprep.subr.mxu0 0.0
  %7588 = vmatpush1.msra.mxu0 %v122
  %7589 = vmatprep.subr.mxu0 0.0
  %7590 = vmatpush2.msra.mxu0 0.0
  %7591 = vmatprep.subr.mxu0 0.0
  %7592 = vmatpush2.msra.mxu0 0.0
  %7593 = vmatprep.subr.mxu0 0.0
  %7594 = vmatpush2.msra.mxu0 0.0
  %7595 = vmatprep.subr.mxu0 0.0
  %7596 = vmatpush2.msra.mxu0 0.0
  %7597 = vmatprep.subr.mxu0 0.0
  %7598 = vmatpush2.msra.mxu0 0.0
  %7599 = vmatprep.subr.mxu0 0.0
  %7600 = vmatpush2.msra.mxu0 0.0
  %7601 = vmatprep.subr.mxu0 0.0
  %7602 = vmatpush2.msra.mxu0 0.0
  %7603 = vmatprep.subr.mxu0 0.0
  %7604 = vmatpush2.msra.mxu0 0.0
  %7605 = vmatprep.subr.mxu0 0.0
  %7606 = vmatpush2.msra.mxu0 0.0
  %7607 = vmatprep.subr.mxu0 0.0
  %7608 = vmatpush2.msra.mxu0 0.0
  %7609 = vmatprep.subr.mxu0 0.0
  %7610 = vmatpush2.msra.mxu0 0.0
  %7611 = vmatprep.subr.mxu0 0.0
  %7612 = vmatpush2.msra.mxu0 0.0
  %7613 = vmatprep.subr.mxu0 0.0
  %7614 = vmatpush2.msra.mxu0 0.0
  %7615 = vmatprep.subr.mxu0 0.0
  %7616 = vmatpush2.msra.mxu0 0.0
  %7617 = vmatprep.subr.mxu0 0.0
  %7618 = vmatpush2.msra.mxu0 0.0
  %7619 = vmatprep.subr.mxu0 0.0
  %7620 = vmatpush2.msra.mxu0 0.0
  %7621 = vmatprep.mubr.f32.mxu0 0.0
  %7622 = vmatmul.mubr.f32.gmra.mxu0 %v7546
  %v7623 = vpop.f32.mrf.mxu0
  %v7624 = vadd.f32 0.0, %v7623
  %v7625 = vpop.f32.mrf.mxu0
  %7626 = vmatprep.mubr.f32.mxu0 0.0
  %7627 = vmatmul.mubr.f32.gmra.mxu0 %v7549
  %v7628 = vpop.f32.mrf.mxu0
  %v7629 = vadd.f32 0.0, %v7628
  %v7630 = vpop.f32.mrf.mxu0
  %7631 = vmatprep.mubr.f32.mxu0 0.0
  %7632 = vmatmul.mubr.f32.gmra.mxu0 %v7552
  %v7633 = vpop.f32.mrf.mxu0
  %v7634 = vadd.f32 0.0, %v7633
  %v7635 = vpop.f32.mrf.mxu0
  %7636 = vmatprep.mubr.f32.mxu0 0.0
  %7637 = vmatmul.mubr.f32.gmra.mxu0 %v7555
  %v7638 = vpop.f32.mrf.mxu0
  %v7639 = vadd.f32 0.0, %v7638
  %v7640 = vpop.f32.mrf.mxu0
  %7641 = vdwg.mxu0
  %v7642 = vadd.f32 %v7279, %v7624
  %v7643 = vadd.f32 %v7280, %v7629
  %v7644 = vadd.f32 %v7281, %v7634
  %v7645 = vadd.f32 %v7282, %v7639
  %7646 = vrot.lane.b32.xlu0 %v6156, 64
  %v7647 = vpop.permute.xlu0 %7646
  %7648 = vrot.lane.b32.xlu0 %v6162, 64
  %v7649 = vpop.permute.xlu0 %7648
  %7650 = vrot.lane.b32.xlu0 %v6168, 64
  %v7651 = vpop.permute.xlu0 %7650
  %7652 = vrot.lane.b32.xlu0 %v6174, 64
  %v7653 = vpop.permute.xlu0 %7652
  %7654 = vrot.lane.b32.xlu0 %v6158, 112
  %v7655 = vpop.permute.xlu0 %7654
  %7656 = vrot.lane.b32.xlu0 %v6164, 112
  %v7657 = vpop.permute.xlu0 %7656
  %7658 = vrot.lane.b32.xlu0 %v6170, 112
  %v7659 = vpop.permute.xlu0 %7658
  %7660 = vrot.lane.b32.xlu0 %v6176, 112
  %v7661 = vpop.permute.xlu0 %7660
  %v7662 = vsel %vm148, %v7647, 0
  %v7664 = vsel %vm148, %v7649, 0
  %v7666 = vsel %vm148, %v7651, 0
  %v7668 = vsel %vm148, %v7653, 0
  %v7670 = vsel %vm148, %v7655, 0
  %v7672 = vsel %vm148, %v7657, 0
  %v7674 = vsel %vm148, %v7659, 0
  %v7676 = vsel %vm148, %v7661, 0
  %7678 = vmatprep.subr.mxu0 0.0
  %7679 = vmatpush1.xpose.msra.mxu0 0.0
  %7680 = vmatprep.subr.mxu0 0.0
  %7681 = vmatpush1.xpose.msra.mxu0 0.0
  %7682 = vmatprep.subr.mxu0 0.0
  %7683 = vmatpush1.xpose.msra.mxu0 0.0
  %7684 = vmatprep.subr.mxu0 0.0
  %7685 = vmatpush1.xpose.msra.mxu0 0.0
  %7686 = vmatprep.subr.mxu0 0.0
  %7687 = vmatpush1.xpose.msra.mxu0 0.0
  %7688 = vmatprep.subr.mxu0 0.0
  %7689 = vmatpush1.xpose.msra.mxu0 0.0
  %7690 = vmatprep.subr.mxu0 0.0
  %7691 = vmatpush1.xpose.msra.mxu0 0.0
  %7692 = vmatprep.subr.mxu0 0.0
  %7693 = vmatpush1.xpose.msra.mxu0 0.0
  %7694 = vmatprep.subr.mxu0 0.0
  %7695 = vmatpush1.xpose.msra.mxu0 0.0
  %7696 = vmatprep.subr.mxu0 0.0
  %7697 = vmatpush1.xpose.msra.mxu0 0.0
  %7698 = vmatprep.subr.mxu0 0.0
  %7699 = vmatpush1.xpose.msra.mxu0 0.0
  %7700 = vmatprep.subr.mxu0 0.0
  %7701 = vmatpush1.xpose.msra.mxu0 0.0
  %7702 = vmatprep.subr.mxu0 0.0
  %7703 = vmatpush1.xpose.msra.mxu0 %v7676
  %7704 = vmatprep.subr.mxu0 0.0
  %7705 = vmatpush1.xpose.msra.mxu0 %v7674
  %7706 = vmatprep.subr.mxu0 0.0
  %7707 = vmatpush1.xpose.msra.mxu0 %v7672
  %7708 = vmatprep.subr.mxu0 0.0
  %7709 = vmatpush1.xpose.msra.mxu0 %v7670
  %7710 = vmatprep.subr.mxu0 0.0
  %7711 = vmatpush2.xpose.msra.mxu0 0.0
  %7712 = vmatprep.subr.mxu0 0.0
  %7713 = vmatpush2.xpose.msra.mxu0 0.0
  %7714 = vmatprep.subr.mxu0 0.0
  %7715 = vmatpush2.xpose.msra.mxu0 0.0
  %7716 = vmatprep.subr.mxu0 0.0
  %7717 = vmatpush2.xpose.msra.mxu0 0.0
  %7718 = vmatprep.subr.mxu0 0.0
  %7719 = vmatpush2.xpose.msra.mxu0 0.0
  %7720 = vmatprep.subr.mxu0 0.0
  %7721 = vmatpush2.xpose.msra.mxu0 0.0
  %7722 = vmatprep.subr.mxu0 0.0
  %7723 = vmatpush2.xpose.msra.mxu0 0.0
  %7724 = vmatprep.subr.mxu0 0.0
  %7725 = vmatpush2.xpose.msra.mxu0 0.0
  %7726 = vmatprep.subr.mxu0 0.0
  %7727 = vmatpush2.xpose.msra.mxu0 0.0
  %7728 = vmatprep.subr.mxu0 0.0
  %7729 = vmatpush2.xpose.msra.mxu0 0.0
  %7730 = vmatprep.subr.mxu0 0.0
  %7731 = vmatpush2.xpose.msra.mxu0 0.0
  %7732 = vmatprep.subr.mxu0 0.0
  %7733 = vmatpush2.xpose.msra.mxu0 0.0
  %7734 = vmatprep.subr.mxu0 0.0
  %7735 = vmatpush2.xpose.msra.mxu0 0.0
  %7736 = vmatprep.subr.mxu0 0.0
  %7737 = vmatpush2.xpose.msra.mxu0 0.0
  %7738 = vmatprep.subr.mxu0 0.0
  %7739 = vmatpush2.xpose.msra.mxu0 0.0
  %7740 = vmatprep.subr.mxu0 0.0
  %7741 = vmatpush2.xpose.msra.mxu0 0.0
  %7742 = vmatprep.mubr.f32.mxu0 0.0
  %7743 = vmatmul.mubr.f32.gmra.mxu0 %v7662
  %v7744 = vpop.f32.mrf.mxu0
  %v7745 = vadd.f32 0.0, %v7744
  %v7746 = vpop.f32.mrf.mxu0
  %7747 = vmatprep.mubr.f32.mxu0 0.0
  %7748 = vmatmul.mubr.f32.gmra.mxu0 %v7664
  %v7749 = vpop.f32.mrf.mxu0
  %v7750 = vadd.f32 0.0, %v7749
  %v7751 = vpop.f32.mrf.mxu0
  %7752 = vmatprep.mubr.f32.mxu0 0.0
  %7753 = vmatmul.mubr.f32.gmra.mxu0 %v7666
  %v7754 = vpop.f32.mrf.mxu0
  %v7755 = vadd.f32 0.0, %v7754
  %v7756 = vpop.f32.mrf.mxu0
  %7757 = vmatprep.mubr.f32.mxu0 0.0
  %7758 = vmatmul.mubr.f32.gmra.mxu0 %v7668
  %v7759 = vpop.f32.mrf.mxu0
  %v7760 = vadd.f32 0.0, %v7759
  %v7761 = vpop.f32.mrf.mxu0
  %7762 = vdwg.mxu0
  %v7763 = vsel %vm410, %v7745, -inf
  %7764 = vmax.xlane.f32.xlu0 %v7763
  %v7765 = vpop.xlane.xlu0 %7764
  %v7766 = vsel %vm410, %v7750, -inf
  %7767 = vmax.xlane.f32.xlu0 %v7766
  %v7768 = vpop.xlane.xlu0 %7767
  %v7769 = vsel %vm410, %v7755, -inf
  %7770 = vmax.xlane.f32.xlu0 %v7769
  %v7771 = vpop.xlane.xlu0 %7770
  %v7772 = vsel %vm410, %v7760, -inf
  %7773 = vmax.xlane.f32.xlu0 %v7772
  %v7774 = vpop.xlane.xlu0 %7773
  %v7775 = vsub.f32 %v7745, %v7765
  %v7776 = vsub.f32 %v7750, %v7768
  %v7777 = vsub.f32 %v7755, %v7771
  %v7778 = vsub.f32 %v7760, %v7774
  %v7779 = vmul.f32 %v7775, 1.442695
  %v7780 = vpow.pop %v7779
  %v7781 = vmul.f32 %v7776, 1.442695
  %v7782 = vpow.pop %v7781
  %v7783 = vmul.f32 %v7777, 1.442695
  %v7784 = vpow.pop %v7783
  %v7785 = vmul.f32 %v7778, 1.442695
  %v7786 = vpow.pop %v7785
  %v7787 = vsel %vm410, %v7780, 0.0
  %7788 = vadd.xlane.f32.xlu0 %v7787
  %v7789 = vpop.xlane.xlu0 %7788
  %v7790 = vsel %vm410, %v7782, 0.0
  %7791 = vadd.xlane.f32.xlu0 %v7790
  %v7792 = vpop.xlane.xlu0 %7791
  %v7793 = vsel %vm410, %v7784, 0.0
  %7794 = vadd.xlane.f32.xlu0 %v7793
  %v7795 = vpop.xlane.xlu0 %7794
  %v7796 = vsel %vm410, %v7786, 0.0
  %7797 = vadd.xlane.f32.xlu0 %v7796
  %v7798 = vpop.xlane.xlu0 %7797
  %v7799 = vrcp.pop %v7789
  %v7800 = vrcp.pop %v7792
  %v7801 = vrcp.pop %v7795
  %v7802 = vrcp.pop %v7798
  %v7803 = vmul.f32 %v7780, %v7799
  %v7804 = vmul.f32 %v7782, %v7800
  %v7805 = vmul.f32 %v7784, %v7801
  %v7806 = vmul.f32 %v7786, %v7802
  %7807 = vrot.lane.b32.xlu0 %v6158, 32
  %v7808 = vpop.permute.xlu0 %7807
  %7809 = vrot.lane.b32.xlu0 %v6164, 32
  %v7810 = vpop.permute.xlu0 %7809
  %7811 = vrot.lane.b32.xlu0 %v6170, 32
  %v7812 = vpop.permute.xlu0 %7811
  %7813 = vrot.lane.b32.xlu0 %v6176, 32
  %v7814 = vpop.permute.xlu0 %7813
  %v7820 = vsel %vm410, %v7803, 0
  %v7823 = vsel %vm410, %v7804, 0
  %v7826 = vsel %vm410, %v7805, 0
  %v7829 = vsel %vm410, %v7806, 0
  %7831 = vmatprep.subr.mxu0 0.0
  %7832 = vmatpush1.msra.mxu0 0.0
  %7833 = vmatprep.subr.mxu0 0.0
  %7834 = vmatpush1.msra.mxu0 0.0
  %7835 = vmatprep.subr.mxu0 0.0
  %7836 = vmatpush1.msra.mxu0 0.0
  %7837 = vmatprep.subr.mxu0 0.0
  %7838 = vmatpush1.msra.mxu0 0.0
  %7839 = vmatprep.subr.mxu0 0.0
  %7840 = vmatpush1.msra.mxu0 0.0
  %7841 = vmatprep.subr.mxu0 0.0
  %7842 = vmatpush1.msra.mxu0 0.0
  %7843 = vmatprep.subr.mxu0 0.0
  %7844 = vmatpush1.msra.mxu0 0.0
  %7845 = vmatprep.subr.mxu0 0.0
  %7846 = vmatpush1.msra.mxu0 0.0
  %7847 = vmatprep.subr.mxu0 0.0
  %7848 = vmatpush1.msra.mxu0 0.0
  %7849 = vmatprep.subr.mxu0 0.0
  %7850 = vmatpush1.msra.mxu0 0.0
  %7851 = vmatprep.subr.mxu0 0.0
  %7852 = vmatpush1.msra.mxu0 0.0
  %7853 = vmatprep.subr.mxu0 0.0
  %7854 = vmatpush1.msra.mxu0 0.0
  %7855 = vmatprep.subr.mxu0 0.0
  %7856 = vmatpush1.msra.mxu0 %v7814
  %7857 = vmatprep.subr.mxu0 0.0
  %7858 = vmatpush1.msra.mxu0 %v7812
  %7859 = vmatprep.subr.mxu0 0.0
  %7860 = vmatpush1.msra.mxu0 %v7810
  %7861 = vmatprep.subr.mxu0 0.0
  %7862 = vmatpush1.msra.mxu0 %v7808
  %7863 = vmatprep.subr.mxu0 0.0
  %7864 = vmatpush2.msra.mxu0 0.0
  %7865 = vmatprep.subr.mxu0 0.0
  %7866 = vmatpush2.msra.mxu0 0.0
  %7867 = vmatprep.subr.mxu0 0.0
  %7868 = vmatpush2.msra.mxu0 0.0
  %7869 = vmatprep.subr.mxu0 0.0
  %7870 = vmatpush2.msra.mxu0 0.0
  %7871 = vmatprep.subr.mxu0 0.0
  %7872 = vmatpush2.msra.mxu0 0.0
  %7873 = vmatprep.subr.mxu0 0.0
  %7874 = vmatpush2.msra.mxu0 0.0
  %7875 = vmatprep.subr.mxu0 0.0
  %7876 = vmatpush2.msra.mxu0 0.0
  %7877 = vmatprep.subr.mxu0 0.0
  %7878 = vmatpush2.msra.mxu0 0.0
  %7879 = vmatprep.subr.mxu0 0.0
  %7880 = vmatpush2.msra.mxu0 0.0
  %7881 = vmatprep.subr.mxu0 0.0
  %7882 = vmatpush2.msra.mxu0 0.0
  %7883 = vmatprep.subr.mxu0 0.0
  %7884 = vmatpush2.msra.mxu0 0.0
  %7885 = vmatprep.subr.mxu0 0.0
  %7886 = vmatpush2.msra.mxu0 0.0
  %7887 = vmatprep.subr.mxu0 0.0
  %7888 = vmatpush2.msra.mxu0 0.0
  %7889 = vmatprep.subr.mxu0 0.0
  %7890 = vmatpush2.msra.mxu0 0.0
  %7891 = vmatprep.subr.mxu0 0.0
  %7892 = vmatpush2.msra.mxu0 0.0
  %7893 = vmatprep.subr.mxu0 0.0
  %7894 = vmatpush2.msra.mxu0 0.0
  %7895 = vmatprep.mubr.f32.mxu0 0.0
  %7896 = vmatmul.mubr.f32.gmra.mxu0 %v7820
  %v7897 = vpop.f32.mrf.mxu0
  %v7898 = vadd.f32 0.0, %v7897
  %v7899 = vpop.f32.mrf.mxu0
  %7900 = vmatprep.mubr.f32.mxu0 0.0
  %7901 = vmatmul.mubr.f32.gmra.mxu0 %v7823
  %v7902 = vpop.f32.mrf.mxu0
  %v7903 = vadd.f32 0.0, %v7902
  %v7904 = vpop.f32.mrf.mxu0
  %7905 = vmatprep.mubr.f32.mxu0 0.0
  %7906 = vmatmul.mubr.f32.gmra.mxu0 %v7826
  %v7907 = vpop.f32.mrf.mxu0
  %v7908 = vadd.f32 0.0, %v7907
  %v7909 = vpop.f32.mrf.mxu0
  %7910 = vmatprep.mubr.f32.mxu0 0.0
  %7911 = vmatmul.mubr.f32.gmra.mxu0 %v7829
  %v7912 = vpop.f32.mrf.mxu0
  %v7913 = vadd.f32 0.0, %v7912
  %v7914 = vpop.f32.mrf.mxu0
  %7915 = vdwg.mxu0
  %v7917 = vsel %vm148, %v7898, 0
  %v7920 = vsel %vm148, %v7903, 0
  %v7923 = vsel %vm148, %v7908, 0
  %v7926 = vsel %vm148, %v7913, 0
  %7928 = vmatprep.subr.mxu0 0.0
  %7929 = vmatpush1.msra.mxu0 0.0
  %7930 = vmatprep.subr.mxu0 0.0
  %7931 = vmatpush1.msra.mxu0 0.0
  %7932 = vmatprep.subr.mxu0 0.0
  %7933 = vmatpush1.msra.mxu0 0.0
  %7934 = vmatprep.subr.mxu0 0.0
  %7935 = vmatpush1.msra.mxu0 0.0
  %7936 = vmatprep.subr.mxu0 0.0
  %7937 = vmatpush1.msra.mxu0 0.0
  %7938 = vmatprep.subr.mxu0 0.0
  %7939 = vmatpush1.msra.mxu0 0.0
  %7940 = vmatprep.subr.mxu0 0.0
  %7941 = vmatpush1.msra.mxu0 0.0
  %7942 = vmatprep.subr.mxu0 0.0
  %7943 = vmatpush1.msra.mxu0 0.0
  %7944 = vmatprep.subr.mxu0 0.0
  %7945 = vmatpush1.msra.mxu0 0.0
  %7946 = vmatprep.subr.mxu0 0.0
  %7947 = vmatpush1.msra.mxu0 0.0
  %7948 = vmatprep.subr.mxu0 0.0
  %7949 = vmatpush1.msra.mxu0 0.0
  %7950 = vmatprep.subr.mxu0 0.0
  %7951 = vmatpush1.msra.mxu0 0.0
  %7952 = vmatprep.subr.mxu0 0.0
  %7953 = vmatpush1.msra.mxu0 0.0
  %7954 = vmatprep.subr.mxu0 0.0
  %7955 = vmatpush1.msra.mxu0 0.0
  %7956 = vmatprep.subr.mxu0 0.0
  %7957 = vmatpush1.msra.mxu0 %v125
  %7958 = vmatprep.subr.mxu0 0.0
  %7959 = vmatpush1.msra.mxu0 %v124
  %7960 = vmatprep.subr.mxu0 0.0
  %7961 = vmatpush2.msra.mxu0 0.0
  %7962 = vmatprep.subr.mxu0 0.0
  %7963 = vmatpush2.msra.mxu0 0.0
  %7964 = vmatprep.subr.mxu0 0.0
  %7965 = vmatpush2.msra.mxu0 0.0
  %7966 = vmatprep.subr.mxu0 0.0
  %7967 = vmatpush2.msra.mxu0 0.0
  %7968 = vmatprep.subr.mxu0 0.0
  %7969 = vmatpush2.msra.mxu0 0.0
  %7970 = vmatprep.subr.mxu0 0.0
  %7971 = vmatpush2.msra.mxu0 0.0
  %7972 = vmatprep.subr.mxu0 0.0
  %7973 = vmatpush2.msra.mxu0 0.0
  %7974 = vmatprep.subr.mxu0 0.0
  %7975 = vmatpush2.msra.mxu0 0.0
  %7976 = vmatprep.subr.mxu0 0.0
  %7977 = vmatpush2.msra.mxu0 0.0
  %7978 = vmatprep.subr.mxu0 0.0
  %7979 = vmatpush2.msra.mxu0 0.0
  %7980 = vmatprep.subr.mxu0 0.0
  %7981 = vmatpush2.msra.mxu0 0.0
  %7982 = vmatprep.subr.mxu0 0.0
  %7983 = vmatpush2.msra.mxu0 0.0
  %7984 = vmatprep.subr.mxu0 0.0
  %7985 = vmatpush2.msra.mxu0 0.0
  %7986 = vmatprep.subr.mxu0 0.0
  %7987 = vmatpush2.msra.mxu0 0.0
  %7988 = vmatprep.subr.mxu0 0.0
  %7989 = vmatpush2.msra.mxu0 0.0
  %7990 = vmatprep.subr.mxu0 0.0
  %7991 = vmatpush2.msra.mxu0 0.0
  %7992 = vmatprep.mubr.f32.mxu0 0.0
  %7993 = vmatmul.mubr.f32.gmra.mxu0 %v7917
  %v7994 = vpop.f32.mrf.mxu0
  %v7995 = vadd.f32 0.0, %v7994
  %v7996 = vpop.f32.mrf.mxu0
  %7997 = vmatprep.mubr.f32.mxu0 0.0
  %7998 = vmatmul.mubr.f32.gmra.mxu0 %v7920
  %v7999 = vpop.f32.mrf.mxu0
  %v8000 = vadd.f32 0.0, %v7999
  %v8001 = vpop.f32.mrf.mxu0
  %8002 = vmatprep.mubr.f32.mxu0 0.0
  %8003 = vmatmul.mubr.f32.gmra.mxu0 %v7923
  %v8004 = vpop.f32.mrf.mxu0
  %v8005 = vadd.f32 0.0, %v8004
  %v8006 = vpop.f32.mrf.mxu0
  %8007 = vmatprep.mubr.f32.mxu0 0.0
  %8008 = vmatmul.mubr.f32.gmra.mxu0 %v7926
  %v8009 = vpop.f32.mrf.mxu0
  %v8010 = vadd.f32 0.0, %v8009
  %v8011 = vpop.f32.mrf.mxu0
  %8012 = vdwg.mxu0
  %v8013 = vadd.f32 %v7642, %v7995
  %v8014 = vadd.f32 %v7643, %v8000
  %v8015 = vadd.f32 %v7644, %v8005
  %v8016 = vadd.f32 %v7645, %v8010
  %v8017 = vadd.f32 %v8013, %v3106
  %v8018 = vadd.f32 %v8014, %v3106
  %v8019 = vadd.f32 %v8015, %v3106
  %v8020 = vadd.f32 %v8016, %v3106
  %8021 = vxpose.xlu0.b32.start [1/16] %v8017, 128
  %8022 = vxpose.xlu0.b32.cont [2/16] %v8018, 128
  %8023 = vxpose.xlu0.b32.cont [3/16] %v8019, 128
  %8024 = vxpose.xlu0.b32.cont [4/16] %v8020, 128
  %8025 = vxpose.xlu0.b32.cont [5/16] 0.0, 128
  %8026 = vxpose.xlu0.b32.cont [6/16] 0.0, 128
  %8027 = vxpose.xlu0.b32.cont [7/16] 0.0, 128
  %8028 = vxpose.xlu0.b32.cont [8/16] 0.0, 128
  %8029 = vxpose.xlu0.b32.cont [9/16] 0.0, 128
  %8030 = vxpose.xlu0.b32.cont [10/16] 0.0, 128
  %8031 = vxpose.xlu0.b32.cont [11/16] 0.0, 128
  %8032 = vxpose.xlu0.b32.cont [12/16] 0.0, 128
  %8033 = vxpose.xlu0.b32.cont [13/16] 0.0, 128
  %8034 = vxpose.xlu0.b32.cont [14/16] 0.0, 128
  %8035 = vxpose.xlu0.b32.cont [15/16] 0.0, 128
  %8036 = vxpose.xlu0.b32.end [16/16] 0.0, 128
  %v8037 = vpop.trf.xlu0
  %v8038 = vpop.trf.xlu0
  %v8039 = vpop.trf.xlu0
  %v8040 = vpop.trf.xlu0
  %v8041 = vpop.trf.xlu0
  %v8042 = vpop.trf.xlu0
  %v8043 = vpop.trf.xlu0
  %v8044 = vpop.trf.xlu0
  %v8045 = vpop.trf.xlu0
  %v8046 = vpop.trf.xlu0
  %v8047 = vpop.trf.xlu0
  %v8048 = vpop.trf.xlu0
  %v8049 = vpop.trf.xlu0
  %v8050 = vpop.trf.xlu0
  %v8051 = vpop.trf.xlu0
  %v8052 = vpop.trf.xlu0
  %8059 = vrot.lane.b32.xlu0 %v640, 96
  %v8060 = vpop.permute.xlu0 %8059
  %8061 = vrot.lane.b32.xlu0 %v645, 96
  %v8062 = vpop.permute.xlu0 %8061
  %8063 = vrot.lane.b32.xlu0 %v650, 96
  %v8064 = vpop.permute.xlu0 %8063
  %8065 = vrot.lane.b32.xlu0 %v655, 96
  %v8066 = vpop.permute.xlu0 %8065
  %8067 = vrot.lane.b32.xlu0 %v660, 96
  %v8068 = vpop.permute.xlu0 %8067
  %8069 = vrot.lane.b32.xlu0 %v665, 96
  %v8070 = vpop.permute.xlu0 %8069
  %v8071 = vsel %vm410, %v640, 0
  %v8073 = vsel %vm410, %v645, 0
  %v8075 = vsel %vm410, %v650, 0
  %v8077 = vsel %vm410, %v655, 0
  %v8079 = vsel %vm410, %v660, 0
  %v8081 = vsel %vm410, %v665, 0
  %v8083 = vsel %vm410, %v8060, 0
  %v8085 = vsel %vm410, %v8062, 0
  %v8087 = vsel %vm410, %v8064, 0
  %v8089 = vsel %vm410, %v8066, 0
  %v8091 = vsel %vm410, %v8068, 0
  %v8093 = vsel %vm410, %v8070, 0
  %8095 = vmatprep.subr.mxu0 0.0
  %8096 = vmatpush1.xpose.msra.mxu0 0.0
  %8097 = vmatprep.subr.mxu0 0.0
  %8098 = vmatpush1.xpose.msra.mxu0 0.0
  %8099 = vmatprep.subr.mxu0 0.0
  %8100 = vmatpush1.xpose.msra.mxu0 0.0
  %8101 = vmatprep.subr.mxu0 0.0
  %8102 = vmatpush1.xpose.msra.mxu0 0.0
  %8103 = vmatprep.subr.mxu0 0.0
  %8104 = vmatpush1.xpose.msra.mxu0 0.0
  %8105 = vmatprep.subr.mxu0 0.0
  %8106 = vmatpush1.xpose.msra.mxu0 0.0
  %8107 = vmatprep.subr.mxu0 0.0
  %8108 = vmatpush1.xpose.msra.mxu0 0.0
  %8109 = vmatprep.subr.mxu0 0.0
  %8110 = vmatpush1.xpose.msra.mxu0 0.0
  %8111 = vmatprep.subr.mxu0 0.0
  %8112 = vmatpush1.xpose.msra.mxu0 0.0
  %8113 = vmatprep.subr.mxu0 0.0
  %8114 = vmatpush1.xpose.msra.mxu0 0.0
  %8115 = vmatprep.subr.mxu0 0.0
  %8116 = vmatpush1.xpose.msra.mxu0 %v8093
  %8117 = vmatprep.subr.mxu0 0.0
  %8118 = vmatpush1.xpose.msra.mxu0 %v8091
  %8119 = vmatprep.subr.mxu0 0.0
  %8120 = vmatpush1.xpose.msra.mxu0 %v8089
  %8121 = vmatprep.subr.mxu0 0.0
  %8122 = vmatpush1.xpose.msra.mxu0 %v8087
  %8123 = vmatprep.subr.mxu0 0.0
  %8124 = vmatpush1.xpose.msra.mxu0 %v8085
  %8125 = vmatprep.subr.mxu0 0.0
  %8126 = vmatpush1.xpose.msra.mxu0 %v8083
  %8127 = vmatprep.subr.mxu0 0.0
  %8128 = vmatpush2.xpose.msra.mxu0 0.0
  %8129 = vmatprep.subr.mxu0 0.0
  %8130 = vmatpush2.xpose.msra.mxu0 0.0
  %8131 = vmatprep.subr.mxu0 0.0
  %8132 = vmatpush2.xpose.msra.mxu0 0.0
  %8133 = vmatprep.subr.mxu0 0.0
  %8134 = vmatpush2.xpose.msra.mxu0 0.0
  %8135 = vmatprep.subr.mxu0 0.0
  %8136 = vmatpush2.xpose.msra.mxu0 0.0
  %8137 = vmatprep.subr.mxu0 0.0
  %8138 = vmatpush2.xpose.msra.mxu0 0.0
  %8139 = vmatprep.subr.mxu0 0.0
  %8140 = vmatpush2.xpose.msra.mxu0 0.0
  %8141 = vmatprep.subr.mxu0 0.0
  %8142 = vmatpush2.xpose.msra.mxu0 0.0
  %8143 = vmatprep.subr.mxu0 0.0
  %8144 = vmatpush2.xpose.msra.mxu0 0.0
  %8145 = vmatprep.subr.mxu0 0.0
  %8146 = vmatpush2.xpose.msra.mxu0 0.0
  %8147 = vmatprep.subr.mxu0 0.0
  %8148 = vmatpush2.xpose.msra.mxu0 0.0
  %8149 = vmatprep.subr.mxu0 0.0
  %8150 = vmatpush2.xpose.msra.mxu0 0.0
  %8151 = vmatprep.subr.mxu0 0.0
  %8152 = vmatpush2.xpose.msra.mxu0 0.0
  %8153 = vmatprep.subr.mxu0 0.0
  %8154 = vmatpush2.xpose.msra.mxu0 0.0
  %8155 = vmatprep.subr.mxu0 0.0
  %8156 = vmatpush2.xpose.msra.mxu0 0.0
  %8157 = vmatprep.subr.mxu0 0.0
  %8158 = vmatpush2.xpose.msra.mxu0 0.0
  %8159 = vmatprep.mubr.f32.mxu0 0.0
  %8160 = vmatmul.mubr.f32.gmra.mxu0 %v8071
  %v8161 = vpop.f32.mrf.mxu0
  %v8162 = vadd.f32 %v147, %v8161
  %v8163 = vpop.f32.mrf.mxu0
  %8164 = vmatprep.mubr.f32.mxu0 0.0
  %8165 = vmatmul.mubr.f32.gmra.mxu0 %v8073
  %v8166 = vpop.f32.mrf.mxu0
  %v8167 = vadd.f32 %v147, %v8166
  %v8168 = vpop.f32.mrf.mxu0
  %8169 = vmatprep.mubr.f32.mxu0 0.0
  %8170 = vmatmul.mubr.f32.gmra.mxu0 %v8075
  %v8171 = vpop.f32.mrf.mxu0
  %v8172 = vadd.f32 %v147, %v8171
  %v8173 = vpop.f32.mrf.mxu0
  %8174 = vmatprep.mubr.f32.mxu0 0.0
  %8175 = vmatmul.mubr.f32.gmra.mxu0 %v8077
  %v8176 = vpop.f32.mrf.mxu0
  %v8177 = vadd.f32 %v147, %v8176
  %v8178 = vpop.f32.mrf.mxu0
  %8179 = vmatprep.mubr.f32.mxu0 0.0
  %8180 = vmatmul.mubr.f32.gmra.mxu0 %v8079
  %v8181 = vpop.f32.mrf.mxu0
  %v8182 = vadd.f32 %v147, %v8181
  %v8183 = vpop.f32.mrf.mxu0
  %8184 = vmatprep.mubr.f32.mxu0 0.0
  %8185 = vmatmul.mubr.f32.gmra.mxu0 %v8081
  %v8186 = vpop.f32.mrf.mxu0
  %v8187 = vadd.f32 %v147, %v8186
  %v8188 = vpop.f32.mrf.mxu0
  %8189 = vdwg.mxu0
  %v8190 = vsel %vm805, %v8162, -inf
  %8191 = vmax.xlane.f32.xlu0 %v8190
  %v8192 = vpop.xlane.xlu0 %8191
  %v8193 = vsel %vm805, %v8167, -inf
  %8194 = vmax.xlane.f32.xlu0 %v8193
  %v8195 = vpop.xlane.xlu0 %8194
  %v8196 = vsel %vm805, %v8172, -inf
  %8197 = vmax.xlane.f32.xlu0 %v8196
  %v8198 = vpop.xlane.xlu0 %8197
  %v8199 = vsel %vm805, %v8177, -inf
  %8200 = vmax.xlane.f32.xlu0 %v8199
  %v8201 = vpop.xlane.xlu0 %8200
  %v8202 = vsel %vm805, %v8182, -inf
  %8203 = vmax.xlane.f32.xlu0 %v8202
  %v8204 = vpop.xlane.xlu0 %8203
  %v8205 = vsel %vm805, %v8187, -inf
  %8206 = vmax.xlane.f32.xlu0 %v8205
  %v8207 = vpop.xlane.xlu0 %8206
  %v8208 = vsub.f32 %v8162, %v8192
  %v8209 = vsub.f32 %v8167, %v8195
  %v8210 = vsub.f32 %v8172, %v8198
  %v8211 = vsub.f32 %v8177, %v8201
  %v8212 = vsub.f32 %v8182, %v8204
  %v8213 = vsub.f32 %v8187, %v8207
  %v8214 = vmul.f32 %v8208, 1.442695
  %v8215 = vpow.pop %v8214
  %v8216 = vmul.f32 %v8209, 1.442695
  %v8217 = vpow.pop %v8216
  %v8218 = vmul.f32 %v8210, 1.442695
  %v8219 = vpow.pop %v8218
  %v8220 = vmul.f32 %v8211, 1.442695
  %v8221 = vpow.pop %v8220
  %v8222 = vmul.f32 %v8212, 1.442695
  %v8223 = vpow.pop %v8222
  %v8224 = vmul.f32 %v8213, 1.442695
  %v8225 = vpow.pop %v8224
  %v8226 = vsel %vm805, %v8215, 0.0
  %8227 = vadd.xlane.f32.xlu0 %v8226
  %v8228 = vpop.xlane.xlu0 %8227
  %v8229 = vsel %vm805, %v8217, 0.0
  %8230 = vadd.xlane.f32.xlu0 %v8229
  %v8231 = vpop.xlane.xlu0 %8230
  %v8232 = vsel %vm805, %v8219, 0.0
  %8233 = vadd.xlane.f32.xlu0 %v8232
  %v8234 = vpop.xlane.xlu0 %8233
  %v8235 = vsel %vm805, %v8221, 0.0
  %8236 = vadd.xlane.f32.xlu0 %v8235
  %v8237 = vpop.xlane.xlu0 %8236
  %v8238 = vsel %vm805, %v8223, 0.0
  %8239 = vadd.xlane.f32.xlu0 %v8238
  %v8240 = vpop.xlane.xlu0 %8239
  %v8241 = vsel %vm805, %v8225, 0.0
  %8242 = vadd.xlane.f32.xlu0 %v8241
  %v8243 = vpop.xlane.xlu0 %8242
  %v8244 = vrcp.pop %v8228
  %v8245 = vrcp.pop %v8231
  %v8246 = vrcp.pop %v8234
  %v8247 = vrcp.pop %v8237
  %v8248 = vrcp.pop %v8240
  %v8249 = vrcp.pop %v8243
  %v8250 = vmul.f32 %v8215, %v8244
  %v8251 = vmul.f32 %v8217, %v8245
  %v8252 = vmul.f32 %v8219, %v8246
  %v8253 = vmul.f32 %v8221, %v8247
  %v8254 = vmul.f32 %v8223, %v8248
  %v8255 = vmul.f32 %v8225, %v8249
  %8256 = vrot.lane.b32.xlu0 %v640, 64
  %v8257 = vpop.permute.xlu0 %8256
  %8258 = vrot.lane.b32.xlu0 %v645, 64
  %v8259 = vpop.permute.xlu0 %8258
  %8260 = vrot.lane.b32.xlu0 %v650, 64
  %v8261 = vpop.permute.xlu0 %8260
  %8262 = vrot.lane.b32.xlu0 %v655, 64
  %v8263 = vpop.permute.xlu0 %8262
  %8264 = vrot.lane.b32.xlu0 %v660, 64
  %v8265 = vpop.permute.xlu0 %8264
  %8266 = vrot.lane.b32.xlu0 %v665, 64
  %v8267 = vpop.permute.xlu0 %8266
  %v8275 = vsel %vm805, %v8250, 0
  %v8278 = vsel %vm805, %v8251, 0
  %v8281 = vsel %vm805, %v8252, 0
  %v8284 = vsel %vm805, %v8253, 0
  %v8287 = vsel %vm805, %v8254, 0
  %v8290 = vsel %vm805, %v8255, 0
  %8292 = vmatprep.subr.mxu0 0.0
  %8293 = vmatpush1.msra.mxu0 0.0
  %8294 = vmatprep.subr.mxu0 0.0
  %8295 = vmatpush1.msra.mxu0 0.0
  %8296 = vmatprep.subr.mxu0 0.0
  %8297 = vmatpush1.msra.mxu0 0.0
  %8298 = vmatprep.subr.mxu0 0.0
  %8299 = vmatpush1.msra.mxu0 0.0
  %8300 = vmatprep.subr.mxu0 0.0
  %8301 = vmatpush1.msra.mxu0 0.0
  %8302 = vmatprep.subr.mxu0 0.0
  %8303 = vmatpush1.msra.mxu0 0.0
  %8304 = vmatprep.subr.mxu0 0.0
  %8305 = vmatpush1.msra.mxu0 0.0
  %8306 = vmatprep.subr.mxu0 0.0
  %8307 = vmatpush1.msra.mxu0 0.0
  %8308 = vmatprep.subr.mxu0 0.0
  %8309 = vmatpush1.msra.mxu0 0.0
  %8310 = vmatprep.subr.mxu0 0.0
  %8311 = vmatpush1.msra.mxu0 0.0
  %8312 = vmatprep.subr.mxu0 0.0
  %8313 = vmatpush1.msra.mxu0 %v8267
  %8314 = vmatprep.subr.mxu0 0.0
  %8315 = vmatpush1.msra.mxu0 %v8265
  %8316 = vmatprep.subr.mxu0 0.0
  %8317 = vmatpush1.msra.mxu0 %v8263
  %8318 = vmatprep.subr.mxu0 0.0
  %8319 = vmatpush1.msra.mxu0 %v8261
  %8320 = vmatprep.subr.mxu0 0.0
  %8321 = vmatpush1.msra.mxu0 %v8259
  %8322 = vmatprep.subr.mxu0 0.0
  %8323 = vmatpush1.msra.mxu0 %v8257
  %8324 = vmatprep.subr.mxu0 0.0
  %8325 = vmatpush2.msra.mxu0 0.0
  %8326 = vmatprep.subr.mxu0 0.0
  %8327 = vmatpush2.msra.mxu0 0.0
  %8328 = vmatprep.subr.mxu0 0.0
  %8329 = vmatpush2.msra.mxu0 0.0
  %8330 = vmatprep.subr.mxu0 0.0
  %8331 = vmatpush2.msra.mxu0 0.0
  %8332 = vmatprep.subr.mxu0 0.0
  %8333 = vmatpush2.msra.mxu0 0.0
  %8334 = vmatprep.subr.mxu0 0.0
  %8335 = vmatpush2.msra.mxu0 0.0
  %8336 = vmatprep.subr.mxu0 0.0
  %8337 = vmatpush2.msra.mxu0 0.0
  %8338 = vmatprep.subr.mxu0 0.0
  %8339 = vmatpush2.msra.mxu0 0.0
  %8340 = vmatprep.subr.mxu0 0.0
  %8341 = vmatpush2.msra.mxu0 0.0
  %8342 = vmatprep.subr.mxu0 0.0
  %8343 = vmatpush2.msra.mxu0 0.0
  %8344 = vmatprep.subr.mxu0 0.0
  %8345 = vmatpush2.msra.mxu0 0.0
  %8346 = vmatprep.subr.mxu0 0.0
  %8347 = vmatpush2.msra.mxu0 0.0
  %8348 = vmatprep.subr.mxu0 0.0
  %8349 = vmatpush2.msra.mxu0 0.0
  %8350 = vmatprep.subr.mxu0 0.0
  %8351 = vmatpush2.msra.mxu0 0.0
  %8352 = vmatprep.subr.mxu0 0.0
  %8353 = vmatpush2.msra.mxu0 0.0
  %8354 = vmatprep.subr.mxu0 0.0
  %8355 = vmatpush2.msra.mxu0 0.0
  %8356 = vmatprep.mubr.f32.mxu0 0.0
  %8357 = vmatmul.mubr.f32.gmra.mxu0 %v8275
  %v8358 = vpop.f32.mrf.mxu0
  %v8359 = vadd.f32 0.0, %v8358
  %v8360 = vpop.f32.mrf.mxu0
  %8361 = vmatprep.mubr.f32.mxu0 0.0
  %8362 = vmatmul.mubr.f32.gmra.mxu0 %v8278
  %v8363 = vpop.f32.mrf.mxu0
  %v8364 = vadd.f32 0.0, %v8363
  %v8365 = vpop.f32.mrf.mxu0
  %8366 = vmatprep.mubr.f32.mxu0 0.0
  %8367 = vmatmul.mubr.f32.gmra.mxu0 %v8281
  %v8368 = vpop.f32.mrf.mxu0
  %v8369 = vadd.f32 0.0, %v8368
  %v8370 = vpop.f32.mrf.mxu0
  %8371 = vmatprep.mubr.f32.mxu0 0.0
  %8372 = vmatmul.mubr.f32.gmra.mxu0 %v8284
  %v8373 = vpop.f32.mrf.mxu0
  %v8374 = vadd.f32 0.0, %v8373
  %v8375 = vpop.f32.mrf.mxu0
  %8376 = vmatprep.mubr.f32.mxu0 0.0
  %8377 = vmatmul.mubr.f32.gmra.mxu0 %v8287
  %v8378 = vpop.f32.mrf.mxu0
  %v8379 = vadd.f32 0.0, %v8378
  %v8380 = vpop.f32.mrf.mxu0
  %8381 = vmatprep.mubr.f32.mxu0 0.0
  %8382 = vmatmul.mubr.f32.gmra.mxu0 %v8290
  %v8383 = vpop.f32.mrf.mxu0
  %v8384 = vadd.f32 0.0, %v8383
  %v8385 = vpop.f32.mrf.mxu0
  %8386 = vdwg.mxu0
  %v8388 = vsel %vm410, %v8359, 0
  %v8391 = vsel %vm410, %v8364, 0
  %v8394 = vsel %vm410, %v8369, 0
  %v8397 = vsel %vm410, %v8374, 0
  %v8400 = vsel %vm410, %v8379, 0
  %v8403 = vsel %vm410, %v8384, 0
  %8405 = vmatprep.subr.mxu0 0.0
  %8406 = vmatpush1.msra.mxu0 0.0
  %8407 = vmatprep.subr.mxu0 0.0
  %8408 = vmatpush1.msra.mxu0 0.0
  %8409 = vmatprep.subr.mxu0 0.0
  %8410 = vmatpush1.msra.mxu0 0.0
  %8411 = vmatprep.subr.mxu0 0.0
  %8412 = vmatpush1.msra.mxu0 0.0
  %8413 = vmatprep.subr.mxu0 0.0
  %8414 = vmatpush1.msra.mxu0 0.0
  %8415 = vmatprep.subr.mxu0 0.0
  %8416 = vmatpush1.msra.mxu0 0.0
  %8417 = vmatprep.subr.mxu0 0.0
  %8418 = vmatpush1.msra.mxu0 0.0
  %8419 = vmatprep.subr.mxu0 0.0
  %8420 = vmatpush1.msra.mxu0 0.0
  %8421 = vmatprep.subr.mxu0 0.0
  %8422 = vmatpush1.msra.mxu0 0.0
  %8423 = vmatprep.subr.mxu0 0.0
  %8424 = vmatpush1.msra.mxu0 0.0
  %8425 = vmatprep.subr.mxu0 0.0
  %8426 = vmatpush1.msra.mxu0 0.0
  %8427 = vmatprep.subr.mxu0 0.0
  %8428 = vmatpush1.msra.mxu0 0.0
  %8429 = vmatprep.subr.mxu0 0.0
  %8430 = vmatpush1.msra.mxu0 %v82
  %8431 = vmatprep.subr.mxu0 0.0
  %8432 = vmatpush1.msra.mxu0 %v81
  %8433 = vmatprep.subr.mxu0 0.0
  %8434 = vmatpush1.msra.mxu0 %v80
  %8435 = vmatprep.subr.mxu0 0.0
  %8436 = vmatpush1.msra.mxu0 %v79
  %8437 = vmatprep.subr.mxu0 0.0
  %8438 = vmatpush2.msra.mxu0 0.0
  %8439 = vmatprep.subr.mxu0 0.0
  %8440 = vmatpush2.msra.mxu0 0.0
  %8441 = vmatprep.subr.mxu0 0.0
  %8442 = vmatpush2.msra.mxu0 0.0
  %8443 = vmatprep.subr.mxu0 0.0
  %8444 = vmatpush2.msra.mxu0 0.0
  %8445 = vmatprep.subr.mxu0 0.0
  %8446 = vmatpush2.msra.mxu0 0.0
  %8447 = vmatprep.subr.mxu0 0.0
  %8448 = vmatpush2.msra.mxu0 0.0
  %8449 = vmatprep.subr.mxu0 0.0
  %8450 = vmatpush2.msra.mxu0 0.0
  %8451 = vmatprep.subr.mxu0 0.0
  %8452 = vmatpush2.msra.mxu0 0.0
  %8453 = vmatprep.subr.mxu0 0.0
  %8454 = vmatpush2.msra.mxu0 0.0
  %8455 = vmatprep.subr.mxu0 0.0
  %8456 = vmatpush2.msra.mxu0 0.0
  %8457 = vmatprep.subr.mxu0 0.0
  %8458 = vmatpush2.msra.mxu0 0.0
  %8459 = vmatprep.subr.mxu0 0.0
  %8460 = vmatpush2.msra.mxu0 0.0
  %8461 = vmatprep.subr.mxu0 0.0
  %8462 = vmatpush2.msra.mxu0 0.0
  %8463 = vmatprep.subr.mxu0 0.0
  %8464 = vmatpush2.msra.mxu0 0.0
  %8465 = vmatprep.subr.mxu0 0.0
  %8466 = vmatpush2.msra.mxu0 0.0
  %8467 = vmatprep.subr.mxu0 0.0
  %8468 = vmatpush2.msra.mxu0 0.0
  %8469 = vmatprep.mubr.f32.mxu0 0.0
  %8470 = vmatmul.mubr.f32.gmra.mxu0 %v8388
  %v8471 = vpop.f32.mrf.mxu0
  %v8472 = vadd.f32 %v1006, %v8471
  %v8473 = vpop.f32.mrf.mxu0
  %8474 = vmatprep.mubr.f32.mxu0 0.0
  %8475 = vmatmul.mubr.f32.gmra.mxu0 %v8391
  %v8476 = vpop.f32.mrf.mxu0
  %v8477 = vadd.f32 %v1006, %v8476
  %v8478 = vpop.f32.mrf.mxu0
  %8479 = vmatprep.mubr.f32.mxu0 0.0
  %8480 = vmatmul.mubr.f32.gmra.mxu0 %v8394
  %v8481 = vpop.f32.mrf.mxu0
  %v8482 = vadd.f32 %v1006, %v8481
  %v8483 = vpop.f32.mrf.mxu0
  %8484 = vmatprep.mubr.f32.mxu0 0.0
  %8485 = vmatmul.mubr.f32.gmra.mxu0 %v8397
  %v8486 = vpop.f32.mrf.mxu0
  %v8487 = vadd.f32 %v1006, %v8486
  %v8488 = vpop.f32.mrf.mxu0
  %8489 = vmatprep.mubr.f32.mxu0 0.0
  %8490 = vmatmul.mubr.f32.gmra.mxu0 %v8400
  %v8491 = vpop.f32.mrf.mxu0
  %v8492 = vadd.f32 %v1006, %v8491
  %v8493 = vpop.f32.mrf.mxu0
  %8494 = vmatprep.mubr.f32.mxu0 0.0
  %8495 = vmatmul.mubr.f32.gmra.mxu0 %v8403
  %v8496 = vpop.f32.mrf.mxu0
  %v8497 = vadd.f32 %v1006, %v8496
  %v8498 = vpop.f32.mrf.mxu0
  %8499 = vdwg.mxu0
  %8500 = vxpose.xlu0.b32.start [1/16] %v8472, 128
  %8501 = vxpose.xlu0.b32.cont [2/16] %v8477, 128
  %8502 = vxpose.xlu0.b32.cont [3/16] %v8482, 128
  %8503 = vxpose.xlu0.b32.cont [4/16] %v8487, 128
  %8504 = vxpose.xlu0.b32.cont [5/16] %v8492, 128
  %8505 = vxpose.xlu0.b32.cont [6/16] %v8497, 128
  %8506 = vxpose.xlu0.b32.cont [7/16] 0.0, 128
  %8507 = vxpose.xlu0.b32.cont [8/16] 0.0, 128
  %8508 = vxpose.xlu0.b32.cont [9/16] 0.0, 128
  %8509 = vxpose.xlu0.b32.cont [10/16] 0.0, 128
  %8510 = vxpose.xlu0.b32.cont [11/16] 0.0, 128
  %8511 = vxpose.xlu0.b32.cont [12/16] 0.0, 128
  %8512 = vxpose.xlu0.b32.cont [13/16] 0.0, 128
  %8513 = vxpose.xlu0.b32.cont [14/16] 0.0, 128
  %8514 = vxpose.xlu0.b32.cont [15/16] 0.0, 128
  %8515 = vxpose.xlu0.b32.end [16/16] 0.0, 128
  %v8516 = vpop.trf.xlu0
  %v8517 = vpop.trf.xlu0
  %v8518 = vpop.trf.xlu0
  %v8519 = vpop.trf.xlu0
  %v8520 = vpop.trf.xlu0
  %v8521 = vpop.trf.xlu0
  %v8522 = vpop.trf.xlu0
  %v8523 = vpop.trf.xlu0
  %v8524 = vpop.trf.xlu0
  %v8525 = vpop.trf.xlu0
  %v8526 = vpop.trf.xlu0
  %v8527 = vpop.trf.xlu0
  %v8528 = vpop.trf.xlu0
  %v8529 = vpop.trf.xlu0
  %v8530 = vpop.trf.xlu0
  %v8531 = vpop.trf.xlu0
  %v8533 = vsel %vm805, %v8516, 0
  %v8536 = vsel %vm805, %v8517, 0
  %v8539 = vsel %vm805, %v8518, 0
  %v8542 = vsel %vm805, %v8519, 0
  %8544 = vmatprep.subr.mxu0 0.0
  %8545 = vmatpush1.msra.mxu0 0.0
  %8546 = vmatprep.subr.mxu0 0.0
  %8547 = vmatpush1.msra.mxu0 0.0
  %8548 = vmatprep.subr.mxu0 0.0
  %8549 = vmatpush1.msra.mxu0 0.0
  %8550 = vmatprep.subr.mxu0 0.0
  %8551 = vmatpush1.msra.mxu0 0.0
  %8552 = vmatprep.subr.mxu0 0.0
  %8553 = vmatpush1.msra.mxu0 0.0
  %8554 = vmatprep.subr.mxu0 0.0
  %8555 = vmatpush1.msra.mxu0 0.0
  %8556 = vmatprep.subr.mxu0 0.0
  %8557 = vmatpush1.msra.mxu0 0.0
  %8558 = vmatprep.subr.mxu0 0.0
  %8559 = vmatpush1.msra.mxu0 0.0
  %8560 = vmatprep.subr.mxu0 0.0
  %8561 = vmatpush1.msra.mxu0 0.0
  %8562 = vmatprep.subr.mxu0 0.0
  %8563 = vmatpush1.msra.mxu0 0.0
  %8564 = vmatprep.subr.mxu0 %v113
  %8565 = vmatpush1.msra.mxu0 %v112
  %8566 = vmatprep.subr.mxu0 %v111
  %8567 = vmatpush1.msra.mxu0 %v110
  %8568 = vmatprep.subr.mxu0 %v109
  %8569 = vmatpush1.msra.mxu0 %v108
  %8570 = vmatprep.subr.mxu0 %v107
  %8571 = vmatpush1.msra.mxu0 %v106
  %8572 = vmatprep.subr.mxu0 %v105
  %8573 = vmatpush1.msra.mxu0 %v104
  %8574 = vmatprep.subr.mxu0 %v103
  %8575 = vmatpush1.msra.mxu0 %v102
  %8576 = vmatprep.subr.mxu0 0.0
  %8577 = vmatpush2.msra.mxu0 0.0
  %8578 = vmatprep.subr.mxu0 0.0
  %8579 = vmatpush2.msra.mxu0 0.0
  %8580 = vmatprep.subr.mxu0 0.0
  %8581 = vmatpush2.msra.mxu0 0.0
  %8582 = vmatprep.subr.mxu0 0.0
  %8583 = vmatpush2.msra.mxu0 0.0
  %8584 = vmatprep.subr.mxu0 0.0
  %8585 = vmatpush2.msra.mxu0 0.0
  %8586 = vmatprep.subr.mxu0 0.0
  %8587 = vmatpush2.msra.mxu0 0.0
  %8588 = vmatprep.subr.mxu0 0.0
  %8589 = vmatpush2.msra.mxu0 0.0
  %8590 = vmatprep.subr.mxu0 0.0
  %8591 = vmatpush2.msra.mxu0 0.0
  %8592 = vmatprep.subr.mxu0 0.0
  %8593 = vmatpush2.msra.mxu0 0.0
  %8594 = vmatprep.subr.mxu0 0.0
  %8595 = vmatpush2.msra.mxu0 0.0
  %8596 = vmatprep.subr.mxu0 0.0
  %8597 = vmatpush2.msra.mxu0 0.0
  %8598 = vmatprep.subr.mxu0 0.0
  %8599 = vmatpush2.msra.mxu0 0.0
  %8600 = vmatprep.subr.mxu0 0.0
  %8601 = vmatpush2.msra.mxu0 0.0
  %8602 = vmatprep.subr.mxu0 0.0
  %8603 = vmatpush2.msra.mxu0 0.0
  %8604 = vmatprep.subr.mxu0 0.0
  %8605 = vmatpush2.msra.mxu0 0.0
  %8606 = vmatprep.subr.mxu0 0.0
  %8607 = vmatpush2.msra.mxu0 0.0
  %8608 = vmatprep.mubr.f32.mxu0 0.0
  %8609 = vmatmul.mubr.f32.gmra.mxu0 %v8533
  %v8610 = vpop.f32.mrf.mxu0
  %v8611 = vadd.f32 %v1156, %v8610
  %v8612 = vpop.f32.mrf.mxu0
  %v8613 = vadd.f32 %v1160, %v8612
  %8614 = vmatprep.mubr.f32.mxu0 0.0
  %8615 = vmatmul.mubr.f32.gmra.mxu0 %v8536
  %v8616 = vpop.f32.mrf.mxu0
  %v8617 = vadd.f32 %v1156, %v8616
  %v8618 = vpop.f32.mrf.mxu0
  %v8619 = vadd.f32 %v1160, %v8618
  %8620 = vmatprep.mubr.f32.mxu0 0.0
  %8621 = vmatmul.mubr.f32.gmra.mxu0 %v8539
  %v8622 = vpop.f32.mrf.mxu0
  %v8623 = vadd.f32 %v1156, %v8622
  %v8624 = vpop.f32.mrf.mxu0
  %v8625 = vadd.f32 %v1160, %v8624
  %8626 = vmatprep.mubr.f32.mxu0 0.0
  %8627 = vmatmul.mubr.f32.gmra.mxu0 %v8542
  %v8628 = vpop.f32.mrf.mxu0
  %v8629 = vadd.f32 %v1156, %v8628
  %v8630 = vpop.f32.mrf.mxu0
  %v8631 = vadd.f32 %v1160, %v8630
  %8632 = vdwg.mxu0
  %8637 = vrot.lane.b32.xlu0 %v8611, 48
  %v8638 = vpop.permute.xlu0 %8637
  %8639 = vrot.lane.b32.xlu0 %v8617, 48
  %v8640 = vpop.permute.xlu0 %8639
  %8641 = vrot.lane.b32.xlu0 %v8623, 48
  %v8642 = vpop.permute.xlu0 %8641
  %8643 = vrot.lane.b32.xlu0 %v8629, 48
  %v8644 = vpop.permute.xlu0 %8643
  %v8645 = vsel %vm148, %v8611, 0
  %v8647 = vsel %vm148, %v8617, 0
  %v8649 = vsel %vm148, %v8623, 0
  %v8651 = vsel %vm148, %v8629, 0
  %v8653 = vsel %vm148, %v8638, 0
  %v8655 = vsel %vm148, %v8640, 0
  %v8657 = vsel %vm148, %v8642, 0
  %v8659 = vsel %vm148, %v8644, 0
  %8661 = vmatprep.subr.mxu0 0.0
  %8662 = vmatpush1.xpose.msra.mxu0 0.0
  %8663 = vmatprep.subr.mxu0 0.0
  %8664 = vmatpush1.xpose.msra.mxu0 0.0
  %8665 = vmatprep.subr.mxu0 0.0
  %8666 = vmatpush1.xpose.msra.mxu0 0.0
  %8667 = vmatprep.subr.mxu0 0.0
  %8668 = vmatpush1.xpose.msra.mxu0 0.0
  %8669 = vmatprep.subr.mxu0 0.0
  %8670 = vmatpush1.xpose.msra.mxu0 0.0
  %8671 = vmatprep.subr.mxu0 0.0
  %8672 = vmatpush1.xpose.msra.mxu0 0.0
  %8673 = vmatprep.subr.mxu0 0.0
  %8674 = vmatpush1.xpose.msra.mxu0 0.0
  %8675 = vmatprep.subr.mxu0 0.0
  %8676 = vmatpush1.xpose.msra.mxu0 0.0
  %8677 = vmatprep.subr.mxu0 0.0
  %8678 = vmatpush1.xpose.msra.mxu0 0.0
  %8679 = vmatprep.subr.mxu0 0.0
  %8680 = vmatpush1.xpose.msra.mxu0 0.0
  %8681 = vmatprep.subr.mxu0 0.0
  %8682 = vmatpush1.xpose.msra.mxu0 0.0
  %8683 = vmatprep.subr.mxu0 0.0
  %8684 = vmatpush1.xpose.msra.mxu0 0.0
  %8685 = vmatprep.subr.mxu0 0.0
  %8686 = vmatpush1.xpose.msra.mxu0 %v8659
  %8687 = vmatprep.subr.mxu0 0.0
  %8688 = vmatpush1.xpose.msra.mxu0 %v8657
  %8689 = vmatprep.subr.mxu0 0.0
  %8690 = vmatpush1.xpose.msra.mxu0 %v8655
  %8691 = vmatprep.subr.mxu0 0.0
  %8692 = vmatpush1.xpose.msra.mxu0 %v8653
  %8693 = vmatprep.subr.mxu0 0.0
  %8694 = vmatpush2.xpose.msra.mxu0 0.0
  %8695 = vmatprep.subr.mxu0 0.0
  %8696 = vmatpush2.xpose.msra.mxu0 0.0
  %8697 = vmatprep.subr.mxu0 0.0
  %8698 = vmatpush2.xpose.msra.mxu0 0.0
  %8699 = vmatprep.subr.mxu0 0.0
  %8700 = vmatpush2.xpose.msra.mxu0 0.0
  %8701 = vmatprep.subr.mxu0 0.0
  %8702 = vmatpush2.xpose.msra.mxu0 0.0
  %8703 = vmatprep.subr.mxu0 0.0
  %8704 = vmatpush2.xpose.msra.mxu0 0.0
  %8705 = vmatprep.subr.mxu0 0.0
  %8706 = vmatpush2.xpose.msra.mxu0 0.0
  %8707 = vmatprep.subr.mxu0 0.0
  %8708 = vmatpush2.xpose.msra.mxu0 0.0
  %8709 = vmatprep.subr.mxu0 0.0
  %8710 = vmatpush2.xpose.msra.mxu0 0.0
  %8711 = vmatprep.subr.mxu0 0.0
  %8712 = vmatpush2.xpose.msra.mxu0 0.0
  %8713 = vmatprep.subr.mxu0 0.0
  %8714 = vmatpush2.xpose.msra.mxu0 0.0
  %8715 = vmatprep.subr.mxu0 0.0
  %8716 = vmatpush2.xpose.msra.mxu0 0.0
  %8717 = vmatprep.subr.mxu0 0.0
  %8718 = vmatpush2.xpose.msra.mxu0 0.0
  %8719 = vmatprep.subr.mxu0 0.0
  %8720 = vmatpush2.xpose.msra.mxu0 0.0
  %8721 = vmatprep.subr.mxu0 0.0
  %8722 = vmatpush2.xpose.msra.mxu0 0.0
  %8723 = vmatprep.subr.mxu0 0.0
  %8724 = vmatpush2.xpose.msra.mxu0 0.0
  %8725 = vmatprep.mubr.f32.mxu0 0.0
  %8726 = vmatmul.mubr.f32.gmra.mxu0 %v8645
  %v8727 = vpop.f32.mrf.mxu0
  %v8728 = vadd.f32 0.0, %v8727
  %v8729 = vpop.f32.mrf.mxu0
  %8730 = vmatprep.mubr.f32.mxu0 0.0
  %8731 = vmatmul.mubr.f32.gmra.mxu0 %v8647
  %v8732 = vpop.f32.mrf.mxu0
  %v8733 = vadd.f32 0.0, %v8732
  %v8734 = vpop.f32.mrf.mxu0
  %8735 = vmatprep.mubr.f32.mxu0 0.0
  %8736 = vmatmul.mubr.f32.gmra.mxu0 %v8649
  %v8737 = vpop.f32.mrf.mxu0
  %v8738 = vadd.f32 0.0, %v8737
  %v8739 = vpop.f32.mrf.mxu0
  %8740 = vmatprep.mubr.f32.mxu0 0.0
  %8741 = vmatmul.mubr.f32.gmra.mxu0 %v8651
  %v8742 = vpop.f32.mrf.mxu0
  %v8743 = vadd.f32 0.0, %v8742
  %v8744 = vpop.f32.mrf.mxu0
  %8745 = vdwg.mxu0
  %v8746 = vsel %vm410, %v8728, -inf
  %8747 = vmax.xlane.f32.xlu0 %v8746
  %v8748 = vpop.xlane.xlu0 %8747
  %v8749 = vsel %vm410, %v8733, -inf
  %8750 = vmax.xlane.f32.xlu0 %v8749
  %v8751 = vpop.xlane.xlu0 %8750
  %v8752 = vsel %vm410, %v8738, -inf
  %8753 = vmax.xlane.f32.xlu0 %v8752
  %v8754 = vpop.xlane.xlu0 %8753
  %v8755 = vsel %vm410, %v8743, -inf
  %8756 = vmax.xlane.f32.xlu0 %v8755
  %v8757 = vpop.xlane.xlu0 %8756
  %v8758 = vsub.f32 %v8728, %v8748
  %v8759 = vsub.f32 %v8733, %v8751
  %v8760 = vsub.f32 %v8738, %v8754
  %v8761 = vsub.f32 %v8743, %v8757
  %v8762 = vmul.f32 %v8758, 1.442695
  %v8763 = vpow.pop %v8762
  %v8764 = vmul.f32 %v8759, 1.442695
  %v8765 = vpow.pop %v8764
  %v8766 = vmul.f32 %v8760, 1.442695
  %v8767 = vpow.pop %v8766
  %v8768 = vmul.f32 %v8761, 1.442695
  %v8769 = vpow.pop %v8768
  %v8770 = vsel %vm410, %v8763, 0.0
  %8771 = vadd.xlane.f32.xlu0 %v8770
  %v8772 = vpop.xlane.xlu0 %8771
  %v8773 = vsel %vm410, %v8765, 0.0
  %8774 = vadd.xlane.f32.xlu0 %v8773
  %v8775 = vpop.xlane.xlu0 %8774
  %v8776 = vsel %vm410, %v8767, 0.0
  %8777 = vadd.xlane.f32.xlu0 %v8776
  %v8778 = vpop.xlane.xlu0 %8777
  %v8779 = vsel %vm410, %v8769, 0.0
  %8780 = vadd.xlane.f32.xlu0 %v8779
  %v8781 = vpop.xlane.xlu0 %8780
  %v8782 = vrcp.pop %v8772
  %v8783 = vrcp.pop %v8775
  %v8784 = vrcp.pop %v8778
  %v8785 = vrcp.pop %v8781
  %v8786 = vmul.f32 %v8763, %v8782
  %v8787 = vmul.f32 %v8765, %v8783
  %v8788 = vmul.f32 %v8767, %v8784
  %v8789 = vmul.f32 %v8769, %v8785
  %8794 = vrot.lane.b32.xlu0 %v8613, 96
  %v8795 = vpop.permute.xlu0 %8794
  %8796 = vrot.lane.b32.xlu0 %v8619, 96
  %v8797 = vpop.permute.xlu0 %8796
  %8798 = vrot.lane.b32.xlu0 %v8625, 96
  %v8799 = vpop.permute.xlu0 %8798
  %8800 = vrot.lane.b32.xlu0 %v8631, 96
  %v8801 = vpop.permute.xlu0 %8800
  %v8807 = vsel %vm410, %v8786, 0
  %v8810 = vsel %vm410, %v8787, 0
  %v8813 = vsel %vm410, %v8788, 0
  %v8816 = vsel %vm410, %v8789, 0
  %8818 = vmatprep.subr.mxu0 0.0
  %8819 = vmatpush1.msra.mxu0 0.0
  %8820 = vmatprep.subr.mxu0 0.0
  %8821 = vmatpush1.msra.mxu0 0.0
  %8822 = vmatprep.subr.mxu0 0.0
  %8823 = vmatpush1.msra.mxu0 0.0
  %8824 = vmatprep.subr.mxu0 0.0
  %8825 = vmatpush1.msra.mxu0 0.0
  %8826 = vmatprep.subr.mxu0 0.0
  %8827 = vmatpush1.msra.mxu0 0.0
  %8828 = vmatprep.subr.mxu0 0.0
  %8829 = vmatpush1.msra.mxu0 0.0
  %8830 = vmatprep.subr.mxu0 0.0
  %8831 = vmatpush1.msra.mxu0 0.0
  %8832 = vmatprep.subr.mxu0 0.0
  %8833 = vmatpush1.msra.mxu0 0.0
  %8834 = vmatprep.subr.mxu0 0.0
  %8835 = vmatpush1.msra.mxu0 0.0
  %8836 = vmatprep.subr.mxu0 0.0
  %8837 = vmatpush1.msra.mxu0 0.0
  %8838 = vmatprep.subr.mxu0 0.0
  %8839 = vmatpush1.msra.mxu0 0.0
  %8840 = vmatprep.subr.mxu0 0.0
  %8841 = vmatpush1.msra.mxu0 0.0
  %8842 = vmatprep.subr.mxu0 0.0
  %8843 = vmatpush1.msra.mxu0 %v8801
  %8844 = vmatprep.subr.mxu0 0.0
  %8845 = vmatpush1.msra.mxu0 %v8799
  %8846 = vmatprep.subr.mxu0 0.0
  %8847 = vmatpush1.msra.mxu0 %v8797
  %8848 = vmatprep.subr.mxu0 0.0
  %8849 = vmatpush1.msra.mxu0 %v8795
  %8850 = vmatprep.subr.mxu0 0.0
  %8851 = vmatpush2.msra.mxu0 0.0
  %8852 = vmatprep.subr.mxu0 0.0
  %8853 = vmatpush2.msra.mxu0 0.0
  %8854 = vmatprep.subr.mxu0 0.0
  %8855 = vmatpush2.msra.mxu0 0.0
  %8856 = vmatprep.subr.mxu0 0.0
  %8857 = vmatpush2.msra.mxu0 0.0
  %8858 = vmatprep.subr.mxu0 0.0
  %8859 = vmatpush2.msra.mxu0 0.0
  %8860 = vmatprep.subr.mxu0 0.0
  %8861 = vmatpush2.msra.mxu0 0.0
  %8862 = vmatprep.subr.mxu0 0.0
  %8863 = vmatpush2.msra.mxu0 0.0
  %8864 = vmatprep.subr.mxu0 0.0
  %8865 = vmatpush2.msra.mxu0 0.0
  %8866 = vmatprep.subr.mxu0 0.0
  %8867 = vmatpush2.msra.mxu0 0.0
  %8868 = vmatprep.subr.mxu0 0.0
  %8869 = vmatpush2.msra.mxu0 0.0
  %8870 = vmatprep.subr.mxu0 0.0
  %8871 = vmatpush2.msra.mxu0 0.0
  %8872 = vmatprep.subr.mxu0 0.0
  %8873 = vmatpush2.msra.mxu0 0.0
  %8874 = vmatprep.subr.mxu0 0.0
  %8875 = vmatpush2.msra.mxu0 0.0
  %8876 = vmatprep.subr.mxu0 0.0
  %8877 = vmatpush2.msra.mxu0 0.0
  %8878 = vmatprep.subr.mxu0 0.0
  %8879 = vmatpush2.msra.mxu0 0.0
  %8880 = vmatprep.subr.mxu0 0.0
  %8881 = vmatpush2.msra.mxu0 0.0
  %8882 = vmatprep.mubr.f32.mxu0 0.0
  %8883 = vmatmul.mubr.f32.gmra.mxu0 %v8807
  %v8884 = vpop.f32.mrf.mxu0
  %v8885 = vadd.f32 0.0, %v8884
  %v8886 = vpop.f32.mrf.mxu0
  %8887 = vmatprep.mubr.f32.mxu0 0.0
  %8888 = vmatmul.mubr.f32.gmra.mxu0 %v8810
  %v8889 = vpop.f32.mrf.mxu0
  %v8890 = vadd.f32 0.0, %v8889
  %v8891 = vpop.f32.mrf.mxu0
  %8892 = vmatprep.mubr.f32.mxu0 0.0
  %8893 = vmatmul.mubr.f32.gmra.mxu0 %v8813
  %v8894 = vpop.f32.mrf.mxu0
  %v8895 = vadd.f32 0.0, %v8894
  %v8896 = vpop.f32.mrf.mxu0
  %8897 = vmatprep.mubr.f32.mxu0 0.0
  %8898 = vmatmul.mubr.f32.gmra.mxu0 %v8816
  %v8899 = vpop.f32.mrf.mxu0
  %v8900 = vadd.f32 0.0, %v8899
  %v8901 = vpop.f32.mrf.mxu0
  %8902 = vdwg.mxu0
  %8903 = vrot.lane.b32.xlu0 %v8611, 112
  %v8904 = vpop.permute.xlu0 %8903
  %8905 = vrot.lane.b32.xlu0 %v8617, 112
  %v8906 = vpop.permute.xlu0 %8905
  %8907 = vrot.lane.b32.xlu0 %v8623, 112
  %v8908 = vpop.permute.xlu0 %8907
  %8909 = vrot.lane.b32.xlu0 %v8629, 112
  %v8910 = vpop.permute.xlu0 %8909
  %8911 = vrot.lane.b32.xlu0 %v8611, 32
  %v8912 = vpop.permute.xlu0 %8911
  %8913 = vrot.lane.b32.xlu0 %v8617, 32
  %v8914 = vpop.permute.xlu0 %8913
  %8915 = vrot.lane.b32.xlu0 %v8623, 32
  %v8916 = vpop.permute.xlu0 %8915
  %8917 = vrot.lane.b32.xlu0 %v8629, 32
  %v8918 = vpop.permute.xlu0 %8917
  %v8919 = vsel %vm148, %v8904, 0
  %v8921 = vsel %vm148, %v8906, 0
  %v8923 = vsel %vm148, %v8908, 0
  %v8925 = vsel %vm148, %v8910, 0
  %v8927 = vsel %vm148, %v8912, 0
  %v8929 = vsel %vm148, %v8914, 0
  %v8931 = vsel %vm148, %v8916, 0
  %v8933 = vsel %vm148, %v8918, 0
  %8935 = vmatprep.subr.mxu0 0.0
  %8936 = vmatpush1.xpose.msra.mxu0 0.0
  %8937 = vmatprep.subr.mxu0 0.0
  %8938 = vmatpush1.xpose.msra.mxu0 0.0
  %8939 = vmatprep.subr.mxu0 0.0
  %8940 = vmatpush1.xpose.msra.mxu0 0.0
  %8941 = vmatprep.subr.mxu0 0.0
  %8942 = vmatpush1.xpose.msra.mxu0 0.0
  %8943 = vmatprep.subr.mxu0 0.0
  %8944 = vmatpush1.xpose.msra.mxu0 0.0
  %8945 = vmatprep.subr.mxu0 0.0
  %8946 = vmatpush1.xpose.msra.mxu0 0.0
  %8947 = vmatprep.subr.mxu0 0.0
  %8948 = vmatpush1.xpose.msra.mxu0 0.0
  %8949 = vmatprep.subr.mxu0 0.0
  %8950 = vmatpush1.xpose.msra.mxu0 0.0
  %8951 = vmatprep.subr.mxu0 0.0
  %8952 = vmatpush1.xpose.msra.mxu0 0.0
  %8953 = vmatprep.subr.mxu0 0.0
  %8954 = vmatpush1.xpose.msra.mxu0 0.0
  %8955 = vmatprep.subr.mxu0 0.0
  %8956 = vmatpush1.xpose.msra.mxu0 0.0
  %8957 = vmatprep.subr.mxu0 0.0
  %8958 = vmatpush1.xpose.msra.mxu0 0.0
  %8959 = vmatprep.subr.mxu0 0.0
  %8960 = vmatpush1.xpose.msra.mxu0 %v8933
  %8961 = vmatprep.subr.mxu0 0.0
  %8962 = vmatpush1.xpose.msra.mxu0 %v8931
  %8963 = vmatprep.subr.mxu0 0.0
  %8964 = vmatpush1.xpose.msra.mxu0 %v8929
  %8965 = vmatprep.subr.mxu0 0.0
  %8966 = vmatpush1.xpose.msra.mxu0 %v8927
  %8967 = vmatprep.subr.mxu0 0.0
  %8968 = vmatpush2.xpose.msra.mxu0 0.0
  %8969 = vmatprep.subr.mxu0 0.0
  %8970 = vmatpush2.xpose.msra.mxu0 0.0
  %8971 = vmatprep.subr.mxu0 0.0
  %8972 = vmatpush2.xpose.msra.mxu0 0.0
  %8973 = vmatprep.subr.mxu0 0.0
  %8974 = vmatpush2.xpose.msra.mxu0 0.0
  %8975 = vmatprep.subr.mxu0 0.0
  %8976 = vmatpush2.xpose.msra.mxu0 0.0
  %8977 = vmatprep.subr.mxu0 0.0
  %8978 = vmatpush2.xpose.msra.mxu0 0.0
  %8979 = vmatprep.subr.mxu0 0.0
  %8980 = vmatpush2.xpose.msra.mxu0 0.0
  %8981 = vmatprep.subr.mxu0 0.0
  %8982 = vmatpush2.xpose.msra.mxu0 0.0
  %8983 = vmatprep.subr.mxu0 0.0
  %8984 = vmatpush2.xpose.msra.mxu0 0.0
  %8985 = vmatprep.subr.mxu0 0.0
  %8986 = vmatpush2.xpose.msra.mxu0 0.0
  %8987 = vmatprep.subr.mxu0 0.0
  %8988 = vmatpush2.xpose.msra.mxu0 0.0
  %8989 = vmatprep.subr.mxu0 0.0
  %8990 = vmatpush2.xpose.msra.mxu0 0.0
  %8991 = vmatprep.subr.mxu0 0.0
  %8992 = vmatpush2.xpose.msra.mxu0 0.0
  %8993 = vmatprep.subr.mxu0 0.0
  %8994 = vmatpush2.xpose.msra.mxu0 0.0
  %8995 = vmatprep.subr.mxu0 0.0
  %8996 = vmatpush2.xpose.msra.mxu0 0.0
  %8997 = vmatprep.subr.mxu0 0.0
  %8998 = vmatpush2.xpose.msra.mxu0 0.0
  %8999 = vmatprep.mubr.f32.mxu0 0.0
  %9000 = vmatmul.mubr.f32.gmra.mxu0 %v8919
  %v9001 = vpop.f32.mrf.mxu0
  %v9002 = vadd.f32 0.0, %v9001
  %v9003 = vpop.f32.mrf.mxu0
  %9004 = vmatprep.mubr.f32.mxu0 0.0
  %9005 = vmatmul.mubr.f32.gmra.mxu0 %v8921
  %v9006 = vpop.f32.mrf.mxu0
  %v9007 = vadd.f32 0.0, %v9006
  %v9008 = vpop.f32.mrf.mxu0
  %9009 = vmatprep.mubr.f32.mxu0 0.0
  %9010 = vmatmul.mubr.f32.gmra.mxu0 %v8923
  %v9011 = vpop.f32.mrf.mxu0
  %v9012 = vadd.f32 0.0, %v9011
  %v9013 = vpop.f32.mrf.mxu0
  %9014 = vmatprep.mubr.f32.mxu0 0.0
  %9015 = vmatmul.mubr.f32.gmra.mxu0 %v8925
  %v9016 = vpop.f32.mrf.mxu0
  %v9017 = vadd.f32 0.0, %v9016
  %v9018 = vpop.f32.mrf.mxu0
  %9019 = vdwg.mxu0
  %v9020 = vsel %vm410, %v9002, -inf
  %9021 = vmax.xlane.f32.xlu0 %v9020
  %v9022 = vpop.xlane.xlu0 %9021
  %v9023 = vsel %vm410, %v9007, -inf
  %9024 = vmax.xlane.f32.xlu0 %v9023
  %v9025 = vpop.xlane.xlu0 %9024
  %v9026 = vsel %vm410, %v9012, -inf
  %9027 = vmax.xlane.f32.xlu0 %v9026
  %v9028 = vpop.xlane.xlu0 %9027
  %v9029 = vsel %vm410, %v9017, -inf
  %9030 = vmax.xlane.f32.xlu0 %v9029
  %v9031 = vpop.xlane.xlu0 %9030
  %v9032 = vsub.f32 %v9002, %v9022
  %v9033 = vsub.f32 %v9007, %v9025
  %v9034 = vsub.f32 %v9012, %v9028
  %v9035 = vsub.f32 %v9017, %v9031
  %v9036 = vmul.f32 %v9032, 1.442695
  %v9037 = vpow.pop %v9036
  %v9038 = vmul.f32 %v9033, 1.442695
  %v9039 = vpow.pop %v9038
  %v9040 = vmul.f32 %v9034, 1.442695
  %v9041 = vpow.pop %v9040
  %v9042 = vmul.f32 %v9035, 1.442695
  %v9043 = vpow.pop %v9042
  %v9044 = vsel %vm410, %v9037, 0.0
  %9045 = vadd.xlane.f32.xlu0 %v9044
  %v9046 = vpop.xlane.xlu0 %9045
  %v9047 = vsel %vm410, %v9039, 0.0
  %9048 = vadd.xlane.f32.xlu0 %v9047
  %v9049 = vpop.xlane.xlu0 %9048
  %v9050 = vsel %vm410, %v9041, 0.0
  %9051 = vadd.xlane.f32.xlu0 %v9050
  %v9052 = vpop.xlane.xlu0 %9051
  %v9053 = vsel %vm410, %v9043, 0.0
  %9054 = vadd.xlane.f32.xlu0 %v9053
  %v9055 = vpop.xlane.xlu0 %9054
  %v9056 = vrcp.pop %v9046
  %v9057 = vrcp.pop %v9049
  %v9058 = vrcp.pop %v9052
  %v9059 = vrcp.pop %v9055
  %v9060 = vmul.f32 %v9037, %v9056
  %v9061 = vmul.f32 %v9039, %v9057
  %v9062 = vmul.f32 %v9041, %v9058
  %v9063 = vmul.f32 %v9043, %v9059
  %9064 = vrot.lane.b32.xlu0 %v8613, 80
  %v9065 = vpop.permute.xlu0 %9064
  %9066 = vrot.lane.b32.xlu0 %v8619, 80
  %v9067 = vpop.permute.xlu0 %9066
  %9068 = vrot.lane.b32.xlu0 %v8625, 80
  %v9069 = vpop.permute.xlu0 %9068
  %9070 = vrot.lane.b32.xlu0 %v8631, 80
  %v9071 = vpop.permute.xlu0 %9070
  %v9077 = vsel %vm410, %v9060, 0
  %v9080 = vsel %vm410, %v9061, 0
  %v9083 = vsel %vm410, %v9062, 0
  %v9086 = vsel %vm410, %v9063, 0
  %9088 = vmatprep.subr.mxu0 0.0
  %9089 = vmatpush1.msra.mxu0 0.0
  %9090 = vmatprep.subr.mxu0 0.0
  %9091 = vmatpush1.msra.mxu0 0.0
  %9092 = vmatprep.subr.mxu0 0.0
  %9093 = vmatpush1.msra.mxu0 0.0
  %9094 = vmatprep.subr.mxu0 0.0
  %9095 = vmatpush1.msra.mxu0 0.0
  %9096 = vmatprep.subr.mxu0 0.0
  %9097 = vmatpush1.msra.mxu0 0.0
  %9098 = vmatprep.subr.mxu0 0.0
  %9099 = vmatpush1.msra.mxu0 0.0
  %9100 = vmatprep.subr.mxu0 0.0
  %9101 = vmatpush1.msra.mxu0 0.0
  %9102 = vmatprep.subr.mxu0 0.0
  %9103 = vmatpush1.msra.mxu0 0.0
  %9104 = vmatprep.subr.mxu0 0.0
  %9105 = vmatpush1.msra.mxu0 0.0
  %9106 = vmatprep.subr.mxu0 0.0
  %9107 = vmatpush1.msra.mxu0 0.0
  %9108 = vmatprep.subr.mxu0 0.0
  %9109 = vmatpush1.msra.mxu0 0.0
  %9110 = vmatprep.subr.mxu0 0.0
  %9111 = vmatpush1.msra.mxu0 0.0
  %9112 = vmatprep.subr.mxu0 0.0
  %9113 = vmatpush1.msra.mxu0 %v9071
  %9114 = vmatprep.subr.mxu0 0.0
  %9115 = vmatpush1.msra.mxu0 %v9069
  %9116 = vmatprep.subr.mxu0 0.0
  %9117 = vmatpush1.msra.mxu0 %v9067
  %9118 = vmatprep.subr.mxu0 0.0
  %9119 = vmatpush1.msra.mxu0 %v9065
  %9120 = vmatprep.subr.mxu0 0.0
  %9121 = vmatpush2.msra.mxu0 0.0
  %9122 = vmatprep.subr.mxu0 0.0
  %9123 = vmatpush2.msra.mxu0 0.0
  %9124 = vmatprep.subr.mxu0 0.0
  %9125 = vmatpush2.msra.mxu0 0.0
  %9126 = vmatprep.subr.mxu0 0.0
  %9127 = vmatpush2.msra.mxu0 0.0
  %9128 = vmatprep.subr.mxu0 0.0
  %9129 = vmatpush2.msra.mxu0 0.0
  %9130 = vmatprep.subr.mxu0 0.0
  %9131 = vmatpush2.msra.mxu0 0.0
  %9132 = vmatprep.subr.mxu0 0.0
  %9133 = vmatpush2.msra.mxu0 0.0
  %9134 = vmatprep.subr.mxu0 0.0
  %9135 = vmatpush2.msra.mxu0 0.0
  %9136 = vmatprep.subr.mxu0 0.0
  %9137 = vmatpush2.msra.mxu0 0.0
  %9138 = vmatprep.subr.mxu0 0.0
  %9139 = vmatpush2.msra.mxu0 0.0
  %9140 = vmatprep.subr.mxu0 0.0
  %9141 = vmatpush2.msra.mxu0 0.0
  %9142 = vmatprep.subr.mxu0 0.0
  %9143 = vmatpush2.msra.mxu0 0.0
  %9144 = vmatprep.subr.mxu0 0.0
  %9145 = vmatpush2.msra.mxu0 0.0
  %9146 = vmatprep.subr.mxu0 0.0
  %9147 = vmatpush2.msra.mxu0 0.0
  %9148 = vmatprep.subr.mxu0 0.0
  %9149 = vmatpush2.msra.mxu0 0.0
  %9150 = vmatprep.subr.mxu0 0.0
  %9151 = vmatpush2.msra.mxu0 0.0
  %9152 = vmatprep.mubr.f32.mxu0 0.0
  %9153 = vmatmul.mubr.f32.gmra.mxu0 %v9077
  %v9154 = vpop.f32.mrf.mxu0
  %v9155 = vadd.f32 0.0, %v9154
  %v9156 = vpop.f32.mrf.mxu0
  %9157 = vmatprep.mubr.f32.mxu0 0.0
  %9158 = vmatmul.mubr.f32.gmra.mxu0 %v9080
  %v9159 = vpop.f32.mrf.mxu0
  %v9160 = vadd.f32 0.0, %v9159
  %v9161 = vpop.f32.mrf.mxu0
  %9162 = vmatprep.mubr.f32.mxu0 0.0
  %9163 = vmatmul.mubr.f32.gmra.mxu0 %v9083
  %v9164 = vpop.f32.mrf.mxu0
  %v9165 = vadd.f32 0.0, %v9164
  %v9166 = vpop.f32.mrf.mxu0
  %9167 = vmatprep.mubr.f32.mxu0 0.0
  %9168 = vmatmul.mubr.f32.gmra.mxu0 %v9086
  %v9169 = vpop.f32.mrf.mxu0
  %v9170 = vadd.f32 0.0, %v9169
  %v9171 = vpop.f32.mrf.mxu0
  %9172 = vdwg.mxu0
  %v9174 = vsel %vm148, %v9155, 0
  %v9177 = vsel %vm148, %v9160, 0
  %v9180 = vsel %vm148, %v9165, 0
  %v9183 = vsel %vm148, %v9170, 0
  %9185 = vmatprep.subr.mxu0 0.0
  %9186 = vmatpush1.msra.mxu0 0.0
  %9187 = vmatprep.subr.mxu0 0.0
  %9188 = vmatpush1.msra.mxu0 0.0
  %9189 = vmatprep.subr.mxu0 0.0
  %9190 = vmatpush1.msra.mxu0 0.0
  %9191 = vmatprep.subr.mxu0 0.0
  %9192 = vmatpush1.msra.mxu0 0.0
  %9193 = vmatprep.subr.mxu0 0.0
  %9194 = vmatpush1.msra.mxu0 0.0
  %9195 = vmatprep.subr.mxu0 0.0
  %9196 = vmatpush1.msra.mxu0 0.0
  %9197 = vmatprep.subr.mxu0 0.0
  %9198 = vmatpush1.msra.mxu0 0.0
  %9199 = vmatprep.subr.mxu0 0.0
  %9200 = vmatpush1.msra.mxu0 0.0
  %9201 = vmatprep.subr.mxu0 0.0
  %9202 = vmatpush1.msra.mxu0 0.0
  %9203 = vmatprep.subr.mxu0 0.0
  %9204 = vmatpush1.msra.mxu0 0.0
  %9205 = vmatprep.subr.mxu0 0.0
  %9206 = vmatpush1.msra.mxu0 0.0
  %9207 = vmatprep.subr.mxu0 0.0
  %9208 = vmatpush1.msra.mxu0 0.0
  %9209 = vmatprep.subr.mxu0 0.0
  %9210 = vmatpush1.msra.mxu0 0.0
  %9211 = vmatprep.subr.mxu0 0.0
  %9212 = vmatpush1.msra.mxu0 0.0
  %9213 = vmatprep.subr.mxu0 0.0
  %9214 = vmatpush1.msra.mxu0 %v119
  %9215 = vmatprep.subr.mxu0 0.0
  %9216 = vmatpush1.msra.mxu0 %v118
  %9217 = vmatprep.subr.mxu0 0.0
  %9218 = vmatpush2.msra.mxu0 0.0
  %9219 = vmatprep.subr.mxu0 0.0
  %9220 = vmatpush2.msra.mxu0 0.0
  %9221 = vmatprep.subr.mxu0 0.0
  %9222 = vmatpush2.msra.mxu0 0.0
  %9223 = vmatprep.subr.mxu0 0.0
  %9224 = vmatpush2.msra.mxu0 0.0
  %9225 = vmatprep.subr.mxu0 0.0
  %9226 = vmatpush2.msra.mxu0 0.0
  %9227 = vmatprep.subr.mxu0 0.0
  %9228 = vmatpush2.msra.mxu0 0.0
  %9229 = vmatprep.subr.mxu0 0.0
  %9230 = vmatpush2.msra.mxu0 0.0
  %9231 = vmatprep.subr.mxu0 0.0
  %9232 = vmatpush2.msra.mxu0 0.0
  %9233 = vmatprep.subr.mxu0 0.0
  %9234 = vmatpush2.msra.mxu0 0.0
  %9235 = vmatprep.subr.mxu0 0.0
  %9236 = vmatpush2.msra.mxu0 0.0
  %9237 = vmatprep.subr.mxu0 0.0
  %9238 = vmatpush2.msra.mxu0 0.0
  %9239 = vmatprep.subr.mxu0 0.0
  %9240 = vmatpush2.msra.mxu0 0.0
  %9241 = vmatprep.subr.mxu0 0.0
  %9242 = vmatpush2.msra.mxu0 0.0
  %9243 = vmatprep.subr.mxu0 0.0
  %9244 = vmatpush2.msra.mxu0 0.0
  %9245 = vmatprep.subr.mxu0 0.0
  %9246 = vmatpush2.msra.mxu0 0.0
  %9247 = vmatprep.subr.mxu0 0.0
  %9248 = vmatpush2.msra.mxu0 0.0
  %9249 = vmatprep.mubr.f32.mxu0 0.0
  %9250 = vmatmul.mubr.f32.gmra.mxu0 %v9174
  %v9251 = vpop.f32.mrf.mxu0
  %v9252 = vadd.f32 0.0, %v9251
  %v9253 = vpop.f32.mrf.mxu0
  %9254 = vmatprep.mubr.f32.mxu0 0.0
  %9255 = vmatmul.mubr.f32.gmra.mxu0 %v9177
  %v9256 = vpop.f32.mrf.mxu0
  %v9257 = vadd.f32 0.0, %v9256
  %v9258 = vpop.f32.mrf.mxu0
  %9259 = vmatprep.mubr.f32.mxu0 0.0
  %9260 = vmatmul.mubr.f32.gmra.mxu0 %v9180
  %v9261 = vpop.f32.mrf.mxu0
  %v9262 = vadd.f32 0.0, %v9261
  %v9263 = vpop.f32.mrf.mxu0
  %9264 = vmatprep.mubr.f32.mxu0 0.0
  %9265 = vmatmul.mubr.f32.gmra.mxu0 %v9183
  %v9266 = vpop.f32.mrf.mxu0
  %v9267 = vadd.f32 0.0, %v9266
  %v9268 = vpop.f32.mrf.mxu0
  %9269 = vdwg.mxu0
  %v9271 = vsel %vm148, %v8885, 0
  %v9274 = vsel %vm148, %v8890, 0
  %v9277 = vsel %vm148, %v8895, 0
  %v9280 = vsel %vm148, %v8900, 0
  %9282 = vmatprep.subr.mxu0 0.0
  %9283 = vmatpush1.msra.mxu0 0.0
  %9284 = vmatprep.subr.mxu0 0.0
  %9285 = vmatpush1.msra.mxu0 0.0
  %9286 = vmatprep.subr.mxu0 0.0
  %9287 = vmatpush1.msra.mxu0 0.0
  %9288 = vmatprep.subr.mxu0 0.0
  %9289 = vmatpush1.msra.mxu0 0.0
  %9290 = vmatprep.subr.mxu0 0.0
  %9291 = vmatpush1.msra.mxu0 0.0
  %9292 = vmatprep.subr.mxu0 0.0
  %9293 = vmatpush1.msra.mxu0 0.0
  %9294 = vmatprep.subr.mxu0 0.0
  %9295 = vmatpush1.msra.mxu0 0.0
  %9296 = vmatprep.subr.mxu0 0.0
  %9297 = vmatpush1.msra.mxu0 0.0
  %9298 = vmatprep.subr.mxu0 0.0
  %9299 = vmatpush1.msra.mxu0 0.0
  %9300 = vmatprep.subr.mxu0 0.0
  %9301 = vmatpush1.msra.mxu0 0.0
  %9302 = vmatprep.subr.mxu0 0.0
  %9303 = vmatpush1.msra.mxu0 0.0
  %9304 = vmatprep.subr.mxu0 0.0
  %9305 = vmatpush1.msra.mxu0 0.0
  %9306 = vmatprep.subr.mxu0 0.0
  %9307 = vmatpush1.msra.mxu0 0.0
  %9308 = vmatprep.subr.mxu0 0.0
  %9309 = vmatpush1.msra.mxu0 0.0
  %9310 = vmatprep.subr.mxu0 0.0
  %9311 = vmatpush1.msra.mxu0 %v117
  %9312 = vmatprep.subr.mxu0 0.0
  %9313 = vmatpush1.msra.mxu0 %v116
  %9314 = vmatprep.subr.mxu0 0.0
  %9315 = vmatpush2.msra.mxu0 0.0
  %9316 = vmatprep.subr.mxu0 0.0
  %9317 = vmatpush2.msra.mxu0 0.0
  %9318 = vmatprep.subr.mxu0 0.0
  %9319 = vmatpush2.msra.mxu0 0.0
  %9320 = vmatprep.subr.mxu0 0.0
  %9321 = vmatpush2.msra.mxu0 0.0
  %9322 = vmatprep.subr.mxu0 0.0
  %9323 = vmatpush2.msra.mxu0 0.0
  %9324 = vmatprep.subr.mxu0 0.0
  %9325 = vmatpush2.msra.mxu0 0.0
  %9326 = vmatprep.subr.mxu0 0.0
  %9327 = vmatpush2.msra.mxu0 0.0
  %9328 = vmatprep.subr.mxu0 0.0
  %9329 = vmatpush2.msra.mxu0 0.0
  %9330 = vmatprep.subr.mxu0 0.0
  %9331 = vmatpush2.msra.mxu0 0.0
  %9332 = vmatprep.subr.mxu0 0.0
  %9333 = vmatpush2.msra.mxu0 0.0
  %9334 = vmatprep.subr.mxu0 0.0
  %9335 = vmatpush2.msra.mxu0 0.0
  %9336 = vmatprep.subr.mxu0 0.0
  %9337 = vmatpush2.msra.mxu0 0.0
  %9338 = vmatprep.subr.mxu0 0.0
  %9339 = vmatpush2.msra.mxu0 0.0
  %9340 = vmatprep.subr.mxu0 0.0
  %9341 = vmatpush2.msra.mxu0 0.0
  %9342 = vmatprep.subr.mxu0 0.0
  %9343 = vmatpush2.msra.mxu0 0.0
  %9344 = vmatprep.subr.mxu0 0.0
  %9345 = vmatpush2.msra.mxu0 0.0
  %9346 = vmatprep.mubr.f32.mxu0 0.0
  %9347 = vmatmul.mubr.f32.gmra.mxu0 %v9271
  %v9348 = vpop.f32.mrf.mxu0
  %v9349 = vadd.f32 %v9252, %v9348
  %v9350 = vpop.f32.mrf.mxu0
  %9351 = vmatprep.mubr.f32.mxu0 0.0
  %9352 = vmatmul.mubr.f32.gmra.mxu0 %v9274
  %v9353 = vpop.f32.mrf.mxu0
  %v9354 = vadd.f32 %v9257, %v9353
  %v9355 = vpop.f32.mrf.mxu0
  %9356 = vmatprep.mubr.f32.mxu0 0.0
  %9357 = vmatmul.mubr.f32.gmra.mxu0 %v9277
  %v9358 = vpop.f32.mrf.mxu0
  %v9359 = vadd.f32 %v9262, %v9358
  %v9360 = vpop.f32.mrf.mxu0
  %9361 = vmatprep.mubr.f32.mxu0 0.0
  %9362 = vmatmul.mubr.f32.gmra.mxu0 %v9280
  %v9363 = vpop.f32.mrf.mxu0
  %v9364 = vadd.f32 %v9267, %v9363
  %v9365 = vpop.f32.mrf.mxu0
  %9366 = vdwg.mxu0
  %9367 = vrot.lane.b32.xlu0 %v8611, 96
  %v9368 = vpop.permute.xlu0 %9367
  %9369 = vrot.lane.b32.xlu0 %v8617, 96
  %v9370 = vpop.permute.xlu0 %9369
  %9371 = vrot.lane.b32.xlu0 %v8623, 96
  %v9372 = vpop.permute.xlu0 %9371
  %9373 = vrot.lane.b32.xlu0 %v8629, 96
  %v9374 = vpop.permute.xlu0 %9373
  %9375 = vrot.lane.b32.xlu0 %v8611, 16
  %v9376 = vpop.permute.xlu0 %9375
  %9377 = vrot.lane.b32.xlu0 %v8617, 16
  %v9378 = vpop.permute.xlu0 %9377
  %9379 = vrot.lane.b32.xlu0 %v8623, 16
  %v9380 = vpop.permute.xlu0 %9379
  %9381 = vrot.lane.b32.xlu0 %v8629, 16
  %v9382 = vpop.permute.xlu0 %9381
  %v9383 = vsel %vm148, %v9368, 0
  %v9385 = vsel %vm148, %v9370, 0
  %v9387 = vsel %vm148, %v9372, 0
  %v9389 = vsel %vm148, %v9374, 0
  %v9391 = vsel %vm148, %v9376, 0
  %v9393 = vsel %vm148, %v9378, 0
  %v9395 = vsel %vm148, %v9380, 0
  %v9397 = vsel %vm148, %v9382, 0
  %9399 = vmatprep.subr.mxu0 0.0
  %9400 = vmatpush1.xpose.msra.mxu0 0.0
  %9401 = vmatprep.subr.mxu0 0.0
  %9402 = vmatpush1.xpose.msra.mxu0 0.0
  %9403 = vmatprep.subr.mxu0 0.0
  %9404 = vmatpush1.xpose.msra.mxu0 0.0
  %9405 = vmatprep.subr.mxu0 0.0
  %9406 = vmatpush1.xpose.msra.mxu0 0.0
  %9407 = vmatprep.subr.mxu0 0.0
  %9408 = vmatpush1.xpose.msra.mxu0 0.0
  %9409 = vmatprep.subr.mxu0 0.0
  %9410 = vmatpush1.xpose.msra.mxu0 0.0
  %9411 = vmatprep.subr.mxu0 0.0
  %9412 = vmatpush1.xpose.msra.mxu0 0.0
  %9413 = vmatprep.subr.mxu0 0.0
  %9414 = vmatpush1.xpose.msra.mxu0 0.0
  %9415 = vmatprep.subr.mxu0 0.0
  %9416 = vmatpush1.xpose.msra.mxu0 0.0
  %9417 = vmatprep.subr.mxu0 0.0
  %9418 = vmatpush1.xpose.msra.mxu0 0.0
  %9419 = vmatprep.subr.mxu0 0.0
  %9420 = vmatpush1.xpose.msra.mxu0 0.0
  %9421 = vmatprep.subr.mxu0 0.0
  %9422 = vmatpush1.xpose.msra.mxu0 0.0
  %9423 = vmatprep.subr.mxu0 0.0
  %9424 = vmatpush1.xpose.msra.mxu0 %v9397
  %9425 = vmatprep.subr.mxu0 0.0
  %9426 = vmatpush1.xpose.msra.mxu0 %v9395
  %9427 = vmatprep.subr.mxu0 0.0
  %9428 = vmatpush1.xpose.msra.mxu0 %v9393
  %9429 = vmatprep.subr.mxu0 0.0
  %9430 = vmatpush1.xpose.msra.mxu0 %v9391
  %9431 = vmatprep.subr.mxu0 0.0
  %9432 = vmatpush2.xpose.msra.mxu0 0.0
  %9433 = vmatprep.subr.mxu0 0.0
  %9434 = vmatpush2.xpose.msra.mxu0 0.0
  %9435 = vmatprep.subr.mxu0 0.0
  %9436 = vmatpush2.xpose.msra.mxu0 0.0
  %9437 = vmatprep.subr.mxu0 0.0
  %9438 = vmatpush2.xpose.msra.mxu0 0.0
  %9439 = vmatprep.subr.mxu0 0.0
  %9440 = vmatpush2.xpose.msra.mxu0 0.0
  %9441 = vmatprep.subr.mxu0 0.0
  %9442 = vmatpush2.xpose.msra.mxu0 0.0
  %9443 = vmatprep.subr.mxu0 0.0
  %9444 = vmatpush2.xpose.msra.mxu0 0.0
  %9445 = vmatprep.subr.mxu0 0.0
  %9446 = vmatpush2.xpose.msra.mxu0 0.0
  %9447 = vmatprep.subr.mxu0 0.0
  %9448 = vmatpush2.xpose.msra.mxu0 0.0
  %9449 = vmatprep.subr.mxu0 0.0
  %9450 = vmatpush2.xpose.msra.mxu0 0.0
  %9451 = vmatprep.subr.mxu0 0.0
  %9452 = vmatpush2.xpose.msra.mxu0 0.0
  %9453 = vmatprep.subr.mxu0 0.0
  %9454 = vmatpush2.xpose.msra.mxu0 0.0
  %9455 = vmatprep.subr.mxu0 0.0
  %9456 = vmatpush2.xpose.msra.mxu0 0.0
  %9457 = vmatprep.subr.mxu0 0.0
  %9458 = vmatpush2.xpose.msra.mxu0 0.0
  %9459 = vmatprep.subr.mxu0 0.0
  %9460 = vmatpush2.xpose.msra.mxu0 0.0
  %9461 = vmatprep.subr.mxu0 0.0
  %9462 = vmatpush2.xpose.msra.mxu0 0.0
  %9463 = vmatprep.mubr.f32.mxu0 0.0
  %9464 = vmatmul.mubr.f32.gmra.mxu0 %v9383
  %v9465 = vpop.f32.mrf.mxu0
  %v9466 = vadd.f32 0.0, %v9465
  %v9467 = vpop.f32.mrf.mxu0
  %9468 = vmatprep.mubr.f32.mxu0 0.0
  %9469 = vmatmul.mubr.f32.gmra.mxu0 %v9385
  %v9470 = vpop.f32.mrf.mxu0
  %v9471 = vadd.f32 0.0, %v9470
  %v9472 = vpop.f32.mrf.mxu0
  %9473 = vmatprep.mubr.f32.mxu0 0.0
  %9474 = vmatmul.mubr.f32.gmra.mxu0 %v9387
  %v9475 = vpop.f32.mrf.mxu0
  %v9476 = vadd.f32 0.0, %v9475
  %v9477 = vpop.f32.mrf.mxu0
  %9478 = vmatprep.mubr.f32.mxu0 0.0
  %9479 = vmatmul.mubr.f32.gmra.mxu0 %v9389
  %v9480 = vpop.f32.mrf.mxu0
  %v9481 = vadd.f32 0.0, %v9480
  %v9482 = vpop.f32.mrf.mxu0
  %9483 = vdwg.mxu0
  %v9484 = vsel %vm410, %v9466, -inf
  %9485 = vmax.xlane.f32.xlu0 %v9484
  %v9486 = vpop.xlane.xlu0 %9485
  %v9487 = vsel %vm410, %v9471, -inf
  %9488 = vmax.xlane.f32.xlu0 %v9487
  %v9489 = vpop.xlane.xlu0 %9488
  %v9490 = vsel %vm410, %v9476, -inf
  %9491 = vmax.xlane.f32.xlu0 %v9490
  %v9492 = vpop.xlane.xlu0 %9491
  %v9493 = vsel %vm410, %v9481, -inf
  %9494 = vmax.xlane.f32.xlu0 %v9493
  %v9495 = vpop.xlane.xlu0 %9494
  %v9496 = vsub.f32 %v9466, %v9486
  %v9497 = vsub.f32 %v9471, %v9489
  %v9498 = vsub.f32 %v9476, %v9492
  %v9499 = vsub.f32 %v9481, %v9495
  %v9500 = vmul.f32 %v9496, 1.442695
  %v9501 = vpow.pop %v9500
  %v9502 = vmul.f32 %v9497, 1.442695
  %v9503 = vpow.pop %v9502
  %v9504 = vmul.f32 %v9498, 1.442695
  %v9505 = vpow.pop %v9504
  %v9506 = vmul.f32 %v9499, 1.442695
  %v9507 = vpow.pop %v9506
  %v9508 = vsel %vm410, %v9501, 0.0
  %9509 = vadd.xlane.f32.xlu0 %v9508
  %v9510 = vpop.xlane.xlu0 %9509
  %v9511 = vsel %vm410, %v9503, 0.0
  %9512 = vadd.xlane.f32.xlu0 %v9511
  %v9513 = vpop.xlane.xlu0 %9512
  %v9514 = vsel %vm410, %v9505, 0.0
  %9515 = vadd.xlane.f32.xlu0 %v9514
  %v9516 = vpop.xlane.xlu0 %9515
  %v9517 = vsel %vm410, %v9507, 0.0
  %9518 = vadd.xlane.f32.xlu0 %v9517
  %v9519 = vpop.xlane.xlu0 %9518
  %v9520 = vrcp.pop %v9510
  %v9521 = vrcp.pop %v9513
  %v9522 = vrcp.pop %v9516
  %v9523 = vrcp.pop %v9519
  %v9524 = vmul.f32 %v9501, %v9520
  %v9525 = vmul.f32 %v9503, %v9521
  %v9526 = vmul.f32 %v9505, %v9522
  %v9527 = vmul.f32 %v9507, %v9523
  %9528 = vrot.lane.b32.xlu0 %v8613, 64
  %v9529 = vpop.permute.xlu0 %9528
  %9530 = vrot.lane.b32.xlu0 %v8619, 64
  %v9531 = vpop.permute.xlu0 %9530
  %9532 = vrot.lane.b32.xlu0 %v8625, 64
  %v9533 = vpop.permute.xlu0 %9532
  %9534 = vrot.lane.b32.xlu0 %v8631, 64
  %v9535 = vpop.permute.xlu0 %9534
  %v9541 = vsel %vm410, %v9524, 0
  %v9544 = vsel %vm410, %v9525, 0
  %v9547 = vsel %vm410, %v9526, 0
  %v9550 = vsel %vm410, %v9527, 0
  %9552 = vmatprep.subr.mxu0 0.0
  %9553 = vmatpush1.msra.mxu0 0.0
  %9554 = vmatprep.subr.mxu0 0.0
  %9555 = vmatpush1.msra.mxu0 0.0
  %9556 = vmatprep.subr.mxu0 0.0
  %9557 = vmatpush1.msra.mxu0 0.0
  %9558 = vmatprep.subr.mxu0 0.0
  %9559 = vmatpush1.msra.mxu0 0.0
  %9560 = vmatprep.subr.mxu0 0.0
  %9561 = vmatpush1.msra.mxu0 0.0
  %9562 = vmatprep.subr.mxu0 0.0
  %9563 = vmatpush1.msra.mxu0 0.0
  %9564 = vmatprep.subr.mxu0 0.0
  %9565 = vmatpush1.msra.mxu0 0.0
  %9566 = vmatprep.subr.mxu0 0.0
  %9567 = vmatpush1.msra.mxu0 0.0
  %9568 = vmatprep.subr.mxu0 0.0
  %9569 = vmatpush1.msra.mxu0 0.0
  %9570 = vmatprep.subr.mxu0 0.0
  %9571 = vmatpush1.msra.mxu0 0.0
  %9572 = vmatprep.subr.mxu0 0.0
  %9573 = vmatpush1.msra.mxu0 0.0
  %9574 = vmatprep.subr.mxu0 0.0
  %9575 = vmatpush1.msra.mxu0 0.0
  %9576 = vmatprep.subr.mxu0 0.0
  %9577 = vmatpush1.msra.mxu0 %v9535
  %9578 = vmatprep.subr.mxu0 0.0
  %9579 = vmatpush1.msra.mxu0 %v9533
  %9580 = vmatprep.subr.mxu0 0.0
  %9581 = vmatpush1.msra.mxu0 %v9531
  %9582 = vmatprep.subr.mxu0 0.0
  %9583 = vmatpush1.msra.mxu0 %v9529
  %9584 = vmatprep.subr.mxu0 0.0
  %9585 = vmatpush2.msra.mxu0 0.0
  %9586 = vmatprep.subr.mxu0 0.0
  %9587 = vmatpush2.msra.mxu0 0.0
  %9588 = vmatprep.subr.mxu0 0.0
  %9589 = vmatpush2.msra.mxu0 0.0
  %9590 = vmatprep.subr.mxu0 0.0
  %9591 = vmatpush2.msra.mxu0 0.0
  %9592 = vmatprep.subr.mxu0 0.0
  %9593 = vmatpush2.msra.mxu0 0.0
  %9594 = vmatprep.subr.mxu0 0.0
  %9595 = vmatpush2.msra.mxu0 0.0
  %9596 = vmatprep.subr.mxu0 0.0
  %9597 = vmatpush2.msra.mxu0 0.0
  %9598 = vmatprep.subr.mxu0 0.0
  %9599 = vmatpush2.msra.mxu0 0.0
  %9600 = vmatprep.subr.mxu0 0.0
  %9601 = vmatpush2.msra.mxu0 0.0
  %9602 = vmatprep.subr.mxu0 0.0
  %9603 = vmatpush2.msra.mxu0 0.0
  %9604 = vmatprep.subr.mxu0 0.0
  %9605 = vmatpush2.msra.mxu0 0.0
  %9606 = vmatprep.subr.mxu0 0.0
  %9607 = vmatpush2.msra.mxu0 0.0
  %9608 = vmatprep.subr.mxu0 0.0
  %9609 = vmatpush2.msra.mxu0 0.0
  %9610 = vmatprep.subr.mxu0 0.0
  %9611 = vmatpush2.msra.mxu0 0.0
  %9612 = vmatprep.subr.mxu0 0.0
  %9613 = vmatpush2.msra.mxu0 0.0
  %9614 = vmatprep.subr.mxu0 0.0
  %9615 = vmatpush2.msra.mxu0 0.0
  %9616 = vmatprep.mubr.f32.mxu0 0.0
  %9617 = vmatmul.mubr.f32.gmra.mxu0 %v9541
  %v9618 = vpop.f32.mrf.mxu0
  %v9619 = vadd.f32 0.0, %v9618
  %v9620 = vpop.f32.mrf.mxu0
  %9621 = vmatprep.mubr.f32.mxu0 0.0
  %9622 = vmatmul.mubr.f32.gmra.mxu0 %v9544
  %v9623 = vpop.f32.mrf.mxu0
  %v9624 = vadd.f32 0.0, %v9623
  %v9625 = vpop.f32.mrf.mxu0
  %9626 = vmatprep.mubr.f32.mxu0 0.0
  %9627 = vmatmul.mubr.f32.gmra.mxu0 %v9547
  %v9628 = vpop.f32.mrf.mxu0
  %v9629 = vadd.f32 0.0, %v9628
  %v9630 = vpop.f32.mrf.mxu0
  %9631 = vmatprep.mubr.f32.mxu0 0.0
  %9632 = vmatmul.mubr.f32.gmra.mxu0 %v9550
  %v9633 = vpop.f32.mrf.mxu0
  %v9634 = vadd.f32 0.0, %v9633
  %v9635 = vpop.f32.mrf.mxu0
  %9636 = vdwg.mxu0
  %v9638 = vsel %vm148, %v9619, 0
  %v9641 = vsel %vm148, %v9624, 0
  %v9644 = vsel %vm148, %v9629, 0
  %v9647 = vsel %vm148, %v9634, 0
  %9649 = vmatprep.subr.mxu0 0.0
  %9650 = vmatpush1.msra.mxu0 0.0
  %9651 = vmatprep.subr.mxu0 0.0
  %9652 = vmatpush1.msra.mxu0 0.0
  %9653 = vmatprep.subr.mxu0 0.0
  %9654 = vmatpush1.msra.mxu0 0.0
  %9655 = vmatprep.subr.mxu0 0.0
  %9656 = vmatpush1.msra.mxu0 0.0
  %9657 = vmatprep.subr.mxu0 0.0
  %9658 = vmatpush1.msra.mxu0 0.0
  %9659 = vmatprep.subr.mxu0 0.0
  %9660 = vmatpush1.msra.mxu0 0.0
  %9661 = vmatprep.subr.mxu0 0.0
  %9662 = vmatpush1.msra.mxu0 0.0
  %9663 = vmatprep.subr.mxu0 0.0
  %9664 = vmatpush1.msra.mxu0 0.0
  %9665 = vmatprep.subr.mxu0 0.0
  %9666 = vmatpush1.msra.mxu0 0.0
  %9667 = vmatprep.subr.mxu0 0.0
  %9668 = vmatpush1.msra.mxu0 0.0
  %9669 = vmatprep.subr.mxu0 0.0
  %9670 = vmatpush1.msra.mxu0 0.0
  %9671 = vmatprep.subr.mxu0 0.0
  %9672 = vmatpush1.msra.mxu0 0.0
  %9673 = vmatprep.subr.mxu0 0.0
  %9674 = vmatpush1.msra.mxu0 0.0
  %9675 = vmatprep.subr.mxu0 0.0
  %9676 = vmatpush1.msra.mxu0 0.0
  %9677 = vmatprep.subr.mxu0 0.0
  %9678 = vmatpush1.msra.mxu0 %v121
  %9679 = vmatprep.subr.mxu0 0.0
  %9680 = vmatpush1.msra.mxu0 %v120
  %9681 = vmatprep.subr.mxu0 0.0
  %9682 = vmatpush2.msra.mxu0 0.0
  %9683 = vmatprep.subr.mxu0 0.0
  %9684 = vmatpush2.msra.mxu0 0.0
  %9685 = vmatprep.subr.mxu0 0.0
  %9686 = vmatpush2.msra.mxu0 0.0
  %9687 = vmatprep.subr.mxu0 0.0
  %9688 = vmatpush2.msra.mxu0 0.0
  %9689 = vmatprep.subr.mxu0 0.0
  %9690 = vmatpush2.msra.mxu0 0.0
  %9691 = vmatprep.subr.mxu0 0.0
  %9692 = vmatpush2.msra.mxu0 0.0
  %9693 = vmatprep.subr.mxu0 0.0
  %9694 = vmatpush2.msra.mxu0 0.0
  %9695 = vmatprep.subr.mxu0 0.0
  %9696 = vmatpush2.msra.mxu0 0.0
  %9697 = vmatprep.subr.mxu0 0.0
  %9698 = vmatpush2.msra.mxu0 0.0
  %9699 = vmatprep.subr.mxu0 0.0
  %9700 = vmatpush2.msra.mxu0 0.0
  %9701 = vmatprep.subr.mxu0 0.0
  %9702 = vmatpush2.msra.mxu0 0.0
  %9703 = vmatprep.subr.mxu0 0.0
  %9704 = vmatpush2.msra.mxu0 0.0
  %9705 = vmatprep.subr.mxu0 0.0
  %9706 = vmatpush2.msra.mxu0 0.0
  %9707 = vmatprep.subr.mxu0 0.0
  %9708 = vmatpush2.msra.mxu0 0.0
  %9709 = vmatprep.subr.mxu0 0.0
  %9710 = vmatpush2.msra.mxu0 0.0
  %9711 = vmatprep.subr.mxu0 0.0
  %9712 = vmatpush2.msra.mxu0 0.0
  %9713 = vmatprep.mubr.f32.mxu0 0.0
  %9714 = vmatmul.mubr.f32.gmra.mxu0 %v9638
  %v9715 = vpop.f32.mrf.mxu0
  %v9716 = vadd.f32 0.0, %v9715
  %v9717 = vpop.f32.mrf.mxu0
  %9718 = vmatprep.mubr.f32.mxu0 0.0
  %9719 = vmatmul.mubr.f32.gmra.mxu0 %v9641
  %v9720 = vpop.f32.mrf.mxu0
  %v9721 = vadd.f32 0.0, %v9720
  %v9722 = vpop.f32.mrf.mxu0
  %9723 = vmatprep.mubr.f32.mxu0 0.0
  %9724 = vmatmul.mubr.f32.gmra.mxu0 %v9644
  %v9725 = vpop.f32.mrf.mxu0
  %v9726 = vadd.f32 0.0, %v9725
  %v9727 = vpop.f32.mrf.mxu0
  %9728 = vmatprep.mubr.f32.mxu0 0.0
  %9729 = vmatmul.mubr.f32.gmra.mxu0 %v9647
  %v9730 = vpop.f32.mrf.mxu0
  %v9731 = vadd.f32 0.0, %v9730
  %v9732 = vpop.f32.mrf.mxu0
  %9733 = vdwg.mxu0
  %v9734 = vadd.f32 %v9349, %v9716
  %v9735 = vadd.f32 %v9354, %v9721
  %v9736 = vadd.f32 %v9359, %v9726
  %v9737 = vadd.f32 %v9364, %v9731
  %9738 = vrot.lane.b32.xlu0 %v8611, 80
  %v9739 = vpop.permute.xlu0 %9738
  %9740 = vrot.lane.b32.xlu0 %v8617, 80
  %v9741 = vpop.permute.xlu0 %9740
  %9742 = vrot.lane.b32.xlu0 %v8623, 80
  %v9743 = vpop.permute.xlu0 %9742
  %9744 = vrot.lane.b32.xlu0 %v8629, 80
  %v9745 = vpop.permute.xlu0 %9744
  %v9746 = vsel %vm148, %v9739, 0
  %v9748 = vsel %vm148, %v9741, 0
  %v9750 = vsel %vm148, %v9743, 0
  %v9752 = vsel %vm148, %v9745, 0
  %v9754 = vsel %vm148, %v8613, 0
  %v9756 = vsel %vm148, %v8619, 0
  %v9758 = vsel %vm148, %v8625, 0
  %v9760 = vsel %vm148, %v8631, 0
  %9762 = vmatprep.subr.mxu0 0.0
  %9763 = vmatpush1.xpose.msra.mxu0 0.0
  %9764 = vmatprep.subr.mxu0 0.0
  %9765 = vmatpush1.xpose.msra.mxu0 0.0
  %9766 = vmatprep.subr.mxu0 0.0
  %9767 = vmatpush1.xpose.msra.mxu0 0.0
  %9768 = vmatprep.subr.mxu0 0.0
  %9769 = vmatpush1.xpose.msra.mxu0 0.0
  %9770 = vmatprep.subr.mxu0 0.0
  %9771 = vmatpush1.xpose.msra.mxu0 0.0
  %9772 = vmatprep.subr.mxu0 0.0
  %9773 = vmatpush1.xpose.msra.mxu0 0.0
  %9774 = vmatprep.subr.mxu0 0.0
  %9775 = vmatpush1.xpose.msra.mxu0 0.0
  %9776 = vmatprep.subr.mxu0 0.0
  %9777 = vmatpush1.xpose.msra.mxu0 0.0
  %9778 = vmatprep.subr.mxu0 0.0
  %9779 = vmatpush1.xpose.msra.mxu0 0.0
  %9780 = vmatprep.subr.mxu0 0.0
  %9781 = vmatpush1.xpose.msra.mxu0 0.0
  %9782 = vmatprep.subr.mxu0 0.0
  %9783 = vmatpush1.xpose.msra.mxu0 0.0
  %9784 = vmatprep.subr.mxu0 0.0
  %9785 = vmatpush1.xpose.msra.mxu0 0.0
  %9786 = vmatprep.subr.mxu0 0.0
  %9787 = vmatpush1.xpose.msra.mxu0 %v9760
  %9788 = vmatprep.subr.mxu0 0.0
  %9789 = vmatpush1.xpose.msra.mxu0 %v9758
  %9790 = vmatprep.subr.mxu0 0.0
  %9791 = vmatpush1.xpose.msra.mxu0 %v9756
  %9792 = vmatprep.subr.mxu0 0.0
  %9793 = vmatpush1.xpose.msra.mxu0 %v9754
  %9794 = vmatprep.subr.mxu0 0.0
  %9795 = vmatpush2.xpose.msra.mxu0 0.0
  %9796 = vmatprep.subr.mxu0 0.0
  %9797 = vmatpush2.xpose.msra.mxu0 0.0
  %9798 = vmatprep.subr.mxu0 0.0
  %9799 = vmatpush2.xpose.msra.mxu0 0.0
  %9800 = vmatprep.subr.mxu0 0.0
  %9801 = vmatpush2.xpose.msra.mxu0 0.0
  %9802 = vmatprep.subr.mxu0 0.0
  %9803 = vmatpush2.xpose.msra.mxu0 0.0
  %9804 = vmatprep.subr.mxu0 0.0
  %9805 = vmatpush2.xpose.msra.mxu0 0.0
  %9806 = vmatprep.subr.mxu0 0.0
  %9807 = vmatpush2.xpose.msra.mxu0 0.0
  %9808 = vmatprep.subr.mxu0 0.0
  %9809 = vmatpush2.xpose.msra.mxu0 0.0
  %9810 = vmatprep.subr.mxu0 0.0
  %9811 = vmatpush2.xpose.msra.mxu0 0.0
  %9812 = vmatprep.subr.mxu0 0.0
  %9813 = vmatpush2.xpose.msra.mxu0 0.0
  %9814 = vmatprep.subr.mxu0 0.0
  %9815 = vmatpush2.xpose.msra.mxu0 0.0
  %9816 = vmatprep.subr.mxu0 0.0
  %9817 = vmatpush2.xpose.msra.mxu0 0.0
  %9818 = vmatprep.subr.mxu0 0.0
  %9819 = vmatpush2.xpose.msra.mxu0 0.0
  %9820 = vmatprep.subr.mxu0 0.0
  %9821 = vmatpush2.xpose.msra.mxu0 0.0
  %9822 = vmatprep.subr.mxu0 0.0
  %9823 = vmatpush2.xpose.msra.mxu0 0.0
  %9824 = vmatprep.subr.mxu0 0.0
  %9825 = vmatpush2.xpose.msra.mxu0 0.0
  %9826 = vmatprep.mubr.f32.mxu0 0.0
  %9827 = vmatmul.mubr.f32.gmra.mxu0 %v9746
  %v9828 = vpop.f32.mrf.mxu0
  %v9829 = vadd.f32 0.0, %v9828
  %v9830 = vpop.f32.mrf.mxu0
  %9831 = vmatprep.mubr.f32.mxu0 0.0
  %9832 = vmatmul.mubr.f32.gmra.mxu0 %v9748
  %v9833 = vpop.f32.mrf.mxu0
  %v9834 = vadd.f32 0.0, %v9833
  %v9835 = vpop.f32.mrf.mxu0
  %9836 = vmatprep.mubr.f32.mxu0 0.0
  %9837 = vmatmul.mubr.f32.gmra.mxu0 %v9750
  %v9838 = vpop.f32.mrf.mxu0
  %v9839 = vadd.f32 0.0, %v9838
  %v9840 = vpop.f32.mrf.mxu0
  %9841 = vmatprep.mubr.f32.mxu0 0.0
  %9842 = vmatmul.mubr.f32.gmra.mxu0 %v9752
  %v9843 = vpop.f32.mrf.mxu0
  %v9844 = vadd.f32 0.0, %v9843
  %v9845 = vpop.f32.mrf.mxu0
  %9846 = vdwg.mxu0
  %v9847 = vsel %vm410, %v9829, -inf
  %9848 = vmax.xlane.f32.xlu0 %v9847
  %v9849 = vpop.xlane.xlu0 %9848
  %v9850 = vsel %vm410, %v9834, -inf
  %9851 = vmax.xlane.f32.xlu0 %v9850
  %v9852 = vpop.xlane.xlu0 %9851
  %v9853 = vsel %vm410, %v9839, -inf
  %9854 = vmax.xlane.f32.xlu0 %v9853
  %v9855 = vpop.xlane.xlu0 %9854
  %v9856 = vsel %vm410, %v9844, -inf
  %9857 = vmax.xlane.f32.xlu0 %v9856
  %v9858 = vpop.xlane.xlu0 %9857
  %v9859 = vsub.f32 %v9829, %v9849
  %v9860 = vsub.f32 %v9834, %v9852
  %v9861 = vsub.f32 %v9839, %v9855
  %v9862 = vsub.f32 %v9844, %v9858
  %v9863 = vmul.f32 %v9859, 1.442695
  %v9864 = vpow.pop %v9863
  %v9865 = vmul.f32 %v9860, 1.442695
  %v9866 = vpow.pop %v9865
  %v9867 = vmul.f32 %v9861, 1.442695
  %v9868 = vpow.pop %v9867
  %v9869 = vmul.f32 %v9862, 1.442695
  %v9870 = vpow.pop %v9869
  %v9871 = vsel %vm410, %v9864, 0.0
  %9872 = vadd.xlane.f32.xlu0 %v9871
  %v9873 = vpop.xlane.xlu0 %9872
  %v9874 = vsel %vm410, %v9866, 0.0
  %9875 = vadd.xlane.f32.xlu0 %v9874
  %v9876 = vpop.xlane.xlu0 %9875
  %v9877 = vsel %vm410, %v9868, 0.0
  %9878 = vadd.xlane.f32.xlu0 %v9877
  %v9879 = vpop.xlane.xlu0 %9878
  %v9880 = vsel %vm410, %v9870, 0.0
  %9881 = vadd.xlane.f32.xlu0 %v9880
  %v9882 = vpop.xlane.xlu0 %9881
  %v9883 = vrcp.pop %v9873
  %v9884 = vrcp.pop %v9876
  %v9885 = vrcp.pop %v9879
  %v9886 = vrcp.pop %v9882
  %v9887 = vmul.f32 %v9864, %v9883
  %v9888 = vmul.f32 %v9866, %v9884
  %v9889 = vmul.f32 %v9868, %v9885
  %v9890 = vmul.f32 %v9870, %v9886
  %9891 = vrot.lane.b32.xlu0 %v8613, 48
  %v9892 = vpop.permute.xlu0 %9891
  %9893 = vrot.lane.b32.xlu0 %v8619, 48
  %v9894 = vpop.permute.xlu0 %9893
  %9895 = vrot.lane.b32.xlu0 %v8625, 48
  %v9896 = vpop.permute.xlu0 %9895
  %9897 = vrot.lane.b32.xlu0 %v8631, 48
  %v9898 = vpop.permute.xlu0 %9897
  %v9904 = vsel %vm410, %v9887, 0
  %v9907 = vsel %vm410, %v9888, 0
  %v9910 = vsel %vm410, %v9889, 0
  %v9913 = vsel %vm410, %v9890, 0
  %9915 = vmatprep.subr.mxu0 0.0
  %9916 = vmatpush1.msra.mxu0 0.0
  %9917 = vmatprep.subr.mxu0 0.0
  %9918 = vmatpush1.msra.mxu0 0.0
  %9919 = vmatprep.subr.mxu0 0.0
  %9920 = vmatpush1.msra.mxu0 0.0
  %9921 = vmatprep.subr.mxu0 0.0
  %9922 = vmatpush1.msra.mxu0 0.0
  %9923 = vmatprep.subr.mxu0 0.0
  %9924 = vmatpush1.msra.mxu0 0.0
  %9925 = vmatprep.subr.mxu0 0.0
  %9926 = vmatpush1.msra.mxu0 0.0
  %9927 = vmatprep.subr.mxu0 0.0
  %9928 = vmatpush1.msra.mxu0 0.0
  %9929 = vmatprep.subr.mxu0 0.0
  %9930 = vmatpush1.msra.mxu0 0.0
  %9931 = vmatprep.subr.mxu0 0.0
  %9932 = vmatpush1.msra.mxu0 0.0
  %9933 = vmatprep.subr.mxu0 0.0
  %9934 = vmatpush1.msra.mxu0 0.0
  %9935 = vmatprep.subr.mxu0 0.0
  %9936 = vmatpush1.msra.mxu0 0.0
  %9937 = vmatprep.subr.mxu0 0.0
  %9938 = vmatpush1.msra.mxu0 0.0
  %9939 = vmatprep.subr.mxu0 0.0
  %9940 = vmatpush1.msra.mxu0 %v9898
  %9941 = vmatprep.subr.mxu0 0.0
  %9942 = vmatpush1.msra.mxu0 %v9896
  %9943 = vmatprep.subr.mxu0 0.0
  %9944 = vmatpush1.msra.mxu0 %v9894
  %9945 = vmatprep.subr.mxu0 0.0
  %9946 = vmatpush1.msra.mxu0 %v9892
  %9947 = vmatprep.subr.mxu0 0.0
  %9948 = vmatpush2.msra.mxu0 0.0
  %9949 = vmatprep.subr.mxu0 0.0
  %9950 = vmatpush2.msra.mxu0 0.0
  %9951 = vmatprep.subr.mxu0 0.0
  %9952 = vmatpush2.msra.mxu0 0.0
  %9953 = vmatprep.subr.mxu0 0.0
  %9954 = vmatpush2.msra.mxu0 0.0
  %9955 = vmatprep.subr.mxu0 0.0
  %9956 = vmatpush2.msra.mxu0 0.0
  %9957 = vmatprep.subr.mxu0 0.0
  %9958 = vmatpush2.msra.mxu0 0.0
  %9959 = vmatprep.subr.mxu0 0.0
  %9960 = vmatpush2.msra.mxu0 0.0
  %9961 = vmatprep.subr.mxu0 0.0
  %9962 = vmatpush2.msra.mxu0 0.0
  %9963 = vmatprep.subr.mxu0 0.0
  %9964 = vmatpush2.msra.mxu0 0.0
  %9965 = vmatprep.subr.mxu0 0.0
  %9966 = vmatpush2.msra.mxu0 0.0
  %9967 = vmatprep.subr.mxu0 0.0
  %9968 = vmatpush2.msra.mxu0 0.0
  %9969 = vmatprep.subr.mxu0 0.0
  %9970 = vmatpush2.msra.mxu0 0.0
  %9971 = vmatprep.subr.mxu0 0.0
  %9972 = vmatpush2.msra.mxu0 0.0
  %9973 = vmatprep.subr.mxu0 0.0
  %9974 = vmatpush2.msra.mxu0 0.0
  %9975 = vmatprep.subr.mxu0 0.0
  %9976 = vmatpush2.msra.mxu0 0.0
  %9977 = vmatprep.subr.mxu0 0.0
  %9978 = vmatpush2.msra.mxu0 0.0
  %9979 = vmatprep.mubr.f32.mxu0 0.0
  %9980 = vmatmul.mubr.f32.gmra.mxu0 %v9904
  %v9981 = vpop.f32.mrf.mxu0
  %v9982 = vadd.f32 0.0, %v9981
  %v9983 = vpop.f32.mrf.mxu0
  %9984 = vmatprep.mubr.f32.mxu0 0.0
  %9985 = vmatmul.mubr.f32.gmra.mxu0 %v9907
  %v9986 = vpop.f32.mrf.mxu0
  %v9987 = vadd.f32 0.0, %v9986
  %v9988 = vpop.f32.mrf.mxu0
  %9989 = vmatprep.mubr.f32.mxu0 0.0
  %9990 = vmatmul.mubr.f32.gmra.mxu0 %v9910
  %v9991 = vpop.f32.mrf.mxu0
  %v9992 = vadd.f32 0.0, %v9991
  %v9993 = vpop.f32.mrf.mxu0
  %9994 = vmatprep.mubr.f32.mxu0 0.0
  %9995 = vmatmul.mubr.f32.gmra.mxu0 %v9913
  %v9996 = vpop.f32.mrf.mxu0
  %v9997 = vadd.f32 0.0, %v9996
  %v9998 = vpop.f32.mrf.mxu0
  %9999 = vdwg.mxu0
  %v10001 = vsel %vm148, %v9982, 0
  %v10004 = vsel %vm148, %v9987, 0
  %v10007 = vsel %vm148, %v9992, 0
  %v10010 = vsel %vm148, %v9997, 0
  %10012 = vmatprep.subr.mxu0 0.0
  %10013 = vmatpush1.msra.mxu0 0.0
  %10014 = vmatprep.subr.mxu0 0.0
  %10015 = vmatpush1.msra.mxu0 0.0
  %10016 = vmatprep.subr.mxu0 0.0
  %10017 = vmatpush1.msra.mxu0 0.0
  %10018 = vmatprep.subr.mxu0 0.0
  %10019 = vmatpush1.msra.mxu0 0.0
  %10020 = vmatprep.subr.mxu0 0.0
  %10021 = vmatpush1.msra.mxu0 0.0
  %10022 = vmatprep.subr.mxu0 0.0
  %10023 = vmatpush1.msra.mxu0 0.0
  %10024 = vmatprep.subr.mxu0 0.0
  %10025 = vmatpush1.msra.mxu0 0.0
  %10026 = vmatprep.subr.mxu0 0.0
  %10027 = vmatpush1.msra.mxu0 0.0
  %10028 = vmatprep.subr.mxu0 0.0
  %10029 = vmatpush1.msra.mxu0 0.0
  %10030 = vmatprep.subr.mxu0 0.0
  %10031 = vmatpush1.msra.mxu0 0.0
  %10032 = vmatprep.subr.mxu0 0.0
  %10033 = vmatpush1.msra.mxu0 0.0
  %10034 = vmatprep.subr.mxu0 0.0
  %10035 = vmatpush1.msra.mxu0 0.0
  %10036 = vmatprep.subr.mxu0 0.0
  %10037 = vmatpush1.msra.mxu0 0.0
  %10038 = vmatprep.subr.mxu0 0.0
  %10039 = vmatpush1.msra.mxu0 0.0
  %10040 = vmatprep.subr.mxu0 0.0
  %10041 = vmatpush1.msra.mxu0 %v123
  %10042 = vmatprep.subr.mxu0 0.0
  %10043 = vmatpush1.msra.mxu0 %v122
  %10044 = vmatprep.subr.mxu0 0.0
  %10045 = vmatpush2.msra.mxu0 0.0
  %10046 = vmatprep.subr.mxu0 0.0
  %10047 = vmatpush2.msra.mxu0 0.0
  %10048 = vmatprep.subr.mxu0 0.0
  %10049 = vmatpush2.msra.mxu0 0.0
  %10050 = vmatprep.subr.mxu0 0.0
  %10051 = vmatpush2.msra.mxu0 0.0
  %10052 = vmatprep.subr.mxu0 0.0
  %10053 = vmatpush2.msra.mxu0 0.0
  %10054 = vmatprep.subr.mxu0 0.0
  %10055 = vmatpush2.msra.mxu0 0.0
  %10056 = vmatprep.subr.mxu0 0.0
  %10057 = vmatpush2.msra.mxu0 0.0
  %10058 = vmatprep.subr.mxu0 0.0
  %10059 = vmatpush2.msra.mxu0 0.0
  %10060 = vmatprep.subr.mxu0 0.0
  %10061 = vmatpush2.msra.mxu0 0.0
  %10062 = vmatprep.subr.mxu0 0.0
  %10063 = vmatpush2.msra.mxu0 0.0
  %10064 = vmatprep.subr.mxu0 0.0
  %10065 = vmatpush2.msra.mxu0 0.0
  %10066 = vmatprep.subr.mxu0 0.0
  %10067 = vmatpush2.msra.mxu0 0.0
  %10068 = vmatprep.subr.mxu0 0.0
  %10069 = vmatpush2.msra.mxu0 0.0
  %10070 = vmatprep.subr.mxu0 0.0
  %10071 = vmatpush2.msra.mxu0 0.0
  %10072 = vmatprep.subr.mxu0 0.0
  %10073 = vmatpush2.msra.mxu0 0.0
  %10074 = vmatprep.subr.mxu0 0.0
  %10075 = vmatpush2.msra.mxu0 0.0
  %10076 = vmatprep.mubr.f32.mxu0 0.0
  %10077 = vmatmul.mubr.f32.gmra.mxu0 %v10001
  %v10078 = vpop.f32.mrf.mxu0
  %v10079 = vadd.f32 0.0, %v10078
  %v10080 = vpop.f32.mrf.mxu0
  %10081 = vmatprep.mubr.f32.mxu0 0.0
  %10082 = vmatmul.mubr.f32.gmra.mxu0 %v10004
  %v10083 = vpop.f32.mrf.mxu0
  %v10084 = vadd.f32 0.0, %v10083
  %v10085 = vpop.f32.mrf.mxu0
  %10086 = vmatprep.mubr.f32.mxu0 0.0
  %10087 = vmatmul.mubr.f32.gmra.mxu0 %v10007
  %v10088 = vpop.f32.mrf.mxu0
  %v10089 = vadd.f32 0.0, %v10088
  %v10090 = vpop.f32.mrf.mxu0
  %10091 = vmatprep.mubr.f32.mxu0 0.0
  %10092 = vmatmul.mubr.f32.gmra.mxu0 %v10010
  %v10093 = vpop.f32.mrf.mxu0
  %v10094 = vadd.f32 0.0, %v10093
  %v10095 = vpop.f32.mrf.mxu0
  %10096 = vdwg.mxu0
  %v10097 = vadd.f32 %v9734, %v10079
  %v10098 = vadd.f32 %v9735, %v10084
  %v10099 = vadd.f32 %v9736, %v10089
  %v10100 = vadd.f32 %v9737, %v10094
  %10101 = vrot.lane.b32.xlu0 %v8611, 64
  %v10102 = vpop.permute.xlu0 %10101
  %10103 = vrot.lane.b32.xlu0 %v8617, 64
  %v10104 = vpop.permute.xlu0 %10103
  %10105 = vrot.lane.b32.xlu0 %v8623, 64
  %v10106 = vpop.permute.xlu0 %10105
  %10107 = vrot.lane.b32.xlu0 %v8629, 64
  %v10108 = vpop.permute.xlu0 %10107
  %10109 = vrot.lane.b32.xlu0 %v8613, 112
  %v10110 = vpop.permute.xlu0 %10109
  %10111 = vrot.lane.b32.xlu0 %v8619, 112
  %v10112 = vpop.permute.xlu0 %10111
  %10113 = vrot.lane.b32.xlu0 %v8625, 112
  %v10114 = vpop.permute.xlu0 %10113
  %10115 = vrot.lane.b32.xlu0 %v8631, 112
  %v10116 = vpop.permute.xlu0 %10115
  %v10117 = vsel %vm148, %v10102, 0
  %v10119 = vsel %vm148, %v10104, 0
  %v10121 = vsel %vm148, %v10106, 0
  %v10123 = vsel %vm148, %v10108, 0
  %v10125 = vsel %vm148, %v10110, 0
  %v10127 = vsel %vm148, %v10112, 0
  %v10129 = vsel %vm148, %v10114, 0
  %v10131 = vsel %vm148, %v10116, 0
  %10133 = vmatprep.subr.mxu0 0.0
  %10134 = vmatpush1.xpose.msra.mxu0 0.0
  %10135 = vmatprep.subr.mxu0 0.0
  %10136 = vmatpush1.xpose.msra.mxu0 0.0
  %10137 = vmatprep.subr.mxu0 0.0
  %10138 = vmatpush1.xpose.msra.mxu0 0.0
  %10139 = vmatprep.subr.mxu0 0.0
  %10140 = vmatpush1.xpose.msra.mxu0 0.0
  %10141 = vmatprep.subr.mxu0 0.0
  %10142 = vmatpush1.xpose.msra.mxu0 0.0
  %10143 = vmatprep.subr.mxu0 0.0
  %10144 = vmatpush1.xpose.msra.mxu0 0.0
  %10145 = vmatprep.subr.mxu0 0.0
  %10146 = vmatpush1.xpose.msra.mxu0 0.0
  %10147 = vmatprep.subr.mxu0 0.0
  %10148 = vmatpush1.xpose.msra.mxu0 0.0
  %10149 = vmatprep.subr.mxu0 0.0
  %10150 = vmatpush1.xpose.msra.mxu0 0.0
  %10151 = vmatprep.subr.mxu0 0.0
  %10152 = vmatpush1.xpose.msra.mxu0 0.0
  %10153 = vmatprep.subr.mxu0 0.0
  %10154 = vmatpush1.xpose.msra.mxu0 0.0
  %10155 = vmatprep.subr.mxu0 0.0
  %10156 = vmatpush1.xpose.msra.mxu0 0.0
  %10157 = vmatprep.subr.mxu0 0.0
  %10158 = vmatpush1.xpose.msra.mxu0 %v10131
  %10159 = vmatprep.subr.mxu0 0.0
  %10160 = vmatpush1.xpose.msra.mxu0 %v10129
  %10161 = vmatprep.subr.mxu0 0.0
  %10162 = vmatpush1.xpose.msra.mxu0 %v10127
  %10163 = vmatprep.subr.mxu0 0.0
  %10164 = vmatpush1.xpose.msra.mxu0 %v10125
  %10165 = vmatprep.subr.mxu0 0.0
  %10166 = vmatpush2.xpose.msra.mxu0 0.0
  %10167 = vmatprep.subr.mxu0 0.0
  %10168 = vmatpush2.xpose.msra.mxu0 0.0
  %10169 = vmatprep.subr.mxu0 0.0
  %10170 = vmatpush2.xpose.msra.mxu0 0.0
  %10171 = vmatprep.subr.mxu0 0.0
  %10172 = vmatpush2.xpose.msra.mxu0 0.0
  %10173 = vmatprep.subr.mxu0 0.0
  %10174 = vmatpush2.xpose.msra.mxu0 0.0
  %10175 = vmatprep.subr.mxu0 0.0
  %10176 = vmatpush2.xpose.msra.mxu0 0.0
  %10177 = vmatprep.subr.mxu0 0.0
  %10178 = vmatpush2.xpose.msra.mxu0 0.0
  %10179 = vmatprep.subr.mxu0 0.0
  %10180 = vmatpush2.xpose.msra.mxu0 0.0
  %10181 = vmatprep.subr.mxu0 0.0
  %10182 = vmatpush2.xpose.msra.mxu0 0.0
  %10183 = vmatprep.subr.mxu0 0.0
  %10184 = vmatpush2.xpose.msra.mxu0 0.0
  %10185 = vmatprep.subr.mxu0 0.0
  %10186 = vmatpush2.xpose.msra.mxu0 0.0
  %10187 = vmatprep.subr.mxu0 0.0
  %10188 = vmatpush2.xpose.msra.mxu0 0.0
  %10189 = vmatprep.subr.mxu0 0.0
  %10190 = vmatpush2.xpose.msra.mxu0 0.0
  %10191 = vmatprep.subr.mxu0 0.0
  %10192 = vmatpush2.xpose.msra.mxu0 0.0
  %10193 = vmatprep.subr.mxu0 0.0
  %10194 = vmatpush2.xpose.msra.mxu0 0.0
  %10195 = vmatprep.subr.mxu0 0.0
  %10196 = vmatpush2.xpose.msra.mxu0 0.0
  %10197 = vmatprep.mubr.f32.mxu0 0.0
  %10198 = vmatmul.mubr.f32.gmra.mxu0 %v10117
  %v10199 = vpop.f32.mrf.mxu0
  %v10200 = vadd.f32 0.0, %v10199
  %v10201 = vpop.f32.mrf.mxu0
  %10202 = vmatprep.mubr.f32.mxu0 0.0
  %10203 = vmatmul.mubr.f32.gmra.mxu0 %v10119
  %v10204 = vpop.f32.mrf.mxu0
  %v10205 = vadd.f32 0.0, %v10204
  %v10206 = vpop.f32.mrf.mxu0
  %10207 = vmatprep.mubr.f32.mxu0 0.0
  %10208 = vmatmul.mubr.f32.gmra.mxu0 %v10121
  %v10209 = vpop.f32.mrf.mxu0
  %v10210 = vadd.f32 0.0, %v10209
  %v10211 = vpop.f32.mrf.mxu0
  %10212 = vmatprep.mubr.f32.mxu0 0.0
  %10213 = vmatmul.mubr.f32.gmra.mxu0 %v10123
  %v10214 = vpop.f32.mrf.mxu0
  %v10215 = vadd.f32 0.0, %v10214
  %v10216 = vpop.f32.mrf.mxu0
  %10217 = vdwg.mxu0
  %v10218 = vsel %vm410, %v10200, -inf
  %10219 = vmax.xlane.f32.xlu0 %v10218
  %v10220 = vpop.xlane.xlu0 %10219
  %v10221 = vsel %vm410, %v10205, -inf
  %10222 = vmax.xlane.f32.xlu0 %v10221
  %v10223 = vpop.xlane.xlu0 %10222
  %v10224 = vsel %vm410, %v10210, -inf
  %10225 = vmax.xlane.f32.xlu0 %v10224
  %v10226 = vpop.xlane.xlu0 %10225
  %v10227 = vsel %vm410, %v10215, -inf
  %10228 = vmax.xlane.f32.xlu0 %v10227
  %v10229 = vpop.xlane.xlu0 %10228
  %v10230 = vsub.f32 %v10200, %v10220
  %v10231 = vsub.f32 %v10205, %v10223
  %v10232 = vsub.f32 %v10210, %v10226
  %v10233 = vsub.f32 %v10215, %v10229
  %v10234 = vmul.f32 %v10230, 1.442695
  %v10235 = vpow.pop %v10234
  %v10236 = vmul.f32 %v10231, 1.442695
  %v10237 = vpow.pop %v10236
  %v10238 = vmul.f32 %v10232, 1.442695
  %v10239 = vpow.pop %v10238
  %v10240 = vmul.f32 %v10233, 1.442695
  %v10241 = vpow.pop %v10240
  %v10242 = vsel %vm410, %v10235, 0.0
  %10243 = vadd.xlane.f32.xlu0 %v10242
  %v10244 = vpop.xlane.xlu0 %10243
  %v10245 = vsel %vm410, %v10237, 0.0
  %10246 = vadd.xlane.f32.xlu0 %v10245
  %v10247 = vpop.xlane.xlu0 %10246
  %v10248 = vsel %vm410, %v10239, 0.0
  %10249 = vadd.xlane.f32.xlu0 %v10248
  %v10250 = vpop.xlane.xlu0 %10249
  %v10251 = vsel %vm410, %v10241, 0.0
  %10252 = vadd.xlane.f32.xlu0 %v10251
  %v10253 = vpop.xlane.xlu0 %10252
  %v10254 = vrcp.pop %v10244
  %v10255 = vrcp.pop %v10247
  %v10256 = vrcp.pop %v10250
  %v10257 = vrcp.pop %v10253
  %v10258 = vmul.f32 %v10235, %v10254
  %v10259 = vmul.f32 %v10237, %v10255
  %v10260 = vmul.f32 %v10239, %v10256
  %v10261 = vmul.f32 %v10241, %v10257
  %10262 = vrot.lane.b32.xlu0 %v8613, 32
  %v10263 = vpop.permute.xlu0 %10262
  %10264 = vrot.lane.b32.xlu0 %v8619, 32
  %v10265 = vpop.permute.xlu0 %10264
  %10266 = vrot.lane.b32.xlu0 %v8625, 32
  %v10267 = vpop.permute.xlu0 %10266
  %10268 = vrot.lane.b32.xlu0 %v8631, 32
  %v10269 = vpop.permute.xlu0 %10268
  %v10275 = vsel %vm410, %v10258, 0
  %v10278 = vsel %vm410, %v10259, 0
  %v10281 = vsel %vm410, %v10260, 0
  %v10284 = vsel %vm410, %v10261, 0
  %10286 = vmatprep.subr.mxu0 0.0
  %10287 = vmatpush1.msra.mxu0 0.0
  %10288 = vmatprep.subr.mxu0 0.0
  %10289 = vmatpush1.msra.mxu0 0.0
  %10290 = vmatprep.subr.mxu0 0.0
  %10291 = vmatpush1.msra.mxu0 0.0
  %10292 = vmatprep.subr.mxu0 0.0
  %10293 = vmatpush1.msra.mxu0 0.0
  %10294 = vmatprep.subr.mxu0 0.0
  %10295 = vmatpush1.msra.mxu0 0.0
  %10296 = vmatprep.subr.mxu0 0.0
  %10297 = vmatpush1.msra.mxu0 0.0
  %10298 = vmatprep.subr.mxu0 0.0
  %10299 = vmatpush1.msra.mxu0 0.0
  %10300 = vmatprep.subr.mxu0 0.0
  %10301 = vmatpush1.msra.mxu0 0.0
  %10302 = vmatprep.subr.mxu0 0.0
  %10303 = vmatpush1.msra.mxu0 0.0
  %10304 = vmatprep.subr.mxu0 0.0
  %10305 = vmatpush1.msra.mxu0 0.0
  %10306 = vmatprep.subr.mxu0 0.0
  %10307 = vmatpush1.msra.mxu0 0.0
  %10308 = vmatprep.subr.mxu0 0.0
  %10309 = vmatpush1.msra.mxu0 0.0
  %10310 = vmatprep.subr.mxu0 0.0
  %10311 = vmatpush1.msra.mxu0 %v10269
  %10312 = vmatprep.subr.mxu0 0.0
  %10313 = vmatpush1.msra.mxu0 %v10267
  %10314 = vmatprep.subr.mxu0 0.0
  %10315 = vmatpush1.msra.mxu0 %v10265
  %10316 = vmatprep.subr.mxu0 0.0
  %10317 = vmatpush1.msra.mxu0 %v10263
  %10318 = vmatprep.subr.mxu0 0.0
  %10319 = vmatpush2.msra.mxu0 0.0
  %10320 = vmatprep.subr.mxu0 0.0
  %10321 = vmatpush2.msra.mxu0 0.0
  %10322 = vmatprep.subr.mxu0 0.0
  %10323 = vmatpush2.msra.mxu0 0.0
  %10324 = vmatprep.subr.mxu0 0.0
  %10325 = vmatpush2.msra.mxu0 0.0
  %10326 = vmatprep.subr.mxu0 0.0
  %10327 = vmatpush2.msra.mxu0 0.0
  %10328 = vmatprep.subr.mxu0 0.0
  %10329 = vmatpush2.msra.mxu0 0.0
  %10330 = vmatprep.subr.mxu0 0.0
  %10331 = vmatpush2.msra.mxu0 0.0
  %10332 = vmatprep.subr.mxu0 0.0
  %10333 = vmatpush2.msra.mxu0 0.0
  %10334 = vmatprep.subr.mxu0 0.0
  %10335 = vmatpush2.msra.mxu0 0.0
  %10336 = vmatprep.subr.mxu0 0.0
  %10337 = vmatpush2.msra.mxu0 0.0
  %10338 = vmatprep.subr.mxu0 0.0
  %10339 = vmatpush2.msra.mxu0 0.0
  %10340 = vmatprep.subr.mxu0 0.0
  %10341 = vmatpush2.msra.mxu0 0.0
  %10342 = vmatprep.subr.mxu0 0.0
  %10343 = vmatpush2.msra.mxu0 0.0
  %10344 = vmatprep.subr.mxu0 0.0
  %10345 = vmatpush2.msra.mxu0 0.0
  %10346 = vmatprep.subr.mxu0 0.0
  %10347 = vmatpush2.msra.mxu0 0.0
  %10348 = vmatprep.subr.mxu0 0.0
  %10349 = vmatpush2.msra.mxu0 0.0
  %10350 = vmatprep.mubr.f32.mxu0 0.0
  %10351 = vmatmul.mubr.f32.gmra.mxu0 %v10275
  %v10352 = vpop.f32.mrf.mxu0
  %v10353 = vadd.f32 0.0, %v10352
  %v10354 = vpop.f32.mrf.mxu0
  %10355 = vmatprep.mubr.f32.mxu0 0.0
  %10356 = vmatmul.mubr.f32.gmra.mxu0 %v10278
  %v10357 = vpop.f32.mrf.mxu0
  %v10358 = vadd.f32 0.0, %v10357
  %v10359 = vpop.f32.mrf.mxu0
  %10360 = vmatprep.mubr.f32.mxu0 0.0
  %10361 = vmatmul.mubr.f32.gmra.mxu0 %v10281
  %v10362 = vpop.f32.mrf.mxu0
  %v10363 = vadd.f32 0.0, %v10362
  %v10364 = vpop.f32.mrf.mxu0
  %10365 = vmatprep.mubr.f32.mxu0 0.0
  %10366 = vmatmul.mubr.f32.gmra.mxu0 %v10284
  %v10367 = vpop.f32.mrf.mxu0
  %v10368 = vadd.f32 0.0, %v10367
  %v10369 = vpop.f32.mrf.mxu0
  %10370 = vdwg.mxu0
  %v10372 = vsel %vm148, %v10353, 0
  %v10375 = vsel %vm148, %v10358, 0
  %v10378 = vsel %vm148, %v10363, 0
  %v10381 = vsel %vm148, %v10368, 0
  %10383 = vmatprep.subr.mxu0 0.0
  %10384 = vmatpush1.msra.mxu0 0.0
  %10385 = vmatprep.subr.mxu0 0.0
  %10386 = vmatpush1.msra.mxu0 0.0
  %10387 = vmatprep.subr.mxu0 0.0
  %10388 = vmatpush1.msra.mxu0 0.0
  %10389 = vmatprep.subr.mxu0 0.0
  %10390 = vmatpush1.msra.mxu0 0.0
  %10391 = vmatprep.subr.mxu0 0.0
  %10392 = vmatpush1.msra.mxu0 0.0
  %10393 = vmatprep.subr.mxu0 0.0
  %10394 = vmatpush1.msra.mxu0 0.0
  %10395 = vmatprep.subr.mxu0 0.0
  %10396 = vmatpush1.msra.mxu0 0.0
  %10397 = vmatprep.subr.mxu0 0.0
  %10398 = vmatpush1.msra.mxu0 0.0
  %10399 = vmatprep.subr.mxu0 0.0
  %10400 = vmatpush1.msra.mxu0 0.0
  %10401 = vmatprep.subr.mxu0 0.0
  %10402 = vmatpush1.msra.mxu0 0.0
  %10403 = vmatprep.subr.mxu0 0.0
  %10404 = vmatpush1.msra.mxu0 0.0
  %10405 = vmatprep.subr.mxu0 0.0
  %10406 = vmatpush1.msra.mxu0 0.0
  %10407 = vmatprep.subr.mxu0 0.0
  %10408 = vmatpush1.msra.mxu0 0.0
  %10409 = vmatprep.subr.mxu0 0.0
  %10410 = vmatpush1.msra.mxu0 0.0
  %10411 = vmatprep.subr.mxu0 0.0
  %10412 = vmatpush1.msra.mxu0 %v125
  %10413 = vmatprep.subr.mxu0 0.0
  %10414 = vmatpush1.msra.mxu0 %v124
  %10415 = vmatprep.subr.mxu0 0.0
  %10416 = vmatpush2.msra.mxu0 0.0
  %10417 = vmatprep.subr.mxu0 0.0
  %10418 = vmatpush2.msra.mxu0 0.0
  %10419 = vmatprep.subr.mxu0 0.0
  %10420 = vmatpush2.msra.mxu0 0.0
  %10421 = vmatprep.subr.mxu0 0.0
  %10422 = vmatpush2.msra.mxu0 0.0
  %10423 = vmatprep.subr.mxu0 0.0
  %10424 = vmatpush2.msra.mxu0 0.0
  %10425 = vmatprep.subr.mxu0 0.0
  %10426 = vmatpush2.msra.mxu0 0.0
  %10427 = vmatprep.subr.mxu0 0.0
  %10428 = vmatpush2.msra.mxu0 0.0
  %10429 = vmatprep.subr.mxu0 0.0
  %10430 = vmatpush2.msra.mxu0 0.0
  %10431 = vmatprep.subr.mxu0 0.0
  %10432 = vmatpush2.msra.mxu0 0.0
  %10433 = vmatprep.subr.mxu0 0.0
  %10434 = vmatpush2.msra.mxu0 0.0
  %10435 = vmatprep.subr.mxu0 0.0
  %10436 = vmatpush2.msra.mxu0 0.0
  %10437 = vmatprep.subr.mxu0 0.0
  %10438 = vmatpush2.msra.mxu0 0.0
  %10439 = vmatprep.subr.mxu0 0.0
  %10440 = vmatpush2.msra.mxu0 0.0
  %10441 = vmatprep.subr.mxu0 0.0
  %10442 = vmatpush2.msra.mxu0 0.0
  %10443 = vmatprep.subr.mxu0 0.0
  %10444 = vmatpush2.msra.mxu0 0.0
  %10445 = vmatprep.subr.mxu0 0.0
  %10446 = vmatpush2.msra.mxu0 0.0
  %10447 = vmatprep.mubr.f32.mxu0 0.0
  %10448 = vmatmul.mubr.f32.gmra.mxu0 %v10372
  %v10449 = vpop.f32.mrf.mxu0
  %v10450 = vadd.f32 0.0, %v10449
  %v10451 = vpop.f32.mrf.mxu0
  %10452 = vmatprep.mubr.f32.mxu0 0.0
  %10453 = vmatmul.mubr.f32.gmra.mxu0 %v10375
  %v10454 = vpop.f32.mrf.mxu0
  %v10455 = vadd.f32 0.0, %v10454
  %v10456 = vpop.f32.mrf.mxu0
  %10457 = vmatprep.mubr.f32.mxu0 0.0
  %10458 = vmatmul.mubr.f32.gmra.mxu0 %v10378
  %v10459 = vpop.f32.mrf.mxu0
  %v10460 = vadd.f32 0.0, %v10459
  %v10461 = vpop.f32.mrf.mxu0
  %10462 = vmatprep.mubr.f32.mxu0 0.0
  %10463 = vmatmul.mubr.f32.gmra.mxu0 %v10381
  %v10464 = vpop.f32.mrf.mxu0
  %v10465 = vadd.f32 0.0, %v10464
  %v10466 = vpop.f32.mrf.mxu0
  %10467 = vdwg.mxu0
  %v10468 = vadd.f32 %v10097, %v10450
  %v10469 = vadd.f32 %v10098, %v10455
  %v10470 = vadd.f32 %v10099, %v10460
  %v10471 = vadd.f32 %v10100, %v10465
  %v10472 = vadd.f32 %v10468, %v3106
  %v10473 = vadd.f32 %v10469, %v3106
  %v10474 = vadd.f32 %v10470, %v3106
  %v10475 = vadd.f32 %v10471, %v3106
  %10476 = vxpose.xlu0.b32.start [1/16] %v10472, 128
  %10477 = vxpose.xlu0.b32.cont [2/16] %v10473, 128
  %10478 = vxpose.xlu0.b32.cont [3/16] %v10474, 128
  %10479 = vxpose.xlu0.b32.cont [4/16] %v10475, 128
  %10480 = vxpose.xlu0.b32.cont [5/16] 0.0, 128
  %10481 = vxpose.xlu0.b32.cont [6/16] 0.0, 128
  %10482 = vxpose.xlu0.b32.cont [7/16] 0.0, 128
  %10483 = vxpose.xlu0.b32.cont [8/16] 0.0, 128
  %10484 = vxpose.xlu0.b32.cont [9/16] 0.0, 128
  %10485 = vxpose.xlu0.b32.cont [10/16] 0.0, 128
  %10486 = vxpose.xlu0.b32.cont [11/16] 0.0, 128
  %10487 = vxpose.xlu0.b32.cont [12/16] 0.0, 128
  %10488 = vxpose.xlu0.b32.cont [13/16] 0.0, 128
  %10489 = vxpose.xlu0.b32.cont [14/16] 0.0, 128
  %10490 = vxpose.xlu0.b32.cont [15/16] 0.0, 128
  %10491 = vxpose.xlu0.b32.end [16/16] 0.0, 128
  %v10492 = vpop.trf.xlu0
  %v10493 = vpop.trf.xlu0
  %v10494 = vpop.trf.xlu0
  %v10495 = vpop.trf.xlu0
  %v10496 = vpop.trf.xlu0
  %v10497 = vpop.trf.xlu0
  %v10498 = vpop.trf.xlu0
  %v10499 = vpop.trf.xlu0
  %v10500 = vpop.trf.xlu0
  %v10501 = vpop.trf.xlu0
  %v10502 = vpop.trf.xlu0
  %v10503 = vpop.trf.xlu0
  %v10504 = vpop.trf.xlu0
  %v10505 = vpop.trf.xlu0
  %v10506 = vpop.trf.xlu0
  %v10507 = vpop.trf.xlu0
  %v10508 = vadd.f32 %v288, %v3127
  %v10509 = vadd.f32 %v293, %v3128
  %v10510 = vadd.f32 %v298, %v3129
  %v10511 = vadd.f32 %v303, %v3130
  %v10512 = vadd.f32 %v308, %v3131
  %v10513 = vadd.f32 %v313, %v3132
  %v10514 = vadd.f32 %v318, %v5582
  %v10515 = vadd.f32 %v323, %v5583
  %v10516 = vadd.f32 %v328, %v5584
  %v10517 = vadd.f32 %v333, %v5585
  %v10518 = vadd.f32 %v338, %v5586
  %v10519 = vadd.f32 %v343, %v5587
  %v10520 = vadd.f32 %v348, %v8037
  %v10521 = vadd.f32 %v353, %v8038
  %v10522 = vadd.f32 %v358, %v8039
  %v10523 = vadd.f32 %v363, %v8040
  %v10524 = vadd.f32 %v368, %v8041
  %v10525 = vadd.f32 %v373, %v8042
  %v10526 = vadd.f32 %v378, %v10492
  %v10527 = vadd.f32 %v383, %v10493
  %v10528 = vadd.f32 %v388, %v10494
  %v10529 = vadd.f32 %v393, %v10495
  %v10530 = vadd.f32 %v398, %v10496
  %v10531 = vadd.f32 %v403, %v10497
  %v10532 = vsel %vm410, %v10508, 0.0
  %10533 = vadd.xlane.f32.xlu0 %v10532
  %v10534 = vpop.xlane.xlu0 %10533
  %v10535 = vsel %vm410, %v10509, 0.0
  %10536 = vadd.xlane.f32.xlu0 %v10535
  %v10537 = vpop.xlane.xlu0 %10536
  %v10538 = vsel %vm410, %v10510, 0.0
  %10539 = vadd.xlane.f32.xlu0 %v10538
  %v10540 = vpop.xlane.xlu0 %10539
  %v10541 = vsel %vm410, %v10511, 0.0
  %10542 = vadd.xlane.f32.xlu0 %v10541
  %v10543 = vpop.xlane.xlu0 %10542
  %v10544 = vsel %vm410, %v10512, 0.0
  %10545 = vadd.xlane.f32.xlu0 %v10544
  %v10546 = vpop.xlane.xlu0 %10545
  %v10547 = vsel %vm410, %v10513, 0.0
  %10548 = vadd.xlane.f32.xlu0 %v10547
  %v10549 = vpop.xlane.xlu0 %10548
  %v10550 = vsel %vm410, %v10514, 0.0
  %10551 = vadd.xlane.f32.xlu0 %v10550
  %v10552 = vpop.xlane.xlu0 %10551
  %v10553 = vsel %vm410, %v10515, 0.0
  %10554 = vadd.xlane.f32.xlu0 %v10553
  %v10555 = vpop.xlane.xlu0 %10554
  %v10556 = vsel %vm410, %v10516, 0.0
  %10557 = vadd.xlane.f32.xlu0 %v10556
  %v10558 = vpop.xlane.xlu0 %10557
  %v10559 = vsel %vm410, %v10517, 0.0
  %10560 = vadd.xlane.f32.xlu0 %v10559
  %v10561 = vpop.xlane.xlu0 %10560
  %v10562 = vsel %vm410, %v10518, 0.0
  %10563 = vadd.xlane.f32.xlu0 %v10562
  %v10564 = vpop.xlane.xlu0 %10563
  %v10565 = vsel %vm410, %v10519, 0.0
  %10566 = vadd.xlane.f32.xlu0 %v10565
  %v10567 = vpop.xlane.xlu0 %10566
  %v10568 = vsel %vm410, %v10520, 0.0
  %10569 = vadd.xlane.f32.xlu0 %v10568
  %v10570 = vpop.xlane.xlu0 %10569
  %v10571 = vsel %vm410, %v10521, 0.0
  %10572 = vadd.xlane.f32.xlu0 %v10571
  %v10573 = vpop.xlane.xlu0 %10572
  %v10574 = vsel %vm410, %v10522, 0.0
  %10575 = vadd.xlane.f32.xlu0 %v10574
  %v10576 = vpop.xlane.xlu0 %10575
  %v10577 = vsel %vm410, %v10523, 0.0
  %10578 = vadd.xlane.f32.xlu0 %v10577
  %v10579 = vpop.xlane.xlu0 %10578
  %v10580 = vsel %vm410, %v10524, 0.0
  %10581 = vadd.xlane.f32.xlu0 %v10580
  %v10582 = vpop.xlane.xlu0 %10581
  %v10583 = vsel %vm410, %v10525, 0.0
  %10584 = vadd.xlane.f32.xlu0 %v10583
  %v10585 = vpop.xlane.xlu0 %10584
  %v10586 = vsel %vm410, %v10526, 0.0
  %10587 = vadd.xlane.f32.xlu0 %v10586
  %v10588 = vpop.xlane.xlu0 %10587
  %v10589 = vsel %vm410, %v10527, 0.0
  %10590 = vadd.xlane.f32.xlu0 %v10589
  %v10591 = vpop.xlane.xlu0 %10590
  %v10592 = vsel %vm410, %v10528, 0.0
  %10593 = vadd.xlane.f32.xlu0 %v10592
  %v10594 = vpop.xlane.xlu0 %10593
  %v10595 = vsel %vm410, %v10529, 0.0
  %10596 = vadd.xlane.f32.xlu0 %v10595
  %v10597 = vpop.xlane.xlu0 %10596
  %v10598 = vsel %vm410, %v10530, 0.0
  %10599 = vadd.xlane.f32.xlu0 %v10598
  %v10600 = vpop.xlane.xlu0 %10599
  %v10601 = vsel %vm410, %v10531, 0.0
  %10602 = vadd.xlane.f32.xlu0 %v10601
  %v10603 = vpop.xlane.xlu0 %10602
  %v10604 = vrcp.pop 32.0
  %v10605 = vmul.f32 %v10534, %v10604
  %v10606 = vmul.f32 %v10537, %v10604
  %v10607 = vmul.f32 %v10540, %v10604
  %v10608 = vmul.f32 %v10543, %v10604
  %v10609 = vmul.f32 %v10546, %v10604
  %v10610 = vmul.f32 %v10549, %v10604
  %v10611 = vmul.f32 %v10552, %v10604
  %v10612 = vmul.f32 %v10555, %v10604
  %v10613 = vmul.f32 %v10558, %v10604
  %v10614 = vmul.f32 %v10561, %v10604
  %v10615 = vmul.f32 %v10564, %v10604
  %v10616 = vmul.f32 %v10567, %v10604
  %v10617 = vmul.f32 %v10570, %v10604
  %v10618 = vmul.f32 %v10573, %v10604
  %v10619 = vmul.f32 %v10576, %v10604
  %v10620 = vmul.f32 %v10579, %v10604
  %v10621 = vmul.f32 %v10582, %v10604
  %v10622 = vmul.f32 %v10585, %v10604
  %v10623 = vmul.f32 %v10588, %v10604
  %v10624 = vmul.f32 %v10591, %v10604
  %v10625 = vmul.f32 %v10594, %v10604
  %v10626 = vmul.f32 %v10597, %v10604
  %v10627 = vmul.f32 %v10600, %v10604
  %v10628 = vmul.f32 %v10603, %v10604
  %v10629 = vsub.f32 %v10508, %v10605
  %v10630 = vsub.f32 %v10509, %v10606
  %v10631 = vsub.f32 %v10510, %v10607
  %v10632 = vsub.f32 %v10511, %v10608
  %v10633 = vsub.f32 %v10512, %v10609
  %v10634 = vsub.f32 %v10513, %v10610
  %v10635 = vsub.f32 %v10514, %v10611
  %v10636 = vsub.f32 %v10515, %v10612
  %v10637 = vsub.f32 %v10516, %v10613
  %v10638 = vsub.f32 %v10517, %v10614
  %v10639 = vsub.f32 %v10518, %v10615
  %v10640 = vsub.f32 %v10519, %v10616
  %v10641 = vsub.f32 %v10520, %v10617
  %v10642 = vsub.f32 %v10521, %v10618
  %v10643 = vsub.f32 %v10522, %v10619
  %v10644 = vsub.f32 %v10523, %v10620
  %v10645 = vsub.f32 %v10524, %v10621
  %v10646 = vsub.f32 %v10525, %v10622
  %v10647 = vsub.f32 %v10526, %v10623
  %v10648 = vsub.f32 %v10527, %v10624
  %v10649 = vsub.f32 %v10528, %v10625
  %v10650 = vsub.f32 %v10529, %v10626
  %v10651 = vsub.f32 %v10530, %v10627
  %v10652 = vsub.f32 %v10531, %v10628
  %v10653 = vmul.f32 %v10629, %v10629
  %v10654 = vmul.f32 %v10630, %v10630
  %v10655 = vmul.f32 %v10631, %v10631
  %v10656 = vmul.f32 %v10632, %v10632
  %v10657 = vmul.f32 %v10633, %v10633
  %v10658 = vmul.f32 %v10634, %v10634
  %v10659 = vmul.f32 %v10635, %v10635
  %v10660 = vmul.f32 %v10636, %v10636
  %v10661 = vmul.f32 %v10637, %v10637
  %v10662 = vmul.f32 %v10638, %v10638
  %v10663 = vmul.f32 %v10639, %v10639
  %v10664 = vmul.f32 %v10640, %v10640
  %v10665 = vmul.f32 %v10641, %v10641
  %v10666 = vmul.f32 %v10642, %v10642
  %v10667 = vmul.f32 %v10643, %v10643
  %v10668 = vmul.f32 %v10644, %v10644
  %v10669 = vmul.f32 %v10645, %v10645
  %v10670 = vmul.f32 %v10646, %v10646
  %v10671 = vmul.f32 %v10647, %v10647
  %v10672 = vmul.f32 %v10648, %v10648
  %v10673 = vmul.f32 %v10649, %v10649
  %v10674 = vmul.f32 %v10650, %v10650
  %v10675 = vmul.f32 %v10651, %v10651
  %v10676 = vmul.f32 %v10652, %v10652
  %v10677 = vsel %vm410, %v10653, 0.0
  %10678 = vadd.xlane.f32.xlu0 %v10677
  %v10679 = vpop.xlane.xlu0 %10678
  %v10680 = vsel %vm410, %v10654, 0.0
  %10681 = vadd.xlane.f32.xlu0 %v10680
  %v10682 = vpop.xlane.xlu0 %10681
  %v10683 = vsel %vm410, %v10655, 0.0
  %10684 = vadd.xlane.f32.xlu0 %v10683
  %v10685 = vpop.xlane.xlu0 %10684
  %v10686 = vsel %vm410, %v10656, 0.0
  %10687 = vadd.xlane.f32.xlu0 %v10686
  %v10688 = vpop.xlane.xlu0 %10687
  %v10689 = vsel %vm410, %v10657, 0.0
  %10690 = vadd.xlane.f32.xlu0 %v10689
  %v10691 = vpop.xlane.xlu0 %10690
  %v10692 = vsel %vm410, %v10658, 0.0
  %10693 = vadd.xlane.f32.xlu0 %v10692
  %v10694 = vpop.xlane.xlu0 %10693
  %v10695 = vsel %vm410, %v10659, 0.0
  %10696 = vadd.xlane.f32.xlu0 %v10695
  %v10697 = vpop.xlane.xlu0 %10696
  %v10698 = vsel %vm410, %v10660, 0.0
  %10699 = vadd.xlane.f32.xlu0 %v10698
  %v10700 = vpop.xlane.xlu0 %10699
  %v10701 = vsel %vm410, %v10661, 0.0
  %10702 = vadd.xlane.f32.xlu0 %v10701
  %v10703 = vpop.xlane.xlu0 %10702
  %v10704 = vsel %vm410, %v10662, 0.0
  %10705 = vadd.xlane.f32.xlu0 %v10704
  %v10706 = vpop.xlane.xlu0 %10705
  %v10707 = vsel %vm410, %v10663, 0.0
  %10708 = vadd.xlane.f32.xlu0 %v10707
  %v10709 = vpop.xlane.xlu0 %10708
  %v10710 = vsel %vm410, %v10664, 0.0
  %10711 = vadd.xlane.f32.xlu0 %v10710
  %v10712 = vpop.xlane.xlu0 %10711
  %v10713 = vsel %vm410, %v10665, 0.0
  %10714 = vadd.xlane.f32.xlu0 %v10713
  %v10715 = vpop.xlane.xlu0 %10714
  %v10716 = vsel %vm410, %v10666, 0.0
  %10717 = vadd.xlane.f32.xlu0 %v10716
  %v10718 = vpop.xlane.xlu0 %10717
  %v10719 = vsel %vm410, %v10667, 0.0
  %10720 = vadd.xlane.f32.xlu0 %v10719
  %v10721 = vpop.xlane.xlu0 %10720
  %v10722 = vsel %vm410, %v10668, 0.0
  %10723 = vadd.xlane.f32.xlu0 %v10722
  %v10724 = vpop.xlane.xlu0 %10723
  %v10725 = vsel %vm410, %v10669, 0.0
  %10726 = vadd.xlane.f32.xlu0 %v10725
  %v10727 = vpop.xlane.xlu0 %10726
  %v10728 = vsel %vm410, %v10670, 0.0
  %10729 = vadd.xlane.f32.xlu0 %v10728
  %v10730 = vpop.xlane.xlu0 %10729
  %v10731 = vsel %vm410, %v10671, 0.0
  %10732 = vadd.xlane.f32.xlu0 %v10731
  %v10733 = vpop.xlane.xlu0 %10732
  %v10734 = vsel %vm410, %v10672, 0.0
  %10735 = vadd.xlane.f32.xlu0 %v10734
  %v10736 = vpop.xlane.xlu0 %10735
  %v10737 = vsel %vm410, %v10673, 0.0
  %10738 = vadd.xlane.f32.xlu0 %v10737
  %v10739 = vpop.xlane.xlu0 %10738
  %v10740 = vsel %vm410, %v10674, 0.0
  %10741 = vadd.xlane.f32.xlu0 %v10740
  %v10742 = vpop.xlane.xlu0 %10741
  %v10743 = vsel %vm410, %v10675, 0.0
  %10744 = vadd.xlane.f32.xlu0 %v10743
  %v10745 = vpop.xlane.xlu0 %10744
  %v10746 = vsel %vm410, %v10676, 0.0
  %10747 = vadd.xlane.f32.xlu0 %v10746
  %v10748 = vpop.xlane.xlu0 %10747
  %v10749 = vmul.f32 %v10679, %v10604
  %v10750 = vmul.f32 %v10682, %v10604
  %v10751 = vmul.f32 %v10685, %v10604
  %v10752 = vmul.f32 %v10688, %v10604
  %v10753 = vmul.f32 %v10691, %v10604
  %v10754 = vmul.f32 %v10694, %v10604
  %v10755 = vmul.f32 %v10697, %v10604
  %v10756 = vmul.f32 %v10700, %v10604
  %v10757 = vmul.f32 %v10703, %v10604
  %v10758 = vmul.f32 %v10706, %v10604
  %v10759 = vmul.f32 %v10709, %v10604
  %v10760 = vmul.f32 %v10712, %v10604
  %v10761 = vmul.f32 %v10715, %v10604
  %v10762 = vmul.f32 %v10718, %v10604
  %v10763 = vmul.f32 %v10721, %v10604
  %v10764 = vmul.f32 %v10724, %v10604
  %v10765 = vmul.f32 %v10727, %v10604
  %v10766 = vmul.f32 %v10730, %v10604
  %v10767 = vmul.f32 %v10733, %v10604
  %v10768 = vmul.f32 %v10736, %v10604
  %v10769 = vmul.f32 %v10739, %v10604
  %v10770 = vmul.f32 %v10742, %v10604
  %v10771 = vmul.f32 %v10745, %v10604
  %v10772 = vmul.f32 %v10748, %v10604
  %v10773 = vadd.f32 %v10749, 1e-05
  %v10774 = vadd.f32 %v10750, 1e-05
  %v10775 = vadd.f32 %v10751, 1e-05
  %v10776 = vadd.f32 %v10752, 1e-05
  %v10777 = vadd.f32 %v10753, 1e-05
  %v10778 = vadd.f32 %v10754, 1e-05
  %v10779 = vadd.f32 %v10755, 1e-05
  %v10780 = vadd.f32 %v10756, 1e-05
  %v10781 = vadd.f32 %v10757, 1e-05
  %v10782 = vadd.f32 %v10758, 1e-05
  %v10783 = vadd.f32 %v10759, 1e-05
  %v10784 = vadd.f32 %v10760, 1e-05
  %v10785 = vadd.f32 %v10761, 1e-05
  %v10786 = vadd.f32 %v10762, 1e-05
  %v10787 = vadd.f32 %v10763, 1e-05
  %v10788 = vadd.f32 %v10764, 1e-05
  %v10789 = vadd.f32 %v10765, 1e-05
  %v10790 = vadd.f32 %v10766, 1e-05
  %v10791 = vadd.f32 %v10767, 1e-05
  %v10792 = vadd.f32 %v10768, 1e-05
  %v10793 = vadd.f32 %v10769, 1e-05
  %v10794 = vadd.f32 %v10770, 1e-05
  %v10795 = vadd.f32 %v10771, 1e-05
  %v10796 = vadd.f32 %v10772, 1e-05
  %v10797 = vrsqrt.pop %v10773
  %v10798 = vrsqrt.pop %v10774
  %v10799 = vrsqrt.pop %v10775
  %v10800 = vrsqrt.pop %v10776
  %v10801 = vrsqrt.pop %v10777
  %v10802 = vrsqrt.pop %v10778
  %v10803 = vrsqrt.pop %v10779
  %v10804 = vrsqrt.pop %v10780
  %v10805 = vrsqrt.pop %v10781
  %v10806 = vrsqrt.pop %v10782
  %v10807 = vrsqrt.pop %v10783
  %v10808 = vrsqrt.pop %v10784
  %v10809 = vrsqrt.pop %v10785
  %v10810 = vrsqrt.pop %v10786
  %v10811 = vrsqrt.pop %v10787
  %v10812 = vrsqrt.pop %v10788
  %v10813 = vrsqrt.pop %v10789
  %v10814 = vrsqrt.pop %v10790
  %v10815 = vrsqrt.pop %v10791
  %v10816 = vrsqrt.pop %v10792
  %v10817 = vrsqrt.pop %v10793
  %v10818 = vrsqrt.pop %v10794
  %v10819 = vrsqrt.pop %v10795
  %v10820 = vrsqrt.pop %v10796
  %v10821 = vmul.f32 %v10629, %v10797
  %v10822 = vmul.f32 %v10630, %v10798
  %v10823 = vmul.f32 %v10631, %v10799
  %v10824 = vmul.f32 %v10632, %v10800
  %v10825 = vmul.f32 %v10633, %v10801
  %v10826 = vmul.f32 %v10634, %v10802
  %v10827 = vmul.f32 %v10635, %v10803
  %v10828 = vmul.f32 %v10636, %v10804
  %v10829 = vmul.f32 %v10637, %v10805
  %v10830 = vmul.f32 %v10638, %v10806
  %v10831 = vmul.f32 %v10639, %v10807
  %v10832 = vmul.f32 %v10640, %v10808
  %v10833 = vmul.f32 %v10641, %v10809
  %v10834 = vmul.f32 %v10642, %v10810
  %v10835 = vmul.f32 %v10643, %v10811
  %v10836 = vmul.f32 %v10644, %v10812
  %v10837 = vmul.f32 %v10645, %v10813
  %v10838 = vmul.f32 %v10646, %v10814
  %v10839 = vmul.f32 %v10647, %v10815
  %v10840 = vmul.f32 %v10648, %v10816
  %v10841 = vmul.f32 %v10649, %v10817
  %v10842 = vmul.f32 %v10650, %v10818
  %v10843 = vmul.f32 %v10651, %v10819
  %v10844 = vmul.f32 %v10652, %v10820
  %v10845 = vlaneseq
  %v10846 = vshrl.u32 %v10845, 7
  %v10847 = vsub.s32 0, %v10846
  %v10848 = vrot.slane %v93, %v10847
  %v10849 = vmul.f32 %v10821, %v10848
  %v10850 = vmul.f32 %v10822, %v10848
  %v10851 = vmul.f32 %v10823, %v10848
  %v10852 = vmul.f32 %v10824, %v10848
  %v10853 = vmul.f32 %v10825, %v10848
  %v10854 = vmul.f32 %v10826, %v10848
  %v10855 = vmul.f32 %v10827, %v10848
  %v10856 = vmul.f32 %v10828, %v10848
  %v10857 = vmul.f32 %v10829, %v10848
  %v10858 = vmul.f32 %v10830, %v10848
  %v10859 = vmul.f32 %v10831, %v10848
  %v10860 = vmul.f32 %v10832, %v10848
  %v10861 = vmul.f32 %v10833, %v10848
  %v10862 = vmul.f32 %v10834, %v10848
  %v10863 = vmul.f32 %v10835, %v10848
  %v10864 = vmul.f32 %v10836, %v10848
  %v10865 = vmul.f32 %v10837, %v10848
  %v10866 = vmul.f32 %v10838, %v10848
  %v10867 = vmul.f32 %v10839, %v10848
  %v10868 = vmul.f32 %v10840, %v10848
  %v10869 = vmul.f32 %v10841, %v10848
  %v10870 = vmul.f32 %v10842, %v10848
  %v10871 = vmul.f32 %v10843, %v10848
  %v10872 = vmul.f32 %v10844, %v10848
  %v10873 = vlaneseq
  %v10874 = vshrl.u32 %v10873, 7
  %v10875 = vsub.s32 0, %v10874
  %v10876 = vrot.slane %v94, %v10875
  %v10877 = vadd.f32 %v10849, %v10876
  %v10878 = vadd.f32 %v10850, %v10876
  %v10879 = vadd.f32 %v10851, %v10876
  %v10880 = vadd.f32 %v10852, %v10876
  %v10881 = vadd.f32 %v10853, %v10876
  %v10882 = vadd.f32 %v10854, %v10876
  %v10883 = vadd.f32 %v10855, %v10876
  %v10884 = vadd.f32 %v10856, %v10876
  %v10885 = vadd.f32 %v10857, %v10876
  %v10886 = vadd.f32 %v10858, %v10876
  %v10887 = vadd.f32 %v10859, %v10876
  %v10888 = vadd.f32 %v10860, %v10876
  %v10889 = vadd.f32 %v10861, %v10876
  %v10890 = vadd.f32 %v10862, %v10876
  %v10891 = vadd.f32 %v10863, %v10876
  %v10892 = vadd.f32 %v10864, %v10876
  %v10893 = vadd.f32 %v10865, %v10876
  %v10894 = vadd.f32 %v10866, %v10876
  %v10895 = vadd.f32 %v10867, %v10876
  %v10896 = vadd.f32 %v10868, %v10876
  %v10897 = vadd.f32 %v10869, %v10876
  %v10898 = vadd.f32 %v10870, %v10876
  %v10899 = vadd.f32 %v10871, %v10876
  %v10900 = vadd.f32 %v10872, %v10876
  %v10901 = vlaneseq
  %v10902 = vshrl.u32 %v10901, 7
  %v10903 = vsub.s32 0, %v10902
  %v10904 = vrot.slane %v131, %v10903
  %v10906 = vsel %vm410, %v10877, 0
  %v10909 = vsel %vm410, %v10878, 0
  %v10912 = vsel %vm410, %v10879, 0
  %v10915 = vsel %vm410, %v10880, 0
  %v10918 = vsel %vm410, %v10881, 0
  %v10921 = vsel %vm410, %v10882, 0
  %v10924 = vsel %vm410, %v10883, 0
  %v10927 = vsel %vm410, %v10884, 0
  %v10930 = vsel %vm410, %v10885, 0
  %v10933 = vsel %vm410, %v10886, 0
  %v10936 = vsel %vm410, %v10887, 0
  %v10939 = vsel %vm410, %v10888, 0
  %v10942 = vsel %vm410, %v10889, 0
  %v10945 = vsel %vm410, %v10890, 0
  %v10948 = vsel %vm410, %v10891, 0
  %v10951 = vsel %vm410, %v10892, 0
  %v10954 = vsel %vm410, %v10893, 0
  %v10957 = vsel %vm410, %v10894, 0
  %v10960 = vsel %vm410, %v10895, 0
  %v10963 = vsel %vm410, %v10896, 0
  %v10966 = vsel %vm410, %v10897, 0
  %v10969 = vsel %vm410, %v10898, 0
  %v10972 = vsel %vm410, %v10899, 0
  %v10975 = vsel %vm410, %v10900, 0
  %10977 = vmatprep.subr.mxu0 0.0
  %10978 = vmatpush1.msra.mxu0 0.0
  %10979 = vmatprep.subr.mxu0 0.0
  %10980 = vmatpush1.msra.mxu0 0.0
  %10981 = vmatprep.subr.mxu0 0.0
  %10982 = vmatpush1.msra.mxu0 0.0
  %10983 = vmatprep.subr.mxu0 0.0
  %10984 = vmatpush1.msra.mxu0 0.0
  %10985 = vmatprep.subr.mxu0 0.0
  %10986 = vmatpush1.msra.mxu0 0.0
  %10987 = vmatprep.subr.mxu0 0.0
  %10988 = vmatpush1.msra.mxu0 0.0
  %10989 = vmatprep.subr.mxu0 0.0
  %10990 = vmatpush1.msra.mxu0 0.0
  %10991 = vmatprep.subr.mxu0 0.0
  %10992 = vmatpush1.msra.mxu0 0.0
  %10993 = vmatprep.subr.mxu0 0.0
  %10994 = vmatpush1.msra.mxu0 0.0
  %10995 = vmatprep.subr.mxu0 0.0
  %10996 = vmatpush1.msra.mxu0 0.0
  %10997 = vmatprep.subr.mxu0 0.0
  %10998 = vmatpush1.msra.mxu0 0.0
  %10999 = vmatprep.subr.mxu0 0.0
  %11000 = vmatpush1.msra.mxu0 0.0
  %11001 = vmatprep.subr.mxu0 0.0
  %11002 = vmatpush1.msra.mxu0 %v130
  %11003 = vmatprep.subr.mxu0 0.0
  %11004 = vmatpush1.msra.mxu0 %v129
  %11005 = vmatprep.subr.mxu0 0.0
  %11006 = vmatpush1.msra.mxu0 %v128
  %11007 = vmatprep.subr.mxu0 0.0
  %11008 = vmatpush1.msra.mxu0 %v127
  %11009 = vmatprep.subr.mxu0 0.0
  %11010 = vmatpush2.msra.mxu0 0.0
  %11011 = vmatprep.subr.mxu0 0.0
  %11012 = vmatpush2.msra.mxu0 0.0
  %11013 = vmatprep.subr.mxu0 0.0
  %11014 = vmatpush2.msra.mxu0 0.0
  %11015 = vmatprep.subr.mxu0 0.0
  %11016 = vmatpush2.msra.mxu0 0.0
  %11017 = vmatprep.subr.mxu0 0.0
  %11018 = vmatpush2.msra.mxu0 0.0
  %11019 = vmatprep.subr.mxu0 0.0
  %11020 = vmatpush2.msra.mxu0 0.0
  %11021 = vmatprep.subr.mxu0 0.0
  %11022 = vmatpush2.msra.mxu0 0.0
  %11023 = vmatprep.subr.mxu0 0.0
  %11024 = vmatpush2.msra.mxu0 0.0
  %11025 = vmatprep.subr.mxu0 0.0
  %11026 = vmatpush2.msra.mxu0 0.0
  %11027 = vmatprep.subr.mxu0 0.0
  %11028 = vmatpush2.msra.mxu0 0.0
  %11029 = vmatprep.subr.mxu0 0.0
  %11030 = vmatpush2.msra.mxu0 0.0
  %11031 = vmatprep.subr.mxu0 0.0
  %11032 = vmatpush2.msra.mxu0 0.0
  %11033 = vmatprep.subr.mxu0 0.0
  %11034 = vmatpush2.msra.mxu0 0.0
  %11035 = vmatprep.subr.mxu0 0.0
  %11036 = vmatpush2.msra.mxu0 0.0
  %11037 = vmatprep.subr.mxu0 0.0
  %11038 = vmatpush2.msra.mxu0 0.0
  %11039 = vmatprep.subr.mxu0 0.0
  %11040 = vmatpush2.msra.mxu0 0.0
  %11041 = vmatprep.mubr.f32.mxu0 0.0
  %11042 = vmatmul.mubr.f32.gmra.mxu0 %v10906
  %v11043 = vpop.f32.mrf.mxu0
  %v11044 = vadd.f32 %v10904, %v11043
  %v11045 = vpop.f32.mrf.mxu0
  %11046 = vmatprep.mubr.f32.mxu0 0.0
  %11047 = vmatmul.mubr.f32.gmra.mxu0 %v10909
  %v11048 = vpop.f32.mrf.mxu0
  %v11049 = vadd.f32 %v10904, %v11048
  %v11050 = vpop.f32.mrf.mxu0
  %11051 = vmatprep.mubr.f32.mxu0 0.0
  %11052 = vmatmul.mubr.f32.gmra.mxu0 %v10912
  %v11053 = vpop.f32.mrf.mxu0
  %v11054 = vadd.f32 %v10904, %v11053
  %v11055 = vpop.f32.mrf.mxu0
  %11056 = vmatprep.mubr.f32.mxu0 0.0
  %11057 = vmatmul.mubr.f32.gmra.mxu0 %v10915
  %v11058 = vpop.f32.mrf.mxu0
  %v11059 = vadd.f32 %v10904, %v11058
  %v11060 = vpop.f32.mrf.mxu0
  %11061 = vmatprep.mubr.f32.mxu0 0.0
  %11062 = vmatmul.mubr.f32.gmra.mxu0 %v10918
  %v11063 = vpop.f32.mrf.mxu0
  %v11064 = vadd.f32 %v10904, %v11063
  %v11065 = vpop.f32.mrf.mxu0
  %11066 = vmatprep.mubr.f32.mxu0 0.0
  %11067 = vmatmul.mubr.f32.gmra.mxu0 %v10921
  %v11068 = vpop.f32.mrf.mxu0
  %v11069 = vadd.f32 %v10904, %v11068
  %v11070 = vpop.f32.mrf.mxu0
  %11071 = vmatprep.mubr.f32.mxu0 0.0
  %11072 = vmatmul.mubr.f32.gmra.mxu0 %v10924
  %v11073 = vpop.f32.mrf.mxu0
  %v11074 = vadd.f32 %v10904, %v11073
  %v11075 = vpop.f32.mrf.mxu0
  %11076 = vmatprep.mubr.f32.mxu0 0.0
  %11077 = vmatmul.mubr.f32.gmra.mxu0 %v10927
  %v11078 = vpop.f32.mrf.mxu0
  %v11079 = vadd.f32 %v10904, %v11078
  %v11080 = vpop.f32.mrf.mxu0
  %11081 = vmatprep.mubr.f32.mxu0 0.0
  %11082 = vmatmul.mubr.f32.gmra.mxu0 %v10930
  %v11083 = vpop.f32.mrf.mxu0
  %v11084 = vadd.f32 %v10904, %v11083
  %v11085 = vpop.f32.mrf.mxu0
  %11086 = vmatprep.mubr.f32.mxu0 0.0
  %11087 = vmatmul.mubr.f32.gmra.mxu0 %v10933
  %v11088 = vpop.f32.mrf.mxu0
  %v11089 = vadd.f32 %v10904, %v11088
  %v11090 = vpop.f32.mrf.mxu0
  %11091 = vmatprep.mubr.f32.mxu0 0.0
  %11092 = vmatmul.mubr.f32.gmra.mxu0 %v10936
  %v11093 = vpop.f32.mrf.mxu0
  %v11094 = vadd.f32 %v10904, %v11093
  %v11095 = vpop.f32.mrf.mxu0
  %11096 = vmatprep.mubr.f32.mxu0 0.0
  %11097 = vmatmul.mubr.f32.gmra.mxu0 %v10939
  %v11098 = vpop.f32.mrf.mxu0
  %v11099 = vadd.f32 %v10904, %v11098
  %v11100 = vpop.f32.mrf.mxu0
  %11101 = vmatprep.mubr.f32.mxu0 0.0
  %11102 = vmatmul.mubr.f32.gmra.mxu0 %v10942
  %v11103 = vpop.f32.mrf.mxu0
  %v11104 = vadd.f32 %v10904, %v11103
  %v11105 = vpop.f32.mrf.mxu0
  %11106 = vmatprep.mubr.f32.mxu0 0.0
  %11107 = vmatmul.mubr.f32.gmra.mxu0 %v10945
  %v11108 = vpop.f32.mrf.mxu0
  %v11109 = vadd.f32 %v10904, %v11108
  %v11110 = vpop.f32.mrf.mxu0
  %11111 = vmatprep.mubr.f32.mxu0 0.0
  %11112 = vmatmul.mubr.f32.gmra.mxu0 %v10948
  %v11113 = vpop.f32.mrf.mxu0
  %v11114 = vadd.f32 %v10904, %v11113
  %v11115 = vpop.f32.mrf.mxu0
  %11116 = vmatprep.mubr.f32.mxu0 0.0
  %11117 = vmatmul.mubr.f32.gmra.mxu0 %v10951
  %v11118 = vpop.f32.mrf.mxu0
  %v11119 = vadd.f32 %v10904, %v11118
  %v11120 = vpop.f32.mrf.mxu0
  %11121 = vmatprep.mubr.f32.mxu0 0.0
  %11122 = vmatmul.mubr.f32.gmra.mxu0 %v10954
  %v11123 = vpop.f32.mrf.mxu0
  %v11124 = vadd.f32 %v10904, %v11123
  %v11125 = vpop.f32.mrf.mxu0
  %11126 = vmatprep.mubr.f32.mxu0 0.0
  %11127 = vmatmul.mubr.f32.gmra.mxu0 %v10957
  %v11128 = vpop.f32.mrf.mxu0
  %v11129 = vadd.f32 %v10904, %v11128
  %v11130 = vpop.f32.mrf.mxu0
  %11131 = vmatprep.mubr.f32.mxu0 0.0
  %11132 = vmatmul.mubr.f32.gmra.mxu0 %v10960
  %v11133 = vpop.f32.mrf.mxu0
  %v11134 = vadd.f32 %v10904, %v11133
  %v11135 = vpop.f32.mrf.mxu0
  %11136 = vmatprep.mubr.f32.mxu0 0.0
  %11137 = vmatmul.mubr.f32.gmra.mxu0 %v10963
  %v11138 = vpop.f32.mrf.mxu0
  %v11139 = vadd.f32 %v10904, %v11138
  %v11140 = vpop.f32.mrf.mxu0
  %11141 = vmatprep.mubr.f32.mxu0 0.0
  %11142 = vmatmul.mubr.f32.gmra.mxu0 %v10966
  %v11143 = vpop.f32.mrf.mxu0
  %v11144 = vadd.f32 %v10904, %v11143
  %v11145 = vpop.f32.mrf.mxu0
  %11146 = vmatprep.mubr.f32.mxu0 0.0
  %11147 = vmatmul.mubr.f32.gmra.mxu0 %v10969
  %v11148 = vpop.f32.mrf.mxu0
  %v11149 = vadd.f32 %v10904, %v11148
  %v11150 = vpop.f32.mrf.mxu0
  %11151 = vmatprep.mubr.f32.mxu0 0.0
  %11152 = vmatmul.mubr.f32.gmra.mxu0 %v10972
  %v11153 = vpop.f32.mrf.mxu0
  %v11154 = vadd.f32 %v10904, %v11153
  %v11155 = vpop.f32.mrf.mxu0
  %11156 = vmatprep.mubr.f32.mxu0 0.0
  %11157 = vmatmul.mubr.f32.gmra.mxu0 %v10975
  %v11158 = vpop.f32.mrf.mxu0
  %v11159 = vadd.f32 %v10904, %v11158
  %v11160 = vpop.f32.mrf.mxu0
  %11161 = vdwg.mxu0
  %v11162 = vmax.f32 %v11044, 0.0
  %v11163 = vmax.f32 %v11049, 0.0
  %v11164 = vmax.f32 %v11054, 0.0
  %v11165 = vmax.f32 %v11059, 0.0
  %v11166 = vmax.f32 %v11064, 0.0
  %v11167 = vmax.f32 %v11069, 0.0
  %v11168 = vmax.f32 %v11074, 0.0
  %v11169 = vmax.f32 %v11079, 0.0
  %v11170 = vmax.f32 %v11084, 0.0
  %v11171 = vmax.f32 %v11089, 0.0
  %v11172 = vmax.f32 %v11094, 0.0
  %v11173 = vmax.f32 %v11099, 0.0
  %v11174 = vmax.f32 %v11104, 0.0
  %v11175 = vmax.f32 %v11109, 0.0
  %v11176 = vmax.f32 %v11114, 0.0
  %v11177 = vmax.f32 %v11119, 0.0
  %v11178 = vmax.f32 %v11124, 0.0
  %v11179 = vmax.f32 %v11129, 0.0
  %v11180 = vmax.f32 %v11134, 0.0
  %v11181 = vmax.f32 %v11139, 0.0
  %v11182 = vmax.f32 %v11144, 0.0
  %v11183 = vmax.f32 %v11149, 0.0
  %v11184 = vmax.f32 %v11154, 0.0
  %v11185 = vmax.f32 %v11159, 0.0
  %v11186 = vlaneseq
  %v11187 = vshrl.u32 %v11186, 7
  %v11188 = vsub.s32 0, %v11187
  %v11189 = vrot.slane %v92, %v11188
  %vm11190 = vcmask 523264
  %v11192 = vsel %vm11190, %v11162, 0
  %v11195 = vsel %vm11190, %v11163, 0
  %v11198 = vsel %vm11190, %v11164, 0
  %v11201 = vsel %vm11190, %v11165, 0
  %v11204 = vsel %vm11190, %v11166, 0
  %v11207 = vsel %vm11190, %v11167, 0
  %v11210 = vsel %vm11190, %v11168, 0
  %v11213 = vsel %vm11190, %v11169, 0
  %v11216 = vsel %vm11190, %v11170, 0
  %v11219 = vsel %vm11190, %v11171, 0
  %v11222 = vsel %vm11190, %v11172, 0
  %v11225 = vsel %vm11190, %v11173, 0
  %v11228 = vsel %vm11190, %v11174, 0
  %v11231 = vsel %vm11190, %v11175, 0
  %v11234 = vsel %vm11190, %v11176, 0
  %v11237 = vsel %vm11190, %v11177, 0
  %v11240 = vsel %vm11190, %v11178, 0
  %v11243 = vsel %vm11190, %v11179, 0
  %v11246 = vsel %vm11190, %v11180, 0
  %v11249 = vsel %vm11190, %v11181, 0
  %v11252 = vsel %vm11190, %v11182, 0
  %v11255 = vsel %vm11190, %v11183, 0
  %v11258 = vsel %vm11190, %v11184, 0
  %v11261 = vsel %vm11190, %v11185, 0
  %11263 = vmatprep.subr.mxu0 0.0
  %11264 = vmatpush1.msra.mxu0 0.0
  %11265 = vmatprep.subr.mxu0 0.0
  %11266 = vmatpush1.msra.mxu0 0.0
  %11267 = vmatprep.subr.mxu0 0.0
  %11268 = vmatpush1.msra.mxu0 0.0
  %11269 = vmatprep.subr.mxu0 0.0
  %11270 = vmatpush1.msra.mxu0 0.0
  %11271 = vmatprep.subr.mxu0 0.0
  %11272 = vmatpush1.msra.mxu0 0.0
  %11273 = vmatprep.subr.mxu0 0.0
  %11274 = vmatpush1.msra.mxu0 0.0
  %11275 = vmatprep.subr.mxu0 0.0
  %11276 = vmatpush1.msra.mxu0 0.0
  %11277 = vmatprep.subr.mxu0 0.0
  %11278 = vmatpush1.msra.mxu0 0.0
  %11279 = vmatprep.subr.mxu0 0.0
  %11280 = vmatpush1.msra.mxu0 %v90
  %11281 = vmatprep.subr.mxu0 0.0
  %11282 = vmatpush1.msra.mxu0 %v89
  %11283 = vmatprep.subr.mxu0 0.0
  %11284 = vmatpush1.msra.mxu0 %v88
  %11285 = vmatprep.subr.mxu0 0.0
  %11286 = vmatpush1.msra.mxu0 %v87
  %11287 = vmatprep.subr.mxu0 0.0
  %11288 = vmatpush1.msra.mxu0 %v86
  %11289 = vmatprep.subr.mxu0 0.0
  %11290 = vmatpush1.msra.mxu0 %v85
  %11291 = vmatprep.subr.mxu0 0.0
  %11292 = vmatpush1.msra.mxu0 %v84
  %11293 = vmatprep.subr.mxu0 0.0
  %11294 = vmatpush1.msra.mxu0 %v83
  %11295 = vmatprep.subr.mxu0 0.0
  %11296 = vmatpush2.msra.mxu0 0.0
  %11297 = vmatprep.subr.mxu0 0.0
  %11298 = vmatpush2.msra.mxu0 0.0
  %11299 = vmatprep.subr.mxu0 0.0
  %11300 = vmatpush2.msra.mxu0 0.0
  %11301 = vmatprep.subr.mxu0 0.0
  %11302 = vmatpush2.msra.mxu0 0.0
  %11303 = vmatprep.subr.mxu0 0.0
  %11304 = vmatpush2.msra.mxu0 0.0
  %11305 = vmatprep.subr.mxu0 0.0
  %11306 = vmatpush2.msra.mxu0 0.0
  %11307 = vmatprep.subr.mxu0 0.0
  %11308 = vmatpush2.msra.mxu0 0.0
  %11309 = vmatprep.subr.mxu0 0.0
  %11310 = vmatpush2.msra.mxu0 0.0
  %11311 = vmatprep.subr.mxu0 0.0
  %11312 = vmatpush2.msra.mxu0 0.0
  %11313 = vmatprep.subr.mxu0 0.0
  %11314 = vmatpush2.msra.mxu0 0.0
  %11315 = vmatprep.subr.mxu0 0.0
  %11316 = vmatpush2.msra.mxu0 0.0
  %11317 = vmatprep.subr.mxu0 0.0
  %11318 = vmatpush2.msra.mxu0 0.0
  %11319 = vmatprep.subr.mxu0 0.0
  %11320 = vmatpush2.msra.mxu0 0.0
  %11321 = vmatprep.subr.mxu0 0.0
  %11322 = vmatpush2.msra.mxu0 0.0
  %11323 = vmatprep.subr.mxu0 0.0
  %11324 = vmatpush2.msra.mxu0 0.0
  %11325 = vmatprep.subr.mxu0 0.0
  %11326 = vmatpush2.msra.mxu0 0.0
  %11327 = vmatprep.mubr.f32.mxu0 0.0
  %11328 = vmatmul.mubr.f32.gmra.mxu0 %v11192
  %v11329 = vpop.f32.mrf.mxu0
  %v11330 = vpop.f32.mrf.mxu0
  %11331 = vmatprep.mubr.f32.mxu0 0.0
  %11332 = vmatmul.mubr.f32.gmra.mxu0 %v11195
  %v11333 = vpop.f32.mrf.mxu0
  %v11334 = vpop.f32.mrf.mxu0
  %11335 = vmatprep.mubr.f32.mxu0 0.0
  %11336 = vmatmul.mubr.f32.gmra.mxu0 %v11198
  %v11337 = vpop.f32.mrf.mxu0
  %v11338 = vpop.f32.mrf.mxu0
  %11339 = vmatprep.mubr.f32.mxu0 0.0
  %11340 = vmatmul.mubr.f32.gmra.mxu0 %v11201
  %v11341 = vpop.f32.mrf.mxu0
  %v11342 = vpop.f32.mrf.mxu0
  %11343 = vmatprep.mubr.f32.mxu0 0.0
  %11344 = vmatmul.mubr.f32.gmra.mxu0 %v11204
  %v11345 = vpop.f32.mrf.mxu0
  %v11346 = vpop.f32.mrf.mxu0
  %11347 = vmatprep.mubr.f32.mxu0 0.0
  %11348 = vmatmul.mubr.f32.gmra.mxu0 %v11207
  %v11349 = vpop.f32.mrf.mxu0
  %v11350 = vadd.f32 %v11189, %v11349
  %v11351 = vpop.f32.mrf.mxu0
  %11352 = vmatprep.mubr.f32.mxu0 0.0
  %11353 = vmatmul.mubr.f32.gmra.mxu0 %v11210
  %v11354 = vpop.f32.mrf.mxu0
  %v11355 = vpop.f32.mrf.mxu0
  %11356 = vmatprep.mubr.f32.mxu0 0.0
  %11357 = vmatmul.mubr.f32.gmra.mxu0 %v11213
  %v11358 = vpop.f32.mrf.mxu0
  %v11359 = vpop.f32.mrf.mxu0
  %11360 = vmatprep.mubr.f32.mxu0 0.0
  %11361 = vmatmul.mubr.f32.gmra.mxu0 %v11216
  %v11362 = vpop.f32.mrf.mxu0
  %v11363 = vpop.f32.mrf.mxu0
  %11364 = vmatprep.mubr.f32.mxu0 0.0
  %11365 = vmatmul.mubr.f32.gmra.mxu0 %v11219
  %v11366 = vpop.f32.mrf.mxu0
  %v11367 = vpop.f32.mrf.mxu0
  %11368 = vmatprep.mubr.f32.mxu0 0.0
  %11369 = vmatmul.mubr.f32.gmra.mxu0 %v11222
  %v11370 = vpop.f32.mrf.mxu0
  %v11371 = vpop.f32.mrf.mxu0
  %11372 = vmatprep.mubr.f32.mxu0 0.0
  %11373 = vmatmul.mubr.f32.gmra.mxu0 %v11225
  %v11374 = vpop.f32.mrf.mxu0
  %v11375 = vadd.f32 %v11189, %v11374
  %v11376 = vpop.f32.mrf.mxu0
  %11377 = vmatprep.mubr.f32.mxu0 0.0
  %11378 = vmatmul.mubr.f32.gmra.mxu0 %v11228
  %v11379 = vpop.f32.mrf.mxu0
  %v11380 = vpop.f32.mrf.mxu0
  %11381 = vmatprep.mubr.f32.mxu0 0.0
  %11382 = vmatmul.mubr.f32.gmra.mxu0 %v11231
  %v11383 = vpop.f32.mrf.mxu0
  %v11384 = vpop.f32.mrf.mxu0
  %11385 = vmatprep.mubr.f32.mxu0 0.0
  %11386 = vmatmul.mubr.f32.gmra.mxu0 %v11234
  %v11387 = vpop.f32.mrf.mxu0
  %v11388 = vpop.f32.mrf.mxu0
  %11389 = vmatprep.mubr.f32.mxu0 0.0
  %11390 = vmatmul.mubr.f32.gmra.mxu0 %v11237
  %v11391 = vpop.f32.mrf.mxu0
  %v11392 = vpop.f32.mrf.mxu0
  %11393 = vmatprep.mubr.f32.mxu0 0.0
  %11394 = vmatmul.mubr.f32.gmra.mxu0 %v11240
  %v11395 = vpop.f32.mrf.mxu0
  %v11396 = vpop.f32.mrf.mxu0
  %11397 = vmatprep.mubr.f32.mxu0 0.0
  %11398 = vmatmul.mubr.f32.gmra.mxu0 %v11243
  %v11399 = vpop.f32.mrf.mxu0
  %v11400 = vadd.f32 %v11189, %v11399
  %v11401 = vpop.f32.mrf.mxu0
  %11402 = vmatprep.mubr.f32.mxu0 0.0
  %11403 = vmatmul.mubr.f32.gmra.mxu0 %v11246
  %v11404 = vpop.f32.mrf.mxu0
  %v11405 = vpop.f32.mrf.mxu0
  %11406 = vmatprep.mubr.f32.mxu0 0.0
  %11407 = vmatmul.mubr.f32.gmra.mxu0 %v11249
  %v11408 = vpop.f32.mrf.mxu0
  %v11409 = vpop.f32.mrf.mxu0
  %11410 = vmatprep.mubr.f32.mxu0 0.0
  %11411 = vmatmul.mubr.f32.gmra.mxu0 %v11252
  %v11412 = vpop.f32.mrf.mxu0
  %v11413 = vpop.f32.mrf.mxu0
  %11414 = vmatprep.mubr.f32.mxu0 0.0
  %11415 = vmatmul.mubr.f32.gmra.mxu0 %v11255
  %v11416 = vpop.f32.mrf.mxu0
  %v11417 = vpop.f32.mrf.mxu0
  %11418 = vmatprep.mubr.f32.mxu0 0.0
  %11419 = vmatmul.mubr.f32.gmra.mxu0 %v11258
  %v11420 = vpop.f32.mrf.mxu0
  %v11421 = vpop.f32.mrf.mxu0
  %11422 = vmatprep.mubr.f32.mxu0 0.0
  %11423 = vmatmul.mubr.f32.gmra.mxu0 %v11261
  %v11424 = vpop.f32.mrf.mxu0
  %v11425 = vadd.f32 %v11189, %v11424
  %v11426 = vpop.f32.mrf.mxu0
  %11427 = vdwg.mxu0
  %v11428 = vadd.f32 %v10882, %v11350
  %v11429 = vadd.f32 %v10888, %v11375
  %v11430 = vadd.f32 %v10894, %v11400
  %v11431 = vadd.f32 %v10900, %v11425
  %v11432 = vsel %vm410, %v11428, 0.0
  %11433 = vadd.xlane.f32.xlu0 %v11432
  %v11434 = vpop.xlane.xlu0 %11433
  %v11435 = vsel %vm410, %v11429, 0.0
  %11436 = vadd.xlane.f32.xlu0 %v11435
  %v11437 = vpop.xlane.xlu0 %11436
  %v11438 = vsel %vm410, %v11430, 0.0
  %11439 = vadd.xlane.f32.xlu0 %v11438
  %v11440 = vpop.xlane.xlu0 %11439
  %v11441 = vsel %vm410, %v11431, 0.0
  %11442 = vadd.xlane.f32.xlu0 %v11441
  %v11443 = vpop.xlane.xlu0 %11442
  %v11444 = vmul.f32 %v11434, %v10604
  %v11445 = vmul.f32 %v11437, %v10604
  %v11446 = vmul.f32 %v11440, %v10604
  %v11447 = vmul.f32 %v11443, %v10604
  %v11448 = vsub.f32 %v11428, %v11444
  %v11449 = vsub.f32 %v11429, %v11445
  %v11450 = vsub.f32 %v11430, %v11446
  %v11451 = vsub.f32 %v11431, %v11447
  %v11452 = vmul.f32 %v11448, %v11448
  %v11453 = vmul.f32 %v11449, %v11449
  %v11454 = vmul.f32 %v11450, %v11450
  %v11455 = vmul.f32 %v11451, %v11451
  %v11456 = vsel %vm410, %v11452, 0.0
  %11457 = vadd.xlane.f32.xlu0 %v11456
  %v11458 = vpop.xlane.xlu0 %11457
  %v11459 = vsel %vm410, %v11453, 0.0
  %11460 = vadd.xlane.f32.xlu0 %v11459
  %v11461 = vpop.xlane.xlu0 %11460
  %v11462 = vsel %vm410, %v11454, 0.0
  %11463 = vadd.xlane.f32.xlu0 %v11462
  %v11464 = vpop.xlane.xlu0 %11463
  %v11465 = vsel %vm410, %v11455, 0.0
  %11466 = vadd.xlane.f32.xlu0 %v11465
  %v11467 = vpop.xlane.xlu0 %11466
  %v11468 = vmul.f32 %v11458, %v10604
  %v11469 = vmul.f32 %v11461, %v10604
  %v11470 = vmul.f32 %v11464, %v10604
  %v11471 = vmul.f32 %v11467, %v10604
  %v11472 = vadd.f32 %v11468, 1e-05
  %v11473 = vadd.f32 %v11469, 1e-05
  %v11474 = vadd.f32 %v11470, 1e-05
  %v11475 = vadd.f32 %v11471, 1e-05
  %v11476 = vrsqrt.pop %v11472
  %v11477 = vrsqrt.pop %v11473
  %v11478 = vrsqrt.pop %v11474
  %v11479 = vrsqrt.pop %v11475
  %v11480 = vmul.f32 %v11448, %v11476
  %v11481 = vmul.f32 %v11449, %v11477
  %v11482 = vmul.f32 %v11450, %v11478
  %v11483 = vmul.f32 %v11451, %v11479
  %v11484 = vlaneseq
  %v11485 = vshrl.u32 %v11484, 7
  %v11486 = vsub.s32 0, %v11485
  %v11487 = vrot.slane %v95, %v11486
  %v11488 = vmul.f32 %v11480, %v11487
  %v11489 = vmul.f32 %v11481, %v11487
  %v11490 = vmul.f32 %v11482, %v11487
  %v11491 = vmul.f32 %v11483, %v11487
  %v11492 = vlaneseq
  %v11493 = vshrl.u32 %v11492, 7
  %v11494 = vsub.s32 0, %v11493
  %v11495 = vrot.slane %v96, %v11494
  %v11496 = vadd.f32 %v11488, %v11495
  %v11497 = vadd.f32 %v11489, %v11495
  %v11498 = vadd.f32 %v11490, %v11495
  %v11499 = vadd.f32 %v11491, %v11495
  %v11501 = vrot.slane %v11496, 4
  %v11504 = vrot.slane %v11497, 3
  %v11507 = vrot.slane %v11498, 2
  %v11510 = vrot.slane %v11499, 1
  %vm11512 = vcmask 1040384
  %v11513 = vsel %vm11512, %v11501, %v11504
  %vm11514 = vcmask 1041408
  %v11515 = vsel %vm11514, %v11513, %v11507
  %vm11516 = vcmask 1042432
  %v11517 = vsel %vm11516, %v11515, %v11510
  %v11518 = vlaneseq
  %v11519 = vshrl.u32 %v11518, 7
  %v11520 = vsub.s32 0, %v11519
  %v11521 = vrot.slane %v136, %v11520
  %v11523 = vsel %vm410, %v11517, 0
  %11525 = vmatprep.subr.mxu0 0.0
  %11526 = vmatpush1.msra.mxu0 0.0
  %11527 = vmatprep.subr.mxu0 0.0
  %11528 = vmatpush1.msra.mxu0 0.0
  %11529 = vmatprep.subr.mxu0 0.0
  %11530 = vmatpush1.msra.mxu0 0.0
  %11531 = vmatprep.subr.mxu0 0.0
  %11532 = vmatpush1.msra.mxu0 0.0
  %11533 = vmatprep.subr.mxu0 0.0
  %11534 = vmatpush1.msra.mxu0 0.0
  %11535 = vmatprep.subr.mxu0 0.0
  %11536 = vmatpush1.msra.mxu0 0.0
  %11537 = vmatprep.subr.mxu0 0.0
  %11538 = vmatpush1.msra.mxu0 0.0
  %11539 = vmatprep.subr.mxu0 0.0
  %11540 = vmatpush1.msra.mxu0 0.0
  %11541 = vmatprep.subr.mxu0 0.0
  %11542 = vmatpush1.msra.mxu0 0.0
  %11543 = vmatprep.subr.mxu0 0.0
  %11544 = vmatpush1.msra.mxu0 0.0
  %11545 = vmatprep.subr.mxu0 0.0
  %11546 = vmatpush1.msra.mxu0 0.0
  %11547 = vmatprep.subr.mxu0 0.0
  %11548 = vmatpush1.msra.mxu0 0.0
  %11549 = vmatprep.subr.mxu0 0.0
  %11550 = vmatpush1.msra.mxu0 %v135
  %11551 = vmatprep.subr.mxu0 0.0
  %11552 = vmatpush1.msra.mxu0 %v134
  %11553 = vmatprep.subr.mxu0 0.0
  %11554 = vmatpush1.msra.mxu0 %v133
  %11555 = vmatprep.subr.mxu0 0.0
  %11556 = vmatpush1.msra.mxu0 %v132
  %11557 = vmatprep.subr.mxu0 0.0
  %11558 = vmatpush2.msra.mxu0 0.0
  %11559 = vmatprep.subr.mxu0 0.0
  %11560 = vmatpush2.msra.mxu0 0.0
  %11561 = vmatprep.subr.mxu0 0.0
  %11562 = vmatpush2.msra.mxu0 0.0
  %11563 = vmatprep.subr.mxu0 0.0
  %11564 = vmatpush2.msra.mxu0 0.0
  %11565 = vmatprep.subr.mxu0 0.0
  %11566 = vmatpush2.msra.mxu0 0.0
  %11567 = vmatprep.subr.mxu0 0.0
  %11568 = vmatpush2.msra.mxu0 0.0
  %11569 = vmatprep.subr.mxu0 0.0
  %11570 = vmatpush2.msra.mxu0 0.0
  %11571 = vmatprep.subr.mxu0 0.0
  %11572 = vmatpush2.msra.mxu0 0.0
  %11573 = vmatprep.subr.mxu0 0.0
  %11574 = vmatpush2.msra.mxu0 0.0
  %11575 = vmatprep.subr.mxu0 0.0
  %11576 = vmatpush2.msra.mxu0 0.0
  %11577 = vmatprep.subr.mxu0 0.0
  %11578 = vmatpush2.msra.mxu0 0.0
  %11579 = vmatprep.subr.mxu0 0.0
  %11580 = vmatpush2.msra.mxu0 0.0
  %11581 = vmatprep.subr.mxu0 0.0
  %11582 = vmatpush2.msra.mxu0 0.0
  %11583 = vmatprep.subr.mxu0 0.0
  %11584 = vmatpush2.msra.mxu0 0.0
  %11585 = vmatprep.subr.mxu0 0.0
  %11586 = vmatpush2.msra.mxu0 0.0
  %11587 = vmatprep.subr.mxu0 0.0
  %11588 = vmatpush2.msra.mxu0 0.0
  %11589 = vmatprep.mubr.f32.mxu0 0.0
  %11590 = vmatmul.mubr.f32.gmra.mxu0 %v11523
  %v11591 = vpop.f32.mrf.mxu0
  %v11592 = vadd.f32 %v11521, %v11591
  %v11593 = vpop.f32.mrf.mxu0
  %11594 = vdwg.mxu0
  %v11595 = vmax.f32 %v11592, 0.0
  %vm11596 = vcmask 125952
  %v11597 = vsel %vm11596, %v11595, 0.0
  %11598 = vadd.xlane.f32.xlu0 %v11597
  %v11599 = vpop.xlane.xlu0 %11598
  %v11600 = vrcp.pop 16.0
  %v11601 = vmul.f32 %v11599, %v11600
  %v11602 = vsub.f32 %v11595, %v11601
  %v11603 = vmul.f32 %v11602, %v11602
  %v11604 = vsel %vm11596, %v11603, 0.0
  %11605 = vadd.xlane.f32.xlu0 %v11604
  %v11606 = vpop.xlane.xlu0 %11605
  %v11607 = vmul.f32 %v11606, %v11600
  %v11608 = vadd.f32 %v11607, 1e-05
  %v11609 = vrsqrt.pop %v11608
  %v11610 = vmul.f32 %v11602, %v11609
  %v11611 = vlaneseq
  %v11612 = vshrl.u32 %v11611, 7
  %v11613 = vsub.s32 0, %v11612
  %v11614 = vrot.slane %v137, %v11613
  %v11615 = vmul.f32 %v11610, %v11614
  %v11616 = vlaneseq
  %v11617 = vshrl.u32 %v11616, 7
  %v11618 = vsub.s32 0, %v11617
  %v11619 = vrot.slane %v138, %v11618
  %v11620 = vadd.f32 %v11615, %v11619
  %11622 = vrot.lane.b32.xlu0 %v11595, 112
  %v11623 = vpop.permute.xlu0 %11622
  %v11625 = vsel %vm11596, %v11623, 0.0
  %11626 = vadd.xlane.f32.xlu0 %v11625
  %v11627 = vpop.xlane.xlu0 %11626
  %v11628 = vmul.f32 %v11627, %v11600
  %v11629 = vsub.f32 %v11595, %v11628
  %v11630 = vmul.f32 %v11629, %v11629
  %11632 = vrot.lane.b32.xlu0 %v11630, 112
  %v11633 = vpop.permute.xlu0 %11632
  %v11635 = vsel %vm11596, %v11633, 0.0
  %11636 = vadd.xlane.f32.xlu0 %v11635
  %v11637 = vpop.xlane.xlu0 %11636
  %v11638 = vmul.f32 %v11637, %v11600
  %v11639 = vadd.f32 %v11638, 1e-05
  %v11640 = vrsqrt.pop %v11639
  %v11641 = vmul.f32 %v11629, %v11640
  %v11642 = vmul.f32 %v11641, %v11614
  %v11643 = vadd.f32 %v11642, %v11619
  %v11644 = vsel %vm148, %v11620, %v11643
  %v11645 = vlaneseq
  %v11646 = vshrl.u32 %v11645, 7
  %v11647 = vsub.s32 0, %v11646
  %v11648 = vrot.slane %v143, %v11647
  %v11650 = vsel %vm410, %v11644, 0
  %11652 = vmatprep.subr.mxu0 0.0
  %11653 = vmatpush1.msra.mxu0 0.0
  %11654 = vmatprep.subr.mxu0 0.0
  %11655 = vmatpush1.msra.mxu0 0.0
  %11656 = vmatprep.subr.mxu0 0.0
  %11657 = vmatpush1.msra.mxu0 0.0
  %11658 = vmatprep.subr.mxu0 0.0
  %11659 = vmatpush1.msra.mxu0 0.0
  %11660 = vmatprep.subr.mxu0 0.0
  %11661 = vmatpush1.msra.mxu0 0.0
  %11662 = vmatprep.subr.mxu0 0.0
  %11663 = vmatpush1.msra.mxu0 0.0
  %11664 = vmatprep.subr.mxu0 0.0
  %11665 = vmatpush1.msra.mxu0 0.0
  %11666 = vmatprep.subr.mxu0 0.0
  %11667 = vmatpush1.msra.mxu0 0.0
  %11668 = vmatprep.subr.mxu0 0.0
  %11669 = vmatpush1.msra.mxu0 0.0
  %11670 = vmatprep.subr.mxu0 0.0
  %11671 = vmatpush1.msra.mxu0 0.0
  %11672 = vmatprep.subr.mxu0 0.0
  %11673 = vmatpush1.msra.mxu0 0.0
  %11674 = vmatprep.subr.mxu0 0.0
  %11675 = vmatpush1.msra.mxu0 0.0
  %11676 = vmatprep.subr.mxu0 0.0
  %11677 = vmatpush1.msra.mxu0 %v142
  %11678 = vmatprep.subr.mxu0 0.0
  %11679 = vmatpush1.msra.mxu0 %v141
  %11680 = vmatprep.subr.mxu0 0.0
  %11681 = vmatpush1.msra.mxu0 %v140
  %11682 = vmatprep.subr.mxu0 0.0
  %11683 = vmatpush1.msra.mxu0 %v139
  %11684 = vmatprep.subr.mxu0 0.0
  %11685 = vmatpush2.msra.mxu0 0.0
  %11686 = vmatprep.subr.mxu0 0.0
  %11687 = vmatpush2.msra.mxu0 0.0
  %11688 = vmatprep.subr.mxu0 0.0
  %11689 = vmatpush2.msra.mxu0 0.0
  %11690 = vmatprep.subr.mxu0 0.0
  %11691 = vmatpush2.msra.mxu0 0.0
  %11692 = vmatprep.subr.mxu0 0.0
  %11693 = vmatpush2.msra.mxu0 0.0
  %11694 = vmatprep.subr.mxu0 0.0
  %11695 = vmatpush2.msra.mxu0 0.0
  %11696 = vmatprep.subr.mxu0 0.0
  %11697 = vmatpush2.msra.mxu0 0.0
  %11698 = vmatprep.subr.mxu0 0.0
  %11699 = vmatpush2.msra.mxu0 0.0
  %11700 = vmatprep.subr.mxu0 0.0
  %11701 = vmatpush2.msra.mxu0 0.0
  %11702 = vmatprep.subr.mxu0 0.0
  %11703 = vmatpush2.msra.mxu0 0.0
  %11704 = vmatprep.subr.mxu0 0.0
  %11705 = vmatpush2.msra.mxu0 0.0
  %11706 = vmatprep.subr.mxu0 0.0
  %11707 = vmatpush2.msra.mxu0 0.0
  %11708 = vmatprep.subr.mxu0 0.0
  %11709 = vmatpush2.msra.mxu0 0.0
  %11710 = vmatprep.subr.mxu0 0.0
  %11711 = vmatpush2.msra.mxu0 0.0
  %11712 = vmatprep.subr.mxu0 0.0
  %11713 = vmatpush2.msra.mxu0 0.0
  %11714 = vmatprep.subr.mxu0 0.0
  %11715 = vmatpush2.msra.mxu0 0.0
  %11716 = vmatprep.mubr.f32.mxu0 0.0
  %11717 = vmatmul.mubr.f32.gmra.mxu0 %v11650
  %v11718 = vpop.f32.mrf.mxu0
  %v11719 = vadd.f32 %v11648, %v11718
  %v11720 = vpop.f32.mrf.mxu0
  %11721 = vdwg.mxu0
  %v11722 = vmax.f32 %v11719, 0.0
  %vm11723 = vcmask 19464
  %v11724 = vsel %vm11723, %v11722, -inf
  %11725 = vmax.xlane.f32.xlu0 %v11724
  %v11726 = vpop.xlane.xlu0 %11725
  %v11727 = vsub.f32 %v11722, %v11726
  %v11728 = vmul.f32 %v11727, 1.442695
  %v11729 = vpow.pop %v11728
  %11731 = vrot.lane.b32.xlu0 %v11729, 127
  %v11732 = vpop.permute.xlu0 %11731
  %vm11734 = vcmask 11264
  %v11735 = vsel %vm11734, %v11732, 0.0
  %11736 = vadd.xlane.f32.xlu0 %v11735
  %v11737 = vpop.xlane.xlu0 %11736
  %v11738 = vrcp.pop %v11737
  %v11739 = vmul.f32 %v11729, %v11738
  %vm11740 = vcmask 7168
  %v11741 = vsel %vm11740, %v11719, %v11739
  %vm11742 = vcmask 23552
  %v11743 = vsel %vm11742, %v11741, 0.0
  %11744 = vst [vmem:[%s8] sm:$0xf] %v11743
  // Predicated region
  $region34: #{transformer_pre_forward.1} parent=0 // pred_check
    _
  $region35: #{transformer_pre_forward.1} parent=0 // pred_check_branch
    %11746 = sbr.rel (0) target = $region37
  $region36: #{transformer_pre_forward.1} parent=0 // pred_region
    _
  $region37: #{transformer_pre_forward.1} parent=0 // pred_fallthru
    _
  // Predicated region
  $region38: #{transformer_pre_forward.1} parent=0 // pred_check
    _
  $region39: #{transformer_pre_forward.1} parent=0 // pred_check_branch
    %11748 = sbr.rel (0) target = $region41
  $region40: #{transformer_pre_forward.1} parent=0 // pred_region
    _
  $region41: #{transformer_pre_forward.1} parent=0 // pred_fallthru
    _

</llo_original>
